<compile_context>
chip_gen: v7x
topology: tpu7x:2x2x1
jax: 0.10.0
libtpu: 0.0.40
codegen_flags: <defaults>
</compile_context>

<pallas_src>
import functools

import jax
import jax.numpy as jnp
from jax.experimental import pallas as pl
from jax.experimental.pallas import tpu as pltpu


def _convnet_kernel(*refs, N, H0, W0, chans, eps):
    """Fused 4-block ConvNet forward.

    refs layout:
      refs[0]                     : x       (N, H0, W0, chans[0])      f32  NHWC input
      refs[1 + 3l + 0]            : w_l     (9*chans[l], chans[l+1])   bf16 packed conv taps
      refs[1 + 3l + 1]            : gamma_l (1, chans[l+1])            f32
      refs[1 + 3l + 2]            : beta_l  (1, chans[l+1])            f32
      refs[1 + 3L]                : out     (N, H0/2^L, W0/2^L, chans[-1]) f32
      refs[2 + 3L + l]            : pad_l   (N, H_l+2, W_l+2, chans[l]) f32 scratch
    """
    L = len(chans) - 1
    x_ref = refs[0]
    p_refs = refs[1:1 + 3 * L]
    out_ref = refs[1 + 3 * L]
    pad_refs = refs[2 + 3 * L:]

    x = x_ref[...]                       # (N, H, W, Cin) f32
    H, W = H0, W0
    for l in range(L):
        Cin, Cout = chans[l], chans[l + 1]
        w_ref, g_ref, beta_ref = p_refs[3 * l], p_refs[3 * l + 1], p_refs[3 * l + 2]
        pad_ref = pad_refs[l]

        # --- fused zero padding: zeroed VMEM scratch, interior store ---
        pad_ref[...] = jnp.zeros_like(pad_ref)
        pad_ref[:, 1:H + 1, 1:W + 1, :] = x
        xp = pad_ref[...]                # (N, H+2, W+2, Cin)

        # --- im2col: 9 shifted windows concatenated on the lane (channel) axis ---
        taps = [xp[:, dy:dy + H, dx:dx + W, :] for dy in range(3) for dx in range(3)]
        col = jnp.concatenate(taps, axis=-1).reshape(N * H * W, 9 * Cin)

        # --- one packed-K MXU matmul (bf16 operands, f32 accumulation) ---
        acc = jnp.dot(col.astype(jnp.bfloat16), w_ref[...],
                      preferred_element_type=jnp.float32)      # (rows, Cout) f32

        # --- BatchNorm (training-mode batch stats, biased var), bias folded away ---
        # conv bias is cancelled by the batch-mean subtraction, so it is never added.
        rows = N * H * W
        inv_rows = 1.0 / rows
        mean = jnp.sum(acc, axis=0, keepdims=True) * inv_rows
        var = jnp.sum(acc * acc, axis=0, keepdims=True) * inv_rows - mean * mean
        scale = g_ref[...] * jax.lax.rsqrt(var + eps)
        shift = beta_ref[...] - mean * scale
        y = jnp.maximum(acc * scale + shift, 0.0)               # BN + ReLU in one FMA + max

        # --- MaxPool2d(2): W pairs then H pairs (channel lane dim kept intact) ---
        H2, W2 = H // 2, W // 2
        y = y.reshape(N * H * W2, 2, Cout)
        y = jnp.max(y, axis=1)                                  # pool W -> (N*H*W2, Cout)
        y = y.reshape(N * H2, 2, W2, Cout)                      # split leading rows only
        y = jnp.maximum(y[:, 0], y[:, 1])                       # pool H pairs -> (N*H2, W2, Cout)
        x = y.reshape(N, H2, W2, Cout)
        H, W = H2, W2

    out_ref[...] = x                                            # (N, Hf, Wf, z_dim)


def convnet_forward_pallas(x_nhwc, params, eps=1e-5):
    N, H, W, C0 = x_nhwc.shape
    L = len(params)
    chans = (C0,) + tuple(p['w_packed'].shape[1] for p in params)
    Hf, Wf = H // (2 ** L), W // (2 ** L)

    inputs = [x_nhwc.astype(jnp.float32)]
    for p in params:
        inputs += [p['w_packed'], p['gamma'], p['beta']]

    scratch = []
    h, w = H, W
    for l in range(L):
        scratch.append(pltpu.VMEM((N, h + 2, w + 2, chans[l]), jnp.float32))
        h //= 2
        w //= 2

    out = pl.pallas_call(
        functools.partial(_convnet_kernel, N=N, H0=H, W0=W, chans=chans, eps=eps),
        out_shape=jax.ShapeDtypeStruct((N, Hf, Wf, chans[-1]), jnp.float32),
        in_specs=[pl.BlockSpec(memory_space=pltpu.MemorySpace.VMEM)] * len(inputs),
        out_specs=pl.BlockSpec(memory_space=pltpu.MemorySpace.VMEM),
        scratch_shapes=scratch,
        compiler_params=pltpu.CompilerParams(vmem_limit_bytes=64 * 1024 * 1024),
    )(*inputs)
    return out


def init_params(key, x_dim, hid_dim, z_dim):
    """Deterministic synthetic parameters (shapes match nn.Conv2d / nn.BatchNorm2d)."""
    dims = [(x_dim, hid_dim), (hid_dim, hid_dim), (hid_dim, hid_dim), (hid_dim, z_dim)]
    params = []
    for (cin, cout) in dims:
        key, kw, kb = jax.random.split(key, 3)
        w_oihw = 0.1 * jax.random.normal(kw, (cout, cin, 3, 3), jnp.float32)   # PyTorch layout
        w_hwio = jnp.transpose(w_oihw, (2, 3, 1, 0))                           # (3, 3, Cin, Cout)
        w_packed = w_hwio.reshape(9 * cin, cout).astype(jnp.bfloat16)          # K = 9*Cin packed
        b = 0.01 * jax.random.normal(kb, (1, cout), jnp.float32)               # cancelled by BN
        gamma = jnp.ones((1, cout), jnp.float32)                               # BN default init
        beta = jnp.zeros((1, cout), jnp.float32)
        params.append(dict(w_hwio=w_hwio, w_packed=w_packed, b=b, gamma=gamma, beta=beta))
    return params


@jax.jit
def conv_standard_forward(x_nchw, params):
    # layout: accept NCHW (PyTorch convention), compute in NHWC internally.
    x = jnp.transpose(x_nchw, (0, 2, 3, 1)).astype(jnp.float32)
    y = convnet_forward_pallas(x, params)            # (N, Hf, Wf, z_dim)
    # Flatten: PyTorch flattens the NCHW tensor -> transpose back before flattening.
    y = jnp.transpose(y, (0, 3, 1, 2))
    return y.reshape(y.shape[0], -1)


def _reference_forward(x_nchw, params, eps=1e-5):
    """Pure-JAX reference matching the PyTorch forward (training-mode BN).

    Conv operands are cast to bf16 (f32 accumulation) exactly like the kernel's
    MXU matmuls, so the comparison is apples-to-apples; the conv bias IS added
    here (as in PyTorch) — the kernel omits it because training-mode BN cancels it.
    """
    x = jnp.transpose(x_nchw, (0, 2, 3, 1)).astype(jnp.float32)
    for p in params:
        w = p['w_hwio'].astype(jnp.bfloat16)
        y = jax.lax.conv_general_dilated(
            x.astype(jnp.bfloat16), w, (1, 1), 'SAME',
            dimension_numbers=('NHWC', 'HWIO', 'NHWC'),
            preferred_element_type=jnp.float32) + p['b']
        mean = y.mean(axis=(0, 1, 2))
        var = y.var(axis=(0, 1, 2))
        y = (y - mean) * jax.lax.rsqrt(var + eps) * p['gamma'][0] + p['beta'][0]
        y = jnp.maximum(y, 0.0)
        n, h, wd, c = y.shape
        y = y.reshape(n, h // 2, 2, wd // 2, 2, c).max(axis=(2, 4))
        x = y
    x = jnp.transpose(x, (0, 3, 1, 2))
    return x.reshape(x.shape[0], -1)


if __name__ == "__main__":
    key = jax.random.PRNGKey(0)
    k_x, k_p = jax.random.split(key)

    N, x_dim, H, W = 2, 3, 16, 16      # small image-like input; spatial 16->8->4->2->1
    hid_dim, z_dim = 32, 32

    x = jax.random.normal(k_x, (N, x_dim, H, W), jnp.float32)
    params = init_params(k_p, x_dim, hid_dim, z_dim)

    out = jax.block_until_ready(conv_standard_forward(x, params))
    ref = _reference_forward(x, params)

    assert out.shape == (N, z_dim), out.shape
    assert jnp.allclose(out, ref, rtol=5e-3, atol=5e-3), \
        float(jnp.max(jnp.abs(out - ref)))

    print("KERNEL_OK")
</pallas_src>

<mosaic_0001>
module attributes {stable_mosaic.version = 11 : i64} {
  func.func @_convnet_kernel(%arg0: memref<2x16x16x3xf32, #tpu.memory_space<vmem>>, %arg1: memref<27x32xbf16, #tpu.memory_space<vmem>>, %arg2: memref<1x32xf32, #tpu.memory_space<vmem>>, %arg3: memref<1x32xf32, #tpu.memory_space<vmem>>, %arg4: memref<288x32xbf16, #tpu.memory_space<vmem>>, %arg5: memref<1x32xf32, #tpu.memory_space<vmem>>, %arg6: memref<1x32xf32, #tpu.memory_space<vmem>>, %arg7: memref<288x32xbf16, #tpu.memory_space<vmem>>, %arg8: memref<1x32xf32, #tpu.memory_space<vmem>>, %arg9: memref<1x32xf32, #tpu.memory_space<vmem>>, %arg10: memref<288x32xbf16, #tpu.memory_space<vmem>>, %arg11: memref<1x32xf32, #tpu.memory_space<vmem>>, %arg12: memref<1x32xf32, #tpu.memory_space<vmem>>, %arg13: memref<2x1x1x32xf32, #tpu.memory_space<vmem>>, %arg14: memref<2x18x18x3xf32, #tpu.memory_space<vmem>>, %arg15: memref<2x10x10x32xf32, #tpu.memory_space<vmem>>, %arg16: memref<2x6x6x32xf32, #tpu.memory_space<vmem>>, %arg17: memref<2x4x4x32xf32, #tpu.memory_space<vmem>>) attributes {dimension_semantics = [], scalar_prefetch = 0 : i64, scratch_operands = 4 : i64, tpu.core_type = #tpu.core_type<tc>} {
    %c0 = arith.constant 0 : index
    %c0_0 = arith.constant 0 : index
    %c0_1 = arith.constant 0 : index
    %c0_2 = arith.constant 0 : index
    %0 = vector.load %arg0[%c0, %c0_0, %c0_1, %c0_2] : memref<2x16x16x3xf32, #tpu.memory_space<vmem>>, vector<2x16x16x3xf32>
    %cst = arith.constant 0.000000e+00 : f32
    %1 = vector.broadcast %cst : f32 to vector<2x18x18x3xf32>
    %c0_3 = arith.constant 0 : index
    %c0_4 = arith.constant 0 : index
    %c0_5 = arith.constant 0 : index
    %c0_6 = arith.constant 0 : index
    %2 = vector.load %arg14[%c0_3, %c0_4, %c0_5, %c0_6] : memref<2x18x18x3xf32, #tpu.memory_space<vmem>>, vector<2x18x18x3xf32>
    tpu.vector_store %arg14[%c0_3, %c0_4, %c0_5, %c0_6], %1 {strides = array<i32>} : memref<2x18x18x3xf32, #tpu.memory_space<vmem>>, vector<2x18x18x3xf32>,
    %c0_7 = arith.constant 0 : index
    %c1 = arith.constant 1 : index
    %c1_8 = arith.constant 1 : index
    %c0_9 = arith.constant 0 : index
    %3 = vector.load %arg14[%c0_7, %c1, %c1_8, %c0_9] : memref<2x18x18x3xf32, #tpu.memory_space<vmem>>, vector<2x16x16x3xf32>
    tpu.vector_store %arg14[%c0_7, %c1, %c1_8, %c0_9], %0 {strides = array<i32>} : memref<2x18x18x3xf32, #tpu.memory_space<vmem>>, vector<2x16x16x3xf32>,
    %c0_10 = arith.constant 0 : index
    %c0_11 = arith.constant 0 : index
    %c0_12 = arith.constant 0 : index
    %c0_13 = arith.constant 0 : index
    %4 = vector.load %arg14[%c0_10, %c0_11, %c0_12, %c0_13] : memref<2x18x18x3xf32, #tpu.memory_space<vmem>>, vector<2x18x18x3xf32>
    %5 = vector.extract_strided_slice %4 {offsets = [0, 0, 0, 0], sizes = [2, 16, 16, 3], strides = [1, 1, 1, 1]} : vector<2x18x18x3xf32> to vector<2x16x16x3xf32>
    %6 = vector.extract_strided_slice %4 {offsets = [0, 0, 1, 0], sizes = [2, 16, 16, 3], strides = [1, 1, 1, 1]} : vector<2x18x18x3xf32> to vector<2x16x16x3xf32>
    %7 = vector.extract_strided_slice %4 {offsets = [0, 0, 2, 0], sizes = [2, 16, 16, 3], strides = [1, 1, 1, 1]} : vector<2x18x18x3xf32> to vector<2x16x16x3xf32>
    %8 = vector.extract_strided_slice %4 {offsets = [0, 1, 0, 0], sizes = [2, 16, 16, 3], strides = [1, 1, 1, 1]} : vector<2x18x18x3xf32> to vector<2x16x16x3xf32>
    %9 = vector.extract_strided_slice %4 {offsets = [0, 1, 1, 0], sizes = [2, 16, 16, 3], strides = [1, 1, 1, 1]} : vector<2x18x18x3xf32> to vector<2x16x16x3xf32>
    %10 = vector.extract_strided_slice %4 {offsets = [0, 1, 2, 0], sizes = [2, 16, 16, 3], strides = [1, 1, 1, 1]} : vector<2x18x18x3xf32> to vector<2x16x16x3xf32>
    %11 = vector.extract_strided_slice %4 {offsets = [0, 2, 0, 0], sizes = [2, 16, 16, 3], strides = [1, 1, 1, 1]} : vector<2x18x18x3xf32> to vector<2x16x16x3xf32>
    %12 = vector.extract_strided_slice %4 {offsets = [0, 2, 1, 0], sizes = [2, 16, 16, 3], strides = [1, 1, 1, 1]} : vector<2x18x18x3xf32> to vector<2x16x16x3xf32>
    %13 = vector.extract_strided_slice %4 {offsets = [0, 2, 2, 0], sizes = [2, 16, 16, 3], strides = [1, 1, 1, 1]} : vector<2x18x18x3xf32> to vector<2x16x16x3xf32>
    %14 = tpu.concatenate %5, %6, %7, %8, %9, %10, %11, %12, %13 in 3 : vector<2x16x16x3xf32>, vector<2x16x16x3xf32>, vector<2x16x16x3xf32>, vector<2x16x16x3xf32>, vector<2x16x16x3xf32>, vector<2x16x16x3xf32>, vector<2x16x16x3xf32>, vector<2x16x16x3xf32>, vector<2x16x16x3xf32> -> vector<2x16x16x27xf32>
    %15 = vector.shape_cast %14 : vector<2x16x16x27xf32> to vector<512x27xf32>
    %16 = arith.truncf %15 : vector<512x27xf32> to vector<512x27xbf16>
    %c0_14 = arith.constant 0 : index
    %c0_15 = arith.constant 0 : index
    %17 = vector.load %arg1[%c0_14, %c0_15] : memref<27x32xbf16, #tpu.memory_space<vmem>>, vector<27x32xbf16>
    %cst_16 = arith.constant dense<0.000000e+00> : vector<512x32xf32>
    %18 = tpu.matmul %16, %17, %cst_16 {dimension_numbers = #tpu.dot_dimension_numbers<[1], [0], [0], [1], [0, 0, 1, 1], [], []>} : vector<512x27xbf16>, vector<27x32xbf16>, vector<512x32xf32> -> vector<512x32xf32>
    %cst_17 = arith.constant dense<0.000000e+00> : vector<32xf32>
    %19 = vector.multi_reduction <add>, %18, %cst_17 [0] : vector<512x32xf32> to vector<32xf32>
    %20 = vector.shape_cast %19 : vector<32xf32> to vector<1x32xf32>
    %cst_18 = arith.constant 0.001953125 : f32
    %21 = vector.broadcast %cst_18 : f32 to vector<1x32xf32>
    %22 = arith.mulf %20, %21 : vector<1x32xf32>
    %23 = arith.mulf %18, %18 : vector<512x32xf32>
    %cst_19 = arith.constant dense<0.000000e+00> : vector<32xf32>
    %24 = vector.multi_reduction <add>, %23, %cst_19 [0] : vector<512x32xf32> to vector<32xf32>
    %25 = vector.shape_cast %24 : vector<32xf32> to vector<1x32xf32>
    %cst_20 = arith.constant 0.001953125 : f32
    %26 = vector.broadcast %cst_20 : f32 to vector<1x32xf32>
    %27 = arith.mulf %25, %26 : vector<1x32xf32>
    %28 = arith.mulf %22, %22 : vector<1x32xf32>
    %29 = arith.subf %27, %28 : vector<1x32xf32>
    %c0_21 = arith.constant 0 : index
    %c0_22 = arith.constant 0 : index
    %30 = vector.load %arg2[%c0_21, %c0_22] : memref<1x32xf32, #tpu.memory_space<vmem>>, vector<1x32xf32>
    %cst_23 = arith.constant 9.99999974E-6 : f32
    %31 = vector.broadcast %cst_23 : f32 to vector<1x32xf32>
    %32 = arith.addf %29, %31 : vector<1x32xf32>
    %33 = math.rsqrt %32 : vector<1x32xf32>
    %34 = arith.mulf %30, %33 : vector<1x32xf32>
    %c0_24 = arith.constant 0 : index
    %c0_25 = arith.constant 0 : index
    %35 = vector.load %arg3[%c0_24, %c0_25] : memref<1x32xf32, #tpu.memory_space<vmem>>, vector<1x32xf32>
    %36 = arith.mulf %22, %34 : vector<1x32xf32>
    %37 = arith.subf %35, %36 : vector<1x32xf32>
    %38 = vector.broadcast %34 : vector<1x32xf32> to vector<512x32xf32>
    %39 = arith.mulf %18, %38 : vector<512x32xf32>
    %40 = vector.broadcast %37 : vector<1x32xf32> to vector<512x32xf32>
    %41 = arith.addf %39, %40 : vector<512x32xf32>
    %cst_26 = arith.constant 0.000000e+00 : f32
    %42 = vector.broadcast %cst_26 : f32 to vector<512x32xf32>
    %43 = arith.maximumf %41, %42 : vector<512x32xf32>
    %44 = vector.shape_cast %43 : vector<512x32xf32> to vector<256x2x32xf32>
    %cst_27 = arith.constant dense<0xFF800000> : vector<256x32xf32>
    %45 = vector.multi_reduction <maximumf>, %44, %cst_27 [1] : vector<256x2x32xf32> to vector<256x32xf32>
    %46 = vector.shape_cast %45 : vector<256x32xf32> to vector<16x2x8x32xf32>
    %47 = vector.extract_strided_slice %46 {offsets = [0, 0, 0, 0], sizes = [16, 1, 8, 32], strides = [1, 1, 1, 1]} : vector<16x2x8x32xf32> to vector<16x1x8x32xf32>
    %48 = vector.shape_cast %47 : vector<16x1x8x32xf32> to vector<16x8x32xf32>
    %49 = vector.extract_strided_slice %46 {offsets = [0, 1, 0, 0], sizes = [16, 1, 8, 32], strides = [1, 1, 1, 1]} : vector<16x2x8x32xf32> to vector<16x1x8x32xf32>
    %50 = vector.shape_cast %49 : vector<16x1x8x32xf32> to vector<16x8x32xf32>
    %51 = arith.maximumf %48, %50 : vector<16x8x32xf32>
    %52 = vector.shape_cast %51 : vector<16x8x32xf32> to vector<2x8x8x32xf32>
    %cst_28 = arith.constant 0.000000e+00 : f32
    %53 = vector.broadcast %cst_28 : f32 to vector<2x10x10x32xf32>
    %c0_29 = arith.constant 0 : index
    %c0_30 = arith.constant 0 : index
    %c0_31 = arith.constant 0 : index
    %c0_32 = arith.constant 0 : index
    %54 = vector.load %arg15[%c0_29, %c0_30, %c0_31, %c0_32] : memref<2x10x10x32xf32, #tpu.memory_space<vmem>>, vector<2x10x10x32xf32>
    tpu.vector_store %arg15[%c0_29, %c0_30, %c0_31, %c0_32], %53 {strides = array<i32>} : memref<2x10x10x32xf32, #tpu.memory_space<vmem>>, vector<2x10x10x32xf32>,
    %c0_33 = arith.constant 0 : index
    %c1_34 = arith.constant 1 : index
    %c1_35 = arith.constant 1 : index
    %c0_36 = arith.constant 0 : index
    %55 = vector.load %arg15[%c0_33, %c1_34, %c1_35, %c0_36] : memref<2x10x10x32xf32, #tpu.memory_space<vmem>>, vector<2x8x8x32xf32>
    tpu.vector_store %arg15[%c0_33, %c1_34, %c1_35, %c0_36], %52 {strides = array<i32>} : memref<2x10x10x32xf32, #tpu.memory_space<vmem>>, vector<2x8x8x32xf32>,
    %c0_37 = arith.constant 0 : index
    %c0_38 = arith.constant 0 : index
    %c0_39 = arith.constant 0 : index
    %c0_40 = arith.constant 0 : index
    %56 = vector.load %arg15[%c0_37, %c0_38, %c0_39, %c0_40] : memref<2x10x10x32xf32, #tpu.memory_space<vmem>>, vector<2x10x10x32xf32>
    %57 = vector.extract_strided_slice %56 {offsets = [0, 0, 0, 0], sizes = [2, 8, 8, 32], strides = [1, 1, 1, 1]} : vector<2x10x10x32xf32> to vector<2x8x8x32xf32>
    %58 = vector.extract_strided_slice %56 {offsets = [0, 0, 1, 0], sizes = [2, 8, 8, 32], strides = [1, 1, 1, 1]} : vector<2x10x10x32xf32> to vector<2x8x8x32xf32>
    %59 = vector.extract_strided_slice %56 {offsets = [0, 0, 2, 0], sizes = [2, 8, 8, 32], strides = [1, 1, 1, 1]} : vector<2x10x10x32xf32> to vector<2x8x8x32xf32>
    %60 = vector.extract_strided_slice %56 {offsets = [0, 1, 0, 0], sizes = [2, 8, 8, 32], strides = [1, 1, 1, 1]} : vector<2x10x10x32xf32> to vector<2x8x8x32xf32>
    %61 = vector.extract_strided_slice %56 {offsets = [0, 1, 1, 0], sizes = [2, 8, 8, 32], strides = [1, 1, 1, 1]} : vector<2x10x10x32xf32> to vector<2x8x8x32xf32>
    %62 = vector.extract_strided_slice %56 {offsets = [0, 1, 2, 0], sizes = [2, 8, 8, 32], strides = [1, 1, 1, 1]} : vector<2x10x10x32xf32> to vector<2x8x8x32xf32>
    %63 = vector.extract_strided_slice %56 {offsets = [0, 2, 0, 0], sizes = [2, 8, 8, 32], strides = [1, 1, 1, 1]} : vector<2x10x10x32xf32> to vector<2x8x8x32xf32>
    %64 = vector.extract_strided_slice %56 {offsets = [0, 2, 1, 0], sizes = [2, 8, 8, 32], strides = [1, 1, 1, 1]} : vector<2x10x10x32xf32> to vector<2x8x8x32xf32>
    %65 = vector.extract_strided_slice %56 {offsets = [0, 2, 2, 0], sizes = [2, 8, 8, 32], strides = [1, 1, 1, 1]} : vector<2x10x10x32xf32> to vector<2x8x8x32xf32>
    %66 = tpu.concatenate %57, %58, %59, %60, %61, %62, %63, %64, %65 in 3 : vector<2x8x8x32xf32>, vector<2x8x8x32xf32>, vector<2x8x8x32xf32>, vector<2x8x8x32xf32>, vector<2x8x8x32xf32>, vector<2x8x8x32xf32>, vector<2x8x8x32xf32>, vector<2x8x8x32xf32>, vector<2x8x8x32xf32> -> vector<2x8x8x288xf32>
    %67 = vector.shape_cast %66 : vector<2x8x8x288xf32> to vector<128x288xf32>
    %68 = arith.truncf %67 : vector<128x288xf32> to vector<128x288xbf16>
    %c0_41 = arith.constant 0 : index
    %c0_42 = arith.constant 0 : index
    %69 = vector.load %arg4[%c0_41, %c0_42] : memref<288x32xbf16, #tpu.memory_space<vmem>>, vector<288x32xbf16>
    %cst_43 = arith.constant dense<0.000000e+00> : vector<128x32xf32>
    %70 = tpu.matmul %68, %69, %cst_43 {dimension_numbers = #tpu.dot_dimension_numbers<[1], [0], [0], [1], [0, 0, 1, 1], [], []>} : vector<128x288xbf16>, vector<288x32xbf16>, vector<128x32xf32> -> vector<128x32xf32>
    %cst_44 = arith.constant dense<0.000000e+00> : vector<32xf32>
    %71 = vector.multi_reduction <add>, %70, %cst_44 [0] : vector<128x32xf32> to vector<32xf32>
    %72 = vector.shape_cast %71 : vector<32xf32> to vector<1x32xf32>
    %cst_45 = arith.constant 7.812500e-03 : f32
    %73 = vector.broadcast %cst_45 : f32 to vector<1x32xf32>
    %74 = arith.mulf %72, %73 : vector<1x32xf32>
    %75 = arith.mulf %70, %70 : vector<128x32xf32>
    %cst_46 = arith.constant dense<0.000000e+00> : vector<32xf32>
    %76 = vector.multi_reduction <add>, %75, %cst_46 [0] : vector<128x32xf32> to vector<32xf32>
    %77 = vector.shape_cast %76 : vector<32xf32> to vector<1x32xf32>
    %cst_47 = arith.constant 7.812500e-03 : f32
    %78 = vector.broadcast %cst_47 : f32 to vector<1x32xf32>
    %79 = arith.mulf %77, %78 : vector<1x32xf32>
    %80 = arith.mulf %74, %74 : vector<1x32xf32>
    %81 = arith.subf %79, %80 : vector<1x32xf32>
    %c0_48 = arith.constant 0 : index
    %c0_49 = arith.constant 0 : index
    %82 = vector.load %arg5[%c0_48, %c0_49] : memref<1x32xf32, #tpu.memory_space<vmem>>, vector<1x32xf32>
    %cst_50 = arith.constant 9.99999974E-6 : f32
    %83 = vector.broadcast %cst_50 : f32 to vector<1x32xf32>
    %84 = arith.addf %81, %83 : vector<1x32xf32>
    %85 = math.rsqrt %84 : vector<1x32xf32>
    %86 = arith.mulf %82, %85 : vector<1x32xf32>
    %c0_51 = arith.constant 0 : index
    %c0_52 = arith.constant 0 : index
    %87 = vector.load %arg6[%c0_51, %c0_52] : memref<1x32xf32, #tpu.memory_space<vmem>>, vector<1x32xf32>
    %88 = arith.mulf %74, %86 : vector<1x32xf32>
    %89 = arith.subf %87, %88 : vector<1x32xf32>
    %90 = vector.broadcast %86 : vector<1x32xf32> to vector<128x32xf32>
    %91 = arith.mulf %70, %90 : vector<128x32xf32>
    %92 = vector.broadcast %89 : vector<1x32xf32> to vector<128x32xf32>
    %93 = arith.addf %91, %92 : vector<128x32xf32>
    %cst_53 = arith.constant 0.000000e+00 : f32
    %94 = vector.broadcast %cst_53 : f32 to vector<128x32xf32>
    %95 = arith.maximumf %93, %94 : vector<128x32xf32>
    %96 = vector.shape_cast %95 : vector<128x32xf32> to vector<64x2x32xf32>
    %cst_54 = arith.constant dense<0xFF800000> : vector<64x32xf32>
    %97 = vector.multi_reduction <maximumf>, %96, %cst_54 [1] : vector<64x2x32xf32> to vector<64x32xf32>
    %98 = vector.shape_cast %97 : vector<64x32xf32> to vector<8x2x4x32xf32>
    %99 = vector.extract_strided_slice %98 {offsets = [0, 0, 0, 0], sizes = [8, 1, 4, 32], strides = [1, 1, 1, 1]} : vector<8x2x4x32xf32> to vector<8x1x4x32xf32>
    %100 = vector.shape_cast %99 : vector<8x1x4x32xf32> to vector<8x4x32xf32>
    %101 = vector.extract_strided_slice %98 {offsets = [0, 1, 0, 0], sizes = [8, 1, 4, 32], strides = [1, 1, 1, 1]} : vector<8x2x4x32xf32> to vector<8x1x4x32xf32>
    %102 = vector.shape_cast %101 : vector<8x1x4x32xf32> to vector<8x4x32xf32>
    %103 = arith.maximumf %100, %102 : vector<8x4x32xf32>
    %104 = vector.shape_cast %103 : vector<8x4x32xf32> to vector<2x4x4x32xf32>
    %cst_55 = arith.constant 0.000000e+00 : f32
    %105 = vector.broadcast %cst_55 : f32 to vector<2x6x6x32xf32>
    %c0_56 = arith.constant 0 : index
    %c0_57 = arith.constant 0 : index
    %c0_58 = arith.constant 0 : index
    %c0_59 = arith.constant 0 : index
    %106 = vector.load %arg16[%c0_56, %c0_57, %c0_58, %c0_59] : memref<2x6x6x32xf32, #tpu.memory_space<vmem>>, vector<2x6x6x32xf32>
    tpu.vector_store %arg16[%c0_56, %c0_57, %c0_58, %c0_59], %105 {strides = array<i32>} : memref<2x6x6x32xf32, #tpu.memory_space<vmem>>, vector<2x6x6x32xf32>,
    %c0_60 = arith.constant 0 : index
    %c1_61 = arith.constant 1 : index
    %c1_62 = arith.constant 1 : index
    %c0_63 = arith.constant 0 : index
    %107 = vector.load %arg16[%c0_60, %c1_61, %c1_62, %c0_63] : memref<2x6x6x32xf32, #tpu.memory_space<vmem>>, vector<2x4x4x32xf32>
    tpu.vector_store %arg16[%c0_60, %c1_61, %c1_62, %c0_63], %104 {strides = array<i32>} : memref<2x6x6x32xf32, #tpu.memory_space<vmem>>, vector<2x4x4x32xf32>,
    %c0_64 = arith.constant 0 : index
    %c0_65 = arith.constant 0 : index
    %c0_66 = arith.constant 0 : index
    %c0_67 = arith.constant 0 : index
    %108 = vector.load %arg16[%c0_64, %c0_65, %c0_66, %c0_67] : memref<2x6x6x32xf32, #tpu.memory_space<vmem>>, vector<2x6x6x32xf32>
    %109 = vector.extract_strided_slice %108 {offsets = [0, 0, 0, 0], sizes = [2, 4, 4, 32], strides = [1, 1, 1, 1]} : vector<2x6x6x32xf32> to vector<2x4x4x32xf32>
    %110 = vector.extract_strided_slice %108 {offsets = [0, 0, 1, 0], sizes = [2, 4, 4, 32], strides = [1, 1, 1, 1]} : vector<2x6x6x32xf32> to vector<2x4x4x32xf32>
    %111 = vector.extract_strided_slice %108 {offsets = [0, 0, 2, 0], sizes = [2, 4, 4, 32], strides = [1, 1, 1, 1]} : vector<2x6x6x32xf32> to vector<2x4x4x32xf32>
    %112 = vector.extract_strided_slice %108 {offsets = [0, 1, 0, 0], sizes = [2, 4, 4, 32], strides = [1, 1, 1, 1]} : vector<2x6x6x32xf32> to vector<2x4x4x32xf32>
    %113 = vector.extract_strided_slice %108 {offsets = [0, 1, 1, 0], sizes = [2, 4, 4, 32], strides = [1, 1, 1, 1]} : vector<2x6x6x32xf32> to vector<2x4x4x32xf32>
    %114 = vector.extract_strided_slice %108 {offsets = [0, 1, 2, 0], sizes = [2, 4, 4, 32], strides = [1, 1, 1, 1]} : vector<2x6x6x32xf32> to vector<2x4x4x32xf32>
    %115 = vector.extract_strided_slice %108 {offsets = [0, 2, 0, 0], sizes = [2, 4, 4, 32], strides = [1, 1, 1, 1]} : vector<2x6x6x32xf32> to vector<2x4x4x32xf32>
    %116 = vector.extract_strided_slice %108 {offsets = [0, 2, 1, 0], sizes = [2, 4, 4, 32], strides = [1, 1, 1, 1]} : vector<2x6x6x32xf32> to vector<2x4x4x32xf32>
    %117 = vector.extract_strided_slice %108 {offsets = [0, 2, 2, 0], sizes = [2, 4, 4, 32], strides = [1, 1, 1, 1]} : vector<2x6x6x32xf32> to vector<2x4x4x32xf32>
    %118 = tpu.concatenate %109, %110, %111, %112, %113, %114, %115, %116, %117 in 3 : vector<2x4x4x32xf32>, vector<2x4x4x32xf32>, vector<2x4x4x32xf32>, vector<2x4x4x32xf32>, vector<2x4x4x32xf32>, vector<2x4x4x32xf32>, vector<2x4x4x32xf32>, vector<2x4x4x32xf32>, vector<2x4x4x32xf32> -> vector<2x4x4x288xf32>
    %119 = vector.shape_cast %118 : vector<2x4x4x288xf32> to vector<32x288xf32>
    %120 = arith.truncf %119 : vector<32x288xf32> to vector<32x288xbf16>
    %c0_68 = arith.constant 0 : index
    %c0_69 = arith.constant 0 : index
    %121 = vector.load %arg7[%c0_68, %c0_69] : memref<288x32xbf16, #tpu.memory_space<vmem>>, vector<288x32xbf16>
    %cst_70 = arith.constant dense<0.000000e+00> : vector<32x32xf32>
    %122 = tpu.matmul %120, %121, %cst_70 {dimension_numbers = #tpu.dot_dimension_numbers<[1], [0], [0], [1], [0, 0, 1, 1], [], []>} : vector<32x288xbf16>, vector<288x32xbf16>, vector<32x32xf32> -> vector<32x32xf32>
    %cst_71 = arith.constant dense<0.000000e+00> : vector<32xf32>
    %123 = vector.multi_reduction <add>, %122, %cst_71 [0] : vector<32x32xf32> to vector<32xf32>
    %124 = vector.shape_cast %123 : vector<32xf32> to vector<1x32xf32>
    %cst_72 = arith.constant 3.125000e-02 : f32
    %125 = vector.broadcast %cst_72 : f32 to vector<1x32xf32>
    %126 = arith.mulf %124, %125 : vector<1x32xf32>
    %127 = arith.mulf %122, %122 : vector<32x32xf32>
    %cst_73 = arith.constant dense<0.000000e+00> : vector<32xf32>
    %128 = vector.multi_reduction <add>, %127, %cst_73 [0] : vector<32x32xf32> to vector<32xf32>
    %129 = vector.shape_cast %128 : vector<32xf32> to vector<1x32xf32>
    %cst_74 = arith.constant 3.125000e-02 : f32
    %130 = vector.broadcast %cst_74 : f32 to vector<1x32xf32>
    %131 = arith.mulf %129, %130 : vector<1x32xf32>
    %132 = arith.mulf %126, %126 : vector<1x32xf32>
    %133 = arith.subf %131, %132 : vector<1x32xf32>
    %c0_75 = arith.constant 0 : index
    %c0_76 = arith.constant 0 : index
    %134 = vector.load %arg8[%c0_75, %c0_76] : memref<1x32xf32, #tpu.memory_space<vmem>>, vector<1x32xf32>
    %cst_77 = arith.constant 9.99999974E-6 : f32
    %135 = vector.broadcast %cst_77 : f32 to vector<1x32xf32>
    %136 = arith.addf %133, %135 : vector<1x32xf32>
    %137 = math.rsqrt %136 : vector<1x32xf32>
    %138 = arith.mulf %134, %137 : vector<1x32xf32>
    %c0_78 = arith.constant 0 : index
    %c0_79 = arith.constant 0 : index
    %139 = vector.load %arg9[%c0_78, %c0_79] : memref<1x32xf32, #tpu.memory_space<vmem>>, vector<1x32xf32>
    %140 = arith.mulf %126, %138 : vector<1x32xf32>
    %141 = arith.subf %139, %140 : vector<1x32xf32>
    %142 = vector.broadcast %138 : vector<1x32xf32> to vector<32x32xf32>
    %143 = arith.mulf %122, %142 : vector<32x32xf32>
    %144 = vector.broadcast %141 : vector<1x32xf32> to vector<32x32xf32>
    %145 = arith.addf %143, %144 : vector<32x32xf32>
    %cst_80 = arith.constant 0.000000e+00 : f32
    %146 = vector.broadcast %cst_80 : f32 to vector<32x32xf32>
    %147 = arith.maximumf %145, %146 : vector<32x32xf32>
    %148 = vector.shape_cast %147 : vector<32x32xf32> to vector<16x2x32xf32>
    %cst_81 = arith.constant dense<0xFF800000> : vector<16x32xf32>
    %149 = vector.multi_reduction <maximumf>, %148, %cst_81 [1] : vector<16x2x32xf32> to vector<16x32xf32>
    %150 = vector.shape_cast %149 : vector<16x32xf32> to vector<4x2x2x32xf32>
    %151 = vector.extract_strided_slice %150 {offsets = [0, 0, 0, 0], sizes = [4, 1, 2, 32], strides = [1, 1, 1, 1]} : vector<4x2x2x32xf32> to vector<4x1x2x32xf32>
    %152 = vector.shape_cast %151 : vector<4x1x2x32xf32> to vector<4x2x32xf32>
    %153 = vector.extract_strided_slice %150 {offsets = [0, 1, 0, 0], sizes = [4, 1, 2, 32], strides = [1, 1, 1, 1]} : vector<4x2x2x32xf32> to vector<4x1x2x32xf32>
    %154 = vector.shape_cast %153 : vector<4x1x2x32xf32> to vector<4x2x32xf32>
    %155 = arith.maximumf %152, %154 : vector<4x2x32xf32>
    %156 = vector.shape_cast %155 : vector<4x2x32xf32> to vector<2x2x2x32xf32>
    %cst_82 = arith.constant 0.000000e+00 : f32
    %157 = vector.broadcast %cst_82 : f32 to vector<2x4x4x32xf32>
    %c0_83 = arith.constant 0 : index
    %c0_84 = arith.constant 0 : index
    %c0_85 = arith.constant 0 : index
    %c0_86 = arith.constant 0 : index
    %158 = vector.load %arg17[%c0_83, %c0_84, %c0_85, %c0_86] : memref<2x4x4x32xf32, #tpu.memory_space<vmem>>, vector<2x4x4x32xf32>
    tpu.vector_store %arg17[%c0_83, %c0_84, %c0_85, %c0_86], %157 {strides = array<i32>} : memref<2x4x4x32xf32, #tpu.memory_space<vmem>>, vector<2x4x4x32xf32>,
    %c0_87 = arith.constant 0 : index
    %c1_88 = arith.constant 1 : index
    %c1_89 = arith.constant 1 : index
    %c0_90 = arith.constant 0 : index
    %159 = vector.load %arg17[%c0_87, %c1_88, %c1_89, %c0_90] : memref<2x4x4x32xf32, #tpu.memory_space<vmem>>, vector<2x2x2x32xf32>
    tpu.vector_store %arg17[%c0_87, %c1_88, %c1_89, %c0_90], %156 {strides = array<i32>} : memref<2x4x4x32xf32, #tpu.memory_space<vmem>>, vector<2x2x2x32xf32>,
    %c0_91 = arith.constant 0 : index
    %c0_92 = arith.constant 0 : index
    %c0_93 = arith.constant 0 : index
    %c0_94 = arith.constant 0 : index
    %160 = vector.load %arg17[%c0_91, %c0_92, %c0_93, %c0_94] : memref<2x4x4x32xf32, #tpu.memory_space<vmem>>, vector<2x4x4x32xf32>
    %161 = vector.extract_strided_slice %160 {offsets = [0, 0, 0, 0], sizes = [2, 2, 2, 32], strides = [1, 1, 1, 1]} : vector<2x4x4x32xf32> to vector<2x2x2x32xf32>
    %162 = vector.extract_strided_slice %160 {offsets = [0, 0, 1, 0], sizes = [2, 2, 2, 32], strides = [1, 1, 1, 1]} : vector<2x4x4x32xf32> to vector<2x2x2x32xf32>
    %163 = vector.extract_strided_slice %160 {offsets = [0, 0, 2, 0], sizes = [2, 2, 2, 32], strides = [1, 1, 1, 1]} : vector<2x4x4x32xf32> to vector<2x2x2x32xf32>
    %164 = vector.extract_strided_slice %160 {offsets = [0, 1, 0, 0], sizes = [2, 2, 2, 32], strides = [1, 1, 1, 1]} : vector<2x4x4x32xf32> to vector<2x2x2x32xf32>
    %165 = vector.extract_strided_slice %160 {offsets = [0, 1, 1, 0], sizes = [2, 2, 2, 32], strides = [1, 1, 1, 1]} : vector<2x4x4x32xf32> to vector<2x2x2x32xf32>
    %166 = vector.extract_strided_slice %160 {offsets = [0, 1, 2, 0], sizes = [2, 2, 2, 32], strides = [1, 1, 1, 1]} : vector<2x4x4x32xf32> to vector<2x2x2x32xf32>
    %167 = vector.extract_strided_slice %160 {offsets = [0, 2, 0, 0], sizes = [2, 2, 2, 32], strides = [1, 1, 1, 1]} : vector<2x4x4x32xf32> to vector<2x2x2x32xf32>
    %168 = vector.extract_strided_slice %160 {offsets = [0, 2, 1, 0], sizes = [2, 2, 2, 32], strides = [1, 1, 1, 1]} : vector<2x4x4x32xf32> to vector<2x2x2x32xf32>
    %169 = vector.extract_strided_slice %160 {offsets = [0, 2, 2, 0], sizes = [2, 2, 2, 32], strides = [1, 1, 1, 1]} : vector<2x4x4x32xf32> to vector<2x2x2x32xf32>
    %170 = tpu.concatenate %161, %162, %163, %164, %165, %166, %167, %168, %169 in 3 : vector<2x2x2x32xf32>, vector<2x2x2x32xf32>, vector<2x2x2x32xf32>, vector<2x2x2x32xf32>, vector<2x2x2x32xf32>, vector<2x2x2x32xf32>, vector<2x2x2x32xf32>, vector<2x2x2x32xf32>, vector<2x2x2x32xf32> -> vector<2x2x2x288xf32>
    %171 = vector.shape_cast %170 : vector<2x2x2x288xf32> to vector<8x288xf32>
    %172 = arith.truncf %171 : vector<8x288xf32> to vector<8x288xbf16>
    %c0_95 = arith.constant 0 : index
    %c0_96 = arith.constant 0 : index
    %173 = vector.load %arg10[%c0_95, %c0_96] : memref<288x32xbf16, #tpu.memory_space<vmem>>, vector<288x32xbf16>
    %cst_97 = arith.constant dense<0.000000e+00> : vector<8x32xf32>
    %174 = tpu.matmul %172, %173, %cst_97 {dimension_numbers = #tpu.dot_dimension_numbers<[1], [0], [0], [1], [0, 0, 1, 1], [], []>} : vector<8x288xbf16>, vector<288x32xbf16>, vector<8x32xf32> -> vector<8x32xf32>
    %cst_98 = arith.constant dense<0.000000e+00> : vector<32xf32>
    %175 = vector.multi_reduction <add>, %174, %cst_98 [0] : vector<8x32xf32> to vector<32xf32>
    %176 = vector.shape_cast %175 : vector<32xf32> to vector<1x32xf32>
    %cst_99 = arith.constant 1.250000e-01 : f32
    %177 = vector.broadcast %cst_99 : f32 to vector<1x32xf32>
    %178 = arith.mulf %176, %177 : vector<1x32xf32>
    %179 = arith.mulf %174, %174 : vector<8x32xf32>
    %cst_100 = arith.constant dense<0.000000e+00> : vector<32xf32>
    %180 = vector.multi_reduction <add>, %179, %cst_100 [0] : vector<8x32xf32> to vector<32xf32>
    %181 = vector.shape_cast %180 : vector<32xf32> to vector<1x32xf32>
    %cst_101 = arith.constant 1.250000e-01 : f32
    %182 = vector.broadcast %cst_101 : f32 to vector<1x32xf32>
    %183 = arith.mulf %181, %182 : vector<1x32xf32>
    %184 = arith.mulf %178, %178 : vector<1x32xf32>
    %185 = arith.subf %183, %184 : vector<1x32xf32>
    %c0_102 = arith.constant 0 : index
    %c0_103 = arith.constant 0 : index
    %186 = vector.load %arg11[%c0_102, %c0_103] : memref<1x32xf32, #tpu.memory_space<vmem>>, vector<1x32xf32>
    %cst_104 = arith.constant 9.99999974E-6 : f32
    %187 = vector.broadcast %cst_104 : f32 to vector<1x32xf32>
    %188 = arith.addf %185, %187 : vector<1x32xf32>
    %189 = math.rsqrt %188 : vector<1x32xf32>
    %190 = arith.mulf %186, %189 : vector<1x32xf32>
    %c0_105 = arith.constant 0 : index
    %c0_106 = arith.constant 0 : index
    %191 = vector.load %arg12[%c0_105, %c0_106] : memref<1x32xf32, #tpu.memory_space<vmem>>, vector<1x32xf32>
    %192 = arith.mulf %178, %190 : vector<1x32xf32>
    %193 = arith.subf %191, %192 : vector<1x32xf32>
    %194 = vector.broadcast %190 : vector<1x32xf32> to vector<8x32xf32>
    %195 = arith.mulf %174, %194 : vector<8x32xf32>
    %196 = vector.broadcast %193 : vector<1x32xf32> to vector<8x32xf32>
    %197 = arith.addf %195, %196 : vector<8x32xf32>
    %cst_107 = arith.constant 0.000000e+00 : f32
    %198 = vector.broadcast %cst_107 : f32 to vector<8x32xf32>
    %199 = arith.maximumf %197, %198 : vector<8x32xf32>
    %200 = vector.shape_cast %199 : vector<8x32xf32> to vector<4x2x32xf32>
    %cst_108 = arith.constant dense<0xFF800000> : vector<4x32xf32>
    %201 = vector.multi_reduction <maximumf>, %200, %cst_108 [1] : vector<4x2x32xf32> to vector<4x32xf32>
    %202 = vector.shape_cast %201 : vector<4x32xf32> to vector<2x2x1x32xf32>
    %203 = vector.extract_strided_slice %202 {offsets = [0, 0, 0, 0], sizes = [2, 1, 1, 32], strides = [1, 1, 1, 1]} : vector<2x2x1x32xf32> to vector<2x1x1x32xf32>
    %204 = vector.shape_cast %203 : vector<2x1x1x32xf32> to vector<2x1x32xf32>
    %205 = vector.extract_strided_slice %202 {offsets = [0, 1, 0, 0], sizes = [2, 1, 1, 32], strides = [1, 1, 1, 1]} : vector<2x2x1x32xf32> to vector<2x1x1x32xf32>
    %206 = vector.shape_cast %205 : vector<2x1x1x32xf32> to vector<2x1x32xf32>
    %207 = arith.maximumf %204, %206 : vector<2x1x32xf32>
    %208 = vector.shape_cast %207 : vector<2x1x32xf32> to vector<2x1x1x32xf32>
    %c0_109 = arith.constant 0 : index
    %c0_110 = arith.constant 0 : index
    %c0_111 = arith.constant 0 : index
    %c0_112 = arith.constant 0 : index
    %209 = vector.load %arg13[%c0_109, %c0_110, %c0_111, %c0_112] : memref<2x1x1x32xf32, #tpu.memory_space<vmem>>, vector<2x1x1x32xf32>
    tpu.vector_store %arg13[%c0_109, %c0_110, %c0_111, %c0_112], %208 {strides = array<i32>} : memref<2x1x1x32xf32, #tpu.memory_space<vmem>>, vector<2x1x1x32xf32>,
    return
  }
}

</mosaic_0001>

<llo_original>
// kernel: conv_standard_forward.1
$region0: #{conv_standard_forward.1}
  #allocation0 [shape = 'u32[]', space=smem, size = 0x4, offset = 0x4, fixed_abs, tag = 'smem constant byte address 0x4 - core index']
  #allocation1 [shape = 'u32[144,128]{1,0:T(1,128)}', space=vmem, size = 0x12000, scoped, tag = 'internal scratch']
  #allocation2 [shape = 'f32[2,18,18,3]{3,2,1,0:T(8,128)}', space=vmem, size = 0x6c000, scoped, tag = 'scratch operand']
  #allocation3 [shape = 'f32[2,10,10,32]{3,2,1,0:T(8,128)}', space=vmem, size = 0x28000, scoped, tag = 'scratch operand']
  #allocation4 [shape = 'f32[2,6,6,32]{3,2,1,0:T(8,128)}', space=vmem, size = 0xc000, scoped, tag = 'scratch operand']
  #allocation5 [shape = 'f32[2,4,4,32]{3,2,1,0:T(4,128)}', space=vmem, size = 0x4000, scoped, tag = 'scratch operand']
  %s0 = inlined_call_operand.hbm [shape: f32[2,16,16,3], index: 0, kind: input, shape index: {}]
  %s1 = inlined_call_operand.hbm [shape: bf16[27,32], index: 1, kind: input, shape index: {}]
  %s2 = inlined_call_operand.hbm [shape: f32[1,32], index: 2, kind: input, shape index: {}]
  %s3 = inlined_call_operand.hbm [shape: f32[1,32], index: 3, kind: input, shape index: {}]
  %s4 = inlined_call_operand.hbm [shape: bf16[288,32], index: 4, kind: input, shape index: {}]
  %s5 = inlined_call_operand.hbm [shape: f32[1,32], index: 5, kind: input, shape index: {}]
  %s6 = inlined_call_operand.hbm [shape: f32[1,32], index: 6, kind: input, shape index: {}]
  %s7 = inlined_call_operand.hbm [shape: bf16[288,32], index: 7, kind: input, shape index: {}]
  %s8 = inlined_call_operand.hbm [shape: f32[1,32], index: 8, kind: input, shape index: {}]
  %s9 = inlined_call_operand.hbm [shape: f32[1,32], index: 9, kind: input, shape index: {}]
  %s10 = inlined_call_operand.hbm [shape: bf16[288,32], index: 10, kind: input, shape index: {}]
  %s11 = inlined_call_operand.hbm [shape: f32[1,32], index: 11, kind: input, shape index: {}]
  %s12 = inlined_call_operand.hbm [shape: f32[1,32], index: 12, kind: input, shape index: {}]
  %s13 = inlined_call_operand.hbm [shape: f32[2,1,1,32], index: 13, kind: output, shape index: {}]
  %s14 = sld [smem:[#allocation0]]
  $region114: #{conv_standard_forward.1} parent=0
    _
  %s16 = ssub.s32 1, %s14
  %s17 = scalar_select 0, %s16, %s14
  $region1: #{conv_standard_forward.1} parent=0
    #allocation6 [shape = 'u8[262144]{0}', space=vmem, size = 0x40000, scoped, tag = 'input window, operand 0, single buffered']
    #allocation7 [shape = 's32[1]{0}', space=sflag, size = 0x4, scoped, tag = 'scoped memory for conv_standard_forward.1']
    #allocation8 [shape = 's32[1]{0}', space=sflag, size = 0x4, scoped, tag = 'scoped memory for conv_standard_forward.1']
    #allocation9 [shape = 'u8[8192]{0}', space=vmem, size = 0x2000, scoped, tag = 'input window, operand 1, single buffered']
    #allocation10 [shape = 's32[1]{0}', space=sflag, size = 0x4, scoped, tag = 'scoped memory for conv_standard_forward.1']
    #allocation11 [shape = 'u8[512]{0}', space=vmem, size = 0x400, scoped, tag = 'input window, operand 2, single buffered']
    #allocation12 [shape = 'u8[512]{0}', space=vmem, size = 0x400, scoped, tag = 'input window, operand 3, single buffered']
    #allocation13 [shape = 's32[1]{0}', space=sflag, size = 0x4, scoped, tag = 'scoped memory for conv_standard_forward.1']
    #allocation14 [shape = 'u8[73728]{0}', space=vmem, size = 0x12000, scoped, tag = 'input window, operand 4, single buffered']
    #allocation15 [shape = 'u8[512]{0}', space=vmem, size = 0x400, scoped, tag = 'input window, operand 5, single buffered']
    #allocation16 [shape = 's32[1]{0}', space=sflag, size = 0x4, scoped, tag = 'scoped memory for conv_standard_forward.1']
    #allocation17 [shape = 'u8[512]{0}', space=vmem, size = 0x400, scoped, tag = 'input window, operand 6, single buffered']
    #allocation18 [shape = 'u8[73728]{0}', space=vmem, size = 0x12000, scoped, tag = 'input window, operand 7, single buffered']
    #allocation19 [shape = 's32[1]{0}', space=sflag, size = 0x4, scoped, tag = 'scoped memory for conv_standard_forward.1']
    #allocation20 [shape = 'u8[512]{0}', space=vmem, size = 0x400, scoped, tag = 'input window, operand 8, single buffered']
    #allocation21 [shape = 'u8[512]{0}', space=vmem, size = 0x400, scoped, tag = 'input window, operand 9, single buffered']
    #allocation22 [shape = 's32[1]{0}', space=sflag, size = 0x4, scoped, tag = 'scoped memory for conv_standard_forward.1']
    #allocation23 [shape = 'u8[73728]{0}', space=vmem, size = 0x12000, scoped, tag = 'input window, operand 10, single buffered']
    #allocation24 [shape = 'u8[512]{0}', space=vmem, size = 0x400, scoped, tag = 'input window, operand 11, single buffered']
    #allocation25 [shape = 's32[1]{0}', space=sflag, size = 0x4, scoped, tag = 'scoped memory for conv_standard_forward.1']
    #allocation26 [shape = 'u8[512]{0}', space=vmem, size = 0x400, scoped, tag = 'input window, operand 12, single buffered']
    #allocation27 [shape = 'u8[1024]{0}', space=vmem, size = 0x400, scoped, tag = 'output window, operand 0, single buffered']
    %18 = vsyncpa [#allocation7], 0
    %19 = vsyncpa [#allocation10], 0
    %20 = vsyncpa [#allocation13], 0
    %21 = vsyncpa [#allocation16], 0
    %22 = vsyncpa [#allocation19], 0
    %23 = vsyncpa [#allocation22], 0
    %24 = vsyncpa [#allocation25], 0
    %25 = vsyncpa [#allocation8], 0
    // Predicated region
    $region2: #{conv_standard_forward.1} parent=1 // pred_check
      _
    $region3: #{conv_standard_forward.1} parent=1 // pred_check_branch
      %27 = sbr.rel (0) target = $region5
    $region4: #{conv_standard_forward.1} parent=1 // pred_region
      %s29 = ssub.s32 8192, 8192
      %30 = vsyncadd [#allocation7], %s29
      %s31 = sshll.u32 [#allocation6], 4
      %s32 = int_to_ptr.vmem [resolvable:$true] %s31
      %37 = dma.hbm_to_vmem [thread:$0]  %s0, 8192, %s32, [#allocation7], 128, 128, 8
    $region5: #{conv_standard_forward.1} parent=1 // pred_fallthru
      _
    // Predicated region
    $region6: #{conv_standard_forward.1} parent=1 // pred_check
      _
    $region7: #{conv_standard_forward.1} parent=1 // pred_check_branch
      %39 = sbr.rel (0) target = $region9
    $region8: #{conv_standard_forward.1} parent=1 // pred_region
      %s41 = ssub.s32 256, 256
      %42 = vsyncadd [#allocation10], %s41
      %s43 = sshll.u32 [#allocation9], 4
      %s44 = int_to_ptr.vmem [resolvable:$true] %s43
      %49 = dma.hbm_to_vmem [thread:$0]  %s1, 256, %s44, [#allocation10], 64, 64, 4
    $region9: #{conv_standard_forward.1} parent=1 // pred_fallthru
      _
    // Predicated region
    $region10: #{conv_standard_forward.1} parent=1 // pred_check
      _
    $region11: #{conv_standard_forward.1} parent=1 // pred_check_branch
      %51 = sbr.rel (0) target = $region13
    $region12: #{conv_standard_forward.1} parent=1 // pred_region
      %s53 = ssub.s32 16, 16
      %54 = vsyncadd [#allocation10], %s53
      %s56 = sshll.u32 [#allocation11], 4
      %s57 = int_to_ptr.vmem [resolvable:$true] %s56
      %59 = dma.hbm_to_vmem [thread:$0]  %s2, 16, %s57, [#allocation10]
    $region13: #{conv_standard_forward.1} parent=1 // pred_fallthru
      _
    // Predicated region
    $region14: #{conv_standard_forward.1} parent=1 // pred_check
      _
    $region15: #{conv_standard_forward.1} parent=1 // pred_check_branch
      %61 = sbr.rel (0) target = $region17
    $region16: #{conv_standard_forward.1} parent=1 // pred_region
      %s63 = ssub.s32 16, 16
      %64 = vsyncadd [#allocation13], %s63
      %s66 = sshll.u32 [#allocation12], 4
      %s67 = int_to_ptr.vmem [resolvable:$true] %s66
      %69 = dma.hbm_to_vmem [thread:$0]  %s3, 16, %s67, [#allocation13]
    $region17: #{conv_standard_forward.1} parent=1 // pred_fallthru
      _
    // Predicated region
    $region18: #{conv_standard_forward.1} parent=1 // pred_check
      _
    $region19: #{conv_standard_forward.1} parent=1 // pred_check_branch
      %71 = sbr.rel (0) target = $region21
    $region20: #{conv_standard_forward.1} parent=1 // pred_region
      %s73 = ssub.s32 2304, 2304
      %74 = vsyncadd [#allocation13], %s73
      %s75 = sshll.u32 [#allocation14], 4
      %s76 = int_to_ptr.vmem [resolvable:$true] %s75
      %81 = dma.hbm_to_vmem [thread:$0]  %s4, 2304, %s76, [#allocation13], 64, 64, 4
    $region21: #{conv_standard_forward.1} parent=1 // pred_fallthru
      _
    // Predicated region
    $region22: #{conv_standard_forward.1} parent=1 // pred_check
      _
    $region23: #{conv_standard_forward.1} parent=1 // pred_check_branch
      %83 = sbr.rel (0) target = $region25
    $region24: #{conv_standard_forward.1} parent=1 // pred_region
      %s85 = ssub.s32 16, 16
      %86 = vsyncadd [#allocation16], %s85
      %s88 = sshll.u32 [#allocation15], 4
      %s89 = int_to_ptr.vmem [resolvable:$true] %s88
      %91 = dma.hbm_to_vmem [thread:$0]  %s5, 16, %s89, [#allocation16]
    $region25: #{conv_standard_forward.1} parent=1 // pred_fallthru
      _
    // Predicated region
    $region26: #{conv_standard_forward.1} parent=1 // pred_check
      _
    $region27: #{conv_standard_forward.1} parent=1 // pred_check_branch
      %93 = sbr.rel (0) target = $region29
    $region28: #{conv_standard_forward.1} parent=1 // pred_region
      %s95 = ssub.s32 16, 16
      %96 = vsyncadd [#allocation16], %s95
      %s98 = sshll.u32 [#allocation17], 4
      %s99 = int_to_ptr.vmem [resolvable:$true] %s98
      %101 = dma.hbm_to_vmem [thread:$0]  %s6, 16, %s99, [#allocation16]
    $region29: #{conv_standard_forward.1} parent=1 // pred_fallthru
      _
    // Predicated region
    $region30: #{conv_standard_forward.1} parent=1 // pred_check
      _
    $region31: #{conv_standard_forward.1} parent=1 // pred_check_branch
      %103 = sbr.rel (0) target = $region33
    $region32: #{conv_standard_forward.1} parent=1 // pred_region
      %s105 = ssub.s32 2304, 2304
      %106 = vsyncadd [#allocation19], %s105
      %s107 = sshll.u32 [#allocation18], 4
      %s108 = int_to_ptr.vmem [resolvable:$true] %s107
      %113 = dma.hbm_to_vmem [thread:$0]  %s7, 2304, %s108, [#allocation19], 64, 64, 4
    $region33: #{conv_standard_forward.1} parent=1 // pred_fallthru
      _
    // Predicated region
    $region34: #{conv_standard_forward.1} parent=1 // pred_check
      _
    $region35: #{conv_standard_forward.1} parent=1 // pred_check_branch
      %115 = sbr.rel (0) target = $region37
    $region36: #{conv_standard_forward.1} parent=1 // pred_region
      %s117 = ssub.s32 16, 16
      %118 = vsyncadd [#allocation19], %s117
      %s120 = sshll.u32 [#allocation20], 4
      %s121 = int_to_ptr.vmem [resolvable:$true] %s120
      %123 = dma.hbm_to_vmem [thread:$0]  %s8, 16, %s121, [#allocation19]
    $region37: #{conv_standard_forward.1} parent=1 // pred_fallthru
      _
    // Predicated region
    $region38: #{conv_standard_forward.1} parent=1 // pred_check
      _
    $region39: #{conv_standard_forward.1} parent=1 // pred_check_branch
      %125 = sbr.rel (0) target = $region41
    $region40: #{conv_standard_forward.1} parent=1 // pred_region
      %s127 = ssub.s32 16, 16
      %128 = vsyncadd [#allocation22], %s127
      %s130 = sshll.u32 [#allocation21], 4
      %s131 = int_to_ptr.vmem [resolvable:$true] %s130
      %133 = dma.hbm_to_vmem [thread:$0]  %s9, 16, %s131, [#allocation22]
    $region41: #{conv_standard_forward.1} parent=1 // pred_fallthru
      _
    // Predicated region
    $region42: #{conv_standard_forward.1} parent=1 // pred_check
      _
    $region43: #{conv_standard_forward.1} parent=1 // pred_check_branch
      %135 = sbr.rel (0) target = $region45
    $region44: #{conv_standard_forward.1} parent=1 // pred_region
      %s137 = ssub.s32 2304, 2304
      %138 = vsyncadd [#allocation22], %s137
      %s139 = sshll.u32 [#allocation23], 4
      %s140 = int_to_ptr.vmem [resolvable:$true] %s139
      %145 = dma.hbm_to_vmem [thread:$0]  %s10, 2304, %s140, [#allocation22], 64, 64, 4
    $region45: #{conv_standard_forward.1} parent=1 // pred_fallthru
      _
    // Predicated region
    $region46: #{conv_standard_forward.1} parent=1 // pred_check
      _
    $region47: #{conv_standard_forward.1} parent=1 // pred_check_branch
      %147 = sbr.rel (0) target = $region49
    $region48: #{conv_standard_forward.1} parent=1 // pred_region
      %s149 = ssub.s32 16, 16
      %150 = vsyncadd [#allocation25], %s149
      %s152 = sshll.u32 [#allocation24], 4
      %s153 = int_to_ptr.vmem [resolvable:$true] %s152
      %155 = dma.hbm_to_vmem [thread:$0]  %s11, 16, %s153, [#allocation25]
    $region49: #{conv_standard_forward.1} parent=1 // pred_fallthru
      _
    // Predicated region
    $region50: #{conv_standard_forward.1} parent=1 // pred_check
      _
    $region51: #{conv_standard_forward.1} parent=1 // pred_check_branch
      %157 = sbr.rel (0) target = $region53
    $region52: #{conv_standard_forward.1} parent=1 // pred_region
      %s159 = ssub.s32 16, 16
      %160 = vsyncadd [#allocation25], %s159
      %s162 = sshll.u32 [#allocation26], 4
      %s163 = int_to_ptr.vmem [resolvable:$true] %s162
      %165 = dma.hbm_to_vmem [thread:$0]  %s12, 16, %s163, [#allocation25]
    $region53: #{conv_standard_forward.1} parent=1 // pred_fallthru
      _
    // Predicated region
    $region54: #{conv_standard_forward.1} parent=1 // pred_check
      _
    $region55: #{conv_standard_forward.1} parent=1 // pred_check_branch
      %167 = sbr.rel (0) target = $region57
    $region56: #{conv_standard_forward.1} parent=1 // pred_region
      %168 = dma.done [#allocation7], 8192
    $region57: #{conv_standard_forward.1} parent=1 // pred_fallthru
      _
    // Predicated region
    $region58: #{conv_standard_forward.1} parent=1 // pred_check
      _
    $region59: #{conv_standard_forward.1} parent=1 // pred_check_branch
      %170 = sbr.rel (0) target = $region61
    $region60: #{conv_standard_forward.1} parent=1 // pred_region
      %171 = dma.done [#allocation10], 256
    $region61: #{conv_standard_forward.1} parent=1 // pred_fallthru
      _
    // Predicated region
    $region62: #{conv_standard_forward.1} parent=1 // pred_check
      _
    $region63: #{conv_standard_forward.1} parent=1 // pred_check_branch
      %173 = sbr.rel (0) target = $region65
    $region64: #{conv_standard_forward.1} parent=1 // pred_region
      %174 = dma.done [#allocation10], 16
    $region65: #{conv_standard_forward.1} parent=1 // pred_fallthru
      _
    // Predicated region
    $region66: #{conv_standard_forward.1} parent=1 // pred_check
      _
    $region67: #{conv_standard_forward.1} parent=1 // pred_check_branch
      %176 = sbr.rel (0) target = $region69
    $region68: #{conv_standard_forward.1} parent=1 // pred_region
      %177 = dma.done [#allocation13], 16
    $region69: #{conv_standard_forward.1} parent=1 // pred_fallthru
      _
    // Predicated region
    $region70: #{conv_standard_forward.1} parent=1 // pred_check
      _
    $region71: #{conv_standard_forward.1} parent=1 // pred_check_branch
      %179 = sbr.rel (0) target = $region73
    $region72: #{conv_standard_forward.1} parent=1 // pred_region
      %180 = dma.done [#allocation13], 2304
    $region73: #{conv_standard_forward.1} parent=1 // pred_fallthru
      _
    // Predicated region
    $region74: #{conv_standard_forward.1} parent=1 // pred_check
      _
    $region75: #{conv_standard_forward.1} parent=1 // pred_check_branch
      %182 = sbr.rel (0) target = $region77
    $region76: #{conv_standard_forward.1} parent=1 // pred_region
      %183 = dma.done [#allocation16], 16
    $region77: #{conv_standard_forward.1} parent=1 // pred_fallthru
      _
    // Predicated region
    $region78: #{conv_standard_forward.1} parent=1 // pred_check
      _
    $region79: #{conv_standard_forward.1} parent=1 // pred_check_branch
      %185 = sbr.rel (0) target = $region81
    $region80: #{conv_standard_forward.1} parent=1 // pred_region
      %186 = dma.done [#allocation16], 16
    $region81: #{conv_standard_forward.1} parent=1 // pred_fallthru
      _
    // Predicated region
    $region82: #{conv_standard_forward.1} parent=1 // pred_check
      _
    $region83: #{conv_standard_forward.1} parent=1 // pred_check_branch
      %188 = sbr.rel (0) target = $region85
    $region84: #{conv_standard_forward.1} parent=1 // pred_region
      %189 = dma.done [#allocation19], 2304
    $region85: #{conv_standard_forward.1} parent=1 // pred_fallthru
      _
    // Predicated region
    $region86: #{conv_standard_forward.1} parent=1 // pred_check
      _
    $region87: #{conv_standard_forward.1} parent=1 // pred_check_branch
      %191 = sbr.rel (0) target = $region89
    $region88: #{conv_standard_forward.1} parent=1 // pred_region
      %192 = dma.done [#allocation19], 16
    $region89: #{conv_standard_forward.1} parent=1 // pred_fallthru
      _
    // Predicated region
    $region90: #{conv_standard_forward.1} parent=1 // pred_check
      _
    $region91: #{conv_standard_forward.1} parent=1 // pred_check_branch
      %194 = sbr.rel (0) target = $region93
    $region92: #{conv_standard_forward.1} parent=1 // pred_region
      %195 = dma.done [#allocation22], 16
    $region93: #{conv_standard_forward.1} parent=1 // pred_fallthru
      _
    // Predicated region
    $region94: #{conv_standard_forward.1} parent=1 // pred_check
      _
    $region95: #{conv_standard_forward.1} parent=1 // pred_check_branch
      %197 = sbr.rel (0) target = $region97
    $region96: #{conv_standard_forward.1} parent=1 // pred_region
      %198 = dma.done [#allocation22], 2304
    $region97: #{conv_standard_forward.1} parent=1 // pred_fallthru
      _
    // Predicated region
    $region98: #{conv_standard_forward.1} parent=1 // pred_check
      _
    $region99: #{conv_standard_forward.1} parent=1 // pred_check_branch
      %200 = sbr.rel (0) target = $region101
    $region100: #{conv_standard_forward.1} parent=1 // pred_region
      %201 = dma.done [#allocation25], 16
    $region101: #{conv_standard_forward.1} parent=1 // pred_fallthru
      _
    // Predicated region
    $region102: #{conv_standard_forward.1} parent=1 // pred_check
      _
    $region103: #{conv_standard_forward.1} parent=1 // pred_check_branch
      %203 = sbr.rel (0) target = $region105
    $region104: #{conv_standard_forward.1} parent=1 // pred_region
      %204 = dma.done [#allocation25], 16
    $region105: #{conv_standard_forward.1} parent=1 // pred_fallthru
      _
    %v206 = vld [vmem:[#allocation6] sm:$0xff]
    %v207 = vld [vmem:[#allocation6 + $0x8] sm:$0xff]
    %v208 = vld [vmem:[#allocation6 + $0x10] sm:$0xff]
    %v209 = vld [vmem:[#allocation6 + $0x18] sm:$0xff]
    %v210 = vld [vmem:[#allocation6 + $0x20] sm:$0xff]
    %v211 = vld [vmem:[#allocation6 + $0x28] sm:$0xff]
    %v212 = vld [vmem:[#allocation6 + $0x30] sm:$0xff]
    %v213 = vld [vmem:[#allocation6 + $0x38] sm:$0xff]
    %v214 = vld [vmem:[#allocation6 + $0x40] sm:$0xff]
    %v215 = vld [vmem:[#allocation6 + $0x48] sm:$0xff]
    %v216 = vld [vmem:[#allocation6 + $0x50] sm:$0xff]
    %v217 = vld [vmem:[#allocation6 + $0x58] sm:$0xff]
    %v218 = vld [vmem:[#allocation6 + $0x60] sm:$0xff]
    %v219 = vld [vmem:[#allocation6 + $0x68] sm:$0xff]
    %v220 = vld [vmem:[#allocation6 + $0x70] sm:$0xff]
    %v221 = vld [vmem:[#allocation6 + $0x78] sm:$0xff]
    %v222 = vld [vmem:[#allocation6 + $0x80] sm:$0xff]
    %v223 = vld [vmem:[#allocation6 + $0x88] sm:$0xff]
    %v224 = vld [vmem:[#allocation6 + $0x90] sm:$0xff]
    %v225 = vld [vmem:[#allocation6 + $0x98] sm:$0xff]
    %v226 = vld [vmem:[#allocation6 + $0xa0] sm:$0xff]
    %v227 = vld [vmem:[#allocation6 + $0xa8] sm:$0xff]
    %v228 = vld [vmem:[#allocation6 + $0xb0] sm:$0xff]
    %v229 = vld [vmem:[#allocation6 + $0xb8] sm:$0xff]
    %v230 = vld [vmem:[#allocation6 + $0xc0] sm:$0xff]
    %v231 = vld [vmem:[#allocation6 + $0xc8] sm:$0xff]
    %v232 = vld [vmem:[#allocation6 + $0xd0] sm:$0xff]
    %v233 = vld [vmem:[#allocation6 + $0xd8] sm:$0xff]
    %v234 = vld [vmem:[#allocation6 + $0xe0] sm:$0xff]
    %v235 = vld [vmem:[#allocation6 + $0xe8] sm:$0xff]
    %v236 = vld [vmem:[#allocation6 + $0xf0] sm:$0xff]
    %v237 = vld [vmem:[#allocation6 + $0xf8] sm:$0xff]
    %v238 = vld [vmem:[#allocation6 + $0x100] sm:$0xff]
    %v239 = vld [vmem:[#allocation6 + $0x108] sm:$0xff]
    %v240 = vld [vmem:[#allocation6 + $0x110] sm:$0xff]
    %v241 = vld [vmem:[#allocation6 + $0x118] sm:$0xff]
    %v242 = vld [vmem:[#allocation6 + $0x120] sm:$0xff]
    %v243 = vld [vmem:[#allocation6 + $0x128] sm:$0xff]
    %v244 = vld [vmem:[#allocation6 + $0x130] sm:$0xff]
    %v245 = vld [vmem:[#allocation6 + $0x138] sm:$0xff]
    %v246 = vld [vmem:[#allocation6 + $0x140] sm:$0xff]
    %v247 = vld [vmem:[#allocation6 + $0x148] sm:$0xff]
    %v248 = vld [vmem:[#allocation6 + $0x150] sm:$0xff]
    %v249 = vld [vmem:[#allocation6 + $0x158] sm:$0xff]
    %v250 = vld [vmem:[#allocation6 + $0x160] sm:$0xff]
    %v251 = vld [vmem:[#allocation6 + $0x168] sm:$0xff]
    %v252 = vld [vmem:[#allocation6 + $0x170] sm:$0xff]
    %v253 = vld [vmem:[#allocation6 + $0x178] sm:$0xff]
    %v254 = vld [vmem:[#allocation6 + $0x180] sm:$0xff]
    %v255 = vld [vmem:[#allocation6 + $0x188] sm:$0xff]
    %v256 = vld [vmem:[#allocation6 + $0x190] sm:$0xff]
    %v257 = vld [vmem:[#allocation6 + $0x198] sm:$0xff]
    %v258 = vld [vmem:[#allocation6 + $0x1a0] sm:$0xff]
    %v259 = vld [vmem:[#allocation6 + $0x1a8] sm:$0xff]
    %v260 = vld [vmem:[#allocation6 + $0x1b0] sm:$0xff]
    %v261 = vld [vmem:[#allocation6 + $0x1b8] sm:$0xff]
    %v262 = vld [vmem:[#allocation6 + $0x1c0] sm:$0xff]
    %v263 = vld [vmem:[#allocation6 + $0x1c8] sm:$0xff]
    %v264 = vld [vmem:[#allocation6 + $0x1d0] sm:$0xff]
    %v265 = vld [vmem:[#allocation6 + $0x1d8] sm:$0xff]
    %v266 = vld [vmem:[#allocation6 + $0x1e0] sm:$0xff]
    %v267 = vld [vmem:[#allocation6 + $0x1e8] sm:$0xff]
    %v268 = vld [vmem:[#allocation6 + $0x1f0] sm:$0xff]
    %v269 = vld [vmem:[#allocation6 + $0x1f8] sm:$0xff]
    %vm270 = vcmask 23552
    %271 = vst.msk [vmem:[#allocation2] sm:$0xff] %vm270, 0.0
    %272 = vst.msk [vmem:[#allocation2 + $0x8] sm:$0xff] %vm270, 0.0
    %vm273 = vcmask 17408
    %274 = vst.msk [vmem:[#allocation2 + $0x10] sm:$0x3] %vm273, 0.0
    %275 = vst.msk [vmem:[#allocation2 + $0x18] sm:$0xff] %vm270, 0.0
    %276 = vst.msk [vmem:[#allocation2 + $0x20] sm:$0xff] %vm270, 0.0
    %277 = vst.msk [vmem:[#allocation2 + $0x28] sm:$0x3] %vm273, 0.0
    %278 = vst.msk [vmem:[#allocation2 + $0x30] sm:$0xff] %vm270, 0.0
    %279 = vst.msk [vmem:[#allocation2 + $0x38] sm:$0xff] %vm270, 0.0
    %280 = vst.msk [vmem:[#allocation2 + $0x40] sm:$0x3] %vm273, 0.0
    %281 = vst.msk [vmem:[#allocation2 + $0x48] sm:$0xff] %vm270, 0.0
    %282 = vst.msk [vmem:[#allocation2 + $0x50] sm:$0xff] %vm270, 0.0
    %283 = vst.msk [vmem:[#allocation2 + $0x58] sm:$0x3] %vm273, 0.0
    %284 = vst.msk [vmem:[#allocation2 + $0x60] sm:$0xff] %vm270, 0.0
    %285 = vst.msk [vmem:[#allocation2 + $0x68] sm:$0xff] %vm270, 0.0
    %286 = vst.msk [vmem:[#allocation2 + $0x70] sm:$0x3] %vm273, 0.0
    %287 = vst.msk [vmem:[#allocation2 + $0x78] sm:$0xff] %vm270, 0.0
    %288 = vst.msk [vmem:[#allocation2 + $0x80] sm:$0xff] %vm270, 0.0
    %289 = vst.msk [vmem:[#allocation2 + $0x88] sm:$0x3] %vm273, 0.0
    %290 = vst.msk [vmem:[#allocation2 + $0x90] sm:$0xff] %vm270, 0.0
    %291 = vst.msk [vmem:[#allocation2 + $0x98] sm:$0xff] %vm270, 0.0
    %292 = vst.msk [vmem:[#allocation2 + $0xa0] sm:$0x3] %vm273, 0.0
    %293 = vst.msk [vmem:[#allocation2 + $0xa8] sm:$0xff] %vm270, 0.0
    %294 = vst.msk [vmem:[#allocation2 + $0xb0] sm:$0xff] %vm270, 0.0
    %295 = vst.msk [vmem:[#allocation2 + $0xb8] sm:$0x3] %vm273, 0.0
    %296 = vst.msk [vmem:[#allocation2 + $0xc0] sm:$0xff] %vm270, 0.0
    %297 = vst.msk [vmem:[#allocation2 + $0xc8] sm:$0xff] %vm270, 0.0
    %298 = vst.msk [vmem:[#allocation2 + $0xd0] sm:$0x3] %vm273, 0.0
    %299 = vst.msk [vmem:[#allocation2 + $0xd8] sm:$0xff] %vm270, 0.0
    %300 = vst.msk [vmem:[#allocation2 + $0xe0] sm:$0xff] %vm270, 0.0
    %301 = vst.msk [vmem:[#allocation2 + $0xe8] sm:$0x3] %vm273, 0.0
    %302 = vst.msk [vmem:[#allocation2 + $0xf0] sm:$0xff] %vm270, 0.0
    %303 = vst.msk [vmem:[#allocation2 + $0xf8] sm:$0xff] %vm270, 0.0
    %304 = vst.msk [vmem:[#allocation2 + $0x100] sm:$0x3] %vm273, 0.0
    %305 = vst.msk [vmem:[#allocation2 + $0x108] sm:$0xff] %vm270, 0.0
    %306 = vst.msk [vmem:[#allocation2 + $0x110] sm:$0xff] %vm270, 0.0
    %307 = vst.msk [vmem:[#allocation2 + $0x118] sm:$0x3] %vm273, 0.0
    %308 = vst.msk [vmem:[#allocation2 + $0x120] sm:$0xff] %vm270, 0.0
    %309 = vst.msk [vmem:[#allocation2 + $0x128] sm:$0xff] %vm270, 0.0
    %310 = vst.msk [vmem:[#allocation2 + $0x130] sm:$0x3] %vm273, 0.0
    %311 = vst.msk [vmem:[#allocation2 + $0x138] sm:$0xff] %vm270, 0.0
    %312 = vst.msk [vmem:[#allocation2 + $0x140] sm:$0xff] %vm270, 0.0
    %313 = vst.msk [vmem:[#allocation2 + $0x148] sm:$0x3] %vm273, 0.0
    %314 = vst.msk [vmem:[#allocation2 + $0x150] sm:$0xff] %vm270, 0.0
    %315 = vst.msk [vmem:[#allocation2 + $0x158] sm:$0xff] %vm270, 0.0
    %316 = vst.msk [vmem:[#allocation2 + $0x160] sm:$0x3] %vm273, 0.0
    %317 = vst.msk [vmem:[#allocation2 + $0x168] sm:$0xff] %vm270, 0.0
    %318 = vst.msk [vmem:[#allocation2 + $0x170] sm:$0xff] %vm270, 0.0
    %319 = vst.msk [vmem:[#allocation2 + $0x178] sm:$0x3] %vm273, 0.0
    %320 = vst.msk [vmem:[#allocation2 + $0x180] sm:$0xff] %vm270, 0.0
    %321 = vst.msk [vmem:[#allocation2 + $0x188] sm:$0xff] %vm270, 0.0
    %322 = vst.msk [vmem:[#allocation2 + $0x190] sm:$0x3] %vm273, 0.0
    %323 = vst.msk [vmem:[#allocation2 + $0x198] sm:$0xff] %vm270, 0.0
    %324 = vst.msk [vmem:[#allocation2 + $0x1a0] sm:$0xff] %vm270, 0.0
    %325 = vst.msk [vmem:[#allocation2 + $0x1a8] sm:$0x3] %vm273, 0.0
    %326 = vst.msk [vmem:[#allocation2 + $0x1b0] sm:$0xff] %vm270, 0.0
    %327 = vst.msk [vmem:[#allocation2 + $0x1b8] sm:$0xff] %vm270, 0.0
    %328 = vst.msk [vmem:[#allocation2 + $0x1c0] sm:$0x3] %vm273, 0.0
    %329 = vst.msk [vmem:[#allocation2 + $0x1c8] sm:$0xff] %vm270, 0.0
    %330 = vst.msk [vmem:[#allocation2 + $0x1d0] sm:$0xff] %vm270, 0.0
    %331 = vst.msk [vmem:[#allocation2 + $0x1d8] sm:$0x3] %vm273, 0.0
    %332 = vst.msk [vmem:[#allocation2 + $0x1e0] sm:$0xff] %vm270, 0.0
    %333 = vst.msk [vmem:[#allocation2 + $0x1e8] sm:$0xff] %vm270, 0.0
    %334 = vst.msk [vmem:[#allocation2 + $0x1f0] sm:$0x3] %vm273, 0.0
    %335 = vst.msk [vmem:[#allocation2 + $0x1f8] sm:$0xff] %vm270, 0.0
    %336 = vst.msk [vmem:[#allocation2 + $0x200] sm:$0xff] %vm270, 0.0
    %337 = vst.msk [vmem:[#allocation2 + $0x208] sm:$0x3] %vm273, 0.0
    %338 = vst.msk [vmem:[#allocation2 + $0x210] sm:$0xff] %vm270, 0.0
    %339 = vst.msk [vmem:[#allocation2 + $0x218] sm:$0xff] %vm270, 0.0
    %340 = vst.msk [vmem:[#allocation2 + $0x220] sm:$0x3] %vm273, 0.0
    %341 = vst.msk [vmem:[#allocation2 + $0x228] sm:$0xff] %vm270, 0.0
    %342 = vst.msk [vmem:[#allocation2 + $0x230] sm:$0xff] %vm270, 0.0
    %343 = vst.msk [vmem:[#allocation2 + $0x238] sm:$0x3] %vm273, 0.0
    %344 = vst.msk [vmem:[#allocation2 + $0x240] sm:$0xff] %vm270, 0.0
    %345 = vst.msk [vmem:[#allocation2 + $0x248] sm:$0xff] %vm270, 0.0
    %346 = vst.msk [vmem:[#allocation2 + $0x250] sm:$0x3] %vm273, 0.0
    %347 = vst.msk [vmem:[#allocation2 + $0x258] sm:$0xff] %vm270, 0.0
    %348 = vst.msk [vmem:[#allocation2 + $0x260] sm:$0xff] %vm270, 0.0
    %349 = vst.msk [vmem:[#allocation2 + $0x268] sm:$0x3] %vm273, 0.0
    %350 = vst.msk [vmem:[#allocation2 + $0x270] sm:$0xff] %vm270, 0.0
    %351 = vst.msk [vmem:[#allocation2 + $0x278] sm:$0xff] %vm270, 0.0
    %352 = vst.msk [vmem:[#allocation2 + $0x280] sm:$0x3] %vm273, 0.0
    %353 = vst.msk [vmem:[#allocation2 + $0x288] sm:$0xff] %vm270, 0.0
    %354 = vst.msk [vmem:[#allocation2 + $0x290] sm:$0xff] %vm270, 0.0
    %355 = vst.msk [vmem:[#allocation2 + $0x298] sm:$0x3] %vm273, 0.0
    %356 = vst.msk [vmem:[#allocation2 + $0x2a0] sm:$0xff] %vm270, 0.0
    %357 = vst.msk [vmem:[#allocation2 + $0x2a8] sm:$0xff] %vm270, 0.0
    %358 = vst.msk [vmem:[#allocation2 + $0x2b0] sm:$0x3] %vm273, 0.0
    %359 = vst.msk [vmem:[#allocation2 + $0x2b8] sm:$0xff] %vm270, 0.0
    %360 = vst.msk [vmem:[#allocation2 + $0x2c0] sm:$0xff] %vm270, 0.0
    %361 = vst.msk [vmem:[#allocation2 + $0x2c8] sm:$0x3] %vm273, 0.0
    %362 = vst.msk [vmem:[#allocation2 + $0x2d0] sm:$0xff] %vm270, 0.0
    %363 = vst.msk [vmem:[#allocation2 + $0x2d8] sm:$0xff] %vm270, 0.0
    %364 = vst.msk [vmem:[#allocation2 + $0x2e0] sm:$0x3] %vm273, 0.0
    %365 = vst.msk [vmem:[#allocation2 + $0x2e8] sm:$0xff] %vm270, 0.0
    %366 = vst.msk [vmem:[#allocation2 + $0x2f0] sm:$0xff] %vm270, 0.0
    %367 = vst.msk [vmem:[#allocation2 + $0x2f8] sm:$0x3] %vm273, 0.0
    %368 = vst.msk [vmem:[#allocation2 + $0x300] sm:$0xff] %vm270, 0.0
    %369 = vst.msk [vmem:[#allocation2 + $0x308] sm:$0xff] %vm270, 0.0
    %370 = vst.msk [vmem:[#allocation2 + $0x310] sm:$0x3] %vm273, 0.0
    %371 = vst.msk [vmem:[#allocation2 + $0x318] sm:$0xff] %vm270, 0.0
    %372 = vst.msk [vmem:[#allocation2 + $0x320] sm:$0xff] %vm270, 0.0
    %373 = vst.msk [vmem:[#allocation2 + $0x328] sm:$0x3] %vm273, 0.0
    %374 = vst.msk [vmem:[#allocation2 + $0x330] sm:$0xff] %vm270, 0.0
    %375 = vst.msk [vmem:[#allocation2 + $0x338] sm:$0xff] %vm270, 0.0
    %376 = vst.msk [vmem:[#allocation2 + $0x340] sm:$0x3] %vm273, 0.0
    %377 = vst.msk [vmem:[#allocation2 + $0x348] sm:$0xff] %vm270, 0.0
    %378 = vst.msk [vmem:[#allocation2 + $0x350] sm:$0xff] %vm270, 0.0
    %379 = vst.msk [vmem:[#allocation2 + $0x358] sm:$0x3] %vm273, 0.0
    %s380 = scalar_lea.vmem [#allocation2], 24
    %381 = vst.msk [vmem:[%s380 + $0x1] sm:$0xff] %vm270, %v206
    %382 = vst.msk [vmem:[%s380 + $0x9] sm:$0xff] %vm270, %v207
    %383 = vst.msk [vmem:[%s380 + $0x19] sm:$0xff] %vm270, %v208
    %384 = vst.msk [vmem:[%s380 + $0x21] sm:$0xff] %vm270, %v209
    %385 = vst.msk [vmem:[%s380 + $0x31] sm:$0xff] %vm270, %v210
    %386 = vst.msk [vmem:[%s380 + $0x39] sm:$0xff] %vm270, %v211
    %387 = vst.msk [vmem:[%s380 + $0x49] sm:$0xff] %vm270, %v212
    %388 = vst.msk [vmem:[%s380 + $0x51] sm:$0xff] %vm270, %v213
    %389 = vst.msk [vmem:[%s380 + $0x61] sm:$0xff] %vm270, %v214
    %390 = vst.msk [vmem:[%s380 + $0x69] sm:$0xff] %vm270, %v215
    %391 = vst.msk [vmem:[%s380 + $0x79] sm:$0xff] %vm270, %v216
    %392 = vst.msk [vmem:[%s380 + $0x81] sm:$0xff] %vm270, %v217
    %393 = vst.msk [vmem:[%s380 + $0x91] sm:$0xff] %vm270, %v218
    %394 = vst.msk [vmem:[%s380 + $0x99] sm:$0xff] %vm270, %v219
    %395 = vst.msk [vmem:[%s380 + $0xa9] sm:$0xff] %vm270, %v220
    %396 = vst.msk [vmem:[%s380 + $0xb1] sm:$0xff] %vm270, %v221
    %397 = vst.msk [vmem:[%s380 + $0xc1] sm:$0xff] %vm270, %v222
    %398 = vst.msk [vmem:[%s380 + $0xc9] sm:$0xff] %vm270, %v223
    %399 = vst.msk [vmem:[%s380 + $0xd9] sm:$0xff] %vm270, %v224
    %400 = vst.msk [vmem:[%s380 + $0xe1] sm:$0xff] %vm270, %v225
    %401 = vst.msk [vmem:[%s380 + $0xf1] sm:$0xff] %vm270, %v226
    %402 = vst.msk [vmem:[%s380 + $0xf9] sm:$0xff] %vm270, %v227
    %403 = vst.msk [vmem:[%s380 + $0x109] sm:$0xff] %vm270, %v228
    %404 = vst.msk [vmem:[%s380 + $0x111] sm:$0xff] %vm270, %v229
    %405 = vst.msk [vmem:[%s380 + $0x121] sm:$0xff] %vm270, %v230
    %406 = vst.msk [vmem:[%s380 + $0x129] sm:$0xff] %vm270, %v231
    %407 = vst.msk [vmem:[%s380 + $0x139] sm:$0xff] %vm270, %v232
    %408 = vst.msk [vmem:[%s380 + $0x141] sm:$0xff] %vm270, %v233
    %409 = vst.msk [vmem:[%s380 + $0x151] sm:$0xff] %vm270, %v234
    %410 = vst.msk [vmem:[%s380 + $0x159] sm:$0xff] %vm270, %v235
    %411 = vst.msk [vmem:[%s380 + $0x169] sm:$0xff] %vm270, %v236
    %412 = vst.msk [vmem:[%s380 + $0x171] sm:$0xff] %vm270, %v237
    %413 = vst.msk [vmem:[%s380 + $0x1b1] sm:$0xff] %vm270, %v238
    %414 = vst.msk [vmem:[%s380 + $0x1b9] sm:$0xff] %vm270, %v239
    %415 = vst.msk [vmem:[%s380 + $0x1c9] sm:$0xff] %vm270, %v240
    %416 = vst.msk [vmem:[%s380 + $0x1d1] sm:$0xff] %vm270, %v241
    %417 = vst.msk [vmem:[%s380 + $0x1e1] sm:$0xff] %vm270, %v242
    %418 = vst.msk [vmem:[%s380 + $0x1e9] sm:$0xff] %vm270, %v243
    %419 = vst.msk [vmem:[%s380 + $0x1f9] sm:$0xff] %vm270, %v244
    %420 = vst.msk [vmem:[%s380 + $0x201] sm:$0xff] %vm270, %v245
    %421 = vst.msk [vmem:[%s380 + $0x211] sm:$0xff] %vm270, %v246
    %422 = vst.msk [vmem:[%s380 + $0x219] sm:$0xff] %vm270, %v247
    %423 = vst.msk [vmem:[%s380 + $0x229] sm:$0xff] %vm270, %v248
    %424 = vst.msk [vmem:[%s380 + $0x231] sm:$0xff] %vm270, %v249
    %425 = vst.msk [vmem:[%s380 + $0x241] sm:$0xff] %vm270, %v250
    %426 = vst.msk [vmem:[%s380 + $0x249] sm:$0xff] %vm270, %v251
    %427 = vst.msk [vmem:[%s380 + $0x259] sm:$0xff] %vm270, %v252
    %428 = vst.msk [vmem:[%s380 + $0x261] sm:$0xff] %vm270, %v253
    %429 = vst.msk [vmem:[%s380 + $0x271] sm:$0xff] %vm270, %v254
    %430 = vst.msk [vmem:[%s380 + $0x279] sm:$0xff] %vm270, %v255
    %431 = vst.msk [vmem:[%s380 + $0x289] sm:$0xff] %vm270, %v256
    %432 = vst.msk [vmem:[%s380 + $0x291] sm:$0xff] %vm270, %v257
    %433 = vst.msk [vmem:[%s380 + $0x2a1] sm:$0xff] %vm270, %v258
    %434 = vst.msk [vmem:[%s380 + $0x2a9] sm:$0xff] %vm270, %v259
    %435 = vst.msk [vmem:[%s380 + $0x2b9] sm:$0xff] %vm270, %v260
    %436 = vst.msk [vmem:[%s380 + $0x2c1] sm:$0xff] %vm270, %v261
    %437 = vst.msk [vmem:[%s380 + $0x2d1] sm:$0xff] %vm270, %v262
    %438 = vst.msk [vmem:[%s380 + $0x2d9] sm:$0xff] %vm270, %v263
    %439 = vst.msk [vmem:[%s380 + $0x2e9] sm:$0xff] %vm270, %v264
    %440 = vst.msk [vmem:[%s380 + $0x2f1] sm:$0xff] %vm270, %v265
    %441 = vst.msk [vmem:[%s380 + $0x301] sm:$0xff] %vm270, %v266
    %442 = vst.msk [vmem:[%s380 + $0x309] sm:$0xff] %vm270, %v267
    %443 = vst.msk [vmem:[%s380 + $0x319] sm:$0xff] %vm270, %v268
    %444 = vst.msk [vmem:[%s380 + $0x321] sm:$0xff] %vm270, %v269
    %v445 = vld [vmem:[#allocation2] sm:$0xff]
    %v446 = vld [vmem:[#allocation2 + $0x8] sm:$0xff]
    %v447 = vld [vmem:[#allocation2 + $0x10] sm:$0x3]
    %v448 = vld [vmem:[#allocation2 + $0x18] sm:$0xff]
    %v449 = vld [vmem:[#allocation2 + $0x20] sm:$0xff]
    %v450 = vld [vmem:[#allocation2 + $0x28] sm:$0x3]
    %v451 = vld [vmem:[#allocation2 + $0x30] sm:$0xff]
    %v452 = vld [vmem:[#allocation2 + $0x38] sm:$0xff]
    %v453 = vld [vmem:[#allocation2 + $0x40] sm:$0x3]
    %v454 = vld [vmem:[#allocation2 + $0x48] sm:$0xff]
    %v455 = vld [vmem:[#allocation2 + $0x50] sm:$0xff]
    %v456 = vld [vmem:[#allocation2 + $0x58] sm:$0x3]
    %v457 = vld [vmem:[#allocation2 + $0x60] sm:$0xff]
    %v458 = vld [vmem:[#allocation2 + $0x68] sm:$0xff]
    %v459 = vld [vmem:[#allocation2 + $0x70] sm:$0x3]
    %v460 = vld [vmem:[#allocation2 + $0x78] sm:$0xff]
    %v461 = vld [vmem:[#allocation2 + $0x80] sm:$0xff]
    %v462 = vld [vmem:[#allocation2 + $0x88] sm:$0x3]
    %v463 = vld [vmem:[#allocation2 + $0x90] sm:$0xff]
    %v464 = vld [vmem:[#allocation2 + $0x98] sm:$0xff]
    %v465 = vld [vmem:[#allocation2 + $0xa0] sm:$0x3]
    %v466 = vld [vmem:[#allocation2 + $0xa8] sm:$0xff]
    %v467 = vld [vmem:[#allocation2 + $0xb0] sm:$0xff]
    %v468 = vld [vmem:[#allocation2 + $0xb8] sm:$0x3]
    %v469 = vld [vmem:[#allocation2 + $0xc0] sm:$0xff]
    %v470 = vld [vmem:[#allocation2 + $0xc8] sm:$0xff]
    %v471 = vld [vmem:[#allocation2 + $0xd0] sm:$0x3]
    %v472 = vld [vmem:[#allocation2 + $0xd8] sm:$0xff]
    %v473 = vld [vmem:[#allocation2 + $0xe0] sm:$0xff]
    %v474 = vld [vmem:[#allocation2 + $0xe8] sm:$0x3]
    %v475 = vld [vmem:[#allocation2 + $0xf0] sm:$0xff]
    %v476 = vld [vmem:[#allocation2 + $0xf8] sm:$0xff]
    %v477 = vld [vmem:[#allocation2 + $0x100] sm:$0x3]
    %v478 = vld [vmem:[#allocation2 + $0x108] sm:$0xff]
    %v479 = vld [vmem:[#allocation2 + $0x110] sm:$0xff]
    %v480 = vld [vmem:[#allocation2 + $0x118] sm:$0x3]
    %v481 = vld [vmem:[#allocation2 + $0x120] sm:$0xff]
    %v482 = vld [vmem:[#allocation2 + $0x128] sm:$0xff]
    %v483 = vld [vmem:[#allocation2 + $0x130] sm:$0x3]
    %v484 = vld [vmem:[#allocation2 + $0x138] sm:$0xff]
    %v485 = vld [vmem:[#allocation2 + $0x140] sm:$0xff]
    %v486 = vld [vmem:[#allocation2 + $0x148] sm:$0x3]
    %v487 = vld [vmem:[#allocation2 + $0x150] sm:$0xff]
    %v488 = vld [vmem:[#allocation2 + $0x158] sm:$0xff]
    %v489 = vld [vmem:[#allocation2 + $0x160] sm:$0x3]
    %v490 = vld [vmem:[#allocation2 + $0x168] sm:$0xff]
    %v491 = vld [vmem:[#allocation2 + $0x170] sm:$0xff]
    %v492 = vld [vmem:[#allocation2 + $0x178] sm:$0x3]
    %v493 = vld [vmem:[#allocation2 + $0x180] sm:$0xff]
    %v494 = vld [vmem:[#allocation2 + $0x188] sm:$0xff]
    %v495 = vld [vmem:[#allocation2 + $0x190] sm:$0x3]
    %v496 = vld [vmem:[#allocation2 + $0x198] sm:$0xff]
    %v497 = vld [vmem:[#allocation2 + $0x1a0] sm:$0xff]
    %v498 = vld [vmem:[#allocation2 + $0x1a8] sm:$0x3]
    %v499 = vld [vmem:[#allocation2 + $0x1b0] sm:$0xff]
    %v500 = vld [vmem:[#allocation2 + $0x1b8] sm:$0xff]
    %v501 = vld [vmem:[#allocation2 + $0x1c0] sm:$0x3]
    %v502 = vld [vmem:[#allocation2 + $0x1c8] sm:$0xff]
    %v503 = vld [vmem:[#allocation2 + $0x1d0] sm:$0xff]
    %v504 = vld [vmem:[#allocation2 + $0x1d8] sm:$0x3]
    %v505 = vld [vmem:[#allocation2 + $0x1e0] sm:$0xff]
    %v506 = vld [vmem:[#allocation2 + $0x1e8] sm:$0xff]
    %v507 = vld [vmem:[#allocation2 + $0x1f0] sm:$0x3]
    %v508 = vld [vmem:[#allocation2 + $0x1f8] sm:$0xff]
    %v509 = vld [vmem:[#allocation2 + $0x200] sm:$0xff]
    %v510 = vld [vmem:[#allocation2 + $0x208] sm:$0x3]
    %v511 = vld [vmem:[#allocation2 + $0x210] sm:$0xff]
    %v512 = vld [vmem:[#allocation2 + $0x218] sm:$0xff]
    %v513 = vld [vmem:[#allocation2 + $0x220] sm:$0x3]
    %v514 = vld [vmem:[#allocation2 + $0x228] sm:$0xff]
    %v515 = vld [vmem:[#allocation2 + $0x230] sm:$0xff]
    %v516 = vld [vmem:[#allocation2 + $0x238] sm:$0x3]
    %v517 = vld [vmem:[#allocation2 + $0x240] sm:$0xff]
    %v518 = vld [vmem:[#allocation2 + $0x248] sm:$0xff]
    %v519 = vld [vmem:[#allocation2 + $0x250] sm:$0x3]
    %v520 = vld [vmem:[#allocation2 + $0x258] sm:$0xff]
    %v521 = vld [vmem:[#allocation2 + $0x260] sm:$0xff]
    %v522 = vld [vmem:[#allocation2 + $0x268] sm:$0x3]
    %v523 = vld [vmem:[#allocation2 + $0x270] sm:$0xff]
    %v524 = vld [vmem:[#allocation2 + $0x278] sm:$0xff]
    %v525 = vld [vmem:[#allocation2 + $0x280] sm:$0x3]
    %v526 = vld [vmem:[#allocation2 + $0x288] sm:$0xff]
    %v527 = vld [vmem:[#allocation2 + $0x290] sm:$0xff]
    %v528 = vld [vmem:[#allocation2 + $0x298] sm:$0x3]
    %v529 = vld [vmem:[#allocation2 + $0x2a0] sm:$0xff]
    %v530 = vld [vmem:[#allocation2 + $0x2a8] sm:$0xff]
    %v531 = vld [vmem:[#allocation2 + $0x2b0] sm:$0x3]
    %v532 = vld [vmem:[#allocation2 + $0x2b8] sm:$0xff]
    %v533 = vld [vmem:[#allocation2 + $0x2c0] sm:$0xff]
    %v534 = vld [vmem:[#allocation2 + $0x2c8] sm:$0x3]
    %v535 = vld [vmem:[#allocation2 + $0x2d0] sm:$0xff]
    %v536 = vld [vmem:[#allocation2 + $0x2d8] sm:$0xff]
    %v537 = vld [vmem:[#allocation2 + $0x2e0] sm:$0x3]
    %v538 = vld [vmem:[#allocation2 + $0x2e8] sm:$0xff]
    %v539 = vld [vmem:[#allocation2 + $0x2f0] sm:$0xff]
    %v540 = vld [vmem:[#allocation2 + $0x2f8] sm:$0x3]
    %v541 = vld [vmem:[#allocation2 + $0x300] sm:$0xff]
    %v542 = vld [vmem:[#allocation2 + $0x308] sm:$0xff]
    %v543 = vld [vmem:[#allocation2 + $0x310] sm:$0x3]
    %v544 = vld [vmem:[#allocation2 + $0x318] sm:$0xff]
    %v545 = vld [vmem:[#allocation2 + $0x320] sm:$0xff]
    %v546 = vld [vmem:[#allocation2 + $0x328] sm:$0x3]
    %v547 = vld [vmem:[#allocation2 + $0x330] sm:$0xff]
    %v548 = vld [vmem:[#allocation2 + $0x338] sm:$0xff]
    %v549 = vld [vmem:[#allocation2 + $0x340] sm:$0x3]
    %v550 = vld [vmem:[#allocation2 + $0x348] sm:$0xff]
    %v551 = vld [vmem:[#allocation2 + $0x350] sm:$0xff]
    %v552 = vld [vmem:[#allocation2 + $0x358] sm:$0x3]
    %vm649 = vcmask 1046528
    %v650 = vrot.slane %v445, 1
    %v651 = vrot.slane %v446, 1
    %v652 = vsel %vm649, %v650, %v651
    %v653 = vrot.slane %v447, 1
    %v654 = vsel %vm649, %v651, %v653
    %v655 = vrot.slane %v448, 1
    %v656 = vrot.slane %v449, 1
    %v657 = vsel %vm649, %v655, %v656
    %v658 = vrot.slane %v450, 1
    %v659 = vsel %vm649, %v656, %v658
    %v660 = vrot.slane %v451, 1
    %v661 = vrot.slane %v452, 1
    %v662 = vsel %vm649, %v660, %v661
    %v663 = vrot.slane %v453, 1
    %v664 = vsel %vm649, %v661, %v663
    %v665 = vrot.slane %v454, 1
    %v666 = vrot.slane %v455, 1
    %v667 = vsel %vm649, %v665, %v666
    %v668 = vrot.slane %v456, 1
    %v669 = vsel %vm649, %v666, %v668
    %v670 = vrot.slane %v457, 1
    %v671 = vrot.slane %v458, 1
    %v672 = vsel %vm649, %v670, %v671
    %v673 = vrot.slane %v459, 1
    %v674 = vsel %vm649, %v671, %v673
    %v675 = vrot.slane %v460, 1
    %v676 = vrot.slane %v461, 1
    %v677 = vsel %vm649, %v675, %v676
    %v678 = vrot.slane %v462, 1
    %v679 = vsel %vm649, %v676, %v678
    %v680 = vrot.slane %v463, 1
    %v681 = vrot.slane %v464, 1
    %v682 = vsel %vm649, %v680, %v681
    %v683 = vrot.slane %v465, 1
    %v684 = vsel %vm649, %v681, %v683
    %v685 = vrot.slane %v466, 1
    %v686 = vrot.slane %v467, 1
    %v687 = vsel %vm649, %v685, %v686
    %v688 = vrot.slane %v468, 1
    %v689 = vsel %vm649, %v686, %v688
    %v690 = vrot.slane %v469, 1
    %v691 = vrot.slane %v470, 1
    %v692 = vsel %vm649, %v690, %v691
    %v693 = vrot.slane %v471, 1
    %v694 = vsel %vm649, %v691, %v693
    %v695 = vrot.slane %v472, 1
    %v696 = vrot.slane %v473, 1
    %v697 = vsel %vm649, %v695, %v696
    %v698 = vrot.slane %v474, 1
    %v699 = vsel %vm649, %v696, %v698
    %v700 = vrot.slane %v475, 1
    %v701 = vrot.slane %v476, 1
    %v702 = vsel %vm649, %v700, %v701
    %v703 = vrot.slane %v477, 1
    %v704 = vsel %vm649, %v701, %v703
    %v705 = vrot.slane %v478, 1
    %v706 = vrot.slane %v479, 1
    %v707 = vsel %vm649, %v705, %v706
    %v708 = vrot.slane %v480, 1
    %v709 = vsel %vm649, %v706, %v708
    %v710 = vrot.slane %v481, 1
    %v711 = vrot.slane %v482, 1
    %v712 = vsel %vm649, %v710, %v711
    %v713 = vrot.slane %v483, 1
    %v714 = vsel %vm649, %v711, %v713
    %v715 = vrot.slane %v484, 1
    %v716 = vrot.slane %v485, 1
    %v717 = vsel %vm649, %v715, %v716
    %v718 = vrot.slane %v486, 1
    %v719 = vsel %vm649, %v716, %v718
    %v720 = vrot.slane %v487, 1
    %v721 = vrot.slane %v488, 1
    %v722 = vsel %vm649, %v720, %v721
    %v723 = vrot.slane %v489, 1
    %v724 = vsel %vm649, %v721, %v723
    %v725 = vrot.slane %v490, 1
    %v726 = vrot.slane %v491, 1
    %v727 = vsel %vm649, %v725, %v726
    %v728 = vrot.slane %v492, 1
    %v729 = vsel %vm649, %v726, %v728
    %v730 = vrot.slane %v499, 1
    %v731 = vrot.slane %v500, 1
    %v732 = vsel %vm649, %v730, %v731
    %v733 = vrot.slane %v501, 1
    %v734 = vsel %vm649, %v731, %v733
    %v735 = vrot.slane %v502, 1
    %v736 = vrot.slane %v503, 1
    %v737 = vsel %vm649, %v735, %v736
    %v738 = vrot.slane %v504, 1
    %v739 = vsel %vm649, %v736, %v738
    %v740 = vrot.slane %v505, 1
    %v741 = vrot.slane %v506, 1
    %v742 = vsel %vm649, %v740, %v741
    %v743 = vrot.slane %v507, 1
    %v744 = vsel %vm649, %v741, %v743
    %v745 = vrot.slane %v508, 1
    %v746 = vrot.slane %v509, 1
    %v747 = vsel %vm649, %v745, %v746
    %v748 = vrot.slane %v510, 1
    %v749 = vsel %vm649, %v746, %v748
    %v750 = vrot.slane %v511, 1
    %v751 = vrot.slane %v512, 1
    %v752 = vsel %vm649, %v750, %v751
    %v753 = vrot.slane %v513, 1
    %v754 = vsel %vm649, %v751, %v753
    %v755 = vrot.slane %v514, 1
    %v756 = vrot.slane %v515, 1
    %v757 = vsel %vm649, %v755, %v756
    %v758 = vrot.slane %v516, 1
    %v759 = vsel %vm649, %v756, %v758
    %v760 = vrot.slane %v517, 1
    %v761 = vrot.slane %v518, 1
    %v762 = vsel %vm649, %v760, %v761
    %v763 = vrot.slane %v519, 1
    %v764 = vsel %vm649, %v761, %v763
    %v765 = vrot.slane %v520, 1
    %v766 = vrot.slane %v521, 1
    %v767 = vsel %vm649, %v765, %v766
    %v768 = vrot.slane %v522, 1
    %v769 = vsel %vm649, %v766, %v768
    %v770 = vrot.slane %v523, 1
    %v771 = vrot.slane %v524, 1
    %v772 = vsel %vm649, %v770, %v771
    %v773 = vrot.slane %v525, 1
    %v774 = vsel %vm649, %v771, %v773
    %v775 = vrot.slane %v526, 1
    %v776 = vrot.slane %v527, 1
    %v777 = vsel %vm649, %v775, %v776
    %v778 = vrot.slane %v528, 1
    %v779 = vsel %vm649, %v776, %v778
    %v780 = vrot.slane %v529, 1
    %v781 = vrot.slane %v530, 1
    %v782 = vsel %vm649, %v780, %v781
    %v783 = vrot.slane %v531, 1
    %v784 = vsel %vm649, %v781, %v783
    %v785 = vrot.slane %v532, 1
    %v786 = vrot.slane %v533, 1
    %v787 = vsel %vm649, %v785, %v786
    %v788 = vrot.slane %v534, 1
    %v789 = vsel %vm649, %v786, %v788
    %v790 = vrot.slane %v535, 1
    %v791 = vrot.slane %v536, 1
    %v792 = vsel %vm649, %v790, %v791
    %v793 = vrot.slane %v537, 1
    %v794 = vsel %vm649, %v791, %v793
    %v795 = vrot.slane %v538, 1
    %v796 = vrot.slane %v539, 1
    %v797 = vsel %vm649, %v795, %v796
    %v798 = vrot.slane %v540, 1
    %v799 = vsel %vm649, %v796, %v798
    %v800 = vrot.slane %v541, 1
    %v801 = vrot.slane %v542, 1
    %v802 = vsel %vm649, %v800, %v801
    %v803 = vrot.slane %v543, 1
    %v804 = vsel %vm649, %v801, %v803
    %v805 = vrot.slane %v544, 1
    %v806 = vrot.slane %v545, 1
    %v807 = vsel %vm649, %v805, %v806
    %v808 = vrot.slane %v546, 1
    %v809 = vsel %vm649, %v806, %v808
    %810 = vrot.lane.b32.xlu0 %v652, 3
    %v811 = vpop.permute.xlu0 %810
    %812 = vrot.lane.b32.xlu0 %v654, 3
    %v813 = vpop.permute.xlu0 %812
    %814 = vrot.lane.b32.xlu0 %v657, 3
    %v815 = vpop.permute.xlu0 %814
    %816 = vrot.lane.b32.xlu0 %v659, 3
    %v817 = vpop.permute.xlu0 %816
    %818 = vrot.lane.b32.xlu0 %v662, 3
    %v819 = vpop.permute.xlu0 %818
    %820 = vrot.lane.b32.xlu0 %v664, 3
    %v821 = vpop.permute.xlu0 %820
    %822 = vrot.lane.b32.xlu0 %v667, 3
    %v823 = vpop.permute.xlu0 %822
    %824 = vrot.lane.b32.xlu0 %v669, 3
    %v825 = vpop.permute.xlu0 %824
    %826 = vrot.lane.b32.xlu0 %v672, 3
    %v827 = vpop.permute.xlu0 %826
    %828 = vrot.lane.b32.xlu0 %v674, 3
    %v829 = vpop.permute.xlu0 %828
    %830 = vrot.lane.b32.xlu0 %v677, 3
    %v831 = vpop.permute.xlu0 %830
    %832 = vrot.lane.b32.xlu0 %v679, 3
    %v833 = vpop.permute.xlu0 %832
    %834 = vrot.lane.b32.xlu0 %v682, 3
    %v835 = vpop.permute.xlu0 %834
    %836 = vrot.lane.b32.xlu0 %v684, 3
    %v837 = vpop.permute.xlu0 %836
    %838 = vrot.lane.b32.xlu0 %v687, 3
    %v839 = vpop.permute.xlu0 %838
    %840 = vrot.lane.b32.xlu0 %v689, 3
    %v841 = vpop.permute.xlu0 %840
    %842 = vrot.lane.b32.xlu0 %v692, 3
    %v843 = vpop.permute.xlu0 %842
    %844 = vrot.lane.b32.xlu0 %v694, 3
    %v845 = vpop.permute.xlu0 %844
    %846 = vrot.lane.b32.xlu0 %v697, 3
    %v847 = vpop.permute.xlu0 %846
    %848 = vrot.lane.b32.xlu0 %v699, 3
    %v849 = vpop.permute.xlu0 %848
    %850 = vrot.lane.b32.xlu0 %v702, 3
    %v851 = vpop.permute.xlu0 %850
    %852 = vrot.lane.b32.xlu0 %v704, 3
    %v853 = vpop.permute.xlu0 %852
    %854 = vrot.lane.b32.xlu0 %v707, 3
    %v855 = vpop.permute.xlu0 %854
    %856 = vrot.lane.b32.xlu0 %v709, 3
    %v857 = vpop.permute.xlu0 %856
    %858 = vrot.lane.b32.xlu0 %v712, 3
    %v859 = vpop.permute.xlu0 %858
    %860 = vrot.lane.b32.xlu0 %v714, 3
    %v861 = vpop.permute.xlu0 %860
    %862 = vrot.lane.b32.xlu0 %v717, 3
    %v863 = vpop.permute.xlu0 %862
    %864 = vrot.lane.b32.xlu0 %v719, 3
    %v865 = vpop.permute.xlu0 %864
    %866 = vrot.lane.b32.xlu0 %v722, 3
    %v867 = vpop.permute.xlu0 %866
    %868 = vrot.lane.b32.xlu0 %v724, 3
    %v869 = vpop.permute.xlu0 %868
    %870 = vrot.lane.b32.xlu0 %v727, 3
    %v871 = vpop.permute.xlu0 %870
    %872 = vrot.lane.b32.xlu0 %v729, 3
    %v873 = vpop.permute.xlu0 %872
    %874 = vrot.lane.b32.xlu0 %v732, 3
    %v875 = vpop.permute.xlu0 %874
    %876 = vrot.lane.b32.xlu0 %v734, 3
    %v877 = vpop.permute.xlu0 %876
    %878 = vrot.lane.b32.xlu0 %v737, 3
    %v879 = vpop.permute.xlu0 %878
    %880 = vrot.lane.b32.xlu0 %v739, 3
    %v881 = vpop.permute.xlu0 %880
    %882 = vrot.lane.b32.xlu0 %v742, 3
    %v883 = vpop.permute.xlu0 %882
    %884 = vrot.lane.b32.xlu0 %v744, 3
    %v885 = vpop.permute.xlu0 %884
    %886 = vrot.lane.b32.xlu0 %v747, 3
    %v887 = vpop.permute.xlu0 %886
    %888 = vrot.lane.b32.xlu0 %v749, 3
    %v889 = vpop.permute.xlu0 %888
    %890 = vrot.lane.b32.xlu0 %v752, 3
    %v891 = vpop.permute.xlu0 %890
    %892 = vrot.lane.b32.xlu0 %v754, 3
    %v893 = vpop.permute.xlu0 %892
    %894 = vrot.lane.b32.xlu0 %v757, 3
    %v895 = vpop.permute.xlu0 %894
    %896 = vrot.lane.b32.xlu0 %v759, 3
    %v897 = vpop.permute.xlu0 %896
    %898 = vrot.lane.b32.xlu0 %v762, 3
    %v899 = vpop.permute.xlu0 %898
    %900 = vrot.lane.b32.xlu0 %v764, 3
    %v901 = vpop.permute.xlu0 %900
    %902 = vrot.lane.b32.xlu0 %v767, 3
    %v903 = vpop.permute.xlu0 %902
    %904 = vrot.lane.b32.xlu0 %v769, 3
    %v905 = vpop.permute.xlu0 %904
    %906 = vrot.lane.b32.xlu0 %v772, 3
    %v907 = vpop.permute.xlu0 %906
    %908 = vrot.lane.b32.xlu0 %v774, 3
    %v909 = vpop.permute.xlu0 %908
    %910 = vrot.lane.b32.xlu0 %v777, 3
    %v911 = vpop.permute.xlu0 %910
    %912 = vrot.lane.b32.xlu0 %v779, 3
    %v913 = vpop.permute.xlu0 %912
    %914 = vrot.lane.b32.xlu0 %v782, 3
    %v915 = vpop.permute.xlu0 %914
    %916 = vrot.lane.b32.xlu0 %v784, 3
    %v917 = vpop.permute.xlu0 %916
    %918 = vrot.lane.b32.xlu0 %v787, 3
    %v919 = vpop.permute.xlu0 %918
    %920 = vrot.lane.b32.xlu0 %v789, 3
    %v921 = vpop.permute.xlu0 %920
    %922 = vrot.lane.b32.xlu0 %v792, 3
    %v923 = vpop.permute.xlu0 %922
    %924 = vrot.lane.b32.xlu0 %v794, 3
    %v925 = vpop.permute.xlu0 %924
    %926 = vrot.lane.b32.xlu0 %v797, 3
    %v927 = vpop.permute.xlu0 %926
    %928 = vrot.lane.b32.xlu0 %v799, 3
    %v929 = vpop.permute.xlu0 %928
    %930 = vrot.lane.b32.xlu0 %v802, 3
    %v931 = vpop.permute.xlu0 %930
    %932 = vrot.lane.b32.xlu0 %v804, 3
    %v933 = vpop.permute.xlu0 %932
    %934 = vrot.lane.b32.xlu0 %v807, 3
    %v935 = vpop.permute.xlu0 %934
    %936 = vrot.lane.b32.xlu0 %v809, 3
    %v937 = vpop.permute.xlu0 %936
    %vm1002 = vcmask 1045504
    %v1003 = vrot.slane %v445, 2
    %v1004 = vrot.slane %v446, 2
    %v1005 = vsel %vm1002, %v1003, %v1004
    %v1006 = vrot.slane %v447, 2
    %v1007 = vsel %vm1002, %v1004, %v1006
    %v1008 = vrot.slane %v448, 2
    %v1009 = vrot.slane %v449, 2
    %v1010 = vsel %vm1002, %v1008, %v1009
    %v1011 = vrot.slane %v450, 2
    %v1012 = vsel %vm1002, %v1009, %v1011
    %v1013 = vrot.slane %v451, 2
    %v1014 = vrot.slane %v452, 2
    %v1015 = vsel %vm1002, %v1013, %v1014
    %v1016 = vrot.slane %v453, 2
    %v1017 = vsel %vm1002, %v1014, %v1016
    %v1018 = vrot.slane %v454, 2
    %v1019 = vrot.slane %v455, 2
    %v1020 = vsel %vm1002, %v1018, %v1019
    %v1021 = vrot.slane %v456, 2
    %v1022 = vsel %vm1002, %v1019, %v1021
    %v1023 = vrot.slane %v457, 2
    %v1024 = vrot.slane %v458, 2
    %v1025 = vsel %vm1002, %v1023, %v1024
    %v1026 = vrot.slane %v459, 2
    %v1027 = vsel %vm1002, %v1024, %v1026
    %v1028 = vrot.slane %v460, 2
    %v1029 = vrot.slane %v461, 2
    %v1030 = vsel %vm1002, %v1028, %v1029
    %v1031 = vrot.slane %v462, 2
    %v1032 = vsel %vm1002, %v1029, %v1031
    %v1033 = vrot.slane %v463, 2
    %v1034 = vrot.slane %v464, 2
    %v1035 = vsel %vm1002, %v1033, %v1034
    %v1036 = vrot.slane %v465, 2
    %v1037 = vsel %vm1002, %v1034, %v1036
    %v1038 = vrot.slane %v466, 2
    %v1039 = vrot.slane %v467, 2
    %v1040 = vsel %vm1002, %v1038, %v1039
    %v1041 = vrot.slane %v468, 2
    %v1042 = vsel %vm1002, %v1039, %v1041
    %v1043 = vrot.slane %v469, 2
    %v1044 = vrot.slane %v470, 2
    %v1045 = vsel %vm1002, %v1043, %v1044
    %v1046 = vrot.slane %v471, 2
    %v1047 = vsel %vm1002, %v1044, %v1046
    %v1048 = vrot.slane %v472, 2
    %v1049 = vrot.slane %v473, 2
    %v1050 = vsel %vm1002, %v1048, %v1049
    %v1051 = vrot.slane %v474, 2
    %v1052 = vsel %vm1002, %v1049, %v1051
    %v1053 = vrot.slane %v475, 2
    %v1054 = vrot.slane %v476, 2
    %v1055 = vsel %vm1002, %v1053, %v1054
    %v1056 = vrot.slane %v477, 2
    %v1057 = vsel %vm1002, %v1054, %v1056
    %v1058 = vrot.slane %v478, 2
    %v1059 = vrot.slane %v479, 2
    %v1060 = vsel %vm1002, %v1058, %v1059
    %v1061 = vrot.slane %v480, 2
    %v1062 = vsel %vm1002, %v1059, %v1061
    %v1063 = vrot.slane %v481, 2
    %v1064 = vrot.slane %v482, 2
    %v1065 = vsel %vm1002, %v1063, %v1064
    %v1066 = vrot.slane %v483, 2
    %v1067 = vsel %vm1002, %v1064, %v1066
    %v1068 = vrot.slane %v484, 2
    %v1069 = vrot.slane %v485, 2
    %v1070 = vsel %vm1002, %v1068, %v1069
    %v1071 = vrot.slane %v486, 2
    %v1072 = vsel %vm1002, %v1069, %v1071
    %v1073 = vrot.slane %v487, 2
    %v1074 = vrot.slane %v488, 2
    %v1075 = vsel %vm1002, %v1073, %v1074
    %v1076 = vrot.slane %v489, 2
    %v1077 = vsel %vm1002, %v1074, %v1076
    %v1078 = vrot.slane %v490, 2
    %v1079 = vrot.slane %v491, 2
    %v1080 = vsel %vm1002, %v1078, %v1079
    %v1081 = vrot.slane %v492, 2
    %v1082 = vsel %vm1002, %v1079, %v1081
    %v1083 = vrot.slane %v499, 2
    %v1084 = vrot.slane %v500, 2
    %v1085 = vsel %vm1002, %v1083, %v1084
    %v1086 = vrot.slane %v501, 2
    %v1087 = vsel %vm1002, %v1084, %v1086
    %v1088 = vrot.slane %v502, 2
    %v1089 = vrot.slane %v503, 2
    %v1090 = vsel %vm1002, %v1088, %v1089
    %v1091 = vrot.slane %v504, 2
    %v1092 = vsel %vm1002, %v1089, %v1091
    %v1093 = vrot.slane %v505, 2
    %v1094 = vrot.slane %v506, 2
    %v1095 = vsel %vm1002, %v1093, %v1094
    %v1096 = vrot.slane %v507, 2
    %v1097 = vsel %vm1002, %v1094, %v1096
    %v1098 = vrot.slane %v508, 2
    %v1099 = vrot.slane %v509, 2
    %v1100 = vsel %vm1002, %v1098, %v1099
    %v1101 = vrot.slane %v510, 2
    %v1102 = vsel %vm1002, %v1099, %v1101
    %v1103 = vrot.slane %v511, 2
    %v1104 = vrot.slane %v512, 2
    %v1105 = vsel %vm1002, %v1103, %v1104
    %v1106 = vrot.slane %v513, 2
    %v1107 = vsel %vm1002, %v1104, %v1106
    %v1108 = vrot.slane %v514, 2
    %v1109 = vrot.slane %v515, 2
    %v1110 = vsel %vm1002, %v1108, %v1109
    %v1111 = vrot.slane %v516, 2
    %v1112 = vsel %vm1002, %v1109, %v1111
    %v1113 = vrot.slane %v517, 2
    %v1114 = vrot.slane %v518, 2
    %v1115 = vsel %vm1002, %v1113, %v1114
    %v1116 = vrot.slane %v519, 2
    %v1117 = vsel %vm1002, %v1114, %v1116
    %v1118 = vrot.slane %v520, 2
    %v1119 = vrot.slane %v521, 2
    %v1120 = vsel %vm1002, %v1118, %v1119
    %v1121 = vrot.slane %v522, 2
    %v1122 = vsel %vm1002, %v1119, %v1121
    %v1123 = vrot.slane %v523, 2
    %v1124 = vrot.slane %v524, 2
    %v1125 = vsel %vm1002, %v1123, %v1124
    %v1126 = vrot.slane %v525, 2
    %v1127 = vsel %vm1002, %v1124, %v1126
    %v1128 = vrot.slane %v526, 2
    %v1129 = vrot.slane %v527, 2
    %v1130 = vsel %vm1002, %v1128, %v1129
    %v1131 = vrot.slane %v528, 2
    %v1132 = vsel %vm1002, %v1129, %v1131
    %v1133 = vrot.slane %v529, 2
    %v1134 = vrot.slane %v530, 2
    %v1135 = vsel %vm1002, %v1133, %v1134
    %v1136 = vrot.slane %v531, 2
    %v1137 = vsel %vm1002, %v1134, %v1136
    %v1138 = vrot.slane %v532, 2
    %v1139 = vrot.slane %v533, 2
    %v1140 = vsel %vm1002, %v1138, %v1139
    %v1141 = vrot.slane %v534, 2
    %v1142 = vsel %vm1002, %v1139, %v1141
    %v1143 = vrot.slane %v535, 2
    %v1144 = vrot.slane %v536, 2
    %v1145 = vsel %vm1002, %v1143, %v1144
    %v1146 = vrot.slane %v537, 2
    %v1147 = vsel %vm1002, %v1144, %v1146
    %v1148 = vrot.slane %v538, 2
    %v1149 = vrot.slane %v539, 2
    %v1150 = vsel %vm1002, %v1148, %v1149
    %v1151 = vrot.slane %v540, 2
    %v1152 = vsel %vm1002, %v1149, %v1151
    %v1153 = vrot.slane %v541, 2
    %v1154 = vrot.slane %v542, 2
    %v1155 = vsel %vm1002, %v1153, %v1154
    %v1156 = vrot.slane %v543, 2
    %v1157 = vsel %vm1002, %v1154, %v1156
    %v1158 = vrot.slane %v544, 2
    %v1159 = vrot.slane %v545, 2
    %v1160 = vsel %vm1002, %v1158, %v1159
    %v1161 = vrot.slane %v546, 2
    %v1162 = vsel %vm1002, %v1159, %v1161
    %1163 = vrot.lane.b32.xlu0 %v1005, 6
    %v1164 = vpop.permute.xlu0 %1163
    %1165 = vrot.lane.b32.xlu0 %v1007, 6
    %v1166 = vpop.permute.xlu0 %1165
    %1167 = vrot.lane.b32.xlu0 %v1010, 6
    %v1168 = vpop.permute.xlu0 %1167
    %1169 = vrot.lane.b32.xlu0 %v1012, 6
    %v1170 = vpop.permute.xlu0 %1169
    %1171 = vrot.lane.b32.xlu0 %v1015, 6
    %v1172 = vpop.permute.xlu0 %1171
    %1173 = vrot.lane.b32.xlu0 %v1017, 6
    %v1174 = vpop.permute.xlu0 %1173
    %1175 = vrot.lane.b32.xlu0 %v1020, 6
    %v1176 = vpop.permute.xlu0 %1175
    %1177 = vrot.lane.b32.xlu0 %v1022, 6
    %v1178 = vpop.permute.xlu0 %1177
    %1179 = vrot.lane.b32.xlu0 %v1025, 6
    %v1180 = vpop.permute.xlu0 %1179
    %1181 = vrot.lane.b32.xlu0 %v1027, 6
    %v1182 = vpop.permute.xlu0 %1181
    %1183 = vrot.lane.b32.xlu0 %v1030, 6
    %v1184 = vpop.permute.xlu0 %1183
    %1185 = vrot.lane.b32.xlu0 %v1032, 6
    %v1186 = vpop.permute.xlu0 %1185
    %1187 = vrot.lane.b32.xlu0 %v1035, 6
    %v1188 = vpop.permute.xlu0 %1187
    %1189 = vrot.lane.b32.xlu0 %v1037, 6
    %v1190 = vpop.permute.xlu0 %1189
    %1191 = vrot.lane.b32.xlu0 %v1040, 6
    %v1192 = vpop.permute.xlu0 %1191
    %1193 = vrot.lane.b32.xlu0 %v1042, 6
    %v1194 = vpop.permute.xlu0 %1193
    %1195 = vrot.lane.b32.xlu0 %v1045, 6
    %v1196 = vpop.permute.xlu0 %1195
    %1197 = vrot.lane.b32.xlu0 %v1047, 6
    %v1198 = vpop.permute.xlu0 %1197
    %1199 = vrot.lane.b32.xlu0 %v1050, 6
    %v1200 = vpop.permute.xlu0 %1199
    %1201 = vrot.lane.b32.xlu0 %v1052, 6
    %v1202 = vpop.permute.xlu0 %1201
    %1203 = vrot.lane.b32.xlu0 %v1055, 6
    %v1204 = vpop.permute.xlu0 %1203
    %1205 = vrot.lane.b32.xlu0 %v1057, 6
    %v1206 = vpop.permute.xlu0 %1205
    %1207 = vrot.lane.b32.xlu0 %v1060, 6
    %v1208 = vpop.permute.xlu0 %1207
    %1209 = vrot.lane.b32.xlu0 %v1062, 6
    %v1210 = vpop.permute.xlu0 %1209
    %1211 = vrot.lane.b32.xlu0 %v1065, 6
    %v1212 = vpop.permute.xlu0 %1211
    %1213 = vrot.lane.b32.xlu0 %v1067, 6
    %v1214 = vpop.permute.xlu0 %1213
    %1215 = vrot.lane.b32.xlu0 %v1070, 6
    %v1216 = vpop.permute.xlu0 %1215
    %1217 = vrot.lane.b32.xlu0 %v1072, 6
    %v1218 = vpop.permute.xlu0 %1217
    %1219 = vrot.lane.b32.xlu0 %v1075, 6
    %v1220 = vpop.permute.xlu0 %1219
    %1221 = vrot.lane.b32.xlu0 %v1077, 6
    %v1222 = vpop.permute.xlu0 %1221
    %1223 = vrot.lane.b32.xlu0 %v1080, 6
    %v1224 = vpop.permute.xlu0 %1223
    %1225 = vrot.lane.b32.xlu0 %v1082, 6
    %v1226 = vpop.permute.xlu0 %1225
    %1227 = vrot.lane.b32.xlu0 %v1085, 6
    %v1228 = vpop.permute.xlu0 %1227
    %1229 = vrot.lane.b32.xlu0 %v1087, 6
    %v1230 = vpop.permute.xlu0 %1229
    %1231 = vrot.lane.b32.xlu0 %v1090, 6
    %v1232 = vpop.permute.xlu0 %1231
    %1233 = vrot.lane.b32.xlu0 %v1092, 6
    %v1234 = vpop.permute.xlu0 %1233
    %1235 = vrot.lane.b32.xlu0 %v1095, 6
    %v1236 = vpop.permute.xlu0 %1235
    %1237 = vrot.lane.b32.xlu0 %v1097, 6
    %v1238 = vpop.permute.xlu0 %1237
    %1239 = vrot.lane.b32.xlu0 %v1100, 6
    %v1240 = vpop.permute.xlu0 %1239
    %1241 = vrot.lane.b32.xlu0 %v1102, 6
    %v1242 = vpop.permute.xlu0 %1241
    %1243 = vrot.lane.b32.xlu0 %v1105, 6
    %v1244 = vpop.permute.xlu0 %1243
    %1245 = vrot.lane.b32.xlu0 %v1107, 6
    %v1246 = vpop.permute.xlu0 %1245
    %1247 = vrot.lane.b32.xlu0 %v1110, 6
    %v1248 = vpop.permute.xlu0 %1247
    %1249 = vrot.lane.b32.xlu0 %v1112, 6
    %v1250 = vpop.permute.xlu0 %1249
    %1251 = vrot.lane.b32.xlu0 %v1115, 6
    %v1252 = vpop.permute.xlu0 %1251
    %1253 = vrot.lane.b32.xlu0 %v1117, 6
    %v1254 = vpop.permute.xlu0 %1253
    %1255 = vrot.lane.b32.xlu0 %v1120, 6
    %v1256 = vpop.permute.xlu0 %1255
    %1257 = vrot.lane.b32.xlu0 %v1122, 6
    %v1258 = vpop.permute.xlu0 %1257
    %1259 = vrot.lane.b32.xlu0 %v1125, 6
    %v1260 = vpop.permute.xlu0 %1259
    %1261 = vrot.lane.b32.xlu0 %v1127, 6
    %v1262 = vpop.permute.xlu0 %1261
    %1263 = vrot.lane.b32.xlu0 %v1130, 6
    %v1264 = vpop.permute.xlu0 %1263
    %1265 = vrot.lane.b32.xlu0 %v1132, 6
    %v1266 = vpop.permute.xlu0 %1265
    %1267 = vrot.lane.b32.xlu0 %v1135, 6
    %v1268 = vpop.permute.xlu0 %1267
    %1269 = vrot.lane.b32.xlu0 %v1137, 6
    %v1270 = vpop.permute.xlu0 %1269
    %1271 = vrot.lane.b32.xlu0 %v1140, 6
    %v1272 = vpop.permute.xlu0 %1271
    %1273 = vrot.lane.b32.xlu0 %v1142, 6
    %v1274 = vpop.permute.xlu0 %1273
    %1275 = vrot.lane.b32.xlu0 %v1145, 6
    %v1276 = vpop.permute.xlu0 %1275
    %1277 = vrot.lane.b32.xlu0 %v1147, 6
    %v1278 = vpop.permute.xlu0 %1277
    %1279 = vrot.lane.b32.xlu0 %v1150, 6
    %v1280 = vpop.permute.xlu0 %1279
    %1281 = vrot.lane.b32.xlu0 %v1152, 6
    %v1282 = vpop.permute.xlu0 %1281
    %1283 = vrot.lane.b32.xlu0 %v1155, 6
    %v1284 = vpop.permute.xlu0 %1283
    %1285 = vrot.lane.b32.xlu0 %v1157, 6
    %v1286 = vpop.permute.xlu0 %1285
    %1287 = vrot.lane.b32.xlu0 %v1160, 6
    %v1288 = vpop.permute.xlu0 %1287
    %1289 = vrot.lane.b32.xlu0 %v1162, 6
    %v1290 = vpop.permute.xlu0 %1289
    %1359 = vrot.lane.b32.xlu0 %v448, 9
    %v1360 = vpop.permute.xlu0 %1359
    %1361 = vrot.lane.b32.xlu0 %v449, 9
    %v1362 = vpop.permute.xlu0 %1361
    %1363 = vrot.lane.b32.xlu0 %v451, 9
    %v1364 = vpop.permute.xlu0 %1363
    %1365 = vrot.lane.b32.xlu0 %v452, 9
    %v1366 = vpop.permute.xlu0 %1365
    %1367 = vrot.lane.b32.xlu0 %v454, 9
    %v1368 = vpop.permute.xlu0 %1367
    %1369 = vrot.lane.b32.xlu0 %v455, 9
    %v1370 = vpop.permute.xlu0 %1369
    %1371 = vrot.lane.b32.xlu0 %v457, 9
    %v1372 = vpop.permute.xlu0 %1371
    %1373 = vrot.lane.b32.xlu0 %v458, 9
    %v1374 = vpop.permute.xlu0 %1373
    %1375 = vrot.lane.b32.xlu0 %v460, 9
    %v1376 = vpop.permute.xlu0 %1375
    %1377 = vrot.lane.b32.xlu0 %v461, 9
    %v1378 = vpop.permute.xlu0 %1377
    %1379 = vrot.lane.b32.xlu0 %v463, 9
    %v1380 = vpop.permute.xlu0 %1379
    %1381 = vrot.lane.b32.xlu0 %v464, 9
    %v1382 = vpop.permute.xlu0 %1381
    %1383 = vrot.lane.b32.xlu0 %v466, 9
    %v1384 = vpop.permute.xlu0 %1383
    %1385 = vrot.lane.b32.xlu0 %v467, 9
    %v1386 = vpop.permute.xlu0 %1385
    %1387 = vrot.lane.b32.xlu0 %v469, 9
    %v1388 = vpop.permute.xlu0 %1387
    %1389 = vrot.lane.b32.xlu0 %v470, 9
    %v1390 = vpop.permute.xlu0 %1389
    %1391 = vrot.lane.b32.xlu0 %v472, 9
    %v1392 = vpop.permute.xlu0 %1391
    %1393 = vrot.lane.b32.xlu0 %v473, 9
    %v1394 = vpop.permute.xlu0 %1393
    %1395 = vrot.lane.b32.xlu0 %v475, 9
    %v1396 = vpop.permute.xlu0 %1395
    %1397 = vrot.lane.b32.xlu0 %v476, 9
    %v1398 = vpop.permute.xlu0 %1397
    %1399 = vrot.lane.b32.xlu0 %v478, 9
    %v1400 = vpop.permute.xlu0 %1399
    %1401 = vrot.lane.b32.xlu0 %v479, 9
    %v1402 = vpop.permute.xlu0 %1401
    %1403 = vrot.lane.b32.xlu0 %v481, 9
    %v1404 = vpop.permute.xlu0 %1403
    %1405 = vrot.lane.b32.xlu0 %v482, 9
    %v1406 = vpop.permute.xlu0 %1405
    %1407 = vrot.lane.b32.xlu0 %v484, 9
    %v1408 = vpop.permute.xlu0 %1407
    %1409 = vrot.lane.b32.xlu0 %v485, 9
    %v1410 = vpop.permute.xlu0 %1409
    %1411 = vrot.lane.b32.xlu0 %v487, 9
    %v1412 = vpop.permute.xlu0 %1411
    %1413 = vrot.lane.b32.xlu0 %v488, 9
    %v1414 = vpop.permute.xlu0 %1413
    %1415 = vrot.lane.b32.xlu0 %v490, 9
    %v1416 = vpop.permute.xlu0 %1415
    %1417 = vrot.lane.b32.xlu0 %v491, 9
    %v1418 = vpop.permute.xlu0 %1417
    %1419 = vrot.lane.b32.xlu0 %v493, 9
    %v1420 = vpop.permute.xlu0 %1419
    %1421 = vrot.lane.b32.xlu0 %v494, 9
    %v1422 = vpop.permute.xlu0 %1421
    %1423 = vrot.lane.b32.xlu0 %v502, 9
    %v1424 = vpop.permute.xlu0 %1423
    %1425 = vrot.lane.b32.xlu0 %v503, 9
    %v1426 = vpop.permute.xlu0 %1425
    %1427 = vrot.lane.b32.xlu0 %v505, 9
    %v1428 = vpop.permute.xlu0 %1427
    %1429 = vrot.lane.b32.xlu0 %v506, 9
    %v1430 = vpop.permute.xlu0 %1429
    %1431 = vrot.lane.b32.xlu0 %v508, 9
    %v1432 = vpop.permute.xlu0 %1431
    %1433 = vrot.lane.b32.xlu0 %v509, 9
    %v1434 = vpop.permute.xlu0 %1433
    %1435 = vrot.lane.b32.xlu0 %v511, 9
    %v1436 = vpop.permute.xlu0 %1435
    %1437 = vrot.lane.b32.xlu0 %v512, 9
    %v1438 = vpop.permute.xlu0 %1437
    %1439 = vrot.lane.b32.xlu0 %v514, 9
    %v1440 = vpop.permute.xlu0 %1439
    %1441 = vrot.lane.b32.xlu0 %v515, 9
    %v1442 = vpop.permute.xlu0 %1441
    %1443 = vrot.lane.b32.xlu0 %v517, 9
    %v1444 = vpop.permute.xlu0 %1443
    %1445 = vrot.lane.b32.xlu0 %v518, 9
    %v1446 = vpop.permute.xlu0 %1445
    %1447 = vrot.lane.b32.xlu0 %v520, 9
    %v1448 = vpop.permute.xlu0 %1447
    %1449 = vrot.lane.b32.xlu0 %v521, 9
    %v1450 = vpop.permute.xlu0 %1449
    %1451 = vrot.lane.b32.xlu0 %v523, 9
    %v1452 = vpop.permute.xlu0 %1451
    %1453 = vrot.lane.b32.xlu0 %v524, 9
    %v1454 = vpop.permute.xlu0 %1453
    %1455 = vrot.lane.b32.xlu0 %v526, 9
    %v1456 = vpop.permute.xlu0 %1455
    %1457 = vrot.lane.b32.xlu0 %v527, 9
    %v1458 = vpop.permute.xlu0 %1457
    %1459 = vrot.lane.b32.xlu0 %v529, 9
    %v1460 = vpop.permute.xlu0 %1459
    %1461 = vrot.lane.b32.xlu0 %v530, 9
    %v1462 = vpop.permute.xlu0 %1461
    %1463 = vrot.lane.b32.xlu0 %v532, 9
    %v1464 = vpop.permute.xlu0 %1463
    %1465 = vrot.lane.b32.xlu0 %v533, 9
    %v1466 = vpop.permute.xlu0 %1465
    %1467 = vrot.lane.b32.xlu0 %v535, 9
    %v1468 = vpop.permute.xlu0 %1467
    %1469 = vrot.lane.b32.xlu0 %v536, 9
    %v1470 = vpop.permute.xlu0 %1469
    %1471 = vrot.lane.b32.xlu0 %v538, 9
    %v1472 = vpop.permute.xlu0 %1471
    %1473 = vrot.lane.b32.xlu0 %v539, 9
    %v1474 = vpop.permute.xlu0 %1473
    %1475 = vrot.lane.b32.xlu0 %v541, 9
    %v1476 = vpop.permute.xlu0 %1475
    %1477 = vrot.lane.b32.xlu0 %v542, 9
    %v1478 = vpop.permute.xlu0 %1477
    %1479 = vrot.lane.b32.xlu0 %v544, 9
    %v1480 = vpop.permute.xlu0 %1479
    %1481 = vrot.lane.b32.xlu0 %v545, 9
    %v1482 = vpop.permute.xlu0 %1481
    %1483 = vrot.lane.b32.xlu0 %v547, 9
    %v1484 = vpop.permute.xlu0 %1483
    %1485 = vrot.lane.b32.xlu0 %v548, 9
    %v1486 = vpop.permute.xlu0 %1485
    %v1553 = vrot.slane %v493, 1
    %v1554 = vrot.slane %v494, 1
    %v1555 = vsel %vm649, %v1553, %v1554
    %v1556 = vrot.slane %v495, 1
    %v1557 = vsel %vm649, %v1554, %v1556
    %v1558 = vrot.slane %v547, 1
    %v1559 = vrot.slane %v548, 1
    %v1560 = vsel %vm649, %v1558, %v1559
    %v1561 = vrot.slane %v549, 1
    %v1562 = vsel %vm649, %v1559, %v1561
    %1563 = vrot.lane.b32.xlu0 %v657, 12
    %v1564 = vpop.permute.xlu0 %1563
    %1565 = vrot.lane.b32.xlu0 %v659, 12
    %v1566 = vpop.permute.xlu0 %1565
    %1567 = vrot.lane.b32.xlu0 %v662, 12
    %v1568 = vpop.permute.xlu0 %1567
    %1569 = vrot.lane.b32.xlu0 %v664, 12
    %v1570 = vpop.permute.xlu0 %1569
    %1571 = vrot.lane.b32.xlu0 %v667, 12
    %v1572 = vpop.permute.xlu0 %1571
    %1573 = vrot.lane.b32.xlu0 %v669, 12
    %v1574 = vpop.permute.xlu0 %1573
    %1575 = vrot.lane.b32.xlu0 %v672, 12
    %v1576 = vpop.permute.xlu0 %1575
    %1577 = vrot.lane.b32.xlu0 %v674, 12
    %v1578 = vpop.permute.xlu0 %1577
    %1579 = vrot.lane.b32.xlu0 %v677, 12
    %v1580 = vpop.permute.xlu0 %1579
    %1581 = vrot.lane.b32.xlu0 %v679, 12
    %v1582 = vpop.permute.xlu0 %1581
    %1583 = vrot.lane.b32.xlu0 %v682, 12
    %v1584 = vpop.permute.xlu0 %1583
    %1585 = vrot.lane.b32.xlu0 %v684, 12
    %v1586 = vpop.permute.xlu0 %1585
    %1587 = vrot.lane.b32.xlu0 %v687, 12
    %v1588 = vpop.permute.xlu0 %1587
    %1589 = vrot.lane.b32.xlu0 %v689, 12
    %v1590 = vpop.permute.xlu0 %1589
    %1591 = vrot.lane.b32.xlu0 %v692, 12
    %v1592 = vpop.permute.xlu0 %1591
    %1593 = vrot.lane.b32.xlu0 %v694, 12
    %v1594 = vpop.permute.xlu0 %1593
    %1595 = vrot.lane.b32.xlu0 %v697, 12
    %v1596 = vpop.permute.xlu0 %1595
    %1597 = vrot.lane.b32.xlu0 %v699, 12
    %v1598 = vpop.permute.xlu0 %1597
    %1599 = vrot.lane.b32.xlu0 %v702, 12
    %v1600 = vpop.permute.xlu0 %1599
    %1601 = vrot.lane.b32.xlu0 %v704, 12
    %v1602 = vpop.permute.xlu0 %1601
    %1603 = vrot.lane.b32.xlu0 %v707, 12
    %v1604 = vpop.permute.xlu0 %1603
    %1605 = vrot.lane.b32.xlu0 %v709, 12
    %v1606 = vpop.permute.xlu0 %1605
    %1607 = vrot.lane.b32.xlu0 %v712, 12
    %v1608 = vpop.permute.xlu0 %1607
    %1609 = vrot.lane.b32.xlu0 %v714, 12
    %v1610 = vpop.permute.xlu0 %1609
    %1611 = vrot.lane.b32.xlu0 %v717, 12
    %v1612 = vpop.permute.xlu0 %1611
    %1613 = vrot.lane.b32.xlu0 %v719, 12
    %v1614 = vpop.permute.xlu0 %1613
    %1615 = vrot.lane.b32.xlu0 %v722, 12
    %v1616 = vpop.permute.xlu0 %1615
    %1617 = vrot.lane.b32.xlu0 %v724, 12
    %v1618 = vpop.permute.xlu0 %1617
    %1619 = vrot.lane.b32.xlu0 %v727, 12
    %v1620 = vpop.permute.xlu0 %1619
    %1621 = vrot.lane.b32.xlu0 %v729, 12
    %v1622 = vpop.permute.xlu0 %1621
    %1623 = vrot.lane.b32.xlu0 %v1555, 12
    %v1624 = vpop.permute.xlu0 %1623
    %1625 = vrot.lane.b32.xlu0 %v1557, 12
    %v1626 = vpop.permute.xlu0 %1625
    %1627 = vrot.lane.b32.xlu0 %v737, 12
    %v1628 = vpop.permute.xlu0 %1627
    %1629 = vrot.lane.b32.xlu0 %v739, 12
    %v1630 = vpop.permute.xlu0 %1629
    %1631 = vrot.lane.b32.xlu0 %v742, 12
    %v1632 = vpop.permute.xlu0 %1631
    %1633 = vrot.lane.b32.xlu0 %v744, 12
    %v1634 = vpop.permute.xlu0 %1633
    %1635 = vrot.lane.b32.xlu0 %v747, 12
    %v1636 = vpop.permute.xlu0 %1635
    %1637 = vrot.lane.b32.xlu0 %v749, 12
    %v1638 = vpop.permute.xlu0 %1637
    %1639 = vrot.lane.b32.xlu0 %v752, 12
    %v1640 = vpop.permute.xlu0 %1639
    %1641 = vrot.lane.b32.xlu0 %v754, 12
    %v1642 = vpop.permute.xlu0 %1641
    %1643 = vrot.lane.b32.xlu0 %v757, 12
    %v1644 = vpop.permute.xlu0 %1643
    %1645 = vrot.lane.b32.xlu0 %v759, 12
    %v1646 = vpop.permute.xlu0 %1645
    %1647 = vrot.lane.b32.xlu0 %v762, 12
    %v1648 = vpop.permute.xlu0 %1647
    %1649 = vrot.lane.b32.xlu0 %v764, 12
    %v1650 = vpop.permute.xlu0 %1649
    %1651 = vrot.lane.b32.xlu0 %v767, 12
    %v1652 = vpop.permute.xlu0 %1651
    %1653 = vrot.lane.b32.xlu0 %v769, 12
    %v1654 = vpop.permute.xlu0 %1653
    %1655 = vrot.lane.b32.xlu0 %v772, 12
    %v1656 = vpop.permute.xlu0 %1655
    %1657 = vrot.lane.b32.xlu0 %v774, 12
    %v1658 = vpop.permute.xlu0 %1657
    %1659 = vrot.lane.b32.xlu0 %v777, 12
    %v1660 = vpop.permute.xlu0 %1659
    %1661 = vrot.lane.b32.xlu0 %v779, 12
    %v1662 = vpop.permute.xlu0 %1661
    %1663 = vrot.lane.b32.xlu0 %v782, 12
    %v1664 = vpop.permute.xlu0 %1663
    %1665 = vrot.lane.b32.xlu0 %v784, 12
    %v1666 = vpop.permute.xlu0 %1665
    %1667 = vrot.lane.b32.xlu0 %v787, 12
    %v1668 = vpop.permute.xlu0 %1667
    %1669 = vrot.lane.b32.xlu0 %v789, 12
    %v1670 = vpop.permute.xlu0 %1669
    %1671 = vrot.lane.b32.xlu0 %v792, 12
    %v1672 = vpop.permute.xlu0 %1671
    %1673 = vrot.lane.b32.xlu0 %v794, 12
    %v1674 = vpop.permute.xlu0 %1673
    %1675 = vrot.lane.b32.xlu0 %v797, 12
    %v1676 = vpop.permute.xlu0 %1675
    %1677 = vrot.lane.b32.xlu0 %v799, 12
    %v1678 = vpop.permute.xlu0 %1677
    %1679 = vrot.lane.b32.xlu0 %v802, 12
    %v1680 = vpop.permute.xlu0 %1679
    %1681 = vrot.lane.b32.xlu0 %v804, 12
    %v1682 = vpop.permute.xlu0 %1681
    %1683 = vrot.lane.b32.xlu0 %v807, 12
    %v1684 = vpop.permute.xlu0 %1683
    %1685 = vrot.lane.b32.xlu0 %v809, 12
    %v1686 = vpop.permute.xlu0 %1685
    %1687 = vrot.lane.b32.xlu0 %v1560, 12
    %v1688 = vpop.permute.xlu0 %1687
    %1689 = vrot.lane.b32.xlu0 %v1562, 12
    %v1690 = vpop.permute.xlu0 %1689
    %v1755 = vrot.slane %v493, 2
    %v1756 = vrot.slane %v494, 2
    %v1757 = vsel %vm1002, %v1755, %v1756
    %v1758 = vrot.slane %v495, 2
    %v1759 = vsel %vm1002, %v1756, %v1758
    %v1760 = vrot.slane %v547, 2
    %v1761 = vrot.slane %v548, 2
    %v1762 = vsel %vm1002, %v1760, %v1761
    %v1763 = vrot.slane %v549, 2
    %v1764 = vsel %vm1002, %v1761, %v1763
    %1765 = vrot.lane.b32.xlu0 %v1010, 15
    %v1766 = vpop.permute.xlu0 %1765
    %1767 = vrot.lane.b32.xlu0 %v1012, 15
    %v1768 = vpop.permute.xlu0 %1767
    %1769 = vrot.lane.b32.xlu0 %v1015, 15
    %v1770 = vpop.permute.xlu0 %1769
    %1771 = vrot.lane.b32.xlu0 %v1017, 15
    %v1772 = vpop.permute.xlu0 %1771
    %1773 = vrot.lane.b32.xlu0 %v1020, 15
    %v1774 = vpop.permute.xlu0 %1773
    %1775 = vrot.lane.b32.xlu0 %v1022, 15
    %v1776 = vpop.permute.xlu0 %1775
    %1777 = vrot.lane.b32.xlu0 %v1025, 15
    %v1778 = vpop.permute.xlu0 %1777
    %1779 = vrot.lane.b32.xlu0 %v1027, 15
    %v1780 = vpop.permute.xlu0 %1779
    %1781 = vrot.lane.b32.xlu0 %v1030, 15
    %v1782 = vpop.permute.xlu0 %1781
    %1783 = vrot.lane.b32.xlu0 %v1032, 15
    %v1784 = vpop.permute.xlu0 %1783
    %1785 = vrot.lane.b32.xlu0 %v1035, 15
    %v1786 = vpop.permute.xlu0 %1785
    %1787 = vrot.lane.b32.xlu0 %v1037, 15
    %v1788 = vpop.permute.xlu0 %1787
    %1789 = vrot.lane.b32.xlu0 %v1040, 15
    %v1790 = vpop.permute.xlu0 %1789
    %1791 = vrot.lane.b32.xlu0 %v1042, 15
    %v1792 = vpop.permute.xlu0 %1791
    %1793 = vrot.lane.b32.xlu0 %v1045, 15
    %v1794 = vpop.permute.xlu0 %1793
    %1795 = vrot.lane.b32.xlu0 %v1047, 15
    %v1796 = vpop.permute.xlu0 %1795
    %1797 = vrot.lane.b32.xlu0 %v1050, 15
    %v1798 = vpop.permute.xlu0 %1797
    %1799 = vrot.lane.b32.xlu0 %v1052, 15
    %v1800 = vpop.permute.xlu0 %1799
    %1801 = vrot.lane.b32.xlu0 %v1055, 15
    %v1802 = vpop.permute.xlu0 %1801
    %1803 = vrot.lane.b32.xlu0 %v1057, 15
    %v1804 = vpop.permute.xlu0 %1803
    %1805 = vrot.lane.b32.xlu0 %v1060, 15
    %v1806 = vpop.permute.xlu0 %1805
    %1807 = vrot.lane.b32.xlu0 %v1062, 15
    %v1808 = vpop.permute.xlu0 %1807
    %1809 = vrot.lane.b32.xlu0 %v1065, 15
    %v1810 = vpop.permute.xlu0 %1809
    %1811 = vrot.lane.b32.xlu0 %v1067, 15
    %v1812 = vpop.permute.xlu0 %1811
    %1813 = vrot.lane.b32.xlu0 %v1070, 15
    %v1814 = vpop.permute.xlu0 %1813
    %1815 = vrot.lane.b32.xlu0 %v1072, 15
    %v1816 = vpop.permute.xlu0 %1815
    %1817 = vrot.lane.b32.xlu0 %v1075, 15
    %v1818 = vpop.permute.xlu0 %1817
    %1819 = vrot.lane.b32.xlu0 %v1077, 15
    %v1820 = vpop.permute.xlu0 %1819
    %1821 = vrot.lane.b32.xlu0 %v1080, 15
    %v1822 = vpop.permute.xlu0 %1821
    %1823 = vrot.lane.b32.xlu0 %v1082, 15
    %v1824 = vpop.permute.xlu0 %1823
    %1825 = vrot.lane.b32.xlu0 %v1757, 15
    %v1826 = vpop.permute.xlu0 %1825
    %1827 = vrot.lane.b32.xlu0 %v1759, 15
    %v1828 = vpop.permute.xlu0 %1827
    %1829 = vrot.lane.b32.xlu0 %v1090, 15
    %v1830 = vpop.permute.xlu0 %1829
    %1831 = vrot.lane.b32.xlu0 %v1092, 15
    %v1832 = vpop.permute.xlu0 %1831
    %1833 = vrot.lane.b32.xlu0 %v1095, 15
    %v1834 = vpop.permute.xlu0 %1833
    %1835 = vrot.lane.b32.xlu0 %v1097, 15
    %v1836 = vpop.permute.xlu0 %1835
    %1837 = vrot.lane.b32.xlu0 %v1100, 15
    %v1838 = vpop.permute.xlu0 %1837
    %1839 = vrot.lane.b32.xlu0 %v1102, 15
    %v1840 = vpop.permute.xlu0 %1839
    %1841 = vrot.lane.b32.xlu0 %v1105, 15
    %v1842 = vpop.permute.xlu0 %1841
    %1843 = vrot.lane.b32.xlu0 %v1107, 15
    %v1844 = vpop.permute.xlu0 %1843
    %1845 = vrot.lane.b32.xlu0 %v1110, 15
    %v1846 = vpop.permute.xlu0 %1845
    %1847 = vrot.lane.b32.xlu0 %v1112, 15
    %v1848 = vpop.permute.xlu0 %1847
    %1849 = vrot.lane.b32.xlu0 %v1115, 15
    %v1850 = vpop.permute.xlu0 %1849
    %1851 = vrot.lane.b32.xlu0 %v1117, 15
    %v1852 = vpop.permute.xlu0 %1851
    %1853 = vrot.lane.b32.xlu0 %v1120, 15
    %v1854 = vpop.permute.xlu0 %1853
    %1855 = vrot.lane.b32.xlu0 %v1122, 15
    %v1856 = vpop.permute.xlu0 %1855
    %1857 = vrot.lane.b32.xlu0 %v1125, 15
    %v1858 = vpop.permute.xlu0 %1857
    %1859 = vrot.lane.b32.xlu0 %v1127, 15
    %v1860 = vpop.permute.xlu0 %1859
    %1861 = vrot.lane.b32.xlu0 %v1130, 15
    %v1862 = vpop.permute.xlu0 %1861
    %1863 = vrot.lane.b32.xlu0 %v1132, 15
    %v1864 = vpop.permute.xlu0 %1863
    %1865 = vrot.lane.b32.xlu0 %v1135, 15
    %v1866 = vpop.permute.xlu0 %1865
    %1867 = vrot.lane.b32.xlu0 %v1137, 15
    %v1868 = vpop.permute.xlu0 %1867
    %1869 = vrot.lane.b32.xlu0 %v1140, 15
    %v1870 = vpop.permute.xlu0 %1869
    %1871 = vrot.lane.b32.xlu0 %v1142, 15
    %v1872 = vpop.permute.xlu0 %1871
    %1873 = vrot.lane.b32.xlu0 %v1145, 15
    %v1874 = vpop.permute.xlu0 %1873
    %1875 = vrot.lane.b32.xlu0 %v1147, 15
    %v1876 = vpop.permute.xlu0 %1875
    %1877 = vrot.lane.b32.xlu0 %v1150, 15
    %v1878 = vpop.permute.xlu0 %1877
    %1879 = vrot.lane.b32.xlu0 %v1152, 15
    %v1880 = vpop.permute.xlu0 %1879
    %1881 = vrot.lane.b32.xlu0 %v1155, 15
    %v1882 = vpop.permute.xlu0 %1881
    %1883 = vrot.lane.b32.xlu0 %v1157, 15
    %v1884 = vpop.permute.xlu0 %1883
    %1885 = vrot.lane.b32.xlu0 %v1160, 15
    %v1886 = vpop.permute.xlu0 %1885
    %1887 = vrot.lane.b32.xlu0 %v1162, 15
    %v1888 = vpop.permute.xlu0 %1887
    %1889 = vrot.lane.b32.xlu0 %v1762, 15
    %v1890 = vpop.permute.xlu0 %1889
    %1891 = vrot.lane.b32.xlu0 %v1764, 15
    %v1892 = vpop.permute.xlu0 %1891
    %1961 = vrot.lane.b32.xlu0 %v451, 18
    %v1962 = vpop.permute.xlu0 %1961
    %1963 = vrot.lane.b32.xlu0 %v452, 18
    %v1964 = vpop.permute.xlu0 %1963
    %1965 = vrot.lane.b32.xlu0 %v454, 18
    %v1966 = vpop.permute.xlu0 %1965
    %1967 = vrot.lane.b32.xlu0 %v455, 18
    %v1968 = vpop.permute.xlu0 %1967
    %1969 = vrot.lane.b32.xlu0 %v457, 18
    %v1970 = vpop.permute.xlu0 %1969
    %1971 = vrot.lane.b32.xlu0 %v458, 18
    %v1972 = vpop.permute.xlu0 %1971
    %1973 = vrot.lane.b32.xlu0 %v460, 18
    %v1974 = vpop.permute.xlu0 %1973
    %1975 = vrot.lane.b32.xlu0 %v461, 18
    %v1976 = vpop.permute.xlu0 %1975
    %1977 = vrot.lane.b32.xlu0 %v463, 18
    %v1978 = vpop.permute.xlu0 %1977
    %1979 = vrot.lane.b32.xlu0 %v464, 18
    %v1980 = vpop.permute.xlu0 %1979
    %1981 = vrot.lane.b32.xlu0 %v466, 18
    %v1982 = vpop.permute.xlu0 %1981
    %1983 = vrot.lane.b32.xlu0 %v467, 18
    %v1984 = vpop.permute.xlu0 %1983
    %1985 = vrot.lane.b32.xlu0 %v469, 18
    %v1986 = vpop.permute.xlu0 %1985
    %1987 = vrot.lane.b32.xlu0 %v470, 18
    %v1988 = vpop.permute.xlu0 %1987
    %1989 = vrot.lane.b32.xlu0 %v472, 18
    %v1990 = vpop.permute.xlu0 %1989
    %1991 = vrot.lane.b32.xlu0 %v473, 18
    %v1992 = vpop.permute.xlu0 %1991
    %1993 = vrot.lane.b32.xlu0 %v475, 18
    %v1994 = vpop.permute.xlu0 %1993
    %1995 = vrot.lane.b32.xlu0 %v476, 18
    %v1996 = vpop.permute.xlu0 %1995
    %1997 = vrot.lane.b32.xlu0 %v478, 18
    %v1998 = vpop.permute.xlu0 %1997
    %1999 = vrot.lane.b32.xlu0 %v479, 18
    %v2000 = vpop.permute.xlu0 %1999
    %2001 = vrot.lane.b32.xlu0 %v481, 18
    %v2002 = vpop.permute.xlu0 %2001
    %2003 = vrot.lane.b32.xlu0 %v482, 18
    %v2004 = vpop.permute.xlu0 %2003
    %2005 = vrot.lane.b32.xlu0 %v484, 18
    %v2006 = vpop.permute.xlu0 %2005
    %2007 = vrot.lane.b32.xlu0 %v485, 18
    %v2008 = vpop.permute.xlu0 %2007
    %2009 = vrot.lane.b32.xlu0 %v487, 18
    %v2010 = vpop.permute.xlu0 %2009
    %2011 = vrot.lane.b32.xlu0 %v488, 18
    %v2012 = vpop.permute.xlu0 %2011
    %2013 = vrot.lane.b32.xlu0 %v490, 18
    %v2014 = vpop.permute.xlu0 %2013
    %2015 = vrot.lane.b32.xlu0 %v491, 18
    %v2016 = vpop.permute.xlu0 %2015
    %2017 = vrot.lane.b32.xlu0 %v493, 18
    %v2018 = vpop.permute.xlu0 %2017
    %2019 = vrot.lane.b32.xlu0 %v494, 18
    %v2020 = vpop.permute.xlu0 %2019
    %2021 = vrot.lane.b32.xlu0 %v496, 18
    %v2022 = vpop.permute.xlu0 %2021
    %2023 = vrot.lane.b32.xlu0 %v497, 18
    %v2024 = vpop.permute.xlu0 %2023
    %2025 = vrot.lane.b32.xlu0 %v505, 18
    %v2026 = vpop.permute.xlu0 %2025
    %2027 = vrot.lane.b32.xlu0 %v506, 18
    %v2028 = vpop.permute.xlu0 %2027
    %2029 = vrot.lane.b32.xlu0 %v508, 18
    %v2030 = vpop.permute.xlu0 %2029
    %2031 = vrot.lane.b32.xlu0 %v509, 18
    %v2032 = vpop.permute.xlu0 %2031
    %2033 = vrot.lane.b32.xlu0 %v511, 18
    %v2034 = vpop.permute.xlu0 %2033
    %2035 = vrot.lane.b32.xlu0 %v512, 18
    %v2036 = vpop.permute.xlu0 %2035
    %2037 = vrot.lane.b32.xlu0 %v514, 18
    %v2038 = vpop.permute.xlu0 %2037
    %2039 = vrot.lane.b32.xlu0 %v515, 18
    %v2040 = vpop.permute.xlu0 %2039
    %2041 = vrot.lane.b32.xlu0 %v517, 18
    %v2042 = vpop.permute.xlu0 %2041
    %2043 = vrot.lane.b32.xlu0 %v518, 18
    %v2044 = vpop.permute.xlu0 %2043
    %2045 = vrot.lane.b32.xlu0 %v520, 18
    %v2046 = vpop.permute.xlu0 %2045
    %2047 = vrot.lane.b32.xlu0 %v521, 18
    %v2048 = vpop.permute.xlu0 %2047
    %2049 = vrot.lane.b32.xlu0 %v523, 18
    %v2050 = vpop.permute.xlu0 %2049
    %2051 = vrot.lane.b32.xlu0 %v524, 18
    %v2052 = vpop.permute.xlu0 %2051
    %2053 = vrot.lane.b32.xlu0 %v526, 18
    %v2054 = vpop.permute.xlu0 %2053
    %2055 = vrot.lane.b32.xlu0 %v527, 18
    %v2056 = vpop.permute.xlu0 %2055
    %2057 = vrot.lane.b32.xlu0 %v529, 18
    %v2058 = vpop.permute.xlu0 %2057
    %2059 = vrot.lane.b32.xlu0 %v530, 18
    %v2060 = vpop.permute.xlu0 %2059
    %2061 = vrot.lane.b32.xlu0 %v532, 18
    %v2062 = vpop.permute.xlu0 %2061
    %2063 = vrot.lane.b32.xlu0 %v533, 18
    %v2064 = vpop.permute.xlu0 %2063
    %2065 = vrot.lane.b32.xlu0 %v535, 18
    %v2066 = vpop.permute.xlu0 %2065
    %2067 = vrot.lane.b32.xlu0 %v536, 18
    %v2068 = vpop.permute.xlu0 %2067
    %2069 = vrot.lane.b32.xlu0 %v538, 18
    %v2070 = vpop.permute.xlu0 %2069
    %2071 = vrot.lane.b32.xlu0 %v539, 18
    %v2072 = vpop.permute.xlu0 %2071
    %2073 = vrot.lane.b32.xlu0 %v541, 18
    %v2074 = vpop.permute.xlu0 %2073
    %2075 = vrot.lane.b32.xlu0 %v542, 18
    %v2076 = vpop.permute.xlu0 %2075
    %2077 = vrot.lane.b32.xlu0 %v544, 18
    %v2078 = vpop.permute.xlu0 %2077
    %2079 = vrot.lane.b32.xlu0 %v545, 18
    %v2080 = vpop.permute.xlu0 %2079
    %2081 = vrot.lane.b32.xlu0 %v547, 18
    %v2082 = vpop.permute.xlu0 %2081
    %2083 = vrot.lane.b32.xlu0 %v548, 18
    %v2084 = vpop.permute.xlu0 %2083
    %2085 = vrot.lane.b32.xlu0 %v550, 18
    %v2086 = vpop.permute.xlu0 %2085
    %2087 = vrot.lane.b32.xlu0 %v551, 18
    %v2088 = vpop.permute.xlu0 %2087
    %v2155 = vrot.slane %v496, 1
    %v2156 = vrot.slane %v497, 1
    %v2157 = vsel %vm649, %v2155, %v2156
    %v2158 = vrot.slane %v498, 1
    %v2159 = vsel %vm649, %v2156, %v2158
    %v2160 = vrot.slane %v550, 1
    %v2161 = vrot.slane %v551, 1
    %v2162 = vsel %vm649, %v2160, %v2161
    %v2163 = vrot.slane %v552, 1
    %v2164 = vsel %vm649, %v2161, %v2163
    %2165 = vrot.lane.b32.xlu0 %v662, 21
    %v2166 = vpop.permute.xlu0 %2165
    %2167 = vrot.lane.b32.xlu0 %v664, 21
    %v2168 = vpop.permute.xlu0 %2167
    %2169 = vrot.lane.b32.xlu0 %v667, 21
    %v2170 = vpop.permute.xlu0 %2169
    %2171 = vrot.lane.b32.xlu0 %v669, 21
    %v2172 = vpop.permute.xlu0 %2171
    %2173 = vrot.lane.b32.xlu0 %v672, 21
    %v2174 = vpop.permute.xlu0 %2173
    %2175 = vrot.lane.b32.xlu0 %v674, 21
    %v2176 = vpop.permute.xlu0 %2175
    %2177 = vrot.lane.b32.xlu0 %v677, 21
    %v2178 = vpop.permute.xlu0 %2177
    %2179 = vrot.lane.b32.xlu0 %v679, 21
    %v2180 = vpop.permute.xlu0 %2179
    %2181 = vrot.lane.b32.xlu0 %v682, 21
    %v2182 = vpop.permute.xlu0 %2181
    %2183 = vrot.lane.b32.xlu0 %v684, 21
    %v2184 = vpop.permute.xlu0 %2183
    %2185 = vrot.lane.b32.xlu0 %v687, 21
    %v2186 = vpop.permute.xlu0 %2185
    %2187 = vrot.lane.b32.xlu0 %v689, 21
    %v2188 = vpop.permute.xlu0 %2187
    %2189 = vrot.lane.b32.xlu0 %v692, 21
    %v2190 = vpop.permute.xlu0 %2189
    %2191 = vrot.lane.b32.xlu0 %v694, 21
    %v2192 = vpop.permute.xlu0 %2191
    %2193 = vrot.lane.b32.xlu0 %v697, 21
    %v2194 = vpop.permute.xlu0 %2193
    %2195 = vrot.lane.b32.xlu0 %v699, 21
    %v2196 = vpop.permute.xlu0 %2195
    %2197 = vrot.lane.b32.xlu0 %v702, 21
    %v2198 = vpop.permute.xlu0 %2197
    %2199 = vrot.lane.b32.xlu0 %v704, 21
    %v2200 = vpop.permute.xlu0 %2199
    %2201 = vrot.lane.b32.xlu0 %v707, 21
    %v2202 = vpop.permute.xlu0 %2201
    %2203 = vrot.lane.b32.xlu0 %v709, 21
    %v2204 = vpop.permute.xlu0 %2203
    %2205 = vrot.lane.b32.xlu0 %v712, 21
    %v2206 = vpop.permute.xlu0 %2205
    %2207 = vrot.lane.b32.xlu0 %v714, 21
    %v2208 = vpop.permute.xlu0 %2207
    %2209 = vrot.lane.b32.xlu0 %v717, 21
    %v2210 = vpop.permute.xlu0 %2209
    %2211 = vrot.lane.b32.xlu0 %v719, 21
    %v2212 = vpop.permute.xlu0 %2211
    %2213 = vrot.lane.b32.xlu0 %v722, 21
    %v2214 = vpop.permute.xlu0 %2213
    %2215 = vrot.lane.b32.xlu0 %v724, 21
    %v2216 = vpop.permute.xlu0 %2215
    %2217 = vrot.lane.b32.xlu0 %v727, 21
    %v2218 = vpop.permute.xlu0 %2217
    %2219 = vrot.lane.b32.xlu0 %v729, 21
    %v2220 = vpop.permute.xlu0 %2219
    %2221 = vrot.lane.b32.xlu0 %v1555, 21
    %v2222 = vpop.permute.xlu0 %2221
    %2223 = vrot.lane.b32.xlu0 %v1557, 21
    %v2224 = vpop.permute.xlu0 %2223
    %2225 = vrot.lane.b32.xlu0 %v2157, 21
    %v2226 = vpop.permute.xlu0 %2225
    %2227 = vrot.lane.b32.xlu0 %v2159, 21
    %v2228 = vpop.permute.xlu0 %2227
    %2229 = vrot.lane.b32.xlu0 %v742, 21
    %v2230 = vpop.permute.xlu0 %2229
    %2231 = vrot.lane.b32.xlu0 %v744, 21
    %v2232 = vpop.permute.xlu0 %2231
    %2233 = vrot.lane.b32.xlu0 %v747, 21
    %v2234 = vpop.permute.xlu0 %2233
    %2235 = vrot.lane.b32.xlu0 %v749, 21
    %v2236 = vpop.permute.xlu0 %2235
    %2237 = vrot.lane.b32.xlu0 %v752, 21
    %v2238 = vpop.permute.xlu0 %2237
    %2239 = vrot.lane.b32.xlu0 %v754, 21
    %v2240 = vpop.permute.xlu0 %2239
    %2241 = vrot.lane.b32.xlu0 %v757, 21
    %v2242 = vpop.permute.xlu0 %2241
    %2243 = vrot.lane.b32.xlu0 %v759, 21
    %v2244 = vpop.permute.xlu0 %2243
    %2245 = vrot.lane.b32.xlu0 %v762, 21
    %v2246 = vpop.permute.xlu0 %2245
    %2247 = vrot.lane.b32.xlu0 %v764, 21
    %v2248 = vpop.permute.xlu0 %2247
    %2249 = vrot.lane.b32.xlu0 %v767, 21
    %v2250 = vpop.permute.xlu0 %2249
    %2251 = vrot.lane.b32.xlu0 %v769, 21
    %v2252 = vpop.permute.xlu0 %2251
    %2253 = vrot.lane.b32.xlu0 %v772, 21
    %v2254 = vpop.permute.xlu0 %2253
    %2255 = vrot.lane.b32.xlu0 %v774, 21
    %v2256 = vpop.permute.xlu0 %2255
    %2257 = vrot.lane.b32.xlu0 %v777, 21
    %v2258 = vpop.permute.xlu0 %2257
    %2259 = vrot.lane.b32.xlu0 %v779, 21
    %v2260 = vpop.permute.xlu0 %2259
    %2261 = vrot.lane.b32.xlu0 %v782, 21
    %v2262 = vpop.permute.xlu0 %2261
    %2263 = vrot.lane.b32.xlu0 %v784, 21
    %v2264 = vpop.permute.xlu0 %2263
    %2265 = vrot.lane.b32.xlu0 %v787, 21
    %v2266 = vpop.permute.xlu0 %2265
    %2267 = vrot.lane.b32.xlu0 %v789, 21
    %v2268 = vpop.permute.xlu0 %2267
    %2269 = vrot.lane.b32.xlu0 %v792, 21
    %v2270 = vpop.permute.xlu0 %2269
    %2271 = vrot.lane.b32.xlu0 %v794, 21
    %v2272 = vpop.permute.xlu0 %2271
    %2273 = vrot.lane.b32.xlu0 %v797, 21
    %v2274 = vpop.permute.xlu0 %2273
    %2275 = vrot.lane.b32.xlu0 %v799, 21
    %v2276 = vpop.permute.xlu0 %2275
    %2277 = vrot.lane.b32.xlu0 %v802, 21
    %v2278 = vpop.permute.xlu0 %2277
    %2279 = vrot.lane.b32.xlu0 %v804, 21
    %v2280 = vpop.permute.xlu0 %2279
    %2281 = vrot.lane.b32.xlu0 %v807, 21
    %v2282 = vpop.permute.xlu0 %2281
    %2283 = vrot.lane.b32.xlu0 %v809, 21
    %v2284 = vpop.permute.xlu0 %2283
    %2285 = vrot.lane.b32.xlu0 %v1560, 21
    %v2286 = vpop.permute.xlu0 %2285
    %2287 = vrot.lane.b32.xlu0 %v1562, 21
    %v2288 = vpop.permute.xlu0 %2287
    %2289 = vrot.lane.b32.xlu0 %v2162, 21
    %v2290 = vpop.permute.xlu0 %2289
    %2291 = vrot.lane.b32.xlu0 %v2164, 21
    %v2292 = vpop.permute.xlu0 %2291
    %v2357 = vrot.slane %v496, 2
    %v2358 = vrot.slane %v497, 2
    %v2359 = vsel %vm1002, %v2357, %v2358
    %v2360 = vrot.slane %v498, 2
    %v2361 = vsel %vm1002, %v2358, %v2360
    %v2362 = vrot.slane %v550, 2
    %v2363 = vrot.slane %v551, 2
    %v2364 = vsel %vm1002, %v2362, %v2363
    %v2365 = vrot.slane %v552, 2
    %v2366 = vsel %vm1002, %v2363, %v2365
    %2367 = vrot.lane.b32.xlu0 %v1015, 24
    %v2368 = vpop.permute.xlu0 %2367
    %2369 = vrot.lane.b32.xlu0 %v1017, 24
    %v2370 = vpop.permute.xlu0 %2369
    %2371 = vrot.lane.b32.xlu0 %v1020, 24
    %v2372 = vpop.permute.xlu0 %2371
    %2373 = vrot.lane.b32.xlu0 %v1022, 24
    %v2374 = vpop.permute.xlu0 %2373
    %2375 = vrot.lane.b32.xlu0 %v1025, 24
    %v2376 = vpop.permute.xlu0 %2375
    %2377 = vrot.lane.b32.xlu0 %v1027, 24
    %v2378 = vpop.permute.xlu0 %2377
    %2379 = vrot.lane.b32.xlu0 %v1030, 24
    %v2380 = vpop.permute.xlu0 %2379
    %2381 = vrot.lane.b32.xlu0 %v1032, 24
    %v2382 = vpop.permute.xlu0 %2381
    %2383 = vrot.lane.b32.xlu0 %v1035, 24
    %v2384 = vpop.permute.xlu0 %2383
    %2385 = vrot.lane.b32.xlu0 %v1037, 24
    %v2386 = vpop.permute.xlu0 %2385
    %2387 = vrot.lane.b32.xlu0 %v1040, 24
    %v2388 = vpop.permute.xlu0 %2387
    %2389 = vrot.lane.b32.xlu0 %v1042, 24
    %v2390 = vpop.permute.xlu0 %2389
    %2391 = vrot.lane.b32.xlu0 %v1045, 24
    %v2392 = vpop.permute.xlu0 %2391
    %2393 = vrot.lane.b32.xlu0 %v1047, 24
    %v2394 = vpop.permute.xlu0 %2393
    %2395 = vrot.lane.b32.xlu0 %v1050, 24
    %v2396 = vpop.permute.xlu0 %2395
    %2397 = vrot.lane.b32.xlu0 %v1052, 24
    %v2398 = vpop.permute.xlu0 %2397
    %2399 = vrot.lane.b32.xlu0 %v1055, 24
    %v2400 = vpop.permute.xlu0 %2399
    %2401 = vrot.lane.b32.xlu0 %v1057, 24
    %v2402 = vpop.permute.xlu0 %2401
    %2403 = vrot.lane.b32.xlu0 %v1060, 24
    %v2404 = vpop.permute.xlu0 %2403
    %2405 = vrot.lane.b32.xlu0 %v1062, 24
    %v2406 = vpop.permute.xlu0 %2405
    %2407 = vrot.lane.b32.xlu0 %v1065, 24
    %v2408 = vpop.permute.xlu0 %2407
    %2409 = vrot.lane.b32.xlu0 %v1067, 24
    %v2410 = vpop.permute.xlu0 %2409
    %2411 = vrot.lane.b32.xlu0 %v1070, 24
    %v2412 = vpop.permute.xlu0 %2411
    %2413 = vrot.lane.b32.xlu0 %v1072, 24
    %v2414 = vpop.permute.xlu0 %2413
    %2415 = vrot.lane.b32.xlu0 %v1075, 24
    %v2416 = vpop.permute.xlu0 %2415
    %2417 = vrot.lane.b32.xlu0 %v1077, 24
    %v2418 = vpop.permute.xlu0 %2417
    %2419 = vrot.lane.b32.xlu0 %v1080, 24
    %v2420 = vpop.permute.xlu0 %2419
    %2421 = vrot.lane.b32.xlu0 %v1082, 24
    %v2422 = vpop.permute.xlu0 %2421
    %2423 = vrot.lane.b32.xlu0 %v1757, 24
    %v2424 = vpop.permute.xlu0 %2423
    %2425 = vrot.lane.b32.xlu0 %v1759, 24
    %v2426 = vpop.permute.xlu0 %2425
    %2427 = vrot.lane.b32.xlu0 %v2359, 24
    %v2428 = vpop.permute.xlu0 %2427
    %2429 = vrot.lane.b32.xlu0 %v2361, 24
    %v2430 = vpop.permute.xlu0 %2429
    %2431 = vrot.lane.b32.xlu0 %v1095, 24
    %v2432 = vpop.permute.xlu0 %2431
    %2433 = vrot.lane.b32.xlu0 %v1097, 24
    %v2434 = vpop.permute.xlu0 %2433
    %2435 = vrot.lane.b32.xlu0 %v1100, 24
    %v2436 = vpop.permute.xlu0 %2435
    %2437 = vrot.lane.b32.xlu0 %v1102, 24
    %v2438 = vpop.permute.xlu0 %2437
    %2439 = vrot.lane.b32.xlu0 %v1105, 24
    %v2440 = vpop.permute.xlu0 %2439
    %2441 = vrot.lane.b32.xlu0 %v1107, 24
    %v2442 = vpop.permute.xlu0 %2441
    %2443 = vrot.lane.b32.xlu0 %v1110, 24
    %v2444 = vpop.permute.xlu0 %2443
    %2445 = vrot.lane.b32.xlu0 %v1112, 24
    %v2446 = vpop.permute.xlu0 %2445
    %2447 = vrot.lane.b32.xlu0 %v1115, 24
    %v2448 = vpop.permute.xlu0 %2447
    %2449 = vrot.lane.b32.xlu0 %v1117, 24
    %v2450 = vpop.permute.xlu0 %2449
    %2451 = vrot.lane.b32.xlu0 %v1120, 24
    %v2452 = vpop.permute.xlu0 %2451
    %2453 = vrot.lane.b32.xlu0 %v1122, 24
    %v2454 = vpop.permute.xlu0 %2453
    %2455 = vrot.lane.b32.xlu0 %v1125, 24
    %v2456 = vpop.permute.xlu0 %2455
    %2457 = vrot.lane.b32.xlu0 %v1127, 24
    %v2458 = vpop.permute.xlu0 %2457
    %2459 = vrot.lane.b32.xlu0 %v1130, 24
    %v2460 = vpop.permute.xlu0 %2459
    %2461 = vrot.lane.b32.xlu0 %v1132, 24
    %v2462 = vpop.permute.xlu0 %2461
    %2463 = vrot.lane.b32.xlu0 %v1135, 24
    %v2464 = vpop.permute.xlu0 %2463
    %2465 = vrot.lane.b32.xlu0 %v1137, 24
    %v2466 = vpop.permute.xlu0 %2465
    %2467 = vrot.lane.b32.xlu0 %v1140, 24
    %v2468 = vpop.permute.xlu0 %2467
    %2469 = vrot.lane.b32.xlu0 %v1142, 24
    %v2470 = vpop.permute.xlu0 %2469
    %2471 = vrot.lane.b32.xlu0 %v1145, 24
    %v2472 = vpop.permute.xlu0 %2471
    %2473 = vrot.lane.b32.xlu0 %v1147, 24
    %v2474 = vpop.permute.xlu0 %2473
    %2475 = vrot.lane.b32.xlu0 %v1150, 24
    %v2476 = vpop.permute.xlu0 %2475
    %2477 = vrot.lane.b32.xlu0 %v1152, 24
    %v2478 = vpop.permute.xlu0 %2477
    %2479 = vrot.lane.b32.xlu0 %v1155, 24
    %v2480 = vpop.permute.xlu0 %2479
    %2481 = vrot.lane.b32.xlu0 %v1157, 24
    %v2482 = vpop.permute.xlu0 %2481
    %2483 = vrot.lane.b32.xlu0 %v1160, 24
    %v2484 = vpop.permute.xlu0 %2483
    %2485 = vrot.lane.b32.xlu0 %v1162, 24
    %v2486 = vpop.permute.xlu0 %2485
    %2487 = vrot.lane.b32.xlu0 %v1762, 24
    %v2488 = vpop.permute.xlu0 %2487
    %2489 = vrot.lane.b32.xlu0 %v1764, 24
    %v2490 = vpop.permute.xlu0 %2489
    %2491 = vrot.lane.b32.xlu0 %v2364, 24
    %v2492 = vpop.permute.xlu0 %2491
    %2493 = vrot.lane.b32.xlu0 %v2366, 24
    %v2494 = vpop.permute.xlu0 %2493
    %v2559 = vsel %vm270, %v445, %v811
    %v2560 = vsel %vm270, %v446, %v813
    %v2561 = vsel %vm270, %v448, %v815
    %v2562 = vsel %vm270, %v449, %v817
    %v2563 = vsel %vm270, %v451, %v819
    %v2564 = vsel %vm270, %v452, %v821
    %v2565 = vsel %vm270, %v454, %v823
    %v2566 = vsel %vm270, %v455, %v825
    %v2567 = vsel %vm270, %v457, %v827
    %v2568 = vsel %vm270, %v458, %v829
    %v2569 = vsel %vm270, %v460, %v831
    %v2570 = vsel %vm270, %v461, %v833
    %v2571 = vsel %vm270, %v463, %v835
    %v2572 = vsel %vm270, %v464, %v837
    %v2573 = vsel %vm270, %v466, %v839
    %v2574 = vsel %vm270, %v467, %v841
    %v2575 = vsel %vm270, %v469, %v843
    %v2576 = vsel %vm270, %v470, %v845
    %v2577 = vsel %vm270, %v472, %v847
    %v2578 = vsel %vm270, %v473, %v849
    %v2579 = vsel %vm270, %v475, %v851
    %v2580 = vsel %vm270, %v476, %v853
    %v2581 = vsel %vm270, %v478, %v855
    %v2582 = vsel %vm270, %v479, %v857
    %v2583 = vsel %vm270, %v481, %v859
    %v2584 = vsel %vm270, %v482, %v861
    %v2585 = vsel %vm270, %v484, %v863
    %v2586 = vsel %vm270, %v485, %v865
    %v2587 = vsel %vm270, %v487, %v867
    %v2588 = vsel %vm270, %v488, %v869
    %v2589 = vsel %vm270, %v490, %v871
    %v2590 = vsel %vm270, %v491, %v873
    %v2591 = vsel %vm270, %v499, %v875
    %v2592 = vsel %vm270, %v500, %v877
    %v2593 = vsel %vm270, %v502, %v879
    %v2594 = vsel %vm270, %v503, %v881
    %v2595 = vsel %vm270, %v505, %v883
    %v2596 = vsel %vm270, %v506, %v885
    %v2597 = vsel %vm270, %v508, %v887
    %v2598 = vsel %vm270, %v509, %v889
    %v2599 = vsel %vm270, %v511, %v891
    %v2600 = vsel %vm270, %v512, %v893
    %v2601 = vsel %vm270, %v514, %v895
    %v2602 = vsel %vm270, %v515, %v897
    %v2603 = vsel %vm270, %v517, %v899
    %v2604 = vsel %vm270, %v518, %v901
    %v2605 = vsel %vm270, %v520, %v903
    %v2606 = vsel %vm270, %v521, %v905
    %v2607 = vsel %vm270, %v523, %v907
    %v2608 = vsel %vm270, %v524, %v909
    %v2609 = vsel %vm270, %v526, %v911
    %v2610 = vsel %vm270, %v527, %v913
    %v2611 = vsel %vm270, %v529, %v915
    %v2612 = vsel %vm270, %v530, %v917
    %v2613 = vsel %vm270, %v532, %v919
    %v2614 = vsel %vm270, %v533, %v921
    %v2615 = vsel %vm270, %v535, %v923
    %v2616 = vsel %vm270, %v536, %v925
    %v2617 = vsel %vm270, %v538, %v927
    %v2618 = vsel %vm270, %v539, %v929
    %v2619 = vsel %vm270, %v541, %v931
    %v2620 = vsel %vm270, %v542, %v933
    %v2621 = vsel %vm270, %v544, %v935
    %v2622 = vsel %vm270, %v545, %v937
    %vm2623 = vcmask 48128
    %v2624 = vsel %vm2623, %v2559, %v1164
    %v2625 = vsel %vm2623, %v2560, %v1166
    %v2626 = vsel %vm2623, %v2561, %v1168
    %v2627 = vsel %vm2623, %v2562, %v1170
    %v2628 = vsel %vm2623, %v2563, %v1172
    %v2629 = vsel %vm2623, %v2564, %v1174
    %v2630 = vsel %vm2623, %v2565, %v1176
    %v2631 = vsel %vm2623, %v2566, %v1178
    %v2632 = vsel %vm2623, %v2567, %v1180
    %v2633 = vsel %vm2623, %v2568, %v1182
    %v2634 = vsel %vm2623, %v2569, %v1184
    %v2635 = vsel %vm2623, %v2570, %v1186
    %v2636 = vsel %vm2623, %v2571, %v1188
    %v2637 = vsel %vm2623, %v2572, %v1190
    %v2638 = vsel %vm2623, %v2573, %v1192
    %v2639 = vsel %vm2623, %v2574, %v1194
    %v2640 = vsel %vm2623, %v2575, %v1196
    %v2641 = vsel %vm2623, %v2576, %v1198
    %v2642 = vsel %vm2623, %v2577, %v1200
    %v2643 = vsel %vm2623, %v2578, %v1202
    %v2644 = vsel %vm2623, %v2579, %v1204
    %v2645 = vsel %vm2623, %v2580, %v1206
    %v2646 = vsel %vm2623, %v2581, %v1208
    %v2647 = vsel %vm2623, %v2582, %v1210
    %v2648 = vsel %vm2623, %v2583, %v1212
    %v2649 = vsel %vm2623, %v2584, %v1214
    %v2650 = vsel %vm2623, %v2585, %v1216
    %v2651 = vsel %vm2623, %v2586, %v1218
    %v2652 = vsel %vm2623, %v2587, %v1220
    %v2653 = vsel %vm2623, %v2588, %v1222
    %v2654 = vsel %vm2623, %v2589, %v1224
    %v2655 = vsel %vm2623, %v2590, %v1226
    %v2656 = vsel %vm2623, %v2591, %v1228
    %v2657 = vsel %vm2623, %v2592, %v1230
    %v2658 = vsel %vm2623, %v2593, %v1232
    %v2659 = vsel %vm2623, %v2594, %v1234
    %v2660 = vsel %vm2623, %v2595, %v1236
    %v2661 = vsel %vm2623, %v2596, %v1238
    %v2662 = vsel %vm2623, %v2597, %v1240
    %v2663 = vsel %vm2623, %v2598, %v1242
    %v2664 = vsel %vm2623, %v2599, %v1244
    %v2665 = vsel %vm2623, %v2600, %v1246
    %v2666 = vsel %vm2623, %v2601, %v1248
    %v2667 = vsel %vm2623, %v2602, %v1250
    %v2668 = vsel %vm2623, %v2603, %v1252
    %v2669 = vsel %vm2623, %v2604, %v1254
    %v2670 = vsel %vm2623, %v2605, %v1256
    %v2671 = vsel %vm2623, %v2606, %v1258
    %v2672 = vsel %vm2623, %v2607, %v1260
    %v2673 = vsel %vm2623, %v2608, %v1262
    %v2674 = vsel %vm2623, %v2609, %v1264
    %v2675 = vsel %vm2623, %v2610, %v1266
    %v2676 = vsel %vm2623, %v2611, %v1268
    %v2677 = vsel %vm2623, %v2612, %v1270
    %v2678 = vsel %vm2623, %v2613, %v1272
    %v2679 = vsel %vm2623, %v2614, %v1274
    %v2680 = vsel %vm2623, %v2615, %v1276
    %v2681 = vsel %vm2623, %v2616, %v1278
    %v2682 = vsel %vm2623, %v2617, %v1280
    %v2683 = vsel %vm2623, %v2618, %v1282
    %v2684 = vsel %vm2623, %v2619, %v1284
    %v2685 = vsel %vm2623, %v2620, %v1286
    %v2686 = vsel %vm2623, %v2621, %v1288
    %v2687 = vsel %vm2623, %v2622, %v1290
    %vm2688 = vcmask 72704
    %v2689 = vsel %vm2688, %v2624, %v1360
    %v2690 = vsel %vm2688, %v2625, %v1362
    %v2691 = vsel %vm2688, %v2626, %v1364
    %v2692 = vsel %vm2688, %v2627, %v1366
    %v2693 = vsel %vm2688, %v2628, %v1368
    %v2694 = vsel %vm2688, %v2629, %v1370
    %v2695 = vsel %vm2688, %v2630, %v1372
    %v2696 = vsel %vm2688, %v2631, %v1374
    %v2697 = vsel %vm2688, %v2632, %v1376
    %v2698 = vsel %vm2688, %v2633, %v1378
    %v2699 = vsel %vm2688, %v2634, %v1380
    %v2700 = vsel %vm2688, %v2635, %v1382
    %v2701 = vsel %vm2688, %v2636, %v1384
    %v2702 = vsel %vm2688, %v2637, %v1386
    %v2703 = vsel %vm2688, %v2638, %v1388
    %v2704 = vsel %vm2688, %v2639, %v1390
    %v2705 = vsel %vm2688, %v2640, %v1392
    %v2706 = vsel %vm2688, %v2641, %v1394
    %v2707 = vsel %vm2688, %v2642, %v1396
    %v2708 = vsel %vm2688, %v2643, %v1398
    %v2709 = vsel %vm2688, %v2644, %v1400
    %v2710 = vsel %vm2688, %v2645, %v1402
    %v2711 = vsel %vm2688, %v2646, %v1404
    %v2712 = vsel %vm2688, %v2647, %v1406
    %v2713 = vsel %vm2688, %v2648, %v1408
    %v2714 = vsel %vm2688, %v2649, %v1410
    %v2715 = vsel %vm2688, %v2650, %v1412
    %v2716 = vsel %vm2688, %v2651, %v1414
    %v2717 = vsel %vm2688, %v2652, %v1416
    %v2718 = vsel %vm2688, %v2653, %v1418
    %v2719 = vsel %vm2688, %v2654, %v1420
    %v2720 = vsel %vm2688, %v2655, %v1422
    %v2721 = vsel %vm2688, %v2656, %v1424
    %v2722 = vsel %vm2688, %v2657, %v1426
    %v2723 = vsel %vm2688, %v2658, %v1428
    %v2724 = vsel %vm2688, %v2659, %v1430
    %v2725 = vsel %vm2688, %v2660, %v1432
    %v2726 = vsel %vm2688, %v2661, %v1434
    %v2727 = vsel %vm2688, %v2662, %v1436
    %v2728 = vsel %vm2688, %v2663, %v1438
    %v2729 = vsel %vm2688, %v2664, %v1440
    %v2730 = vsel %vm2688, %v2665, %v1442
    %v2731 = vsel %vm2688, %v2666, %v1444
    %v2732 = vsel %vm2688, %v2667, %v1446
    %v2733 = vsel %vm2688, %v2668, %v1448
    %v2734 = vsel %vm2688, %v2669, %v1450
    %v2735 = vsel %vm2688, %v2670, %v1452
    %v2736 = vsel %vm2688, %v2671, %v1454
    %v2737 = vsel %vm2688, %v2672, %v1456
    %v2738 = vsel %vm2688, %v2673, %v1458
    %v2739 = vsel %vm2688, %v2674, %v1460
    %v2740 = vsel %vm2688, %v2675, %v1462
    %v2741 = vsel %vm2688, %v2676, %v1464
    %v2742 = vsel %vm2688, %v2677, %v1466
    %v2743 = vsel %vm2688, %v2678, %v1468
    %v2744 = vsel %vm2688, %v2679, %v1470
    %v2745 = vsel %vm2688, %v2680, %v1472
    %v2746 = vsel %vm2688, %v2681, %v1474
    %v2747 = vsel %vm2688, %v2682, %v1476
    %v2748 = vsel %vm2688, %v2683, %v1478
    %v2749 = vsel %vm2688, %v2684, %v1480
    %v2750 = vsel %vm2688, %v2685, %v1482
    %v2751 = vsel %vm2688, %v2686, %v1484
    %v2752 = vsel %vm2688, %v2687, %v1486
    %vm2753 = vcmask 97280
    %v2754 = vsel %vm2753, %v2689, %v1564
    %v2755 = vsel %vm2753, %v2690, %v1566
    %v2756 = vsel %vm2753, %v2691, %v1568
    %v2757 = vsel %vm2753, %v2692, %v1570
    %v2758 = vsel %vm2753, %v2693, %v1572
    %v2759 = vsel %vm2753, %v2694, %v1574
    %v2760 = vsel %vm2753, %v2695, %v1576
    %v2761 = vsel %vm2753, %v2696, %v1578
    %v2762 = vsel %vm2753, %v2697, %v1580
    %v2763 = vsel %vm2753, %v2698, %v1582
    %v2764 = vsel %vm2753, %v2699, %v1584
    %v2765 = vsel %vm2753, %v2700, %v1586
    %v2766 = vsel %vm2753, %v2701, %v1588
    %v2767 = vsel %vm2753, %v2702, %v1590
    %v2768 = vsel %vm2753, %v2703, %v1592
    %v2769 = vsel %vm2753, %v2704, %v1594
    %v2770 = vsel %vm2753, %v2705, %v1596
    %v2771 = vsel %vm2753, %v2706, %v1598
    %v2772 = vsel %vm2753, %v2707, %v1600
    %v2773 = vsel %vm2753, %v2708, %v1602
    %v2774 = vsel %vm2753, %v2709, %v1604
    %v2775 = vsel %vm2753, %v2710, %v1606
    %v2776 = vsel %vm2753, %v2711, %v1608
    %v2777 = vsel %vm2753, %v2712, %v1610
    %v2778 = vsel %vm2753, %v2713, %v1612
    %v2779 = vsel %vm2753, %v2714, %v1614
    %v2780 = vsel %vm2753, %v2715, %v1616
    %v2781 = vsel %vm2753, %v2716, %v1618
    %v2782 = vsel %vm2753, %v2717, %v1620
    %v2783 = vsel %vm2753, %v2718, %v1622
    %v2784 = vsel %vm2753, %v2719, %v1624
    %v2785 = vsel %vm2753, %v2720, %v1626
    %v2786 = vsel %vm2753, %v2721, %v1628
    %v2787 = vsel %vm2753, %v2722, %v1630
    %v2788 = vsel %vm2753, %v2723, %v1632
    %v2789 = vsel %vm2753, %v2724, %v1634
    %v2790 = vsel %vm2753, %v2725, %v1636
    %v2791 = vsel %vm2753, %v2726, %v1638
    %v2792 = vsel %vm2753, %v2727, %v1640
    %v2793 = vsel %vm2753, %v2728, %v1642
    %v2794 = vsel %vm2753, %v2729, %v1644
    %v2795 = vsel %vm2753, %v2730, %v1646
    %v2796 = vsel %vm2753, %v2731, %v1648
    %v2797 = vsel %vm2753, %v2732, %v1650
    %v2798 = vsel %vm2753, %v2733, %v1652
    %v2799 = vsel %vm2753, %v2734, %v1654
    %v2800 = vsel %vm2753, %v2735, %v1656
    %v2801 = vsel %vm2753, %v2736, %v1658
    %v2802 = vsel %vm2753, %v2737, %v1660
    %v2803 = vsel %vm2753, %v2738, %v1662
    %v2804 = vsel %vm2753, %v2739, %v1664
    %v2805 = vsel %vm2753, %v2740, %v1666
    %v2806 = vsel %vm2753, %v2741, %v1668
    %v2807 = vsel %vm2753, %v2742, %v1670
    %v2808 = vsel %vm2753, %v2743, %v1672
    %v2809 = vsel %vm2753, %v2744, %v1674
    %v2810 = vsel %vm2753, %v2745, %v1676
    %v2811 = vsel %vm2753, %v2746, %v1678
    %v2812 = vsel %vm2753, %v2747, %v1680
    %v2813 = vsel %vm2753, %v2748, %v1682
    %v2814 = vsel %vm2753, %v2749, %v1684
    %v2815 = vsel %vm2753, %v2750, %v1686
    %v2816 = vsel %vm2753, %v2751, %v1688
    %v2817 = vsel %vm2753, %v2752, %v1690
    %vm2818 = vcmask 121856
    %v2819 = vsel %vm2818, %v2754, %v1766
    %v2820 = vsel %vm2818, %v2755, %v1768
    %v2821 = vsel %vm2818, %v2756, %v1770
    %v2822 = vsel %vm2818, %v2757, %v1772
    %v2823 = vsel %vm2818, %v2758, %v1774
    %v2824 = vsel %vm2818, %v2759, %v1776
    %v2825 = vsel %vm2818, %v2760, %v1778
    %v2826 = vsel %vm2818, %v2761, %v1780
    %v2827 = vsel %vm2818, %v2762, %v1782
    %v2828 = vsel %vm2818, %v2763, %v1784
    %v2829 = vsel %vm2818, %v2764, %v1786
    %v2830 = vsel %vm2818, %v2765, %v1788
    %v2831 = vsel %vm2818, %v2766, %v1790
    %v2832 = vsel %vm2818, %v2767, %v1792
    %v2833 = vsel %vm2818, %v2768, %v1794
    %v2834 = vsel %vm2818, %v2769, %v1796
    %v2835 = vsel %vm2818, %v2770, %v1798
    %v2836 = vsel %vm2818, %v2771, %v1800
    %v2837 = vsel %vm2818, %v2772, %v1802
    %v2838 = vsel %vm2818, %v2773, %v1804
    %v2839 = vsel %vm2818, %v2774, %v1806
    %v2840 = vsel %vm2818, %v2775, %v1808
    %v2841 = vsel %vm2818, %v2776, %v1810
    %v2842 = vsel %vm2818, %v2777, %v1812
    %v2843 = vsel %vm2818, %v2778, %v1814
    %v2844 = vsel %vm2818, %v2779, %v1816
    %v2845 = vsel %vm2818, %v2780, %v1818
    %v2846 = vsel %vm2818, %v2781, %v1820
    %v2847 = vsel %vm2818, %v2782, %v1822
    %v2848 = vsel %vm2818, %v2783, %v1824
    %v2849 = vsel %vm2818, %v2784, %v1826
    %v2850 = vsel %vm2818, %v2785, %v1828
    %v2851 = vsel %vm2818, %v2786, %v1830
    %v2852 = vsel %vm2818, %v2787, %v1832
    %v2853 = vsel %vm2818, %v2788, %v1834
    %v2854 = vsel %vm2818, %v2789, %v1836
    %v2855 = vsel %vm2818, %v2790, %v1838
    %v2856 = vsel %vm2818, %v2791, %v1840
    %v2857 = vsel %vm2818, %v2792, %v1842
    %v2858 = vsel %vm2818, %v2793, %v1844
    %v2859 = vsel %vm2818, %v2794, %v1846
    %v2860 = vsel %vm2818, %v2795, %v1848
    %v2861 = vsel %vm2818, %v2796, %v1850
    %v2862 = vsel %vm2818, %v2797, %v1852
    %v2863 = vsel %vm2818, %v2798, %v1854
    %v2864 = vsel %vm2818, %v2799, %v1856
    %v2865 = vsel %vm2818, %v2800, %v1858
    %v2866 = vsel %vm2818, %v2801, %v1860
    %v2867 = vsel %vm2818, %v2802, %v1862
    %v2868 = vsel %vm2818, %v2803, %v1864
    %v2869 = vsel %vm2818, %v2804, %v1866
    %v2870 = vsel %vm2818, %v2805, %v1868
    %v2871 = vsel %vm2818, %v2806, %v1870
    %v2872 = vsel %vm2818, %v2807, %v1872
    %v2873 = vsel %vm2818, %v2808, %v1874
    %v2874 = vsel %vm2818, %v2809, %v1876
    %v2875 = vsel %vm2818, %v2810, %v1878
    %v2876 = vsel %vm2818, %v2811, %v1880
    %v2877 = vsel %vm2818, %v2812, %v1882
    %v2878 = vsel %vm2818, %v2813, %v1884
    %v2879 = vsel %vm2818, %v2814, %v1886
    %v2880 = vsel %vm2818, %v2815, %v1888
    %v2881 = vsel %vm2818, %v2816, %v1890
    %v2882 = vsel %vm2818, %v2817, %v1892
    %vm2883 = vcmask 146432
    %v2884 = vsel %vm2883, %v2819, %v1962
    %v2885 = vsel %vm2883, %v2820, %v1964
    %v2886 = vsel %vm2883, %v2821, %v1966
    %v2887 = vsel %vm2883, %v2822, %v1968
    %v2888 = vsel %vm2883, %v2823, %v1970
    %v2889 = vsel %vm2883, %v2824, %v1972
    %v2890 = vsel %vm2883, %v2825, %v1974
    %v2891 = vsel %vm2883, %v2826, %v1976
    %v2892 = vsel %vm2883, %v2827, %v1978
    %v2893 = vsel %vm2883, %v2828, %v1980
    %v2894 = vsel %vm2883, %v2829, %v1982
    %v2895 = vsel %vm2883, %v2830, %v1984
    %v2896 = vsel %vm2883, %v2831, %v1986
    %v2897 = vsel %vm2883, %v2832, %v1988
    %v2898 = vsel %vm2883, %v2833, %v1990
    %v2899 = vsel %vm2883, %v2834, %v1992
    %v2900 = vsel %vm2883, %v2835, %v1994
    %v2901 = vsel %vm2883, %v2836, %v1996
    %v2902 = vsel %vm2883, %v2837, %v1998
    %v2903 = vsel %vm2883, %v2838, %v2000
    %v2904 = vsel %vm2883, %v2839, %v2002
    %v2905 = vsel %vm2883, %v2840, %v2004
    %v2906 = vsel %vm2883, %v2841, %v2006
    %v2907 = vsel %vm2883, %v2842, %v2008
    %v2908 = vsel %vm2883, %v2843, %v2010
    %v2909 = vsel %vm2883, %v2844, %v2012
    %v2910 = vsel %vm2883, %v2845, %v2014
    %v2911 = vsel %vm2883, %v2846, %v2016
    %v2912 = vsel %vm2883, %v2847, %v2018
    %v2913 = vsel %vm2883, %v2848, %v2020
    %v2914 = vsel %vm2883, %v2849, %v2022
    %v2915 = vsel %vm2883, %v2850, %v2024
    %v2916 = vsel %vm2883, %v2851, %v2026
    %v2917 = vsel %vm2883, %v2852, %v2028
    %v2918 = vsel %vm2883, %v2853, %v2030
    %v2919 = vsel %vm2883, %v2854, %v2032
    %v2920 = vsel %vm2883, %v2855, %v2034
    %v2921 = vsel %vm2883, %v2856, %v2036
    %v2922 = vsel %vm2883, %v2857, %v2038
    %v2923 = vsel %vm2883, %v2858, %v2040
    %v2924 = vsel %vm2883, %v2859, %v2042
    %v2925 = vsel %vm2883, %v2860, %v2044
    %v2926 = vsel %vm2883, %v2861, %v2046
    %v2927 = vsel %vm2883, %v2862, %v2048
    %v2928 = vsel %vm2883, %v2863, %v2050
    %v2929 = vsel %vm2883, %v2864, %v2052
    %v2930 = vsel %vm2883, %v2865, %v2054
    %v2931 = vsel %vm2883, %v2866, %v2056
    %v2932 = vsel %vm2883, %v2867, %v2058
    %v2933 = vsel %vm2883, %v2868, %v2060
    %v2934 = vsel %vm2883, %v2869, %v2062
    %v2935 = vsel %vm2883, %v2870, %v2064
    %v2936 = vsel %vm2883, %v2871, %v2066
    %v2937 = vsel %vm2883, %v2872, %v2068
    %v2938 = vsel %vm2883, %v2873, %v2070
    %v2939 = vsel %vm2883, %v2874, %v2072
    %v2940 = vsel %vm2883, %v2875, %v2074
    %v2941 = vsel %vm2883, %v2876, %v2076
    %v2942 = vsel %vm2883, %v2877, %v2078
    %v2943 = vsel %vm2883, %v2878, %v2080
    %v2944 = vsel %vm2883, %v2879, %v2082
    %v2945 = vsel %vm2883, %v2880, %v2084
    %v2946 = vsel %vm2883, %v2881, %v2086
    %v2947 = vsel %vm2883, %v2882, %v2088
    %vm2948 = vcmask 171008
    %v2949 = vsel %vm2948, %v2884, %v2166
    %v2950 = vsel %vm2948, %v2885, %v2168
    %v2951 = vsel %vm2948, %v2886, %v2170
    %v2952 = vsel %vm2948, %v2887, %v2172
    %v2953 = vsel %vm2948, %v2888, %v2174
    %v2954 = vsel %vm2948, %v2889, %v2176
    %v2955 = vsel %vm2948, %v2890, %v2178
    %v2956 = vsel %vm2948, %v2891, %v2180
    %v2957 = vsel %vm2948, %v2892, %v2182
    %v2958 = vsel %vm2948, %v2893, %v2184
    %v2959 = vsel %vm2948, %v2894, %v2186
    %v2960 = vsel %vm2948, %v2895, %v2188
    %v2961 = vsel %vm2948, %v2896, %v2190
    %v2962 = vsel %vm2948, %v2897, %v2192
    %v2963 = vsel %vm2948, %v2898, %v2194
    %v2964 = vsel %vm2948, %v2899, %v2196
    %v2965 = vsel %vm2948, %v2900, %v2198
    %v2966 = vsel %vm2948, %v2901, %v2200
    %v2967 = vsel %vm2948, %v2902, %v2202
    %v2968 = vsel %vm2948, %v2903, %v2204
    %v2969 = vsel %vm2948, %v2904, %v2206
    %v2970 = vsel %vm2948, %v2905, %v2208
    %v2971 = vsel %vm2948, %v2906, %v2210
    %v2972 = vsel %vm2948, %v2907, %v2212
    %v2973 = vsel %vm2948, %v2908, %v2214
    %v2974 = vsel %vm2948, %v2909, %v2216
    %v2975 = vsel %vm2948, %v2910, %v2218
    %v2976 = vsel %vm2948, %v2911, %v2220
    %v2977 = vsel %vm2948, %v2912, %v2222
    %v2978 = vsel %vm2948, %v2913, %v2224
    %v2979 = vsel %vm2948, %v2914, %v2226
    %v2980 = vsel %vm2948, %v2915, %v2228
    %v2981 = vsel %vm2948, %v2916, %v2230
    %v2982 = vsel %vm2948, %v2917, %v2232
    %v2983 = vsel %vm2948, %v2918, %v2234
    %v2984 = vsel %vm2948, %v2919, %v2236
    %v2985 = vsel %vm2948, %v2920, %v2238
    %v2986 = vsel %vm2948, %v2921, %v2240
    %v2987 = vsel %vm2948, %v2922, %v2242
    %v2988 = vsel %vm2948, %v2923, %v2244
    %v2989 = vsel %vm2948, %v2924, %v2246
    %v2990 = vsel %vm2948, %v2925, %v2248
    %v2991 = vsel %vm2948, %v2926, %v2250
    %v2992 = vsel %vm2948, %v2927, %v2252
    %v2993 = vsel %vm2948, %v2928, %v2254
    %v2994 = vsel %vm2948, %v2929, %v2256
    %v2995 = vsel %vm2948, %v2930, %v2258
    %v2996 = vsel %vm2948, %v2931, %v2260
    %v2997 = vsel %vm2948, %v2932, %v2262
    %v2998 = vsel %vm2948, %v2933, %v2264
    %v2999 = vsel %vm2948, %v2934, %v2266
    %v3000 = vsel %vm2948, %v2935, %v2268
    %v3001 = vsel %vm2948, %v2936, %v2270
    %v3002 = vsel %vm2948, %v2937, %v2272
    %v3003 = vsel %vm2948, %v2938, %v2274
    %v3004 = vsel %vm2948, %v2939, %v2276
    %v3005 = vsel %vm2948, %v2940, %v2278
    %v3006 = vsel %vm2948, %v2941, %v2280
    %v3007 = vsel %vm2948, %v2942, %v2282
    %v3008 = vsel %vm2948, %v2943, %v2284
    %v3009 = vsel %vm2948, %v2944, %v2286
    %v3010 = vsel %vm2948, %v2945, %v2288
    %v3011 = vsel %vm2948, %v2946, %v2290
    %v3012 = vsel %vm2948, %v2947, %v2292
    %vm3013 = vcmask 195584
    %v3014 = vsel %vm3013, %v2949, %v2368
    %v3015 = vsel %vm3013, %v2950, %v2370
    %v3016 = vsel %vm3013, %v2951, %v2372
    %v3017 = vsel %vm3013, %v2952, %v2374
    %v3018 = vsel %vm3013, %v2953, %v2376
    %v3019 = vsel %vm3013, %v2954, %v2378
    %v3020 = vsel %vm3013, %v2955, %v2380
    %v3021 = vsel %vm3013, %v2956, %v2382
    %v3022 = vsel %vm3013, %v2957, %v2384
    %v3023 = vsel %vm3013, %v2958, %v2386
    %v3024 = vsel %vm3013, %v2959, %v2388
    %v3025 = vsel %vm3013, %v2960, %v2390
    %v3026 = vsel %vm3013, %v2961, %v2392
    %v3027 = vsel %vm3013, %v2962, %v2394
    %v3028 = vsel %vm3013, %v2963, %v2396
    %v3029 = vsel %vm3013, %v2964, %v2398
    %v3030 = vsel %vm3013, %v2965, %v2400
    %v3031 = vsel %vm3013, %v2966, %v2402
    %v3032 = vsel %vm3013, %v2967, %v2404
    %v3033 = vsel %vm3013, %v2968, %v2406
    %v3034 = vsel %vm3013, %v2969, %v2408
    %v3035 = vsel %vm3013, %v2970, %v2410
    %v3036 = vsel %vm3013, %v2971, %v2412
    %v3037 = vsel %vm3013, %v2972, %v2414
    %v3038 = vsel %vm3013, %v2973, %v2416
    %v3039 = vsel %vm3013, %v2974, %v2418
    %v3040 = vsel %vm3013, %v2975, %v2420
    %v3041 = vsel %vm3013, %v2976, %v2422
    %v3042 = vsel %vm3013, %v2977, %v2424
    %v3043 = vsel %vm3013, %v2978, %v2426
    %v3044 = vsel %vm3013, %v2979, %v2428
    %v3045 = vsel %vm3013, %v2980, %v2430
    %v3046 = vsel %vm3013, %v2981, %v2432
    %v3047 = vsel %vm3013, %v2982, %v2434
    %v3048 = vsel %vm3013, %v2983, %v2436
    %v3049 = vsel %vm3013, %v2984, %v2438
    %v3050 = vsel %vm3013, %v2985, %v2440
    %v3051 = vsel %vm3013, %v2986, %v2442
    %v3052 = vsel %vm3013, %v2987, %v2444
    %v3053 = vsel %vm3013, %v2988, %v2446
    %v3054 = vsel %vm3013, %v2989, %v2448
    %v3055 = vsel %vm3013, %v2990, %v2450
    %v3056 = vsel %vm3013, %v2991, %v2452
    %v3057 = vsel %vm3013, %v2992, %v2454
    %v3058 = vsel %vm3013, %v2993, %v2456
    %v3059 = vsel %vm3013, %v2994, %v2458
    %v3060 = vsel %vm3013, %v2995, %v2460
    %v3061 = vsel %vm3013, %v2996, %v2462
    %v3062 = vsel %vm3013, %v2997, %v2464
    %v3063 = vsel %vm3013, %v2998, %v2466
    %v3064 = vsel %vm3013, %v2999, %v2468
    %v3065 = vsel %vm3013, %v3000, %v2470
    %v3066 = vsel %vm3013, %v3001, %v2472
    %v3067 = vsel %vm3013, %v3002, %v2474
    %v3068 = vsel %vm3013, %v3003, %v2476
    %v3069 = vsel %vm3013, %v3004, %v2478
    %v3070 = vsel %vm3013, %v3005, %v2480
    %v3071 = vsel %vm3013, %v3006, %v2482
    %v3072 = vsel %vm3013, %v3007, %v2484
    %v3073 = vsel %vm3013, %v3008, %v2486
    %v3074 = vsel %vm3013, %v3009, %v2488
    %v3075 = vsel %vm3013, %v3010, %v2490
    %v3076 = vsel %vm3013, %v3011, %v2492
    %v3077 = vsel %vm3013, %v3012, %v2494
    %v3078 = vpack.c.bf16 %v3015, %v3014
    %v3079 = vpack.c.bf16 %v3017, %v3016
    %v3080 = vpack.c.bf16 %v3019, %v3018
    %v3081 = vpack.c.bf16 %v3021, %v3020
    %v3082 = vpack.c.bf16 %v3023, %v3022
    %v3083 = vpack.c.bf16 %v3025, %v3024
    %v3084 = vpack.c.bf16 %v3027, %v3026
    %v3085 = vpack.c.bf16 %v3029, %v3028
    %v3086 = vpack.c.bf16 %v3031, %v3030
    %v3087 = vpack.c.bf16 %v3033, %v3032
    %v3088 = vpack.c.bf16 %v3035, %v3034
    %v3089 = vpack.c.bf16 %v3037, %v3036
    %v3090 = vpack.c.bf16 %v3039, %v3038
    %v3091 = vpack.c.bf16 %v3041, %v3040
    %v3092 = vpack.c.bf16 %v3043, %v3042
    %v3093 = vpack.c.bf16 %v3045, %v3044
    %v3094 = vpack.c.bf16 %v3047, %v3046
    %v3095 = vpack.c.bf16 %v3049, %v3048
    %v3096 = vpack.c.bf16 %v3051, %v3050
    %v3097 = vpack.c.bf16 %v3053, %v3052
    %v3098 = vpack.c.bf16 %v3055, %v3054
    %v3099 = vpack.c.bf16 %v3057, %v3056
    %v3100 = vpack.c.bf16 %v3059, %v3058
    %v3101 = vpack.c.bf16 %v3061, %v3060
    %v3102 = vpack.c.bf16 %v3063, %v3062
    %v3103 = vpack.c.bf16 %v3065, %v3064
    %v3104 = vpack.c.bf16 %v3067, %v3066
    %v3105 = vpack.c.bf16 %v3069, %v3068
    %v3106 = vpack.c.bf16 %v3071, %v3070
    %v3107 = vpack.c.bf16 %v3073, %v3072
    %v3108 = vpack.c.bf16 %v3075, %v3074
    %v3109 = vpack.c.bf16 %v3077, %v3076
    %v3110 = vld [vmem:[#allocation9] sm:$0xf]
    %v3111 = vld [vmem:[#allocation9 + $0x4] sm:$0xf]
    %v3112 = vld [vmem:[#allocation9 + $0x8] sm:$0xf]
    %v3113 = vld [vmem:[#allocation9 + $0xc] sm:$0x3]
    %v3118 = vunpack.c.l.b16 %v3110
    %v3119 = vunpack.c.l.b16 %v3111
    %v3120 = vunpack.c.l.b16 %v3112
    %v3121 = vunpack.c.l.b16 %v3113
    %v3122 = vpack.c.b16 %v3119, %v3118
    %v3123 = vpack.c.b16 %v3121, %v3120
    %vm3125 = vcmask 220160
    %v3127 = vsel %vm3125, %v3078, 0
    %v3130 = vsel %vm3125, %v3079, 0
    %v3133 = vsel %vm3125, %v3080, 0
    %v3136 = vsel %vm3125, %v3081, 0
    %v3139 = vsel %vm3125, %v3082, 0
    %v3142 = vsel %vm3125, %v3083, 0
    %v3145 = vsel %vm3125, %v3084, 0
    %v3148 = vsel %vm3125, %v3085, 0
    %v3151 = vsel %vm3125, %v3086, 0
    %v3154 = vsel %vm3125, %v3087, 0
    %v3157 = vsel %vm3125, %v3088, 0
    %v3160 = vsel %vm3125, %v3089, 0
    %v3163 = vsel %vm3125, %v3090, 0
    %v3166 = vsel %vm3125, %v3091, 0
    %v3169 = vsel %vm3125, %v3092, 0
    %v3172 = vsel %vm3125, %v3093, 0
    %v3175 = vsel %vm3125, %v3094, 0
    %v3178 = vsel %vm3125, %v3095, 0
    %v3181 = vsel %vm3125, %v3096, 0
    %v3184 = vsel %vm3125, %v3097, 0
    %v3187 = vsel %vm3125, %v3098, 0
    %v3190 = vsel %vm3125, %v3099, 0
    %v3193 = vsel %vm3125, %v3100, 0
    %v3196 = vsel %vm3125, %v3101, 0
    %v3199 = vsel %vm3125, %v3102, 0
    %v3202 = vsel %vm3125, %v3103, 0
    %v3205 = vsel %vm3125, %v3104, 0
    %v3208 = vsel %vm3125, %v3105, 0
    %v3211 = vsel %vm3125, %v3106, 0
    %v3214 = vsel %vm3125, %v3107, 0
    %v3217 = vsel %vm3125, %v3108, 0
    %v3220 = vsel %vm3125, %v3109, 0
    %vm3222 = vcmask 1044480
    %v3223 = vsel %vm3222, 4294967295, 65535
    %v3224 = vsel %vm1002, %v3223, 0
    %v3226 = vand.u32 %v3123, %v3224
    %3228 = vmatprep.subr.bf16.mxu0 0
    %3229 = vmatpush1.bf16.msra.mxu0 %v3122
    %3230 = vmatprep.subr.bf16.mxu0 0
    %3231 = vmatpush1.bf16.msra.mxu0 %v3226
    %3232 = vmatprep.subr.bf16.mxu0 0
    %3233 = vmatpush1.bf16.msra.mxu0 0
    %3234 = vmatprep.subr.bf16.mxu0 0
    %3235 = vmatpush1.bf16.msra.mxu0 0
    %3236 = vmatprep.subr.bf16.mxu0 0
    %3237 = vmatpush1.bf16.msra.mxu0 0
    %3238 = vmatprep.subr.bf16.mxu0 0
    %3239 = vmatpush1.bf16.msra.mxu0 0
    %3240 = vmatprep.subr.bf16.mxu0 0
    %3241 = vmatpush1.bf16.msra.mxu0 0
    %3242 = vmatprep.subr.bf16.mxu0 0
    %3243 = vmatpush1.bf16.msra.mxu0 0
    %3244 = vmatprep.subr.bf16.mxu0 0
    %3245 = vmatpush1.bf16.msra.mxu0 0
    %3246 = vmatprep.subr.bf16.mxu0 0
    %3247 = vmatpush1.bf16.msra.mxu0 0
    %3248 = vmatprep.subr.bf16.mxu0 0
    %3249 = vmatpush1.bf16.msra.mxu0 0
    %3250 = vmatprep.subr.bf16.mxu0 0
    %3251 = vmatpush1.bf16.msra.mxu0 0
    %3252 = vmatprep.subr.bf16.mxu0 0
    %3253 = vmatpush1.bf16.msra.mxu0 0
    %3254 = vmatprep.subr.bf16.mxu0 0
    %3255 = vmatpush1.bf16.msra.mxu0 0
    %3256 = vmatprep.subr.bf16.mxu0 0
    %3257 = vmatpush1.bf16.msra.mxu0 0
    %3258 = vmatprep.subr.bf16.mxu0 0
    %3259 = vmatpush1.bf16.msra.mxu0 0
    %3260 = vmatprep.mubr.bf16.mxu0 0
    %3261 = vmatmul.mubr.bf16.gmra.mrb[0].mxu0 %v3127
    %v3262 = vpop.f32.mrb[0].mxu0
    %v3263 = vadd.f32 0.0, %v3262
    %v3264 = vpop.f32.mrb[0].mxu0
    %v3265 = vpop.f32.mrb[0].mxu0
    %v3266 = vadd.f32 0.0, %v3265
    %v3267 = vpop.f32.mrb[0].mxu0
    %3268 = vmatprep.mubr.bf16.mxu0 0
    %3269 = vmatmul.mubr.bf16.gmra.mrb[0].mxu0 %v3130
    %v3270 = vpop.f32.mrb[0].mxu0
    %v3271 = vadd.f32 0.0, %v3270
    %v3272 = vpop.f32.mrb[0].mxu0
    %v3273 = vpop.f32.mrb[0].mxu0
    %v3274 = vadd.f32 0.0, %v3273
    %v3275 = vpop.f32.mrb[0].mxu0
    %3276 = vmatprep.mubr.bf16.mxu0 0
    %3277 = vmatmul.mubr.bf16.gmra.mrb[0].mxu0 %v3133
    %v3278 = vpop.f32.mrb[0].mxu0
    %v3279 = vadd.f32 0.0, %v3278
    %v3280 = vpop.f32.mrb[0].mxu0
    %v3281 = vpop.f32.mrb[0].mxu0
    %v3282 = vadd.f32 0.0, %v3281
    %v3283 = vpop.f32.mrb[0].mxu0
    %3284 = vmatprep.mubr.bf16.mxu0 0
    %3285 = vmatmul.mubr.bf16.gmra.mrb[0].mxu0 %v3136
    %v3286 = vpop.f32.mrb[0].mxu0
    %v3287 = vadd.f32 0.0, %v3286
    %v3288 = vpop.f32.mrb[0].mxu0
    %v3289 = vpop.f32.mrb[0].mxu0
    %v3290 = vadd.f32 0.0, %v3289
    %v3291 = vpop.f32.mrb[0].mxu0
    %3292 = vmatprep.mubr.bf16.mxu0 0
    %3293 = vmatmul.mubr.bf16.gmra.mrb[0].mxu0 %v3139
    %v3294 = vpop.f32.mrb[0].mxu0
    %v3295 = vadd.f32 0.0, %v3294
    %v3296 = vpop.f32.mrb[0].mxu0
    %v3297 = vpop.f32.mrb[0].mxu0
    %v3298 = vadd.f32 0.0, %v3297
    %v3299 = vpop.f32.mrb[0].mxu0
    %3300 = vmatprep.mubr.bf16.mxu0 0
    %3301 = vmatmul.mubr.bf16.gmra.mrb[0].mxu0 %v3142
    %v3302 = vpop.f32.mrb[0].mxu0
    %v3303 = vadd.f32 0.0, %v3302
    %v3304 = vpop.f32.mrb[0].mxu0
    %v3305 = vpop.f32.mrb[0].mxu0
    %v3306 = vadd.f32 0.0, %v3305
    %v3307 = vpop.f32.mrb[0].mxu0
    %3308 = vmatprep.mubr.bf16.mxu0 0
    %3309 = vmatmul.mubr.bf16.gmra.mrb[0].mxu0 %v3145
    %v3310 = vpop.f32.mrb[0].mxu0
    %v3311 = vadd.f32 0.0, %v3310
    %v3312 = vpop.f32.mrb[0].mxu0
    %v3313 = vpop.f32.mrb[0].mxu0
    %v3314 = vadd.f32 0.0, %v3313
    %v3315 = vpop.f32.mrb[0].mxu0
    %3316 = vmatprep.mubr.bf16.mxu0 0
    %3317 = vmatmul.mubr.bf16.gmra.mrb[0].mxu0 %v3148
    %v3318 = vpop.f32.mrb[0].mxu0
    %v3319 = vadd.f32 0.0, %v3318
    %v3320 = vpop.f32.mrb[0].mxu0
    %v3321 = vpop.f32.mrb[0].mxu0
    %v3322 = vadd.f32 0.0, %v3321
    %v3323 = vpop.f32.mrb[0].mxu0
    %3324 = vmatprep.mubr.bf16.mxu0 0
    %3325 = vmatmul.mubr.bf16.gmra.mrb[0].mxu0 %v3151
    %v3326 = vpop.f32.mrb[0].mxu0
    %v3327 = vadd.f32 0.0, %v3326
    %v3328 = vpop.f32.mrb[0].mxu0
    %v3329 = vpop.f32.mrb[0].mxu0
    %v3330 = vadd.f32 0.0, %v3329
    %v3331 = vpop.f32.mrb[0].mxu0
    %3332 = vmatprep.mubr.bf16.mxu0 0
    %3333 = vmatmul.mubr.bf16.gmra.mrb[0].mxu0 %v3154
    %v3334 = vpop.f32.mrb[0].mxu0
    %v3335 = vadd.f32 0.0, %v3334
    %v3336 = vpop.f32.mrb[0].mxu0
    %v3337 = vpop.f32.mrb[0].mxu0
    %v3338 = vadd.f32 0.0, %v3337
    %v3339 = vpop.f32.mrb[0].mxu0
    %3340 = vmatprep.mubr.bf16.mxu0 0
    %3341 = vmatmul.mubr.bf16.gmra.mrb[0].mxu0 %v3157
    %v3342 = vpop.f32.mrb[0].mxu0
    %v3343 = vadd.f32 0.0, %v3342
    %v3344 = vpop.f32.mrb[0].mxu0
    %v3345 = vpop.f32.mrb[0].mxu0
    %v3346 = vadd.f32 0.0, %v3345
    %v3347 = vpop.f32.mrb[0].mxu0
    %3348 = vmatprep.mubr.bf16.mxu0 0
    %3349 = vmatmul.mubr.bf16.gmra.mrb[0].mxu0 %v3160
    %v3350 = vpop.f32.mrb[0].mxu0
    %v3351 = vadd.f32 0.0, %v3350
    %v3352 = vpop.f32.mrb[0].mxu0
    %v3353 = vpop.f32.mrb[0].mxu0
    %v3354 = vadd.f32 0.0, %v3353
    %v3355 = vpop.f32.mrb[0].mxu0
    %3356 = vmatprep.mubr.bf16.mxu0 0
    %3357 = vmatmul.mubr.bf16.gmra.mrb[0].mxu0 %v3163
    %v3358 = vpop.f32.mrb[0].mxu0
    %v3359 = vadd.f32 0.0, %v3358
    %v3360 = vpop.f32.mrb[0].mxu0
    %v3361 = vpop.f32.mrb[0].mxu0
    %v3362 = vadd.f32 0.0, %v3361
    %v3363 = vpop.f32.mrb[0].mxu0
    %3364 = vmatprep.mubr.bf16.mxu0 0
    %3365 = vmatmul.mubr.bf16.gmra.mrb[0].mxu0 %v3166
    %v3366 = vpop.f32.mrb[0].mxu0
    %v3367 = vadd.f32 0.0, %v3366
    %v3368 = vpop.f32.mrb[0].mxu0
    %v3369 = vpop.f32.mrb[0].mxu0
    %v3370 = vadd.f32 0.0, %v3369
    %v3371 = vpop.f32.mrb[0].mxu0
    %3372 = vmatprep.mubr.bf16.mxu0 0
    %3373 = vmatmul.mubr.bf16.gmra.mrb[0].mxu0 %v3169
    %v3374 = vpop.f32.mrb[0].mxu0
    %v3375 = vadd.f32 0.0, %v3374
    %v3376 = vpop.f32.mrb[0].mxu0
    %v3377 = vpop.f32.mrb[0].mxu0
    %v3378 = vadd.f32 0.0, %v3377
    %v3379 = vpop.f32.mrb[0].mxu0
    %3380 = vmatprep.mubr.bf16.mxu0 0
    %3381 = vmatmul.mubr.bf16.gmra.mrb[0].mxu0 %v3172
    %v3382 = vpop.f32.mrb[0].mxu0
    %v3383 = vadd.f32 0.0, %v3382
    %v3384 = vpop.f32.mrb[0].mxu0
    %v3385 = vpop.f32.mrb[0].mxu0
    %v3386 = vadd.f32 0.0, %v3385
    %v3387 = vpop.f32.mrb[0].mxu0
    %3388 = vmatprep.mubr.bf16.mxu0 0
    %3389 = vmatmul.mubr.bf16.gmra.mrb[0].mxu0 %v3175
    %v3390 = vpop.f32.mrb[0].mxu0
    %v3391 = vadd.f32 0.0, %v3390
    %v3392 = vpop.f32.mrb[0].mxu0
    %v3393 = vpop.f32.mrb[0].mxu0
    %v3394 = vadd.f32 0.0, %v3393
    %v3395 = vpop.f32.mrb[0].mxu0
    %3396 = vmatprep.mubr.bf16.mxu0 0
    %3397 = vmatmul.mubr.bf16.gmra.mrb[0].mxu0 %v3178
    %v3398 = vpop.f32.mrb[0].mxu0
    %v3399 = vadd.f32 0.0, %v3398
    %v3400 = vpop.f32.mrb[0].mxu0
    %v3401 = vpop.f32.mrb[0].mxu0
    %v3402 = vadd.f32 0.0, %v3401
    %v3403 = vpop.f32.mrb[0].mxu0
    %3404 = vmatprep.mubr.bf16.mxu0 0
    %3405 = vmatmul.mubr.bf16.gmra.mrb[0].mxu0 %v3181
    %v3406 = vpop.f32.mrb[0].mxu0
    %v3407 = vadd.f32 0.0, %v3406
    %v3408 = vpop.f32.mrb[0].mxu0
    %v3409 = vpop.f32.mrb[0].mxu0
    %v3410 = vadd.f32 0.0, %v3409
    %v3411 = vpop.f32.mrb[0].mxu0
    %3412 = vmatprep.mubr.bf16.mxu0 0
    %3413 = vmatmul.mubr.bf16.gmra.mrb[0].mxu0 %v3184
    %v3414 = vpop.f32.mrb[0].mxu0
    %v3415 = vadd.f32 0.0, %v3414
    %v3416 = vpop.f32.mrb[0].mxu0
    %v3417 = vpop.f32.mrb[0].mxu0
    %v3418 = vadd.f32 0.0, %v3417
    %v3419 = vpop.f32.mrb[0].mxu0
    %3420 = vmatprep.mubr.bf16.mxu0 0
    %3421 = vmatmul.mubr.bf16.gmra.mrb[0].mxu0 %v3187
    %v3422 = vpop.f32.mrb[0].mxu0
    %v3423 = vadd.f32 0.0, %v3422
    %v3424 = vpop.f32.mrb[0].mxu0
    %v3425 = vpop.f32.mrb[0].mxu0
    %v3426 = vadd.f32 0.0, %v3425
    %v3427 = vpop.f32.mrb[0].mxu0
    %3428 = vmatprep.mubr.bf16.mxu0 0
    %3429 = vmatmul.mubr.bf16.gmra.mrb[0].mxu0 %v3190
    %v3430 = vpop.f32.mrb[0].mxu0
    %v3431 = vadd.f32 0.0, %v3430
    %v3432 = vpop.f32.mrb[0].mxu0
    %v3433 = vpop.f32.mrb[0].mxu0
    %v3434 = vadd.f32 0.0, %v3433
    %v3435 = vpop.f32.mrb[0].mxu0
    %3436 = vmatprep.mubr.bf16.mxu0 0
    %3437 = vmatmul.mubr.bf16.gmra.mrb[0].mxu0 %v3193
    %v3438 = vpop.f32.mrb[0].mxu0
    %v3439 = vadd.f32 0.0, %v3438
    %v3440 = vpop.f32.mrb[0].mxu0
    %v3441 = vpop.f32.mrb[0].mxu0
    %v3442 = vadd.f32 0.0, %v3441
    %v3443 = vpop.f32.mrb[0].mxu0
    %3444 = vmatprep.mubr.bf16.mxu0 0
    %3445 = vmatmul.mubr.bf16.gmra.mrb[0].mxu0 %v3196
    %v3446 = vpop.f32.mrb[0].mxu0
    %v3447 = vadd.f32 0.0, %v3446
    %v3448 = vpop.f32.mrb[0].mxu0
    %v3449 = vpop.f32.mrb[0].mxu0
    %v3450 = vadd.f32 0.0, %v3449
    %v3451 = vpop.f32.mrb[0].mxu0
    %3452 = vmatprep.mubr.bf16.mxu0 0
    %3453 = vmatmul.mubr.bf16.gmra.mrb[0].mxu0 %v3199
    %v3454 = vpop.f32.mrb[0].mxu0
    %v3455 = vadd.f32 0.0, %v3454
    %v3456 = vpop.f32.mrb[0].mxu0
    %v3457 = vpop.f32.mrb[0].mxu0
    %v3458 = vadd.f32 0.0, %v3457
    %v3459 = vpop.f32.mrb[0].mxu0
    %3460 = vmatprep.mubr.bf16.mxu0 0
    %3461 = vmatmul.mubr.bf16.gmra.mrb[0].mxu0 %v3202
    %v3462 = vpop.f32.mrb[0].mxu0
    %v3463 = vadd.f32 0.0, %v3462
    %v3464 = vpop.f32.mrb[0].mxu0
    %v3465 = vpop.f32.mrb[0].mxu0
    %v3466 = vadd.f32 0.0, %v3465
    %v3467 = vpop.f32.mrb[0].mxu0
    %3468 = vmatprep.mubr.bf16.mxu0 0
    %3469 = vmatmul.mubr.bf16.gmra.mrb[0].mxu0 %v3205
    %v3470 = vpop.f32.mrb[0].mxu0
    %v3471 = vadd.f32 0.0, %v3470
    %v3472 = vpop.f32.mrb[0].mxu0
    %v3473 = vpop.f32.mrb[0].mxu0
    %v3474 = vadd.f32 0.0, %v3473
    %v3475 = vpop.f32.mrb[0].mxu0
    %3476 = vmatprep.mubr.bf16.mxu0 0
    %3477 = vmatmul.mubr.bf16.gmra.mrb[0].mxu0 %v3208
    %v3478 = vpop.f32.mrb[0].mxu0
    %v3479 = vadd.f32 0.0, %v3478
    %v3480 = vpop.f32.mrb[0].mxu0
    %v3481 = vpop.f32.mrb[0].mxu0
    %v3482 = vadd.f32 0.0, %v3481
    %v3483 = vpop.f32.mrb[0].mxu0
    %3484 = vmatprep.mubr.bf16.mxu0 0
    %3485 = vmatmul.mubr.bf16.gmra.mrb[0].mxu0 %v3211
    %v3486 = vpop.f32.mrb[0].mxu0
    %v3487 = vadd.f32 0.0, %v3486
    %v3488 = vpop.f32.mrb[0].mxu0
    %v3489 = vpop.f32.mrb[0].mxu0
    %v3490 = vadd.f32 0.0, %v3489
    %v3491 = vpop.f32.mrb[0].mxu0
    %3492 = vmatprep.mubr.bf16.mxu0 0
    %3493 = vmatmul.mubr.bf16.gmra.mrb[0].mxu0 %v3214
    %v3494 = vpop.f32.mrb[0].mxu0
    %v3495 = vadd.f32 0.0, %v3494
    %v3496 = vpop.f32.mrb[0].mxu0
    %v3497 = vpop.f32.mrb[0].mxu0
    %v3498 = vadd.f32 0.0, %v3497
    %v3499 = vpop.f32.mrb[0].mxu0
    %3500 = vmatprep.mubr.bf16.mxu0 0
    %3501 = vmatmul.mubr.bf16.gmra.mrb[0].mxu0 %v3217
    %v3502 = vpop.f32.mrb[0].mxu0
    %v3503 = vadd.f32 0.0, %v3502
    %v3504 = vpop.f32.mrb[0].mxu0
    %v3505 = vpop.f32.mrb[0].mxu0
    %v3506 = vadd.f32 0.0, %v3505
    %v3507 = vpop.f32.mrb[0].mxu0
    %3508 = vmatprep.mubr.bf16.mxu0 0
    %3509 = vmatmul.mubr.bf16.gmra.mrb[0].mxu0 %v3220
    %v3510 = vpop.f32.mrb[0].mxu0
    %v3511 = vadd.f32 0.0, %v3510
    %v3512 = vpop.f32.mrb[0].mxu0
    %v3513 = vpop.f32.mrb[0].mxu0
    %v3514 = vadd.f32 0.0, %v3513
    %v3515 = vpop.f32.mrb[0].mxu0
    %3516 = vdwg.mxu0
    %vm3517 = vcmask 261120
    %v3518 = vsel %vm3517, %v3263, 0.0
    %v3519 = vsel %vm3517, %v3266, 0.0
    %v3520 = vadd.f32 %v3518, %v3519
    %v3521 = vsel %vm3517, %v3271, 0.0
    %v3522 = vadd.f32 %v3520, %v3521
    %v3523 = vsel %vm3517, %v3274, 0.0
    %v3524 = vadd.f32 %v3522, %v3523
    %v3525 = vsel %vm3517, %v3279, 0.0
    %v3526 = vadd.f32 %v3524, %v3525
    %v3527 = vsel %vm3517, %v3282, 0.0
    %v3528 = vadd.f32 %v3526, %v3527
    %v3529 = vsel %vm3517, %v3287, 0.0
    %v3530 = vadd.f32 %v3528, %v3529
    %v3531 = vsel %vm3517, %v3290, 0.0
    %v3532 = vadd.f32 %v3530, %v3531
    %v3533 = vsel %vm3517, %v3295, 0.0
    %v3534 = vadd.f32 %v3532, %v3533
    %v3535 = vsel %vm3517, %v3298, 0.0
    %v3536 = vadd.f32 %v3534, %v3535
    %v3537 = vsel %vm3517, %v3303, 0.0
    %v3538 = vadd.f32 %v3536, %v3537
    %v3539 = vsel %vm3517, %v3306, 0.0
    %v3540 = vadd.f32 %v3538, %v3539
    %v3541 = vsel %vm3517, %v3311, 0.0
    %v3542 = vadd.f32 %v3540, %v3541
    %v3543 = vsel %vm3517, %v3314, 0.0
    %v3544 = vadd.f32 %v3542, %v3543
    %v3545 = vsel %vm3517, %v3319, 0.0
    %v3546 = vadd.f32 %v3544, %v3545
    %v3547 = vsel %vm3517, %v3322, 0.0
    %v3548 = vadd.f32 %v3546, %v3547
    %v3549 = vsel %vm3517, %v3327, 0.0
    %v3550 = vadd.f32 %v3548, %v3549
    %v3551 = vsel %vm3517, %v3330, 0.0
    %v3552 = vadd.f32 %v3550, %v3551
    %v3553 = vsel %vm3517, %v3335, 0.0
    %v3554 = vadd.f32 %v3552, %v3553
    %v3555 = vsel %vm3517, %v3338, 0.0
    %v3556 = vadd.f32 %v3554, %v3555
    %v3557 = vsel %vm3517, %v3343, 0.0
    %v3558 = vadd.f32 %v3556, %v3557
    %v3559 = vsel %vm3517, %v3346, 0.0
    %v3560 = vadd.f32 %v3558, %v3559
    %v3561 = vsel %vm3517, %v3351, 0.0
    %v3562 = vadd.f32 %v3560, %v3561
    %v3563 = vsel %vm3517, %v3354, 0.0
    %v3564 = vadd.f32 %v3562, %v3563
    %v3565 = vsel %vm3517, %v3359, 0.0
    %v3566 = vadd.f32 %v3564, %v3565
    %v3567 = vsel %vm3517, %v3362, 0.0
    %v3568 = vadd.f32 %v3566, %v3567
    %v3569 = vsel %vm3517, %v3367, 0.0
    %v3570 = vadd.f32 %v3568, %v3569
    %v3571 = vsel %vm3517, %v3370, 0.0
    %v3572 = vadd.f32 %v3570, %v3571
    %v3573 = vsel %vm3517, %v3375, 0.0
    %v3574 = vadd.f32 %v3572, %v3573
    %v3575 = vsel %vm3517, %v3378, 0.0
    %v3576 = vadd.f32 %v3574, %v3575
    %v3577 = vsel %vm3517, %v3383, 0.0
    %v3578 = vadd.f32 %v3576, %v3577
    %v3579 = vsel %vm3517, %v3386, 0.0
    %v3580 = vadd.f32 %v3578, %v3579
    %v3581 = vsel %vm3517, %v3391, 0.0
    %v3582 = vadd.f32 %v3580, %v3581
    %v3583 = vsel %vm3517, %v3394, 0.0
    %v3584 = vadd.f32 %v3582, %v3583
    %v3585 = vsel %vm3517, %v3399, 0.0
    %v3586 = vadd.f32 %v3584, %v3585
    %v3587 = vsel %vm3517, %v3402, 0.0
    %v3588 = vadd.f32 %v3586, %v3587
    %v3589 = vsel %vm3517, %v3407, 0.0
    %v3590 = vadd.f32 %v3588, %v3589
    %v3591 = vsel %vm3517, %v3410, 0.0
    %v3592 = vadd.f32 %v3590, %v3591
    %v3593 = vsel %vm3517, %v3415, 0.0
    %v3594 = vadd.f32 %v3592, %v3593
    %v3595 = vsel %vm3517, %v3418, 0.0
    %v3596 = vadd.f32 %v3594, %v3595
    %v3597 = vsel %vm3517, %v3423, 0.0
    %v3598 = vadd.f32 %v3596, %v3597
    %v3599 = vsel %vm3517, %v3426, 0.0
    %v3600 = vadd.f32 %v3598, %v3599
    %v3601 = vsel %vm3517, %v3431, 0.0
    %v3602 = vadd.f32 %v3600, %v3601
    %v3603 = vsel %vm3517, %v3434, 0.0
    %v3604 = vadd.f32 %v3602, %v3603
    %v3605 = vsel %vm3517, %v3439, 0.0
    %v3606 = vadd.f32 %v3604, %v3605
    %v3607 = vsel %vm3517, %v3442, 0.0
    %v3608 = vadd.f32 %v3606, %v3607
    %v3609 = vsel %vm3517, %v3447, 0.0
    %v3610 = vadd.f32 %v3608, %v3609
    %v3611 = vsel %vm3517, %v3450, 0.0
    %v3612 = vadd.f32 %v3610, %v3611
    %v3613 = vsel %vm3517, %v3455, 0.0
    %v3614 = vadd.f32 %v3612, %v3613
    %v3615 = vsel %vm3517, %v3458, 0.0
    %v3616 = vadd.f32 %v3614, %v3615
    %v3617 = vsel %vm3517, %v3463, 0.0
    %v3618 = vadd.f32 %v3616, %v3617
    %v3619 = vsel %vm3517, %v3466, 0.0
    %v3620 = vadd.f32 %v3618, %v3619
    %v3621 = vsel %vm3517, %v3471, 0.0
    %v3622 = vadd.f32 %v3620, %v3621
    %v3623 = vsel %vm3517, %v3474, 0.0
    %v3624 = vadd.f32 %v3622, %v3623
    %v3625 = vsel %vm3517, %v3479, 0.0
    %v3626 = vadd.f32 %v3624, %v3625
    %v3627 = vsel %vm3517, %v3482, 0.0
    %v3628 = vadd.f32 %v3626, %v3627
    %v3629 = vsel %vm3517, %v3487, 0.0
    %v3630 = vadd.f32 %v3628, %v3629
    %v3631 = vsel %vm3517, %v3490, 0.0
    %v3632 = vadd.f32 %v3630, %v3631
    %v3633 = vsel %vm3517, %v3495, 0.0
    %v3634 = vadd.f32 %v3632, %v3633
    %v3635 = vsel %vm3517, %v3498, 0.0
    %v3636 = vadd.f32 %v3634, %v3635
    %v3637 = vsel %vm3517, %v3503, 0.0
    %v3638 = vadd.f32 %v3636, %v3637
    %v3639 = vsel %vm3517, %v3506, 0.0
    %v3640 = vadd.f32 %v3638, %v3639
    %v3641 = vsel %vm3517, %v3511, 0.0
    %v3642 = vadd.f32 %v3640, %v3641
    %v3643 = vsel %vm3517, %v3514, 0.0
    %v3644 = vadd.f32 %v3642, %v3643
    %v3645 = vrot.slane %v3644, 4
    %v3646 = vadd.f32 %v3644, %v3645
    %v3647 = vrot.slane %v3646, 2
    %v3648 = vadd.f32 %v3646, %v3647
    %v3649 = vrot.slane %v3648, 1
    %v3650 = vadd.f32 %v3648, %v3649
    %v3651 = vmul.f32 %v3650, 0.001953125
    %v3652 = vmul.f32 %v3263, %v3263
    %v3653 = vmul.f32 %v3266, %v3266
    %v3654 = vmul.f32 %v3271, %v3271
    %v3655 = vmul.f32 %v3274, %v3274
    %v3656 = vmul.f32 %v3279, %v3279
    %v3657 = vmul.f32 %v3282, %v3282
    %v3658 = vmul.f32 %v3287, %v3287
    %v3659 = vmul.f32 %v3290, %v3290
    %v3660 = vmul.f32 %v3295, %v3295
    %v3661 = vmul.f32 %v3298, %v3298
    %v3662 = vmul.f32 %v3303, %v3303
    %v3663 = vmul.f32 %v3306, %v3306
    %v3664 = vmul.f32 %v3311, %v3311
    %v3665 = vmul.f32 %v3314, %v3314
    %v3666 = vmul.f32 %v3319, %v3319
    %v3667 = vmul.f32 %v3322, %v3322
    %v3668 = vmul.f32 %v3327, %v3327
    %v3669 = vmul.f32 %v3330, %v3330
    %v3670 = vmul.f32 %v3335, %v3335
    %v3671 = vmul.f32 %v3338, %v3338
    %v3672 = vmul.f32 %v3343, %v3343
    %v3673 = vmul.f32 %v3346, %v3346
    %v3674 = vmul.f32 %v3351, %v3351
    %v3675 = vmul.f32 %v3354, %v3354
    %v3676 = vmul.f32 %v3359, %v3359
    %v3677 = vmul.f32 %v3362, %v3362
    %v3678 = vmul.f32 %v3367, %v3367
    %v3679 = vmul.f32 %v3370, %v3370
    %v3680 = vmul.f32 %v3375, %v3375
    %v3681 = vmul.f32 %v3378, %v3378
    %v3682 = vmul.f32 %v3383, %v3383
    %v3683 = vmul.f32 %v3386, %v3386
    %v3684 = vmul.f32 %v3391, %v3391
    %v3685 = vmul.f32 %v3394, %v3394
    %v3686 = vmul.f32 %v3399, %v3399
    %v3687 = vmul.f32 %v3402, %v3402
    %v3688 = vmul.f32 %v3407, %v3407
    %v3689 = vmul.f32 %v3410, %v3410
    %v3690 = vmul.f32 %v3415, %v3415
    %v3691 = vmul.f32 %v3418, %v3418
    %v3692 = vmul.f32 %v3423, %v3423
    %v3693 = vmul.f32 %v3426, %v3426
    %v3694 = vmul.f32 %v3431, %v3431
    %v3695 = vmul.f32 %v3434, %v3434
    %v3696 = vmul.f32 %v3439, %v3439
    %v3697 = vmul.f32 %v3442, %v3442
    %v3698 = vmul.f32 %v3447, %v3447
    %v3699 = vmul.f32 %v3450, %v3450
    %v3700 = vmul.f32 %v3455, %v3455
    %v3701 = vmul.f32 %v3458, %v3458
    %v3702 = vmul.f32 %v3463, %v3463
    %v3703 = vmul.f32 %v3466, %v3466
    %v3704 = vmul.f32 %v3471, %v3471
    %v3705 = vmul.f32 %v3474, %v3474
    %v3706 = vmul.f32 %v3479, %v3479
    %v3707 = vmul.f32 %v3482, %v3482
    %v3708 = vmul.f32 %v3487, %v3487
    %v3709 = vmul.f32 %v3490, %v3490
    %v3710 = vmul.f32 %v3495, %v3495
    %v3711 = vmul.f32 %v3498, %v3498
    %v3712 = vmul.f32 %v3503, %v3503
    %v3713 = vmul.f32 %v3506, %v3506
    %v3714 = vmul.f32 %v3511, %v3511
    %v3715 = vmul.f32 %v3514, %v3514
    %v3716 = vsel %vm3517, %v3652, 0.0
    %v3717 = vsel %vm3517, %v3653, 0.0
    %v3718 = vadd.f32 %v3716, %v3717
    %v3719 = vsel %vm3517, %v3654, 0.0
    %v3720 = vadd.f32 %v3718, %v3719
    %v3721 = vsel %vm3517, %v3655, 0.0
    %v3722 = vadd.f32 %v3720, %v3721
    %v3723 = vsel %vm3517, %v3656, 0.0
    %v3724 = vadd.f32 %v3722, %v3723
    %v3725 = vsel %vm3517, %v3657, 0.0
    %v3726 = vadd.f32 %v3724, %v3725
    %v3727 = vsel %vm3517, %v3658, 0.0
    %v3728 = vadd.f32 %v3726, %v3727
    %v3729 = vsel %vm3517, %v3659, 0.0
    %v3730 = vadd.f32 %v3728, %v3729
    %v3731 = vsel %vm3517, %v3660, 0.0
    %v3732 = vadd.f32 %v3730, %v3731
    %v3733 = vsel %vm3517, %v3661, 0.0
    %v3734 = vadd.f32 %v3732, %v3733
    %v3735 = vsel %vm3517, %v3662, 0.0
    %v3736 = vadd.f32 %v3734, %v3735
    %v3737 = vsel %vm3517, %v3663, 0.0
    %v3738 = vadd.f32 %v3736, %v3737
    %v3739 = vsel %vm3517, %v3664, 0.0
    %v3740 = vadd.f32 %v3738, %v3739
    %v3741 = vsel %vm3517, %v3665, 0.0
    %v3742 = vadd.f32 %v3740, %v3741
    %v3743 = vsel %vm3517, %v3666, 0.0
    %v3744 = vadd.f32 %v3742, %v3743
    %v3745 = vsel %vm3517, %v3667, 0.0
    %v3746 = vadd.f32 %v3744, %v3745
    %v3747 = vsel %vm3517, %v3668, 0.0
    %v3748 = vadd.f32 %v3746, %v3747
    %v3749 = vsel %vm3517, %v3669, 0.0
    %v3750 = vadd.f32 %v3748, %v3749
    %v3751 = vsel %vm3517, %v3670, 0.0
    %v3752 = vadd.f32 %v3750, %v3751
    %v3753 = vsel %vm3517, %v3671, 0.0
    %v3754 = vadd.f32 %v3752, %v3753
    %v3755 = vsel %vm3517, %v3672, 0.0
    %v3756 = vadd.f32 %v3754, %v3755
    %v3757 = vsel %vm3517, %v3673, 0.0
    %v3758 = vadd.f32 %v3756, %v3757
    %v3759 = vsel %vm3517, %v3674, 0.0
    %v3760 = vadd.f32 %v3758, %v3759
    %v3761 = vsel %vm3517, %v3675, 0.0
    %v3762 = vadd.f32 %v3760, %v3761
    %v3763 = vsel %vm3517, %v3676, 0.0
    %v3764 = vadd.f32 %v3762, %v3763
    %v3765 = vsel %vm3517, %v3677, 0.0
    %v3766 = vadd.f32 %v3764, %v3765
    %v3767 = vsel %vm3517, %v3678, 0.0
    %v3768 = vadd.f32 %v3766, %v3767
    %v3769 = vsel %vm3517, %v3679, 0.0
    %v3770 = vadd.f32 %v3768, %v3769
    %v3771 = vsel %vm3517, %v3680, 0.0
    %v3772 = vadd.f32 %v3770, %v3771
    %v3773 = vsel %vm3517, %v3681, 0.0
    %v3774 = vadd.f32 %v3772, %v3773
    %v3775 = vsel %vm3517, %v3682, 0.0
    %v3776 = vadd.f32 %v3774, %v3775
    %v3777 = vsel %vm3517, %v3683, 0.0
    %v3778 = vadd.f32 %v3776, %v3777
    %v3779 = vsel %vm3517, %v3684, 0.0
    %v3780 = vadd.f32 %v3778, %v3779
    %v3781 = vsel %vm3517, %v3685, 0.0
    %v3782 = vadd.f32 %v3780, %v3781
    %v3783 = vsel %vm3517, %v3686, 0.0
    %v3784 = vadd.f32 %v3782, %v3783
    %v3785 = vsel %vm3517, %v3687, 0.0
    %v3786 = vadd.f32 %v3784, %v3785
    %v3787 = vsel %vm3517, %v3688, 0.0
    %v3788 = vadd.f32 %v3786, %v3787
    %v3789 = vsel %vm3517, %v3689, 0.0
    %v3790 = vadd.f32 %v3788, %v3789
    %v3791 = vsel %vm3517, %v3690, 0.0
    %v3792 = vadd.f32 %v3790, %v3791
    %v3793 = vsel %vm3517, %v3691, 0.0
    %v3794 = vadd.f32 %v3792, %v3793
    %v3795 = vsel %vm3517, %v3692, 0.0
    %v3796 = vadd.f32 %v3794, %v3795
    %v3797 = vsel %vm3517, %v3693, 0.0
    %v3798 = vadd.f32 %v3796, %v3797
    %v3799 = vsel %vm3517, %v3694, 0.0
    %v3800 = vadd.f32 %v3798, %v3799
    %v3801 = vsel %vm3517, %v3695, 0.0
    %v3802 = vadd.f32 %v3800, %v3801
    %v3803 = vsel %vm3517, %v3696, 0.0
    %v3804 = vadd.f32 %v3802, %v3803
    %v3805 = vsel %vm3517, %v3697, 0.0
    %v3806 = vadd.f32 %v3804, %v3805
    %v3807 = vsel %vm3517, %v3698, 0.0
    %v3808 = vadd.f32 %v3806, %v3807
    %v3809 = vsel %vm3517, %v3699, 0.0
    %v3810 = vadd.f32 %v3808, %v3809
    %v3811 = vsel %vm3517, %v3700, 0.0
    %v3812 = vadd.f32 %v3810, %v3811
    %v3813 = vsel %vm3517, %v3701, 0.0
    %v3814 = vadd.f32 %v3812, %v3813
    %v3815 = vsel %vm3517, %v3702, 0.0
    %v3816 = vadd.f32 %v3814, %v3815
    %v3817 = vsel %vm3517, %v3703, 0.0
    %v3818 = vadd.f32 %v3816, %v3817
    %v3819 = vsel %vm3517, %v3704, 0.0
    %v3820 = vadd.f32 %v3818, %v3819
    %v3821 = vsel %vm3517, %v3705, 0.0
    %v3822 = vadd.f32 %v3820, %v3821
    %v3823 = vsel %vm3517, %v3706, 0.0
    %v3824 = vadd.f32 %v3822, %v3823
    %v3825 = vsel %vm3517, %v3707, 0.0
    %v3826 = vadd.f32 %v3824, %v3825
    %v3827 = vsel %vm3517, %v3708, 0.0
    %v3828 = vadd.f32 %v3826, %v3827
    %v3829 = vsel %vm3517, %v3709, 0.0
    %v3830 = vadd.f32 %v3828, %v3829
    %v3831 = vsel %vm3517, %v3710, 0.0
    %v3832 = vadd.f32 %v3830, %v3831
    %v3833 = vsel %vm3517, %v3711, 0.0
    %v3834 = vadd.f32 %v3832, %v3833
    %v3835 = vsel %vm3517, %v3712, 0.0
    %v3836 = vadd.f32 %v3834, %v3835
    %v3837 = vsel %vm3517, %v3713, 0.0
    %v3838 = vadd.f32 %v3836, %v3837
    %v3839 = vsel %vm3517, %v3714, 0.0
    %v3840 = vadd.f32 %v3838, %v3839
    %v3841 = vsel %vm3517, %v3715, 0.0
    %v3842 = vadd.f32 %v3840, %v3841
    %v3843 = vrot.slane %v3842, 4
    %v3844 = vadd.f32 %v3842, %v3843
    %v3845 = vrot.slane %v3844, 2
    %v3846 = vadd.f32 %v3844, %v3845
    %v3847 = vrot.slane %v3846, 1
    %v3848 = vadd.f32 %v3846, %v3847
    %v3849 = vmul.f32 %v3848, 0.001953125
    %v3850 = vmul.f32 %v3651, %v3651
    %v3851 = vsub.f32 %v3849, %v3850
    %v3852 = vld [vmem:[#allocation11] sm:$0x1]
    %v3853 = vadd.f32 %v3851, 1e-05
    %v3854 = vrsqrt.pop %v3853
    %v3855 = vmul.f32 %v3852, %v3854
    %v3856 = vld [vmem:[#allocation12] sm:$0x1]
    %v3857 = vmul.f32 %v3651, %v3855
    %v3858 = vsub.f32 %v3856, %v3857
    %v3860 = vlaneseq
    %v3861 = vshrl.u32 %v3860, 7
    %v3862 = vsub.s32 0, %v3861
    %v3863 = vrot.slane %v3855, %v3862
    %v3865 = vmul.f32 %v3263, %v3863
    %v3866 = vmul.f32 %v3266, %v3863
    %v3867 = vmul.f32 %v3271, %v3863
    %v3868 = vmul.f32 %v3274, %v3863
    %v3869 = vmul.f32 %v3279, %v3863
    %v3870 = vmul.f32 %v3282, %v3863
    %v3871 = vmul.f32 %v3287, %v3863
    %v3872 = vmul.f32 %v3290, %v3863
    %v3873 = vmul.f32 %v3295, %v3863
    %v3874 = vmul.f32 %v3298, %v3863
    %v3875 = vmul.f32 %v3303, %v3863
    %v3876 = vmul.f32 %v3306, %v3863
    %v3877 = vmul.f32 %v3311, %v3863
    %v3878 = vmul.f32 %v3314, %v3863
    %v3879 = vmul.f32 %v3319, %v3863
    %v3880 = vmul.f32 %v3322, %v3863
    %v3881 = vmul.f32 %v3327, %v3863
    %v3882 = vmul.f32 %v3330, %v3863
    %v3883 = vmul.f32 %v3335, %v3863
    %v3884 = vmul.f32 %v3338, %v3863
    %v3885 = vmul.f32 %v3343, %v3863
    %v3886 = vmul.f32 %v3346, %v3863
    %v3887 = vmul.f32 %v3351, %v3863
    %v3888 = vmul.f32 %v3354, %v3863
    %v3889 = vmul.f32 %v3359, %v3863
    %v3890 = vmul.f32 %v3362, %v3863
    %v3891 = vmul.f32 %v3367, %v3863
    %v3892 = vmul.f32 %v3370, %v3863
    %v3893 = vmul.f32 %v3375, %v3863
    %v3894 = vmul.f32 %v3378, %v3863
    %v3895 = vmul.f32 %v3383, %v3863
    %v3896 = vmul.f32 %v3386, %v3863
    %v3897 = vmul.f32 %v3391, %v3863
    %v3898 = vmul.f32 %v3394, %v3863
    %v3899 = vmul.f32 %v3399, %v3863
    %v3900 = vmul.f32 %v3402, %v3863
    %v3901 = vmul.f32 %v3407, %v3863
    %v3902 = vmul.f32 %v3410, %v3863
    %v3903 = vmul.f32 %v3415, %v3863
    %v3904 = vmul.f32 %v3418, %v3863
    %v3905 = vmul.f32 %v3423, %v3863
    %v3906 = vmul.f32 %v3426, %v3863
    %v3907 = vmul.f32 %v3431, %v3863
    %v3908 = vmul.f32 %v3434, %v3863
    %v3909 = vmul.f32 %v3439, %v3863
    %v3910 = vmul.f32 %v3442, %v3863
    %v3911 = vmul.f32 %v3447, %v3863
    %v3912 = vmul.f32 %v3450, %v3863
    %v3913 = vmul.f32 %v3455, %v3863
    %v3914 = vmul.f32 %v3458, %v3863
    %v3915 = vmul.f32 %v3463, %v3863
    %v3916 = vmul.f32 %v3466, %v3863
    %v3917 = vmul.f32 %v3471, %v3863
    %v3918 = vmul.f32 %v3474, %v3863
    %v3919 = vmul.f32 %v3479, %v3863
    %v3920 = vmul.f32 %v3482, %v3863
    %v3921 = vmul.f32 %v3487, %v3863
    %v3922 = vmul.f32 %v3490, %v3863
    %v3923 = vmul.f32 %v3495, %v3863
    %v3924 = vmul.f32 %v3498, %v3863
    %v3925 = vmul.f32 %v3503, %v3863
    %v3926 = vmul.f32 %v3506, %v3863
    %v3927 = vmul.f32 %v3511, %v3863
    %v3928 = vmul.f32 %v3514, %v3863
    %v3930 = vlaneseq
    %v3931 = vshrl.u32 %v3930, 7
    %v3932 = vsub.s32 0, %v3931
    %v3933 = vrot.slane %v3858, %v3932
    %v3935 = vadd.f32 %v3865, %v3933
    %v3936 = vadd.f32 %v3866, %v3933
    %v3937 = vadd.f32 %v3867, %v3933
    %v3938 = vadd.f32 %v3868, %v3933
    %v3939 = vadd.f32 %v3869, %v3933
    %v3940 = vadd.f32 %v3870, %v3933
    %v3941 = vadd.f32 %v3871, %v3933
    %v3942 = vadd.f32 %v3872, %v3933
    %v3943 = vadd.f32 %v3873, %v3933
    %v3944 = vadd.f32 %v3874, %v3933
    %v3945 = vadd.f32 %v3875, %v3933
    %v3946 = vadd.f32 %v3876, %v3933
    %v3947 = vadd.f32 %v3877, %v3933
    %v3948 = vadd.f32 %v3878, %v3933
    %v3949 = vadd.f32 %v3879, %v3933
    %v3950 = vadd.f32 %v3880, %v3933
    %v3951 = vadd.f32 %v3881, %v3933
    %v3952 = vadd.f32 %v3882, %v3933
    %v3953 = vadd.f32 %v3883, %v3933
    %v3954 = vadd.f32 %v3884, %v3933
    %v3955 = vadd.f32 %v3885, %v3933
    %v3956 = vadd.f32 %v3886, %v3933
    %v3957 = vadd.f32 %v3887, %v3933
    %v3958 = vadd.f32 %v3888, %v3933
    %v3959 = vadd.f32 %v3889, %v3933
    %v3960 = vadd.f32 %v3890, %v3933
    %v3961 = vadd.f32 %v3891, %v3933
    %v3962 = vadd.f32 %v3892, %v3933
    %v3963 = vadd.f32 %v3893, %v3933
    %v3964 = vadd.f32 %v3894, %v3933
    %v3965 = vadd.f32 %v3895, %v3933
    %v3966 = vadd.f32 %v3896, %v3933
    %v3967 = vadd.f32 %v3897, %v3933
    %v3968 = vadd.f32 %v3898, %v3933
    %v3969 = vadd.f32 %v3899, %v3933
    %v3970 = vadd.f32 %v3900, %v3933
    %v3971 = vadd.f32 %v3901, %v3933
    %v3972 = vadd.f32 %v3902, %v3933
    %v3973 = vadd.f32 %v3903, %v3933
    %v3974 = vadd.f32 %v3904, %v3933
    %v3975 = vadd.f32 %v3905, %v3933
    %v3976 = vadd.f32 %v3906, %v3933
    %v3977 = vadd.f32 %v3907, %v3933
    %v3978 = vadd.f32 %v3908, %v3933
    %v3979 = vadd.f32 %v3909, %v3933
    %v3980 = vadd.f32 %v3910, %v3933
    %v3981 = vadd.f32 %v3911, %v3933
    %v3982 = vadd.f32 %v3912, %v3933
    %v3983 = vadd.f32 %v3913, %v3933
    %v3984 = vadd.f32 %v3914, %v3933
    %v3985 = vadd.f32 %v3915, %v3933
    %v3986 = vadd.f32 %v3916, %v3933
    %v3987 = vadd.f32 %v3917, %v3933
    %v3988 = vadd.f32 %v3918, %v3933
    %v3989 = vadd.f32 %v3919, %v3933
    %v3990 = vadd.f32 %v3920, %v3933
    %v3991 = vadd.f32 %v3921, %v3933
    %v3992 = vadd.f32 %v3922, %v3933
    %v3993 = vadd.f32 %v3923, %v3933
    %v3994 = vadd.f32 %v3924, %v3933
    %v3995 = vadd.f32 %v3925, %v3933
    %v3996 = vadd.f32 %v3926, %v3933
    %v3997 = vadd.f32 %v3927, %v3933
    %v3998 = vadd.f32 %v3928, %v3933
    %v3999 = vmax.f32 %v3935, 0.0
    %v4000 = vmax.f32 %v3936, 0.0
    %v4001 = vmax.f32 %v3937, 0.0
    %v4002 = vmax.f32 %v3938, 0.0
    %v4003 = vmax.f32 %v3939, 0.0
    %v4004 = vmax.f32 %v3940, 0.0
    %v4005 = vmax.f32 %v3941, 0.0
    %v4006 = vmax.f32 %v3942, 0.0
    %v4007 = vmax.f32 %v3943, 0.0
    %v4008 = vmax.f32 %v3944, 0.0
    %v4009 = vmax.f32 %v3945, 0.0
    %v4010 = vmax.f32 %v3946, 0.0
    %v4011 = vmax.f32 %v3947, 0.0
    %v4012 = vmax.f32 %v3948, 0.0
    %v4013 = vmax.f32 %v3949, 0.0
    %v4014 = vmax.f32 %v3950, 0.0
    %v4015 = vmax.f32 %v3951, 0.0
    %v4016 = vmax.f32 %v3952, 0.0
    %v4017 = vmax.f32 %v3953, 0.0
    %v4018 = vmax.f32 %v3954, 0.0
    %v4019 = vmax.f32 %v3955, 0.0
    %v4020 = vmax.f32 %v3956, 0.0
    %v4021 = vmax.f32 %v3957, 0.0
    %v4022 = vmax.f32 %v3958, 0.0
    %v4023 = vmax.f32 %v3959, 0.0
    %v4024 = vmax.f32 %v3960, 0.0
    %v4025 = vmax.f32 %v3961, 0.0
    %v4026 = vmax.f32 %v3962, 0.0
    %v4027 = vmax.f32 %v3963, 0.0
    %v4028 = vmax.f32 %v3964, 0.0
    %v4029 = vmax.f32 %v3965, 0.0
    %v4030 = vmax.f32 %v3966, 0.0
    %v4031 = vmax.f32 %v3967, 0.0
    %v4032 = vmax.f32 %v3968, 0.0
    %v4033 = vmax.f32 %v3969, 0.0
    %v4034 = vmax.f32 %v3970, 0.0
    %v4035 = vmax.f32 %v3971, 0.0
    %v4036 = vmax.f32 %v3972, 0.0
    %v4037 = vmax.f32 %v3973, 0.0
    %v4038 = vmax.f32 %v3974, 0.0
    %v4039 = vmax.f32 %v3975, 0.0
    %v4040 = vmax.f32 %v3976, 0.0
    %v4041 = vmax.f32 %v3977, 0.0
    %v4042 = vmax.f32 %v3978, 0.0
    %v4043 = vmax.f32 %v3979, 0.0
    %v4044 = vmax.f32 %v3980, 0.0
    %v4045 = vmax.f32 %v3981, 0.0
    %v4046 = vmax.f32 %v3982, 0.0
    %v4047 = vmax.f32 %v3983, 0.0
    %v4048 = vmax.f32 %v3984, 0.0
    %v4049 = vmax.f32 %v3985, 0.0
    %v4050 = vmax.f32 %v3986, 0.0
    %v4051 = vmax.f32 %v3987, 0.0
    %v4052 = vmax.f32 %v3988, 0.0
    %v4053 = vmax.f32 %v3989, 0.0
    %v4054 = vmax.f32 %v3990, 0.0
    %v4055 = vmax.f32 %v3991, 0.0
    %v4056 = vmax.f32 %v3992, 0.0
    %v4057 = vmax.f32 %v3993, 0.0
    %v4058 = vmax.f32 %v3994, 0.0
    %v4059 = vmax.f32 %v3995, 0.0
    %v4060 = vmax.f32 %v3996, 0.0
    %v4061 = vmax.f32 %v3997, 0.0
    %v4062 = vmax.f32 %v3998, 0.0
    %v4127 = vcombine.high %v3999, %v3999
    %v4129 = vunpack.c.l.s4 1983009808
    %v4130 = vunpack.c.0.s8 %v4129
    %v4131 = vlaneseq
    %v4132 = vshrl.u32 %v4131, 7
    %v4133 = vsub.s32 %v4130, %v4132
    %v4134 = vrot.slane %v3999, %v4133
    %v4136 = vunpack.c.l.s4 1983009808
    %v4137 = vunpack.c.0.s8 %v4136
    %v4138 = vlaneseq
    %v4139 = vshrl.u32 %v4138, 7
    %v4140 = vsub.s32 %v4137, %v4139
    %v4141 = vrot.slane %v4127, %v4140
    %v4142 = vcombine.high %v4134, %v4134
    %v4143 = vcombine.high %v4141, %v4141
    %v4144 = vcombine.high %v4000, %v4000
    %v4146 = vunpack.c.l.s4 1983009808
    %v4147 = vunpack.c.0.s8 %v4146
    %v4148 = vlaneseq
    %v4149 = vshrl.u32 %v4148, 7
    %v4150 = vsub.s32 %v4147, %v4149
    %v4151 = vrot.slane %v4000, %v4150
    %v4153 = vunpack.c.l.s4 1983009808
    %v4154 = vunpack.c.0.s8 %v4153
    %v4155 = vlaneseq
    %v4156 = vshrl.u32 %v4155, 7
    %v4157 = vsub.s32 %v4154, %v4156
    %v4158 = vrot.slane %v4144, %v4157
    %v4159 = vcombine.high %v4151, %v4151
    %v4160 = vcombine.high %v4158, %v4158
    %v4161 = vcombine.high %v4001, %v4001
    %v4163 = vunpack.c.l.s4 1983009808
    %v4164 = vunpack.c.0.s8 %v4163
    %v4165 = vlaneseq
    %v4166 = vshrl.u32 %v4165, 7
    %v4167 = vsub.s32 %v4164, %v4166
    %v4168 = vrot.slane %v4001, %v4167
    %v4170 = vunpack.c.l.s4 1983009808
    %v4171 = vunpack.c.0.s8 %v4170
    %v4172 = vlaneseq
    %v4173 = vshrl.u32 %v4172, 7
    %v4174 = vsub.s32 %v4171, %v4173
    %v4175 = vrot.slane %v4161, %v4174
    %v4176 = vcombine.high %v4168, %v4168
    %v4177 = vcombine.high %v4175, %v4175
    %v4178 = vcombine.high %v4002, %v4002
    %v4180 = vunpack.c.l.s4 1983009808
    %v4181 = vunpack.c.0.s8 %v4180
    %v4182 = vlaneseq
    %v4183 = vshrl.u32 %v4182, 7
    %v4184 = vsub.s32 %v4181, %v4183
    %v4185 = vrot.slane %v4002, %v4184
    %v4187 = vunpack.c.l.s4 1983009808
    %v4188 = vunpack.c.0.s8 %v4187
    %v4189 = vlaneseq
    %v4190 = vshrl.u32 %v4189, 7
    %v4191 = vsub.s32 %v4188, %v4190
    %v4192 = vrot.slane %v4178, %v4191
    %v4193 = vcombine.high %v4185, %v4185
    %v4194 = vcombine.high %v4192, %v4192
    %v4195 = vcombine.high %v4003, %v4003
    %v4197 = vunpack.c.l.s4 1983009808
    %v4198 = vunpack.c.0.s8 %v4197
    %v4199 = vlaneseq
    %v4200 = vshrl.u32 %v4199, 7
    %v4201 = vsub.s32 %v4198, %v4200
    %v4202 = vrot.slane %v4003, %v4201
    %v4204 = vunpack.c.l.s4 1983009808
    %v4205 = vunpack.c.0.s8 %v4204
    %v4206 = vlaneseq
    %v4207 = vshrl.u32 %v4206, 7
    %v4208 = vsub.s32 %v4205, %v4207
    %v4209 = vrot.slane %v4195, %v4208
    %v4210 = vcombine.high %v4202, %v4202
    %v4211 = vcombine.high %v4209, %v4209
    %v4212 = vcombine.high %v4004, %v4004
    %v4214 = vunpack.c.l.s4 1983009808
    %v4215 = vunpack.c.0.s8 %v4214
    %v4216 = vlaneseq
    %v4217 = vshrl.u32 %v4216, 7
    %v4218 = vsub.s32 %v4215, %v4217
    %v4219 = vrot.slane %v4004, %v4218
    %v4221 = vunpack.c.l.s4 1983009808
    %v4222 = vunpack.c.0.s8 %v4221
    %v4223 = vlaneseq
    %v4224 = vshrl.u32 %v4223, 7
    %v4225 = vsub.s32 %v4222, %v4224
    %v4226 = vrot.slane %v4212, %v4225
    %v4227 = vcombine.high %v4219, %v4219
    %v4228 = vcombine.high %v4226, %v4226
    %v4229 = vcombine.high %v4005, %v4005
    %v4231 = vunpack.c.l.s4 1983009808
    %v4232 = vunpack.c.0.s8 %v4231
    %v4233 = vlaneseq
    %v4234 = vshrl.u32 %v4233, 7
    %v4235 = vsub.s32 %v4232, %v4234
    %v4236 = vrot.slane %v4005, %v4235
    %v4238 = vunpack.c.l.s4 1983009808
    %v4239 = vunpack.c.0.s8 %v4238
    %v4240 = vlaneseq
    %v4241 = vshrl.u32 %v4240, 7
    %v4242 = vsub.s32 %v4239, %v4241
    %v4243 = vrot.slane %v4229, %v4242
    %v4244 = vcombine.high %v4236, %v4236
    %v4245 = vcombine.high %v4243, %v4243
    %v4246 = vcombine.high %v4006, %v4006
    %v4248 = vunpack.c.l.s4 1983009808
    %v4249 = vunpack.c.0.s8 %v4248
    %v4250 = vlaneseq
    %v4251 = vshrl.u32 %v4250, 7
    %v4252 = vsub.s32 %v4249, %v4251
    %v4253 = vrot.slane %v4006, %v4252
    %v4255 = vunpack.c.l.s4 1983009808
    %v4256 = vunpack.c.0.s8 %v4255
    %v4257 = vlaneseq
    %v4258 = vshrl.u32 %v4257, 7
    %v4259 = vsub.s32 %v4256, %v4258
    %v4260 = vrot.slane %v4246, %v4259
    %v4261 = vcombine.high %v4253, %v4253
    %v4262 = vcombine.high %v4260, %v4260
    %v4263 = vcombine.high %v4007, %v4007
    %v4265 = vunpack.c.l.s4 1983009808
    %v4266 = vunpack.c.0.s8 %v4265
    %v4267 = vlaneseq
    %v4268 = vshrl.u32 %v4267, 7
    %v4269 = vsub.s32 %v4266, %v4268
    %v4270 = vrot.slane %v4007, %v4269
    %v4272 = vunpack.c.l.s4 1983009808
    %v4273 = vunpack.c.0.s8 %v4272
    %v4274 = vlaneseq
    %v4275 = vshrl.u32 %v4274, 7
    %v4276 = vsub.s32 %v4273, %v4275
    %v4277 = vrot.slane %v4263, %v4276
    %v4278 = vcombine.high %v4270, %v4270
    %v4279 = vcombine.high %v4277, %v4277
    %v4280 = vcombine.high %v4008, %v4008
    %v4282 = vunpack.c.l.s4 1983009808
    %v4283 = vunpack.c.0.s8 %v4282
    %v4284 = vlaneseq
    %v4285 = vshrl.u32 %v4284, 7
    %v4286 = vsub.s32 %v4283, %v4285
    %v4287 = vrot.slane %v4008, %v4286
    %v4289 = vunpack.c.l.s4 1983009808
    %v4290 = vunpack.c.0.s8 %v4289
    %v4291 = vlaneseq
    %v4292 = vshrl.u32 %v4291, 7
    %v4293 = vsub.s32 %v4290, %v4292
    %v4294 = vrot.slane %v4280, %v4293
    %v4295 = vcombine.high %v4287, %v4287
    %v4296 = vcombine.high %v4294, %v4294
    %v4297 = vcombine.high %v4009, %v4009
    %v4299 = vunpack.c.l.s4 1983009808
    %v4300 = vunpack.c.0.s8 %v4299
    %v4301 = vlaneseq
    %v4302 = vshrl.u32 %v4301, 7
    %v4303 = vsub.s32 %v4300, %v4302
    %v4304 = vrot.slane %v4009, %v4303
    %v4306 = vunpack.c.l.s4 1983009808
    %v4307 = vunpack.c.0.s8 %v4306
    %v4308 = vlaneseq
    %v4309 = vshrl.u32 %v4308, 7
    %v4310 = vsub.s32 %v4307, %v4309
    %v4311 = vrot.slane %v4297, %v4310
    %v4312 = vcombine.high %v4304, %v4304
    %v4313 = vcombine.high %v4311, %v4311
    %v4314 = vcombine.high %v4010, %v4010
    %v4316 = vunpack.c.l.s4 1983009808
    %v4317 = vunpack.c.0.s8 %v4316
    %v4318 = vlaneseq
    %v4319 = vshrl.u32 %v4318, 7
    %v4320 = vsub.s32 %v4317, %v4319
    %v4321 = vrot.slane %v4010, %v4320
    %v4323 = vunpack.c.l.s4 1983009808
    %v4324 = vunpack.c.0.s8 %v4323
    %v4325 = vlaneseq
    %v4326 = vshrl.u32 %v4325, 7
    %v4327 = vsub.s32 %v4324, %v4326
    %v4328 = vrot.slane %v4314, %v4327
    %v4329 = vcombine.high %v4321, %v4321
    %v4330 = vcombine.high %v4328, %v4328
    %v4331 = vcombine.high %v4011, %v4011
    %v4333 = vunpack.c.l.s4 1983009808
    %v4334 = vunpack.c.0.s8 %v4333
    %v4335 = vlaneseq
    %v4336 = vshrl.u32 %v4335, 7
    %v4337 = vsub.s32 %v4334, %v4336
    %v4338 = vrot.slane %v4011, %v4337
    %v4340 = vunpack.c.l.s4 1983009808
    %v4341 = vunpack.c.0.s8 %v4340
    %v4342 = vlaneseq
    %v4343 = vshrl.u32 %v4342, 7
    %v4344 = vsub.s32 %v4341, %v4343
    %v4345 = vrot.slane %v4331, %v4344
    %v4346 = vcombine.high %v4338, %v4338
    %v4347 = vcombine.high %v4345, %v4345
    %v4348 = vcombine.high %v4012, %v4012
    %v4350 = vunpack.c.l.s4 1983009808
    %v4351 = vunpack.c.0.s8 %v4350
    %v4352 = vlaneseq
    %v4353 = vshrl.u32 %v4352, 7
    %v4354 = vsub.s32 %v4351, %v4353
    %v4355 = vrot.slane %v4012, %v4354
    %v4357 = vunpack.c.l.s4 1983009808
    %v4358 = vunpack.c.0.s8 %v4357
    %v4359 = vlaneseq
    %v4360 = vshrl.u32 %v4359, 7
    %v4361 = vsub.s32 %v4358, %v4360
    %v4362 = vrot.slane %v4348, %v4361
    %v4363 = vcombine.high %v4355, %v4355
    %v4364 = vcombine.high %v4362, %v4362
    %v4365 = vcombine.high %v4013, %v4013
    %v4367 = vunpack.c.l.s4 1983009808
    %v4368 = vunpack.c.0.s8 %v4367
    %v4369 = vlaneseq
    %v4370 = vshrl.u32 %v4369, 7
    %v4371 = vsub.s32 %v4368, %v4370
    %v4372 = vrot.slane %v4013, %v4371
    %v4374 = vunpack.c.l.s4 1983009808
    %v4375 = vunpack.c.0.s8 %v4374
    %v4376 = vlaneseq
    %v4377 = vshrl.u32 %v4376, 7
    %v4378 = vsub.s32 %v4375, %v4377
    %v4379 = vrot.slane %v4365, %v4378
    %v4380 = vcombine.high %v4372, %v4372
    %v4381 = vcombine.high %v4379, %v4379
    %v4382 = vcombine.high %v4014, %v4014
    %v4384 = vunpack.c.l.s4 1983009808
    %v4385 = vunpack.c.0.s8 %v4384
    %v4386 = vlaneseq
    %v4387 = vshrl.u32 %v4386, 7
    %v4388 = vsub.s32 %v4385, %v4387
    %v4389 = vrot.slane %v4014, %v4388
    %v4391 = vunpack.c.l.s4 1983009808
    %v4392 = vunpack.c.0.s8 %v4391
    %v4393 = vlaneseq
    %v4394 = vshrl.u32 %v4393, 7
    %v4395 = vsub.s32 %v4392, %v4394
    %v4396 = vrot.slane %v4382, %v4395
    %v4397 = vcombine.high %v4389, %v4389
    %v4398 = vcombine.high %v4396, %v4396
    %v4399 = vcombine.high %v4015, %v4015
    %v4401 = vunpack.c.l.s4 1983009808
    %v4402 = vunpack.c.0.s8 %v4401
    %v4403 = vlaneseq
    %v4404 = vshrl.u32 %v4403, 7
    %v4405 = vsub.s32 %v4402, %v4404
    %v4406 = vrot.slane %v4015, %v4405
    %v4408 = vunpack.c.l.s4 1983009808
    %v4409 = vunpack.c.0.s8 %v4408
    %v4410 = vlaneseq
    %v4411 = vshrl.u32 %v4410, 7
    %v4412 = vsub.s32 %v4409, %v4411
    %v4413 = vrot.slane %v4399, %v4412
    %v4414 = vcombine.high %v4406, %v4406
    %v4415 = vcombine.high %v4413, %v4413
    %v4416 = vcombine.high %v4016, %v4016
    %v4418 = vunpack.c.l.s4 1983009808
    %v4419 = vunpack.c.0.s8 %v4418
    %v4420 = vlaneseq
    %v4421 = vshrl.u32 %v4420, 7
    %v4422 = vsub.s32 %v4419, %v4421
    %v4423 = vrot.slane %v4016, %v4422
    %v4425 = vunpack.c.l.s4 1983009808
    %v4426 = vunpack.c.0.s8 %v4425
    %v4427 = vlaneseq
    %v4428 = vshrl.u32 %v4427, 7
    %v4429 = vsub.s32 %v4426, %v4428
    %v4430 = vrot.slane %v4416, %v4429
    %v4431 = vcombine.high %v4423, %v4423
    %v4432 = vcombine.high %v4430, %v4430
    %v4433 = vcombine.high %v4017, %v4017
    %v4435 = vunpack.c.l.s4 1983009808
    %v4436 = vunpack.c.0.s8 %v4435
    %v4437 = vlaneseq
    %v4438 = vshrl.u32 %v4437, 7
    %v4439 = vsub.s32 %v4436, %v4438
    %v4440 = vrot.slane %v4017, %v4439
    %v4442 = vunpack.c.l.s4 1983009808
    %v4443 = vunpack.c.0.s8 %v4442
    %v4444 = vlaneseq
    %v4445 = vshrl.u32 %v4444, 7
    %v4446 = vsub.s32 %v4443, %v4445
    %v4447 = vrot.slane %v4433, %v4446
    %v4448 = vcombine.high %v4440, %v4440
    %v4449 = vcombine.high %v4447, %v4447
    %v4450 = vcombine.high %v4018, %v4018
    %v4452 = vunpack.c.l.s4 1983009808
    %v4453 = vunpack.c.0.s8 %v4452
    %v4454 = vlaneseq
    %v4455 = vshrl.u32 %v4454, 7
    %v4456 = vsub.s32 %v4453, %v4455
    %v4457 = vrot.slane %v4018, %v4456
    %v4459 = vunpack.c.l.s4 1983009808
    %v4460 = vunpack.c.0.s8 %v4459
    %v4461 = vlaneseq
    %v4462 = vshrl.u32 %v4461, 7
    %v4463 = vsub.s32 %v4460, %v4462
    %v4464 = vrot.slane %v4450, %v4463
    %v4465 = vcombine.high %v4457, %v4457
    %v4466 = vcombine.high %v4464, %v4464
    %v4467 = vcombine.high %v4019, %v4019
    %v4469 = vunpack.c.l.s4 1983009808
    %v4470 = vunpack.c.0.s8 %v4469
    %v4471 = vlaneseq
    %v4472 = vshrl.u32 %v4471, 7
    %v4473 = vsub.s32 %v4470, %v4472
    %v4474 = vrot.slane %v4019, %v4473
    %v4476 = vunpack.c.l.s4 1983009808
    %v4477 = vunpack.c.0.s8 %v4476
    %v4478 = vlaneseq
    %v4479 = vshrl.u32 %v4478, 7
    %v4480 = vsub.s32 %v4477, %v4479
    %v4481 = vrot.slane %v4467, %v4480
    %v4482 = vcombine.high %v4474, %v4474
    %v4483 = vcombine.high %v4481, %v4481
    %v4484 = vcombine.high %v4020, %v4020
    %v4486 = vunpack.c.l.s4 1983009808
    %v4487 = vunpack.c.0.s8 %v4486
    %v4488 = vlaneseq
    %v4489 = vshrl.u32 %v4488, 7
    %v4490 = vsub.s32 %v4487, %v4489
    %v4491 = vrot.slane %v4020, %v4490
    %v4493 = vunpack.c.l.s4 1983009808
    %v4494 = vunpack.c.0.s8 %v4493
    %v4495 = vlaneseq
    %v4496 = vshrl.u32 %v4495, 7
    %v4497 = vsub.s32 %v4494, %v4496
    %v4498 = vrot.slane %v4484, %v4497
    %v4499 = vcombine.high %v4491, %v4491
    %v4500 = vcombine.high %v4498, %v4498
    %v4501 = vcombine.high %v4021, %v4021
    %v4503 = vunpack.c.l.s4 1983009808
    %v4504 = vunpack.c.0.s8 %v4503
    %v4505 = vlaneseq
    %v4506 = vshrl.u32 %v4505, 7
    %v4507 = vsub.s32 %v4504, %v4506
    %v4508 = vrot.slane %v4021, %v4507
    %v4510 = vunpack.c.l.s4 1983009808
    %v4511 = vunpack.c.0.s8 %v4510
    %v4512 = vlaneseq
    %v4513 = vshrl.u32 %v4512, 7
    %v4514 = vsub.s32 %v4511, %v4513
    %v4515 = vrot.slane %v4501, %v4514
    %v4516 = vcombine.high %v4508, %v4508
    %v4517 = vcombine.high %v4515, %v4515
    %v4518 = vcombine.high %v4022, %v4022
    %v4520 = vunpack.c.l.s4 1983009808
    %v4521 = vunpack.c.0.s8 %v4520
    %v4522 = vlaneseq
    %v4523 = vshrl.u32 %v4522, 7
    %v4524 = vsub.s32 %v4521, %v4523
    %v4525 = vrot.slane %v4022, %v4524
    %v4527 = vunpack.c.l.s4 1983009808
    %v4528 = vunpack.c.0.s8 %v4527
    %v4529 = vlaneseq
    %v4530 = vshrl.u32 %v4529, 7
    %v4531 = vsub.s32 %v4528, %v4530
    %v4532 = vrot.slane %v4518, %v4531
    %v4533 = vcombine.high %v4525, %v4525
    %v4534 = vcombine.high %v4532, %v4532
    %v4535 = vcombine.high %v4023, %v4023
    %v4537 = vunpack.c.l.s4 1983009808
    %v4538 = vunpack.c.0.s8 %v4537
    %v4539 = vlaneseq
    %v4540 = vshrl.u32 %v4539, 7
    %v4541 = vsub.s32 %v4538, %v4540
    %v4542 = vrot.slane %v4023, %v4541
    %v4544 = vunpack.c.l.s4 1983009808
    %v4545 = vunpack.c.0.s8 %v4544
    %v4546 = vlaneseq
    %v4547 = vshrl.u32 %v4546, 7
    %v4548 = vsub.s32 %v4545, %v4547
    %v4549 = vrot.slane %v4535, %v4548
    %v4550 = vcombine.high %v4542, %v4542
    %v4551 = vcombine.high %v4549, %v4549
    %v4552 = vcombine.high %v4024, %v4024
    %v4554 = vunpack.c.l.s4 1983009808
    %v4555 = vunpack.c.0.s8 %v4554
    %v4556 = vlaneseq
    %v4557 = vshrl.u32 %v4556, 7
    %v4558 = vsub.s32 %v4555, %v4557
    %v4559 = vrot.slane %v4024, %v4558
    %v4561 = vunpack.c.l.s4 1983009808
    %v4562 = vunpack.c.0.s8 %v4561
    %v4563 = vlaneseq
    %v4564 = vshrl.u32 %v4563, 7
    %v4565 = vsub.s32 %v4562, %v4564
    %v4566 = vrot.slane %v4552, %v4565
    %v4567 = vcombine.high %v4559, %v4559
    %v4568 = vcombine.high %v4566, %v4566
    %v4569 = vcombine.high %v4025, %v4025
    %v4571 = vunpack.c.l.s4 1983009808
    %v4572 = vunpack.c.0.s8 %v4571
    %v4573 = vlaneseq
    %v4574 = vshrl.u32 %v4573, 7
    %v4575 = vsub.s32 %v4572, %v4574
    %v4576 = vrot.slane %v4025, %v4575
    %v4578 = vunpack.c.l.s4 1983009808
    %v4579 = vunpack.c.0.s8 %v4578
    %v4580 = vlaneseq
    %v4581 = vshrl.u32 %v4580, 7
    %v4582 = vsub.s32 %v4579, %v4581
    %v4583 = vrot.slane %v4569, %v4582
    %v4584 = vcombine.high %v4576, %v4576
    %v4585 = vcombine.high %v4583, %v4583
    %v4586 = vcombine.high %v4026, %v4026
    %v4588 = vunpack.c.l.s4 1983009808
    %v4589 = vunpack.c.0.s8 %v4588
    %v4590 = vlaneseq
    %v4591 = vshrl.u32 %v4590, 7
    %v4592 = vsub.s32 %v4589, %v4591
    %v4593 = vrot.slane %v4026, %v4592
    %v4595 = vunpack.c.l.s4 1983009808
    %v4596 = vunpack.c.0.s8 %v4595
    %v4597 = vlaneseq
    %v4598 = vshrl.u32 %v4597, 7
    %v4599 = vsub.s32 %v4596, %v4598
    %v4600 = vrot.slane %v4586, %v4599
    %v4601 = vcombine.high %v4593, %v4593
    %v4602 = vcombine.high %v4600, %v4600
    %v4603 = vcombine.high %v4027, %v4027
    %v4605 = vunpack.c.l.s4 1983009808
    %v4606 = vunpack.c.0.s8 %v4605
    %v4607 = vlaneseq
    %v4608 = vshrl.u32 %v4607, 7
    %v4609 = vsub.s32 %v4606, %v4608
    %v4610 = vrot.slane %v4027, %v4609
    %v4612 = vunpack.c.l.s4 1983009808
    %v4613 = vunpack.c.0.s8 %v4612
    %v4614 = vlaneseq
    %v4615 = vshrl.u32 %v4614, 7
    %v4616 = vsub.s32 %v4613, %v4615
    %v4617 = vrot.slane %v4603, %v4616
    %v4618 = vcombine.high %v4610, %v4610
    %v4619 = vcombine.high %v4617, %v4617
    %v4620 = vcombine.high %v4028, %v4028
    %v4622 = vunpack.c.l.s4 1983009808
    %v4623 = vunpack.c.0.s8 %v4622
    %v4624 = vlaneseq
    %v4625 = vshrl.u32 %v4624, 7
    %v4626 = vsub.s32 %v4623, %v4625
    %v4627 = vrot.slane %v4028, %v4626
    %v4629 = vunpack.c.l.s4 1983009808
    %v4630 = vunpack.c.0.s8 %v4629
    %v4631 = vlaneseq
    %v4632 = vshrl.u32 %v4631, 7
    %v4633 = vsub.s32 %v4630, %v4632
    %v4634 = vrot.slane %v4620, %v4633
    %v4635 = vcombine.high %v4627, %v4627
    %v4636 = vcombine.high %v4634, %v4634
    %v4637 = vcombine.high %v4029, %v4029
    %v4639 = vunpack.c.l.s4 1983009808
    %v4640 = vunpack.c.0.s8 %v4639
    %v4641 = vlaneseq
    %v4642 = vshrl.u32 %v4641, 7
    %v4643 = vsub.s32 %v4640, %v4642
    %v4644 = vrot.slane %v4029, %v4643
    %v4646 = vunpack.c.l.s4 1983009808
    %v4647 = vunpack.c.0.s8 %v4646
    %v4648 = vlaneseq
    %v4649 = vshrl.u32 %v4648, 7
    %v4650 = vsub.s32 %v4647, %v4649
    %v4651 = vrot.slane %v4637, %v4650
    %v4652 = vcombine.high %v4644, %v4644
    %v4653 = vcombine.high %v4651, %v4651
    %v4654 = vcombine.high %v4030, %v4030
    %v4656 = vunpack.c.l.s4 1983009808
    %v4657 = vunpack.c.0.s8 %v4656
    %v4658 = vlaneseq
    %v4659 = vshrl.u32 %v4658, 7
    %v4660 = vsub.s32 %v4657, %v4659
    %v4661 = vrot.slane %v4030, %v4660
    %v4663 = vunpack.c.l.s4 1983009808
    %v4664 = vunpack.c.0.s8 %v4663
    %v4665 = vlaneseq
    %v4666 = vshrl.u32 %v4665, 7
    %v4667 = vsub.s32 %v4664, %v4666
    %v4668 = vrot.slane %v4654, %v4667
    %v4669 = vcombine.high %v4661, %v4661
    %v4670 = vcombine.high %v4668, %v4668
    %v4671 = vcombine.high %v4031, %v4031
    %v4673 = vunpack.c.l.s4 1983009808
    %v4674 = vunpack.c.0.s8 %v4673
    %v4675 = vlaneseq
    %v4676 = vshrl.u32 %v4675, 7
    %v4677 = vsub.s32 %v4674, %v4676
    %v4678 = vrot.slane %v4031, %v4677
    %v4680 = vunpack.c.l.s4 1983009808
    %v4681 = vunpack.c.0.s8 %v4680
    %v4682 = vlaneseq
    %v4683 = vshrl.u32 %v4682, 7
    %v4684 = vsub.s32 %v4681, %v4683
    %v4685 = vrot.slane %v4671, %v4684
    %v4686 = vcombine.high %v4678, %v4678
    %v4687 = vcombine.high %v4685, %v4685
    %v4688 = vcombine.high %v4032, %v4032
    %v4690 = vunpack.c.l.s4 1983009808
    %v4691 = vunpack.c.0.s8 %v4690
    %v4692 = vlaneseq
    %v4693 = vshrl.u32 %v4692, 7
    %v4694 = vsub.s32 %v4691, %v4693
    %v4695 = vrot.slane %v4032, %v4694
    %v4697 = vunpack.c.l.s4 1983009808
    %v4698 = vunpack.c.0.s8 %v4697
    %v4699 = vlaneseq
    %v4700 = vshrl.u32 %v4699, 7
    %v4701 = vsub.s32 %v4698, %v4700
    %v4702 = vrot.slane %v4688, %v4701
    %v4703 = vcombine.high %v4695, %v4695
    %v4704 = vcombine.high %v4702, %v4702
    %v4705 = vcombine.high %v4033, %v4033
    %v4707 = vunpack.c.l.s4 1983009808
    %v4708 = vunpack.c.0.s8 %v4707
    %v4709 = vlaneseq
    %v4710 = vshrl.u32 %v4709, 7
    %v4711 = vsub.s32 %v4708, %v4710
    %v4712 = vrot.slane %v4033, %v4711
    %v4714 = vunpack.c.l.s4 1983009808
    %v4715 = vunpack.c.0.s8 %v4714
    %v4716 = vlaneseq
    %v4717 = vshrl.u32 %v4716, 7
    %v4718 = vsub.s32 %v4715, %v4717
    %v4719 = vrot.slane %v4705, %v4718
    %v4720 = vcombine.high %v4712, %v4712
    %v4721 = vcombine.high %v4719, %v4719
    %v4722 = vcombine.high %v4034, %v4034
    %v4724 = vunpack.c.l.s4 1983009808
    %v4725 = vunpack.c.0.s8 %v4724
    %v4726 = vlaneseq
    %v4727 = vshrl.u32 %v4726, 7
    %v4728 = vsub.s32 %v4725, %v4727
    %v4729 = vrot.slane %v4034, %v4728
    %v4731 = vunpack.c.l.s4 1983009808
    %v4732 = vunpack.c.0.s8 %v4731
    %v4733 = vlaneseq
    %v4734 = vshrl.u32 %v4733, 7
    %v4735 = vsub.s32 %v4732, %v4734
    %v4736 = vrot.slane %v4722, %v4735
    %v4737 = vcombine.high %v4729, %v4729
    %v4738 = vcombine.high %v4736, %v4736
    %v4739 = vcombine.high %v4035, %v4035
    %v4741 = vunpack.c.l.s4 1983009808
    %v4742 = vunpack.c.0.s8 %v4741
    %v4743 = vlaneseq
    %v4744 = vshrl.u32 %v4743, 7
    %v4745 = vsub.s32 %v4742, %v4744
    %v4746 = vrot.slane %v4035, %v4745
    %v4748 = vunpack.c.l.s4 1983009808
    %v4749 = vunpack.c.0.s8 %v4748
    %v4750 = vlaneseq
    %v4751 = vshrl.u32 %v4750, 7
    %v4752 = vsub.s32 %v4749, %v4751
    %v4753 = vrot.slane %v4739, %v4752
    %v4754 = vcombine.high %v4746, %v4746
    %v4755 = vcombine.high %v4753, %v4753
    %v4756 = vcombine.high %v4036, %v4036
    %v4758 = vunpack.c.l.s4 1983009808
    %v4759 = vunpack.c.0.s8 %v4758
    %v4760 = vlaneseq
    %v4761 = vshrl.u32 %v4760, 7
    %v4762 = vsub.s32 %v4759, %v4761
    %v4763 = vrot.slane %v4036, %v4762
    %v4765 = vunpack.c.l.s4 1983009808
    %v4766 = vunpack.c.0.s8 %v4765
    %v4767 = vlaneseq
    %v4768 = vshrl.u32 %v4767, 7
    %v4769 = vsub.s32 %v4766, %v4768
    %v4770 = vrot.slane %v4756, %v4769
    %v4771 = vcombine.high %v4763, %v4763
    %v4772 = vcombine.high %v4770, %v4770
    %v4773 = vcombine.high %v4037, %v4037
    %v4775 = vunpack.c.l.s4 1983009808
    %v4776 = vunpack.c.0.s8 %v4775
    %v4777 = vlaneseq
    %v4778 = vshrl.u32 %v4777, 7
    %v4779 = vsub.s32 %v4776, %v4778
    %v4780 = vrot.slane %v4037, %v4779
    %v4782 = vunpack.c.l.s4 1983009808
    %v4783 = vunpack.c.0.s8 %v4782
    %v4784 = vlaneseq
    %v4785 = vshrl.u32 %v4784, 7
    %v4786 = vsub.s32 %v4783, %v4785
    %v4787 = vrot.slane %v4773, %v4786
    %v4788 = vcombine.high %v4780, %v4780
    %v4789 = vcombine.high %v4787, %v4787
    %v4790 = vcombine.high %v4038, %v4038
    %v4792 = vunpack.c.l.s4 1983009808
    %v4793 = vunpack.c.0.s8 %v4792
    %v4794 = vlaneseq
    %v4795 = vshrl.u32 %v4794, 7
    %v4796 = vsub.s32 %v4793, %v4795
    %v4797 = vrot.slane %v4038, %v4796
    %v4799 = vunpack.c.l.s4 1983009808
    %v4800 = vunpack.c.0.s8 %v4799
    %v4801 = vlaneseq
    %v4802 = vshrl.u32 %v4801, 7
    %v4803 = vsub.s32 %v4800, %v4802
    %v4804 = vrot.slane %v4790, %v4803
    %v4805 = vcombine.high %v4797, %v4797
    %v4806 = vcombine.high %v4804, %v4804
    %v4807 = vcombine.high %v4039, %v4039
    %v4809 = vunpack.c.l.s4 1983009808
    %v4810 = vunpack.c.0.s8 %v4809
    %v4811 = vlaneseq
    %v4812 = vshrl.u32 %v4811, 7
    %v4813 = vsub.s32 %v4810, %v4812
    %v4814 = vrot.slane %v4039, %v4813
    %v4816 = vunpack.c.l.s4 1983009808
    %v4817 = vunpack.c.0.s8 %v4816
    %v4818 = vlaneseq
    %v4819 = vshrl.u32 %v4818, 7
    %v4820 = vsub.s32 %v4817, %v4819
    %v4821 = vrot.slane %v4807, %v4820
    %v4822 = vcombine.high %v4814, %v4814
    %v4823 = vcombine.high %v4821, %v4821
    %v4824 = vcombine.high %v4040, %v4040
    %v4826 = vunpack.c.l.s4 1983009808
    %v4827 = vunpack.c.0.s8 %v4826
    %v4828 = vlaneseq
    %v4829 = vshrl.u32 %v4828, 7
    %v4830 = vsub.s32 %v4827, %v4829
    %v4831 = vrot.slane %v4040, %v4830
    %v4833 = vunpack.c.l.s4 1983009808
    %v4834 = vunpack.c.0.s8 %v4833
    %v4835 = vlaneseq
    %v4836 = vshrl.u32 %v4835, 7
    %v4837 = vsub.s32 %v4834, %v4836
    %v4838 = vrot.slane %v4824, %v4837
    %v4839 = vcombine.high %v4831, %v4831
    %v4840 = vcombine.high %v4838, %v4838
    %v4841 = vcombine.high %v4041, %v4041
    %v4843 = vunpack.c.l.s4 1983009808
    %v4844 = vunpack.c.0.s8 %v4843
    %v4845 = vlaneseq
    %v4846 = vshrl.u32 %v4845, 7
    %v4847 = vsub.s32 %v4844, %v4846
    %v4848 = vrot.slane %v4041, %v4847
    %v4850 = vunpack.c.l.s4 1983009808
    %v4851 = vunpack.c.0.s8 %v4850
    %v4852 = vlaneseq
    %v4853 = vshrl.u32 %v4852, 7
    %v4854 = vsub.s32 %v4851, %v4853
    %v4855 = vrot.slane %v4841, %v4854
    %v4856 = vcombine.high %v4848, %v4848
    %v4857 = vcombine.high %v4855, %v4855
    %v4858 = vcombine.high %v4042, %v4042
    %v4860 = vunpack.c.l.s4 1983009808
    %v4861 = vunpack.c.0.s8 %v4860
    %v4862 = vlaneseq
    %v4863 = vshrl.u32 %v4862, 7
    %v4864 = vsub.s32 %v4861, %v4863
    %v4865 = vrot.slane %v4042, %v4864
    %v4867 = vunpack.c.l.s4 1983009808
    %v4868 = vunpack.c.0.s8 %v4867
    %v4869 = vlaneseq
    %v4870 = vshrl.u32 %v4869, 7
    %v4871 = vsub.s32 %v4868, %v4870
    %v4872 = vrot.slane %v4858, %v4871
    %v4873 = vcombine.high %v4865, %v4865
    %v4874 = vcombine.high %v4872, %v4872
    %v4875 = vcombine.high %v4043, %v4043
    %v4877 = vunpack.c.l.s4 1983009808
    %v4878 = vunpack.c.0.s8 %v4877
    %v4879 = vlaneseq
    %v4880 = vshrl.u32 %v4879, 7
    %v4881 = vsub.s32 %v4878, %v4880
    %v4882 = vrot.slane %v4043, %v4881
    %v4884 = vunpack.c.l.s4 1983009808
    %v4885 = vunpack.c.0.s8 %v4884
    %v4886 = vlaneseq
    %v4887 = vshrl.u32 %v4886, 7
    %v4888 = vsub.s32 %v4885, %v4887
    %v4889 = vrot.slane %v4875, %v4888
    %v4890 = vcombine.high %v4882, %v4882
    %v4891 = vcombine.high %v4889, %v4889
    %v4892 = vcombine.high %v4044, %v4044
    %v4894 = vunpack.c.l.s4 1983009808
    %v4895 = vunpack.c.0.s8 %v4894
    %v4896 = vlaneseq
    %v4897 = vshrl.u32 %v4896, 7
    %v4898 = vsub.s32 %v4895, %v4897
    %v4899 = vrot.slane %v4044, %v4898
    %v4901 = vunpack.c.l.s4 1983009808
    %v4902 = vunpack.c.0.s8 %v4901
    %v4903 = vlaneseq
    %v4904 = vshrl.u32 %v4903, 7
    %v4905 = vsub.s32 %v4902, %v4904
    %v4906 = vrot.slane %v4892, %v4905
    %v4907 = vcombine.high %v4899, %v4899
    %v4908 = vcombine.high %v4906, %v4906
    %v4909 = vcombine.high %v4045, %v4045
    %v4911 = vunpack.c.l.s4 1983009808
    %v4912 = vunpack.c.0.s8 %v4911
    %v4913 = vlaneseq
    %v4914 = vshrl.u32 %v4913, 7
    %v4915 = vsub.s32 %v4912, %v4914
    %v4916 = vrot.slane %v4045, %v4915
    %v4918 = vunpack.c.l.s4 1983009808
    %v4919 = vunpack.c.0.s8 %v4918
    %v4920 = vlaneseq
    %v4921 = vshrl.u32 %v4920, 7
    %v4922 = vsub.s32 %v4919, %v4921
    %v4923 = vrot.slane %v4909, %v4922
    %v4924 = vcombine.high %v4916, %v4916
    %v4925 = vcombine.high %v4923, %v4923
    %v4926 = vcombine.high %v4046, %v4046
    %v4928 = vunpack.c.l.s4 1983009808
    %v4929 = vunpack.c.0.s8 %v4928
    %v4930 = vlaneseq
    %v4931 = vshrl.u32 %v4930, 7
    %v4932 = vsub.s32 %v4929, %v4931
    %v4933 = vrot.slane %v4046, %v4932
    %v4935 = vunpack.c.l.s4 1983009808
    %v4936 = vunpack.c.0.s8 %v4935
    %v4937 = vlaneseq
    %v4938 = vshrl.u32 %v4937, 7
    %v4939 = vsub.s32 %v4936, %v4938
    %v4940 = vrot.slane %v4926, %v4939
    %v4941 = vcombine.high %v4933, %v4933
    %v4942 = vcombine.high %v4940, %v4940
    %v4943 = vcombine.high %v4047, %v4047
    %v4945 = vunpack.c.l.s4 1983009808
    %v4946 = vunpack.c.0.s8 %v4945
    %v4947 = vlaneseq
    %v4948 = vshrl.u32 %v4947, 7
    %v4949 = vsub.s32 %v4946, %v4948
    %v4950 = vrot.slane %v4047, %v4949
    %v4952 = vunpack.c.l.s4 1983009808
    %v4953 = vunpack.c.0.s8 %v4952
    %v4954 = vlaneseq
    %v4955 = vshrl.u32 %v4954, 7
    %v4956 = vsub.s32 %v4953, %v4955
    %v4957 = vrot.slane %v4943, %v4956
    %v4958 = vcombine.high %v4950, %v4950
    %v4959 = vcombine.high %v4957, %v4957
    %v4960 = vcombine.high %v4048, %v4048
    %v4962 = vunpack.c.l.s4 1983009808
    %v4963 = vunpack.c.0.s8 %v4962
    %v4964 = vlaneseq
    %v4965 = vshrl.u32 %v4964, 7
    %v4966 = vsub.s32 %v4963, %v4965
    %v4967 = vrot.slane %v4048, %v4966
    %v4969 = vunpack.c.l.s4 1983009808
    %v4970 = vunpack.c.0.s8 %v4969
    %v4971 = vlaneseq
    %v4972 = vshrl.u32 %v4971, 7
    %v4973 = vsub.s32 %v4970, %v4972
    %v4974 = vrot.slane %v4960, %v4973
    %v4975 = vcombine.high %v4967, %v4967
    %v4976 = vcombine.high %v4974, %v4974
    %v4977 = vcombine.high %v4049, %v4049
    %v4979 = vunpack.c.l.s4 1983009808
    %v4980 = vunpack.c.0.s8 %v4979
    %v4981 = vlaneseq
    %v4982 = vshrl.u32 %v4981, 7
    %v4983 = vsub.s32 %v4980, %v4982
    %v4984 = vrot.slane %v4049, %v4983
    %v4986 = vunpack.c.l.s4 1983009808
    %v4987 = vunpack.c.0.s8 %v4986
    %v4988 = vlaneseq
    %v4989 = vshrl.u32 %v4988, 7
    %v4990 = vsub.s32 %v4987, %v4989
    %v4991 = vrot.slane %v4977, %v4990
    %v4992 = vcombine.high %v4984, %v4984
    %v4993 = vcombine.high %v4991, %v4991
    %v4994 = vcombine.high %v4050, %v4050
    %v4996 = vunpack.c.l.s4 1983009808
    %v4997 = vunpack.c.0.s8 %v4996
    %v4998 = vlaneseq
    %v4999 = vshrl.u32 %v4998, 7
    %v5000 = vsub.s32 %v4997, %v4999
    %v5001 = vrot.slane %v4050, %v5000
    %v5003 = vunpack.c.l.s4 1983009808
    %v5004 = vunpack.c.0.s8 %v5003
    %v5005 = vlaneseq
    %v5006 = vshrl.u32 %v5005, 7
    %v5007 = vsub.s32 %v5004, %v5006
    %v5008 = vrot.slane %v4994, %v5007
    %v5009 = vcombine.high %v5001, %v5001
    %v5010 = vcombine.high %v5008, %v5008
    %v5011 = vcombine.high %v4051, %v4051
    %v5013 = vunpack.c.l.s4 1983009808
    %v5014 = vunpack.c.0.s8 %v5013
    %v5015 = vlaneseq
    %v5016 = vshrl.u32 %v5015, 7
    %v5017 = vsub.s32 %v5014, %v5016
    %v5018 = vrot.slane %v4051, %v5017
    %v5020 = vunpack.c.l.s4 1983009808
    %v5021 = vunpack.c.0.s8 %v5020
    %v5022 = vlaneseq
    %v5023 = vshrl.u32 %v5022, 7
    %v5024 = vsub.s32 %v5021, %v5023
    %v5025 = vrot.slane %v5011, %v5024
    %v5026 = vcombine.high %v5018, %v5018
    %v5027 = vcombine.high %v5025, %v5025
    %v5028 = vcombine.high %v4052, %v4052
    %v5030 = vunpack.c.l.s4 1983009808
    %v5031 = vunpack.c.0.s8 %v5030
    %v5032 = vlaneseq
    %v5033 = vshrl.u32 %v5032, 7
    %v5034 = vsub.s32 %v5031, %v5033
    %v5035 = vrot.slane %v4052, %v5034
    %v5037 = vunpack.c.l.s4 1983009808
    %v5038 = vunpack.c.0.s8 %v5037
    %v5039 = vlaneseq
    %v5040 = vshrl.u32 %v5039, 7
    %v5041 = vsub.s32 %v5038, %v5040
    %v5042 = vrot.slane %v5028, %v5041
    %v5043 = vcombine.high %v5035, %v5035
    %v5044 = vcombine.high %v5042, %v5042
    %v5045 = vcombine.high %v4053, %v4053
    %v5047 = vunpack.c.l.s4 1983009808
    %v5048 = vunpack.c.0.s8 %v5047
    %v5049 = vlaneseq
    %v5050 = vshrl.u32 %v5049, 7
    %v5051 = vsub.s32 %v5048, %v5050
    %v5052 = vrot.slane %v4053, %v5051
    %v5054 = vunpack.c.l.s4 1983009808
    %v5055 = vunpack.c.0.s8 %v5054
    %v5056 = vlaneseq
    %v5057 = vshrl.u32 %v5056, 7
    %v5058 = vsub.s32 %v5055, %v5057
    %v5059 = vrot.slane %v5045, %v5058
    %v5060 = vcombine.high %v5052, %v5052
    %v5061 = vcombine.high %v5059, %v5059
    %v5062 = vcombine.high %v4054, %v4054
    %v5064 = vunpack.c.l.s4 1983009808
    %v5065 = vunpack.c.0.s8 %v5064
    %v5066 = vlaneseq
    %v5067 = vshrl.u32 %v5066, 7
    %v5068 = vsub.s32 %v5065, %v5067
    %v5069 = vrot.slane %v4054, %v5068
    %v5071 = vunpack.c.l.s4 1983009808
    %v5072 = vunpack.c.0.s8 %v5071
    %v5073 = vlaneseq
    %v5074 = vshrl.u32 %v5073, 7
    %v5075 = vsub.s32 %v5072, %v5074
    %v5076 = vrot.slane %v5062, %v5075
    %v5077 = vcombine.high %v5069, %v5069
    %v5078 = vcombine.high %v5076, %v5076
    %v5079 = vcombine.high %v4055, %v4055
    %v5081 = vunpack.c.l.s4 1983009808
    %v5082 = vunpack.c.0.s8 %v5081
    %v5083 = vlaneseq
    %v5084 = vshrl.u32 %v5083, 7
    %v5085 = vsub.s32 %v5082, %v5084
    %v5086 = vrot.slane %v4055, %v5085
    %v5088 = vunpack.c.l.s4 1983009808
    %v5089 = vunpack.c.0.s8 %v5088
    %v5090 = vlaneseq
    %v5091 = vshrl.u32 %v5090, 7
    %v5092 = vsub.s32 %v5089, %v5091
    %v5093 = vrot.slane %v5079, %v5092
    %v5094 = vcombine.high %v5086, %v5086
    %v5095 = vcombine.high %v5093, %v5093
    %v5096 = vcombine.high %v4056, %v4056
    %v5098 = vunpack.c.l.s4 1983009808
    %v5099 = vunpack.c.0.s8 %v5098
    %v5100 = vlaneseq
    %v5101 = vshrl.u32 %v5100, 7
    %v5102 = vsub.s32 %v5099, %v5101
    %v5103 = vrot.slane %v4056, %v5102
    %v5105 = vunpack.c.l.s4 1983009808
    %v5106 = vunpack.c.0.s8 %v5105
    %v5107 = vlaneseq
    %v5108 = vshrl.u32 %v5107, 7
    %v5109 = vsub.s32 %v5106, %v5108
    %v5110 = vrot.slane %v5096, %v5109
    %v5111 = vcombine.high %v5103, %v5103
    %v5112 = vcombine.high %v5110, %v5110
    %v5113 = vcombine.high %v4057, %v4057
    %v5115 = vunpack.c.l.s4 1983009808
    %v5116 = vunpack.c.0.s8 %v5115
    %v5117 = vlaneseq
    %v5118 = vshrl.u32 %v5117, 7
    %v5119 = vsub.s32 %v5116, %v5118
    %v5120 = vrot.slane %v4057, %v5119
    %v5122 = vunpack.c.l.s4 1983009808
    %v5123 = vunpack.c.0.s8 %v5122
    %v5124 = vlaneseq
    %v5125 = vshrl.u32 %v5124, 7
    %v5126 = vsub.s32 %v5123, %v5125
    %v5127 = vrot.slane %v5113, %v5126
    %v5128 = vcombine.high %v5120, %v5120
    %v5129 = vcombine.high %v5127, %v5127
    %v5130 = vcombine.high %v4058, %v4058
    %v5132 = vunpack.c.l.s4 1983009808
    %v5133 = vunpack.c.0.s8 %v5132
    %v5134 = vlaneseq
    %v5135 = vshrl.u32 %v5134, 7
    %v5136 = vsub.s32 %v5133, %v5135
    %v5137 = vrot.slane %v4058, %v5136
    %v5139 = vunpack.c.l.s4 1983009808
    %v5140 = vunpack.c.0.s8 %v5139
    %v5141 = vlaneseq
    %v5142 = vshrl.u32 %v5141, 7
    %v5143 = vsub.s32 %v5140, %v5142
    %v5144 = vrot.slane %v5130, %v5143
    %v5145 = vcombine.high %v5137, %v5137
    %v5146 = vcombine.high %v5144, %v5144
    %v5147 = vcombine.high %v4059, %v4059
    %v5149 = vunpack.c.l.s4 1983009808
    %v5150 = vunpack.c.0.s8 %v5149
    %v5151 = vlaneseq
    %v5152 = vshrl.u32 %v5151, 7
    %v5153 = vsub.s32 %v5150, %v5152
    %v5154 = vrot.slane %v4059, %v5153
    %v5156 = vunpack.c.l.s4 1983009808
    %v5157 = vunpack.c.0.s8 %v5156
    %v5158 = vlaneseq
    %v5159 = vshrl.u32 %v5158, 7
    %v5160 = vsub.s32 %v5157, %v5159
    %v5161 = vrot.slane %v5147, %v5160
    %v5162 = vcombine.high %v5154, %v5154
    %v5163 = vcombine.high %v5161, %v5161
    %v5164 = vcombine.high %v4060, %v4060
    %v5166 = vunpack.c.l.s4 1983009808
    %v5167 = vunpack.c.0.s8 %v5166
    %v5168 = vlaneseq
    %v5169 = vshrl.u32 %v5168, 7
    %v5170 = vsub.s32 %v5167, %v5169
    %v5171 = vrot.slane %v4060, %v5170
    %v5173 = vunpack.c.l.s4 1983009808
    %v5174 = vunpack.c.0.s8 %v5173
    %v5175 = vlaneseq
    %v5176 = vshrl.u32 %v5175, 7
    %v5177 = vsub.s32 %v5174, %v5176
    %v5178 = vrot.slane %v5164, %v5177
    %v5179 = vcombine.high %v5171, %v5171
    %v5180 = vcombine.high %v5178, %v5178
    %v5181 = vcombine.high %v4061, %v4061
    %v5183 = vunpack.c.l.s4 1983009808
    %v5184 = vunpack.c.0.s8 %v5183
    %v5185 = vlaneseq
    %v5186 = vshrl.u32 %v5185, 7
    %v5187 = vsub.s32 %v5184, %v5186
    %v5188 = vrot.slane %v4061, %v5187
    %v5190 = vunpack.c.l.s4 1983009808
    %v5191 = vunpack.c.0.s8 %v5190
    %v5192 = vlaneseq
    %v5193 = vshrl.u32 %v5192, 7
    %v5194 = vsub.s32 %v5191, %v5193
    %v5195 = vrot.slane %v5181, %v5194
    %v5196 = vcombine.high %v5188, %v5188
    %v5197 = vcombine.high %v5195, %v5195
    %v5198 = vcombine.high %v4062, %v4062
    %v5200 = vunpack.c.l.s4 1983009808
    %v5201 = vunpack.c.0.s8 %v5200
    %v5202 = vlaneseq
    %v5203 = vshrl.u32 %v5202, 7
    %v5204 = vsub.s32 %v5201, %v5203
    %v5205 = vrot.slane %v4062, %v5204
    %v5207 = vunpack.c.l.s4 1983009808
    %v5208 = vunpack.c.0.s8 %v5207
    %v5209 = vlaneseq
    %v5210 = vshrl.u32 %v5209, 7
    %v5211 = vsub.s32 %v5208, %v5210
    %v5212 = vrot.slane %v5198, %v5211
    %v5213 = vcombine.high %v5205, %v5205
    %v5214 = vcombine.high %v5212, %v5212
    %vm5471 = vcmask 254976
    %v5472 = vsel %vm5471, %v4134, -inf
    %v5473 = vrot.slane %v5472, 4
    %v5474 = vmax.f32 %v5472, %v5473
    %v5475 = vrot.slane %v5474, 2
    %v5476 = vmax.f32 %v5474, %v5475
    %v5477 = vrot.slane %v5476, 1
    %v5478 = vmax.f32 %v5476, %v5477
    %v5479 = vsel %vm5471, %v4142, -inf
    %v5480 = vrot.slane %v5479, 4
    %v5481 = vmax.f32 %v5479, %v5480
    %v5482 = vrot.slane %v5481, 2
    %v5483 = vmax.f32 %v5481, %v5482
    %v5484 = vrot.slane %v5483, 1
    %v5485 = vmax.f32 %v5483, %v5484
    %v5486 = vsel %vm5471, %v4141, -inf
    %v5487 = vrot.slane %v5486, 4
    %v5488 = vmax.f32 %v5486, %v5487
    %v5489 = vrot.slane %v5488, 2
    %v5490 = vmax.f32 %v5488, %v5489
    %v5491 = vrot.slane %v5490, 1
    %v5492 = vmax.f32 %v5490, %v5491
    %v5493 = vsel %vm5471, %v4143, -inf
    %v5494 = vrot.slane %v5493, 4
    %v5495 = vmax.f32 %v5493, %v5494
    %v5496 = vrot.slane %v5495, 2
    %v5497 = vmax.f32 %v5495, %v5496
    %v5498 = vrot.slane %v5497, 1
    %v5499 = vmax.f32 %v5497, %v5498
    %v5500 = vsel %vm5471, %v4151, -inf
    %v5501 = vrot.slane %v5500, 4
    %v5502 = vmax.f32 %v5500, %v5501
    %v5503 = vrot.slane %v5502, 2
    %v5504 = vmax.f32 %v5502, %v5503
    %v5505 = vrot.slane %v5504, 1
    %v5506 = vmax.f32 %v5504, %v5505
    %v5507 = vsel %vm5471, %v4159, -inf
    %v5508 = vrot.slane %v5507, 4
    %v5509 = vmax.f32 %v5507, %v5508
    %v5510 = vrot.slane %v5509, 2
    %v5511 = vmax.f32 %v5509, %v5510
    %v5512 = vrot.slane %v5511, 1
    %v5513 = vmax.f32 %v5511, %v5512
    %v5514 = vsel %vm5471, %v4158, -inf
    %v5515 = vrot.slane %v5514, 4
    %v5516 = vmax.f32 %v5514, %v5515
    %v5517 = vrot.slane %v5516, 2
    %v5518 = vmax.f32 %v5516, %v5517
    %v5519 = vrot.slane %v5518, 1
    %v5520 = vmax.f32 %v5518, %v5519
    %v5521 = vsel %vm5471, %v4160, -inf
    %v5522 = vrot.slane %v5521, 4
    %v5523 = vmax.f32 %v5521, %v5522
    %v5524 = vrot.slane %v5523, 2
    %v5525 = vmax.f32 %v5523, %v5524
    %v5526 = vrot.slane %v5525, 1
    %v5527 = vmax.f32 %v5525, %v5526
    %v5528 = vsel %vm5471, %v4168, -inf
    %v5529 = vrot.slane %v5528, 4
    %v5530 = vmax.f32 %v5528, %v5529
    %v5531 = vrot.slane %v5530, 2
    %v5532 = vmax.f32 %v5530, %v5531
    %v5533 = vrot.slane %v5532, 1
    %v5534 = vmax.f32 %v5532, %v5533
    %v5535 = vsel %vm5471, %v4176, -inf
    %v5536 = vrot.slane %v5535, 4
    %v5537 = vmax.f32 %v5535, %v5536
    %v5538 = vrot.slane %v5537, 2
    %v5539 = vmax.f32 %v5537, %v5538
    %v5540 = vrot.slane %v5539, 1
    %v5541 = vmax.f32 %v5539, %v5540
    %v5542 = vsel %vm5471, %v4175, -inf
    %v5543 = vrot.slane %v5542, 4
    %v5544 = vmax.f32 %v5542, %v5543
    %v5545 = vrot.slane %v5544, 2
    %v5546 = vmax.f32 %v5544, %v5545
    %v5547 = vrot.slane %v5546, 1
    %v5548 = vmax.f32 %v5546, %v5547
    %v5549 = vsel %vm5471, %v4177, -inf
    %v5550 = vrot.slane %v5549, 4
    %v5551 = vmax.f32 %v5549, %v5550
    %v5552 = vrot.slane %v5551, 2
    %v5553 = vmax.f32 %v5551, %v5552
    %v5554 = vrot.slane %v5553, 1
    %v5555 = vmax.f32 %v5553, %v5554
    %v5556 = vsel %vm5471, %v4185, -inf
    %v5557 = vrot.slane %v5556, 4
    %v5558 = vmax.f32 %v5556, %v5557
    %v5559 = vrot.slane %v5558, 2
    %v5560 = vmax.f32 %v5558, %v5559
    %v5561 = vrot.slane %v5560, 1
    %v5562 = vmax.f32 %v5560, %v5561
    %v5563 = vsel %vm5471, %v4193, -inf
    %v5564 = vrot.slane %v5563, 4
    %v5565 = vmax.f32 %v5563, %v5564
    %v5566 = vrot.slane %v5565, 2
    %v5567 = vmax.f32 %v5565, %v5566
    %v5568 = vrot.slane %v5567, 1
    %v5569 = vmax.f32 %v5567, %v5568
    %v5570 = vsel %vm5471, %v4192, -inf
    %v5571 = vrot.slane %v5570, 4
    %v5572 = vmax.f32 %v5570, %v5571
    %v5573 = vrot.slane %v5572, 2
    %v5574 = vmax.f32 %v5572, %v5573
    %v5575 = vrot.slane %v5574, 1
    %v5576 = vmax.f32 %v5574, %v5575
    %v5577 = vsel %vm5471, %v4194, -inf
    %v5578 = vrot.slane %v5577, 4
    %v5579 = vmax.f32 %v5577, %v5578
    %v5580 = vrot.slane %v5579, 2
    %v5581 = vmax.f32 %v5579, %v5580
    %v5582 = vrot.slane %v5581, 1
    %v5583 = vmax.f32 %v5581, %v5582
    %v5584 = vsel %vm5471, %v4202, -inf
    %v5585 = vrot.slane %v5584, 4
    %v5586 = vmax.f32 %v5584, %v5585
    %v5587 = vrot.slane %v5586, 2
    %v5588 = vmax.f32 %v5586, %v5587
    %v5589 = vrot.slane %v5588, 1
    %v5590 = vmax.f32 %v5588, %v5589
    %v5591 = vsel %vm5471, %v4210, -inf
    %v5592 = vrot.slane %v5591, 4
    %v5593 = vmax.f32 %v5591, %v5592
    %v5594 = vrot.slane %v5593, 2
    %v5595 = vmax.f32 %v5593, %v5594
    %v5596 = vrot.slane %v5595, 1
    %v5597 = vmax.f32 %v5595, %v5596
    %v5598 = vsel %vm5471, %v4209, -inf
    %v5599 = vrot.slane %v5598, 4
    %v5600 = vmax.f32 %v5598, %v5599
    %v5601 = vrot.slane %v5600, 2
    %v5602 = vmax.f32 %v5600, %v5601
    %v5603 = vrot.slane %v5602, 1
    %v5604 = vmax.f32 %v5602, %v5603
    %v5605 = vsel %vm5471, %v4211, -inf
    %v5606 = vrot.slane %v5605, 4
    %v5607 = vmax.f32 %v5605, %v5606
    %v5608 = vrot.slane %v5607, 2
    %v5609 = vmax.f32 %v5607, %v5608
    %v5610 = vrot.slane %v5609, 1
    %v5611 = vmax.f32 %v5609, %v5610
    %v5612 = vsel %vm5471, %v4219, -inf
    %v5613 = vrot.slane %v5612, 4
    %v5614 = vmax.f32 %v5612, %v5613
    %v5615 = vrot.slane %v5614, 2
    %v5616 = vmax.f32 %v5614, %v5615
    %v5617 = vrot.slane %v5616, 1
    %v5618 = vmax.f32 %v5616, %v5617
    %v5619 = vsel %vm5471, %v4227, -inf
    %v5620 = vrot.slane %v5619, 4
    %v5621 = vmax.f32 %v5619, %v5620
    %v5622 = vrot.slane %v5621, 2
    %v5623 = vmax.f32 %v5621, %v5622
    %v5624 = vrot.slane %v5623, 1
    %v5625 = vmax.f32 %v5623, %v5624
    %v5626 = vsel %vm5471, %v4226, -inf
    %v5627 = vrot.slane %v5626, 4
    %v5628 = vmax.f32 %v5626, %v5627
    %v5629 = vrot.slane %v5628, 2
    %v5630 = vmax.f32 %v5628, %v5629
    %v5631 = vrot.slane %v5630, 1
    %v5632 = vmax.f32 %v5630, %v5631
    %v5633 = vsel %vm5471, %v4228, -inf
    %v5634 = vrot.slane %v5633, 4
    %v5635 = vmax.f32 %v5633, %v5634
    %v5636 = vrot.slane %v5635, 2
    %v5637 = vmax.f32 %v5635, %v5636
    %v5638 = vrot.slane %v5637, 1
    %v5639 = vmax.f32 %v5637, %v5638
    %v5640 = vsel %vm5471, %v4236, -inf
    %v5641 = vrot.slane %v5640, 4
    %v5642 = vmax.f32 %v5640, %v5641
    %v5643 = vrot.slane %v5642, 2
    %v5644 = vmax.f32 %v5642, %v5643
    %v5645 = vrot.slane %v5644, 1
    %v5646 = vmax.f32 %v5644, %v5645
    %v5647 = vsel %vm5471, %v4244, -inf
    %v5648 = vrot.slane %v5647, 4
    %v5649 = vmax.f32 %v5647, %v5648
    %v5650 = vrot.slane %v5649, 2
    %v5651 = vmax.f32 %v5649, %v5650
    %v5652 = vrot.slane %v5651, 1
    %v5653 = vmax.f32 %v5651, %v5652
    %v5654 = vsel %vm5471, %v4243, -inf
    %v5655 = vrot.slane %v5654, 4
    %v5656 = vmax.f32 %v5654, %v5655
    %v5657 = vrot.slane %v5656, 2
    %v5658 = vmax.f32 %v5656, %v5657
    %v5659 = vrot.slane %v5658, 1
    %v5660 = vmax.f32 %v5658, %v5659
    %v5661 = vsel %vm5471, %v4245, -inf
    %v5662 = vrot.slane %v5661, 4
    %v5663 = vmax.f32 %v5661, %v5662
    %v5664 = vrot.slane %v5663, 2
    %v5665 = vmax.f32 %v5663, %v5664
    %v5666 = vrot.slane %v5665, 1
    %v5667 = vmax.f32 %v5665, %v5666
    %v5668 = vsel %vm5471, %v4253, -inf
    %v5669 = vrot.slane %v5668, 4
    %v5670 = vmax.f32 %v5668, %v5669
    %v5671 = vrot.slane %v5670, 2
    %v5672 = vmax.f32 %v5670, %v5671
    %v5673 = vrot.slane %v5672, 1
    %v5674 = vmax.f32 %v5672, %v5673
    %v5675 = vsel %vm5471, %v4261, -inf
    %v5676 = vrot.slane %v5675, 4
    %v5677 = vmax.f32 %v5675, %v5676
    %v5678 = vrot.slane %v5677, 2
    %v5679 = vmax.f32 %v5677, %v5678
    %v5680 = vrot.slane %v5679, 1
    %v5681 = vmax.f32 %v5679, %v5680
    %v5682 = vsel %vm5471, %v4260, -inf
    %v5683 = vrot.slane %v5682, 4
    %v5684 = vmax.f32 %v5682, %v5683
    %v5685 = vrot.slane %v5684, 2
    %v5686 = vmax.f32 %v5684, %v5685
    %v5687 = vrot.slane %v5686, 1
    %v5688 = vmax.f32 %v5686, %v5687
    %v5689 = vsel %vm5471, %v4262, -inf
    %v5690 = vrot.slane %v5689, 4
    %v5691 = vmax.f32 %v5689, %v5690
    %v5692 = vrot.slane %v5691, 2
    %v5693 = vmax.f32 %v5691, %v5692
    %v5694 = vrot.slane %v5693, 1
    %v5695 = vmax.f32 %v5693, %v5694
    %v5696 = vsel %vm5471, %v4270, -inf
    %v5697 = vrot.slane %v5696, 4
    %v5698 = vmax.f32 %v5696, %v5697
    %v5699 = vrot.slane %v5698, 2
    %v5700 = vmax.f32 %v5698, %v5699
    %v5701 = vrot.slane %v5700, 1
    %v5702 = vmax.f32 %v5700, %v5701
    %v5703 = vsel %vm5471, %v4278, -inf
    %v5704 = vrot.slane %v5703, 4
    %v5705 = vmax.f32 %v5703, %v5704
    %v5706 = vrot.slane %v5705, 2
    %v5707 = vmax.f32 %v5705, %v5706
    %v5708 = vrot.slane %v5707, 1
    %v5709 = vmax.f32 %v5707, %v5708
    %v5710 = vsel %vm5471, %v4277, -inf
    %v5711 = vrot.slane %v5710, 4
    %v5712 = vmax.f32 %v5710, %v5711
    %v5713 = vrot.slane %v5712, 2
    %v5714 = vmax.f32 %v5712, %v5713
    %v5715 = vrot.slane %v5714, 1
    %v5716 = vmax.f32 %v5714, %v5715
    %v5717 = vsel %vm5471, %v4279, -inf
    %v5718 = vrot.slane %v5717, 4
    %v5719 = vmax.f32 %v5717, %v5718
    %v5720 = vrot.slane %v5719, 2
    %v5721 = vmax.f32 %v5719, %v5720
    %v5722 = vrot.slane %v5721, 1
    %v5723 = vmax.f32 %v5721, %v5722
    %v5724 = vsel %vm5471, %v4287, -inf
    %v5725 = vrot.slane %v5724, 4
    %v5726 = vmax.f32 %v5724, %v5725
    %v5727 = vrot.slane %v5726, 2
    %v5728 = vmax.f32 %v5726, %v5727
    %v5729 = vrot.slane %v5728, 1
    %v5730 = vmax.f32 %v5728, %v5729
    %v5731 = vsel %vm5471, %v4295, -inf
    %v5732 = vrot.slane %v5731, 4
    %v5733 = vmax.f32 %v5731, %v5732
    %v5734 = vrot.slane %v5733, 2
    %v5735 = vmax.f32 %v5733, %v5734
    %v5736 = vrot.slane %v5735, 1
    %v5737 = vmax.f32 %v5735, %v5736
    %v5738 = vsel %vm5471, %v4294, -inf
    %v5739 = vrot.slane %v5738, 4
    %v5740 = vmax.f32 %v5738, %v5739
    %v5741 = vrot.slane %v5740, 2
    %v5742 = vmax.f32 %v5740, %v5741
    %v5743 = vrot.slane %v5742, 1
    %v5744 = vmax.f32 %v5742, %v5743
    %v5745 = vsel %vm5471, %v4296, -inf
    %v5746 = vrot.slane %v5745, 4
    %v5747 = vmax.f32 %v5745, %v5746
    %v5748 = vrot.slane %v5747, 2
    %v5749 = vmax.f32 %v5747, %v5748
    %v5750 = vrot.slane %v5749, 1
    %v5751 = vmax.f32 %v5749, %v5750
    %v5752 = vsel %vm5471, %v4304, -inf
    %v5753 = vrot.slane %v5752, 4
    %v5754 = vmax.f32 %v5752, %v5753
    %v5755 = vrot.slane %v5754, 2
    %v5756 = vmax.f32 %v5754, %v5755
    %v5757 = vrot.slane %v5756, 1
    %v5758 = vmax.f32 %v5756, %v5757
    %v5759 = vsel %vm5471, %v4312, -inf
    %v5760 = vrot.slane %v5759, 4
    %v5761 = vmax.f32 %v5759, %v5760
    %v5762 = vrot.slane %v5761, 2
    %v5763 = vmax.f32 %v5761, %v5762
    %v5764 = vrot.slane %v5763, 1
    %v5765 = vmax.f32 %v5763, %v5764
    %v5766 = vsel %vm5471, %v4311, -inf
    %v5767 = vrot.slane %v5766, 4
    %v5768 = vmax.f32 %v5766, %v5767
    %v5769 = vrot.slane %v5768, 2
    %v5770 = vmax.f32 %v5768, %v5769
    %v5771 = vrot.slane %v5770, 1
    %v5772 = vmax.f32 %v5770, %v5771
    %v5773 = vsel %vm5471, %v4313, -inf
    %v5774 = vrot.slane %v5773, 4
    %v5775 = vmax.f32 %v5773, %v5774
    %v5776 = vrot.slane %v5775, 2
    %v5777 = vmax.f32 %v5775, %v5776
    %v5778 = vrot.slane %v5777, 1
    %v5779 = vmax.f32 %v5777, %v5778
    %v5780 = vsel %vm5471, %v4321, -inf
    %v5781 = vrot.slane %v5780, 4
    %v5782 = vmax.f32 %v5780, %v5781
    %v5783 = vrot.slane %v5782, 2
    %v5784 = vmax.f32 %v5782, %v5783
    %v5785 = vrot.slane %v5784, 1
    %v5786 = vmax.f32 %v5784, %v5785
    %v5787 = vsel %vm5471, %v4329, -inf
    %v5788 = vrot.slane %v5787, 4
    %v5789 = vmax.f32 %v5787, %v5788
    %v5790 = vrot.slane %v5789, 2
    %v5791 = vmax.f32 %v5789, %v5790
    %v5792 = vrot.slane %v5791, 1
    %v5793 = vmax.f32 %v5791, %v5792
    %v5794 = vsel %vm5471, %v4328, -inf
    %v5795 = vrot.slane %v5794, 4
    %v5796 = vmax.f32 %v5794, %v5795
    %v5797 = vrot.slane %v5796, 2
    %v5798 = vmax.f32 %v5796, %v5797
    %v5799 = vrot.slane %v5798, 1
    %v5800 = vmax.f32 %v5798, %v5799
    %v5801 = vsel %vm5471, %v4330, -inf
    %v5802 = vrot.slane %v5801, 4
    %v5803 = vmax.f32 %v5801, %v5802
    %v5804 = vrot.slane %v5803, 2
    %v5805 = vmax.f32 %v5803, %v5804
    %v5806 = vrot.slane %v5805, 1
    %v5807 = vmax.f32 %v5805, %v5806
    %v5808 = vsel %vm5471, %v4338, -inf
    %v5809 = vrot.slane %v5808, 4
    %v5810 = vmax.f32 %v5808, %v5809
    %v5811 = vrot.slane %v5810, 2
    %v5812 = vmax.f32 %v5810, %v5811
    %v5813 = vrot.slane %v5812, 1
    %v5814 = vmax.f32 %v5812, %v5813
    %v5815 = vsel %vm5471, %v4346, -inf
    %v5816 = vrot.slane %v5815, 4
    %v5817 = vmax.f32 %v5815, %v5816
    %v5818 = vrot.slane %v5817, 2
    %v5819 = vmax.f32 %v5817, %v5818
    %v5820 = vrot.slane %v5819, 1
    %v5821 = vmax.f32 %v5819, %v5820
    %v5822 = vsel %vm5471, %v4345, -inf
    %v5823 = vrot.slane %v5822, 4
    %v5824 = vmax.f32 %v5822, %v5823
    %v5825 = vrot.slane %v5824, 2
    %v5826 = vmax.f32 %v5824, %v5825
    %v5827 = vrot.slane %v5826, 1
    %v5828 = vmax.f32 %v5826, %v5827
    %v5829 = vsel %vm5471, %v4347, -inf
    %v5830 = vrot.slane %v5829, 4
    %v5831 = vmax.f32 %v5829, %v5830
    %v5832 = vrot.slane %v5831, 2
    %v5833 = vmax.f32 %v5831, %v5832
    %v5834 = vrot.slane %v5833, 1
    %v5835 = vmax.f32 %v5833, %v5834
    %v5836 = vsel %vm5471, %v4355, -inf
    %v5837 = vrot.slane %v5836, 4
    %v5838 = vmax.f32 %v5836, %v5837
    %v5839 = vrot.slane %v5838, 2
    %v5840 = vmax.f32 %v5838, %v5839
    %v5841 = vrot.slane %v5840, 1
    %v5842 = vmax.f32 %v5840, %v5841
    %v5843 = vsel %vm5471, %v4363, -inf
    %v5844 = vrot.slane %v5843, 4
    %v5845 = vmax.f32 %v5843, %v5844
    %v5846 = vrot.slane %v5845, 2
    %v5847 = vmax.f32 %v5845, %v5846
    %v5848 = vrot.slane %v5847, 1
    %v5849 = vmax.f32 %v5847, %v5848
    %v5850 = vsel %vm5471, %v4362, -inf
    %v5851 = vrot.slane %v5850, 4
    %v5852 = vmax.f32 %v5850, %v5851
    %v5853 = vrot.slane %v5852, 2
    %v5854 = vmax.f32 %v5852, %v5853
    %v5855 = vrot.slane %v5854, 1
    %v5856 = vmax.f32 %v5854, %v5855
    %v5857 = vsel %vm5471, %v4364, -inf
    %v5858 = vrot.slane %v5857, 4
    %v5859 = vmax.f32 %v5857, %v5858
    %v5860 = vrot.slane %v5859, 2
    %v5861 = vmax.f32 %v5859, %v5860
    %v5862 = vrot.slane %v5861, 1
    %v5863 = vmax.f32 %v5861, %v5862
    %v5864 = vsel %vm5471, %v4372, -inf
    %v5865 = vrot.slane %v5864, 4
    %v5866 = vmax.f32 %v5864, %v5865
    %v5867 = vrot.slane %v5866, 2
    %v5868 = vmax.f32 %v5866, %v5867
    %v5869 = vrot.slane %v5868, 1
    %v5870 = vmax.f32 %v5868, %v5869
    %v5871 = vsel %vm5471, %v4380, -inf
    %v5872 = vrot.slane %v5871, 4
    %v5873 = vmax.f32 %v5871, %v5872
    %v5874 = vrot.slane %v5873, 2
    %v5875 = vmax.f32 %v5873, %v5874
    %v5876 = vrot.slane %v5875, 1
    %v5877 = vmax.f32 %v5875, %v5876
    %v5878 = vsel %vm5471, %v4379, -inf
    %v5879 = vrot.slane %v5878, 4
    %v5880 = vmax.f32 %v5878, %v5879
    %v5881 = vrot.slane %v5880, 2
    %v5882 = vmax.f32 %v5880, %v5881
    %v5883 = vrot.slane %v5882, 1
    %v5884 = vmax.f32 %v5882, %v5883
    %v5885 = vsel %vm5471, %v4381, -inf
    %v5886 = vrot.slane %v5885, 4
    %v5887 = vmax.f32 %v5885, %v5886
    %v5888 = vrot.slane %v5887, 2
    %v5889 = vmax.f32 %v5887, %v5888
    %v5890 = vrot.slane %v5889, 1
    %v5891 = vmax.f32 %v5889, %v5890
    %v5892 = vsel %vm5471, %v4389, -inf
    %v5893 = vrot.slane %v5892, 4
    %v5894 = vmax.f32 %v5892, %v5893
    %v5895 = vrot.slane %v5894, 2
    %v5896 = vmax.f32 %v5894, %v5895
    %v5897 = vrot.slane %v5896, 1
    %v5898 = vmax.f32 %v5896, %v5897
    %v5899 = vsel %vm5471, %v4397, -inf
    %v5900 = vrot.slane %v5899, 4
    %v5901 = vmax.f32 %v5899, %v5900
    %v5902 = vrot.slane %v5901, 2
    %v5903 = vmax.f32 %v5901, %v5902
    %v5904 = vrot.slane %v5903, 1
    %v5905 = vmax.f32 %v5903, %v5904
    %v5906 = vsel %vm5471, %v4396, -inf
    %v5907 = vrot.slane %v5906, 4
    %v5908 = vmax.f32 %v5906, %v5907
    %v5909 = vrot.slane %v5908, 2
    %v5910 = vmax.f32 %v5908, %v5909
    %v5911 = vrot.slane %v5910, 1
    %v5912 = vmax.f32 %v5910, %v5911
    %v5913 = vsel %vm5471, %v4398, -inf
    %v5914 = vrot.slane %v5913, 4
    %v5915 = vmax.f32 %v5913, %v5914
    %v5916 = vrot.slane %v5915, 2
    %v5917 = vmax.f32 %v5915, %v5916
    %v5918 = vrot.slane %v5917, 1
    %v5919 = vmax.f32 %v5917, %v5918
    %v5920 = vsel %vm5471, %v4406, -inf
    %v5921 = vrot.slane %v5920, 4
    %v5922 = vmax.f32 %v5920, %v5921
    %v5923 = vrot.slane %v5922, 2
    %v5924 = vmax.f32 %v5922, %v5923
    %v5925 = vrot.slane %v5924, 1
    %v5926 = vmax.f32 %v5924, %v5925
    %v5927 = vsel %vm5471, %v4414, -inf
    %v5928 = vrot.slane %v5927, 4
    %v5929 = vmax.f32 %v5927, %v5928
    %v5930 = vrot.slane %v5929, 2
    %v5931 = vmax.f32 %v5929, %v5930
    %v5932 = vrot.slane %v5931, 1
    %v5933 = vmax.f32 %v5931, %v5932
    %v5934 = vsel %vm5471, %v4413, -inf
    %v5935 = vrot.slane %v5934, 4
    %v5936 = vmax.f32 %v5934, %v5935
    %v5937 = vrot.slane %v5936, 2
    %v5938 = vmax.f32 %v5936, %v5937
    %v5939 = vrot.slane %v5938, 1
    %v5940 = vmax.f32 %v5938, %v5939
    %v5941 = vsel %vm5471, %v4415, -inf
    %v5942 = vrot.slane %v5941, 4
    %v5943 = vmax.f32 %v5941, %v5942
    %v5944 = vrot.slane %v5943, 2
    %v5945 = vmax.f32 %v5943, %v5944
    %v5946 = vrot.slane %v5945, 1
    %v5947 = vmax.f32 %v5945, %v5946
    %v5948 = vsel %vm5471, %v4423, -inf
    %v5949 = vrot.slane %v5948, 4
    %v5950 = vmax.f32 %v5948, %v5949
    %v5951 = vrot.slane %v5950, 2
    %v5952 = vmax.f32 %v5950, %v5951
    %v5953 = vrot.slane %v5952, 1
    %v5954 = vmax.f32 %v5952, %v5953
    %v5955 = vsel %vm5471, %v4431, -inf
    %v5956 = vrot.slane %v5955, 4
    %v5957 = vmax.f32 %v5955, %v5956
    %v5958 = vrot.slane %v5957, 2
    %v5959 = vmax.f32 %v5957, %v5958
    %v5960 = vrot.slane %v5959, 1
    %v5961 = vmax.f32 %v5959, %v5960
    %v5962 = vsel %vm5471, %v4430, -inf
    %v5963 = vrot.slane %v5962, 4
    %v5964 = vmax.f32 %v5962, %v5963
    %v5965 = vrot.slane %v5964, 2
    %v5966 = vmax.f32 %v5964, %v5965
    %v5967 = vrot.slane %v5966, 1
    %v5968 = vmax.f32 %v5966, %v5967
    %v5969 = vsel %vm5471, %v4432, -inf
    %v5970 = vrot.slane %v5969, 4
    %v5971 = vmax.f32 %v5969, %v5970
    %v5972 = vrot.slane %v5971, 2
    %v5973 = vmax.f32 %v5971, %v5972
    %v5974 = vrot.slane %v5973, 1
    %v5975 = vmax.f32 %v5973, %v5974
    %v5976 = vsel %vm5471, %v4440, -inf
    %v5977 = vrot.slane %v5976, 4
    %v5978 = vmax.f32 %v5976, %v5977
    %v5979 = vrot.slane %v5978, 2
    %v5980 = vmax.f32 %v5978, %v5979
    %v5981 = vrot.slane %v5980, 1
    %v5982 = vmax.f32 %v5980, %v5981
    %v5983 = vsel %vm5471, %v4448, -inf
    %v5984 = vrot.slane %v5983, 4
    %v5985 = vmax.f32 %v5983, %v5984
    %v5986 = vrot.slane %v5985, 2
    %v5987 = vmax.f32 %v5985, %v5986
    %v5988 = vrot.slane %v5987, 1
    %v5989 = vmax.f32 %v5987, %v5988
    %v5990 = vsel %vm5471, %v4447, -inf
    %v5991 = vrot.slane %v5990, 4
    %v5992 = vmax.f32 %v5990, %v5991
    %v5993 = vrot.slane %v5992, 2
    %v5994 = vmax.f32 %v5992, %v5993
    %v5995 = vrot.slane %v5994, 1
    %v5996 = vmax.f32 %v5994, %v5995
    %v5997 = vsel %vm5471, %v4449, -inf
    %v5998 = vrot.slane %v5997, 4
    %v5999 = vmax.f32 %v5997, %v5998
    %v6000 = vrot.slane %v5999, 2
    %v6001 = vmax.f32 %v5999, %v6000
    %v6002 = vrot.slane %v6001, 1
    %v6003 = vmax.f32 %v6001, %v6002
    %v6004 = vsel %vm5471, %v4457, -inf
    %v6005 = vrot.slane %v6004, 4
    %v6006 = vmax.f32 %v6004, %v6005
    %v6007 = vrot.slane %v6006, 2
    %v6008 = vmax.f32 %v6006, %v6007
    %v6009 = vrot.slane %v6008, 1
    %v6010 = vmax.f32 %v6008, %v6009
    %v6011 = vsel %vm5471, %v4465, -inf
    %v6012 = vrot.slane %v6011, 4
    %v6013 = vmax.f32 %v6011, %v6012
    %v6014 = vrot.slane %v6013, 2
    %v6015 = vmax.f32 %v6013, %v6014
    %v6016 = vrot.slane %v6015, 1
    %v6017 = vmax.f32 %v6015, %v6016
    %v6018 = vsel %vm5471, %v4464, -inf
    %v6019 = vrot.slane %v6018, 4
    %v6020 = vmax.f32 %v6018, %v6019
    %v6021 = vrot.slane %v6020, 2
    %v6022 = vmax.f32 %v6020, %v6021
    %v6023 = vrot.slane %v6022, 1
    %v6024 = vmax.f32 %v6022, %v6023
    %v6025 = vsel %vm5471, %v4466, -inf
    %v6026 = vrot.slane %v6025, 4
    %v6027 = vmax.f32 %v6025, %v6026
    %v6028 = vrot.slane %v6027, 2
    %v6029 = vmax.f32 %v6027, %v6028
    %v6030 = vrot.slane %v6029, 1
    %v6031 = vmax.f32 %v6029, %v6030
    %v6032 = vsel %vm5471, %v4474, -inf
    %v6033 = vrot.slane %v6032, 4
    %v6034 = vmax.f32 %v6032, %v6033
    %v6035 = vrot.slane %v6034, 2
    %v6036 = vmax.f32 %v6034, %v6035
    %v6037 = vrot.slane %v6036, 1
    %v6038 = vmax.f32 %v6036, %v6037
    %v6039 = vsel %vm5471, %v4482, -inf
    %v6040 = vrot.slane %v6039, 4
    %v6041 = vmax.f32 %v6039, %v6040
    %v6042 = vrot.slane %v6041, 2
    %v6043 = vmax.f32 %v6041, %v6042
    %v6044 = vrot.slane %v6043, 1
    %v6045 = vmax.f32 %v6043, %v6044
    %v6046 = vsel %vm5471, %v4481, -inf
    %v6047 = vrot.slane %v6046, 4
    %v6048 = vmax.f32 %v6046, %v6047
    %v6049 = vrot.slane %v6048, 2
    %v6050 = vmax.f32 %v6048, %v6049
    %v6051 = vrot.slane %v6050, 1
    %v6052 = vmax.f32 %v6050, %v6051
    %v6053 = vsel %vm5471, %v4483, -inf
    %v6054 = vrot.slane %v6053, 4
    %v6055 = vmax.f32 %v6053, %v6054
    %v6056 = vrot.slane %v6055, 2
    %v6057 = vmax.f32 %v6055, %v6056
    %v6058 = vrot.slane %v6057, 1
    %v6059 = vmax.f32 %v6057, %v6058
    %v6060 = vsel %vm5471, %v4491, -inf
    %v6061 = vrot.slane %v6060, 4
    %v6062 = vmax.f32 %v6060, %v6061
    %v6063 = vrot.slane %v6062, 2
    %v6064 = vmax.f32 %v6062, %v6063
    %v6065 = vrot.slane %v6064, 1
    %v6066 = vmax.f32 %v6064, %v6065
    %v6067 = vsel %vm5471, %v4499, -inf
    %v6068 = vrot.slane %v6067, 4
    %v6069 = vmax.f32 %v6067, %v6068
    %v6070 = vrot.slane %v6069, 2
    %v6071 = vmax.f32 %v6069, %v6070
    %v6072 = vrot.slane %v6071, 1
    %v6073 = vmax.f32 %v6071, %v6072
    %v6074 = vsel %vm5471, %v4498, -inf
    %v6075 = vrot.slane %v6074, 4
    %v6076 = vmax.f32 %v6074, %v6075
    %v6077 = vrot.slane %v6076, 2
    %v6078 = vmax.f32 %v6076, %v6077
    %v6079 = vrot.slane %v6078, 1
    %v6080 = vmax.f32 %v6078, %v6079
    %v6081 = vsel %vm5471, %v4500, -inf
    %v6082 = vrot.slane %v6081, 4
    %v6083 = vmax.f32 %v6081, %v6082
    %v6084 = vrot.slane %v6083, 2
    %v6085 = vmax.f32 %v6083, %v6084
    %v6086 = vrot.slane %v6085, 1
    %v6087 = vmax.f32 %v6085, %v6086
    %v6088 = vsel %vm5471, %v4508, -inf
    %v6089 = vrot.slane %v6088, 4
    %v6090 = vmax.f32 %v6088, %v6089
    %v6091 = vrot.slane %v6090, 2
    %v6092 = vmax.f32 %v6090, %v6091
    %v6093 = vrot.slane %v6092, 1
    %v6094 = vmax.f32 %v6092, %v6093
    %v6095 = vsel %vm5471, %v4516, -inf
    %v6096 = vrot.slane %v6095, 4
    %v6097 = vmax.f32 %v6095, %v6096
    %v6098 = vrot.slane %v6097, 2
    %v6099 = vmax.f32 %v6097, %v6098
    %v6100 = vrot.slane %v6099, 1
    %v6101 = vmax.f32 %v6099, %v6100
    %v6102 = vsel %vm5471, %v4515, -inf
    %v6103 = vrot.slane %v6102, 4
    %v6104 = vmax.f32 %v6102, %v6103
    %v6105 = vrot.slane %v6104, 2
    %v6106 = vmax.f32 %v6104, %v6105
    %v6107 = vrot.slane %v6106, 1
    %v6108 = vmax.f32 %v6106, %v6107
    %v6109 = vsel %vm5471, %v4517, -inf
    %v6110 = vrot.slane %v6109, 4
    %v6111 = vmax.f32 %v6109, %v6110
    %v6112 = vrot.slane %v6111, 2
    %v6113 = vmax.f32 %v6111, %v6112
    %v6114 = vrot.slane %v6113, 1
    %v6115 = vmax.f32 %v6113, %v6114
    %v6116 = vsel %vm5471, %v4525, -inf
    %v6117 = vrot.slane %v6116, 4
    %v6118 = vmax.f32 %v6116, %v6117
    %v6119 = vrot.slane %v6118, 2
    %v6120 = vmax.f32 %v6118, %v6119
    %v6121 = vrot.slane %v6120, 1
    %v6122 = vmax.f32 %v6120, %v6121
    %v6123 = vsel %vm5471, %v4533, -inf
    %v6124 = vrot.slane %v6123, 4
    %v6125 = vmax.f32 %v6123, %v6124
    %v6126 = vrot.slane %v6125, 2
    %v6127 = vmax.f32 %v6125, %v6126
    %v6128 = vrot.slane %v6127, 1
    %v6129 = vmax.f32 %v6127, %v6128
    %v6130 = vsel %vm5471, %v4532, -inf
    %v6131 = vrot.slane %v6130, 4
    %v6132 = vmax.f32 %v6130, %v6131
    %v6133 = vrot.slane %v6132, 2
    %v6134 = vmax.f32 %v6132, %v6133
    %v6135 = vrot.slane %v6134, 1
    %v6136 = vmax.f32 %v6134, %v6135
    %v6137 = vsel %vm5471, %v4534, -inf
    %v6138 = vrot.slane %v6137, 4
    %v6139 = vmax.f32 %v6137, %v6138
    %v6140 = vrot.slane %v6139, 2
    %v6141 = vmax.f32 %v6139, %v6140
    %v6142 = vrot.slane %v6141, 1
    %v6143 = vmax.f32 %v6141, %v6142
    %v6144 = vsel %vm5471, %v4542, -inf
    %v6145 = vrot.slane %v6144, 4
    %v6146 = vmax.f32 %v6144, %v6145
    %v6147 = vrot.slane %v6146, 2
    %v6148 = vmax.f32 %v6146, %v6147
    %v6149 = vrot.slane %v6148, 1
    %v6150 = vmax.f32 %v6148, %v6149
    %v6151 = vsel %vm5471, %v4550, -inf
    %v6152 = vrot.slane %v6151, 4
    %v6153 = vmax.f32 %v6151, %v6152
    %v6154 = vrot.slane %v6153, 2
    %v6155 = vmax.f32 %v6153, %v6154
    %v6156 = vrot.slane %v6155, 1
    %v6157 = vmax.f32 %v6155, %v6156
    %v6158 = vsel %vm5471, %v4549, -inf
    %v6159 = vrot.slane %v6158, 4
    %v6160 = vmax.f32 %v6158, %v6159
    %v6161 = vrot.slane %v6160, 2
    %v6162 = vmax.f32 %v6160, %v6161
    %v6163 = vrot.slane %v6162, 1
    %v6164 = vmax.f32 %v6162, %v6163
    %v6165 = vsel %vm5471, %v4551, -inf
    %v6166 = vrot.slane %v6165, 4
    %v6167 = vmax.f32 %v6165, %v6166
    %v6168 = vrot.slane %v6167, 2
    %v6169 = vmax.f32 %v6167, %v6168
    %v6170 = vrot.slane %v6169, 1
    %v6171 = vmax.f32 %v6169, %v6170
    %v6172 = vsel %vm5471, %v4559, -inf
    %v6173 = vrot.slane %v6172, 4
    %v6174 = vmax.f32 %v6172, %v6173
    %v6175 = vrot.slane %v6174, 2
    %v6176 = vmax.f32 %v6174, %v6175
    %v6177 = vrot.slane %v6176, 1
    %v6178 = vmax.f32 %v6176, %v6177
    %v6179 = vsel %vm5471, %v4567, -inf
    %v6180 = vrot.slane %v6179, 4
    %v6181 = vmax.f32 %v6179, %v6180
    %v6182 = vrot.slane %v6181, 2
    %v6183 = vmax.f32 %v6181, %v6182
    %v6184 = vrot.slane %v6183, 1
    %v6185 = vmax.f32 %v6183, %v6184
    %v6186 = vsel %vm5471, %v4566, -inf
    %v6187 = vrot.slane %v6186, 4
    %v6188 = vmax.f32 %v6186, %v6187
    %v6189 = vrot.slane %v6188, 2
    %v6190 = vmax.f32 %v6188, %v6189
    %v6191 = vrot.slane %v6190, 1
    %v6192 = vmax.f32 %v6190, %v6191
    %v6193 = vsel %vm5471, %v4568, -inf
    %v6194 = vrot.slane %v6193, 4
    %v6195 = vmax.f32 %v6193, %v6194
    %v6196 = vrot.slane %v6195, 2
    %v6197 = vmax.f32 %v6195, %v6196
    %v6198 = vrot.slane %v6197, 1
    %v6199 = vmax.f32 %v6197, %v6198
    %v6200 = vsel %vm5471, %v4576, -inf
    %v6201 = vrot.slane %v6200, 4
    %v6202 = vmax.f32 %v6200, %v6201
    %v6203 = vrot.slane %v6202, 2
    %v6204 = vmax.f32 %v6202, %v6203
    %v6205 = vrot.slane %v6204, 1
    %v6206 = vmax.f32 %v6204, %v6205
    %v6207 = vsel %vm5471, %v4584, -inf
    %v6208 = vrot.slane %v6207, 4
    %v6209 = vmax.f32 %v6207, %v6208
    %v6210 = vrot.slane %v6209, 2
    %v6211 = vmax.f32 %v6209, %v6210
    %v6212 = vrot.slane %v6211, 1
    %v6213 = vmax.f32 %v6211, %v6212
    %v6214 = vsel %vm5471, %v4583, -inf
    %v6215 = vrot.slane %v6214, 4
    %v6216 = vmax.f32 %v6214, %v6215
    %v6217 = vrot.slane %v6216, 2
    %v6218 = vmax.f32 %v6216, %v6217
    %v6219 = vrot.slane %v6218, 1
    %v6220 = vmax.f32 %v6218, %v6219
    %v6221 = vsel %vm5471, %v4585, -inf
    %v6222 = vrot.slane %v6221, 4
    %v6223 = vmax.f32 %v6221, %v6222
    %v6224 = vrot.slane %v6223, 2
    %v6225 = vmax.f32 %v6223, %v6224
    %v6226 = vrot.slane %v6225, 1
    %v6227 = vmax.f32 %v6225, %v6226
    %v6228 = vsel %vm5471, %v4593, -inf
    %v6229 = vrot.slane %v6228, 4
    %v6230 = vmax.f32 %v6228, %v6229
    %v6231 = vrot.slane %v6230, 2
    %v6232 = vmax.f32 %v6230, %v6231
    %v6233 = vrot.slane %v6232, 1
    %v6234 = vmax.f32 %v6232, %v6233
    %v6235 = vsel %vm5471, %v4601, -inf
    %v6236 = vrot.slane %v6235, 4
    %v6237 = vmax.f32 %v6235, %v6236
    %v6238 = vrot.slane %v6237, 2
    %v6239 = vmax.f32 %v6237, %v6238
    %v6240 = vrot.slane %v6239, 1
    %v6241 = vmax.f32 %v6239, %v6240
    %v6242 = vsel %vm5471, %v4600, -inf
    %v6243 = vrot.slane %v6242, 4
    %v6244 = vmax.f32 %v6242, %v6243
    %v6245 = vrot.slane %v6244, 2
    %v6246 = vmax.f32 %v6244, %v6245
    %v6247 = vrot.slane %v6246, 1
    %v6248 = vmax.f32 %v6246, %v6247
    %v6249 = vsel %vm5471, %v4602, -inf
    %v6250 = vrot.slane %v6249, 4
    %v6251 = vmax.f32 %v6249, %v6250
    %v6252 = vrot.slane %v6251, 2
    %v6253 = vmax.f32 %v6251, %v6252
    %v6254 = vrot.slane %v6253, 1
    %v6255 = vmax.f32 %v6253, %v6254
    %v6256 = vsel %vm5471, %v4610, -inf
    %v6257 = vrot.slane %v6256, 4
    %v6258 = vmax.f32 %v6256, %v6257
    %v6259 = vrot.slane %v6258, 2
    %v6260 = vmax.f32 %v6258, %v6259
    %v6261 = vrot.slane %v6260, 1
    %v6262 = vmax.f32 %v6260, %v6261
    %v6263 = vsel %vm5471, %v4618, -inf
    %v6264 = vrot.slane %v6263, 4
    %v6265 = vmax.f32 %v6263, %v6264
    %v6266 = vrot.slane %v6265, 2
    %v6267 = vmax.f32 %v6265, %v6266
    %v6268 = vrot.slane %v6267, 1
    %v6269 = vmax.f32 %v6267, %v6268
    %v6270 = vsel %vm5471, %v4617, -inf
    %v6271 = vrot.slane %v6270, 4
    %v6272 = vmax.f32 %v6270, %v6271
    %v6273 = vrot.slane %v6272, 2
    %v6274 = vmax.f32 %v6272, %v6273
    %v6275 = vrot.slane %v6274, 1
    %v6276 = vmax.f32 %v6274, %v6275
    %v6277 = vsel %vm5471, %v4619, -inf
    %v6278 = vrot.slane %v6277, 4
    %v6279 = vmax.f32 %v6277, %v6278
    %v6280 = vrot.slane %v6279, 2
    %v6281 = vmax.f32 %v6279, %v6280
    %v6282 = vrot.slane %v6281, 1
    %v6283 = vmax.f32 %v6281, %v6282
    %v6284 = vsel %vm5471, %v4627, -inf
    %v6285 = vrot.slane %v6284, 4
    %v6286 = vmax.f32 %v6284, %v6285
    %v6287 = vrot.slane %v6286, 2
    %v6288 = vmax.f32 %v6286, %v6287
    %v6289 = vrot.slane %v6288, 1
    %v6290 = vmax.f32 %v6288, %v6289
    %v6291 = vsel %vm5471, %v4635, -inf
    %v6292 = vrot.slane %v6291, 4
    %v6293 = vmax.f32 %v6291, %v6292
    %v6294 = vrot.slane %v6293, 2
    %v6295 = vmax.f32 %v6293, %v6294
    %v6296 = vrot.slane %v6295, 1
    %v6297 = vmax.f32 %v6295, %v6296
    %v6298 = vsel %vm5471, %v4634, -inf
    %v6299 = vrot.slane %v6298, 4
    %v6300 = vmax.f32 %v6298, %v6299
    %v6301 = vrot.slane %v6300, 2
    %v6302 = vmax.f32 %v6300, %v6301
    %v6303 = vrot.slane %v6302, 1
    %v6304 = vmax.f32 %v6302, %v6303
    %v6305 = vsel %vm5471, %v4636, -inf
    %v6306 = vrot.slane %v6305, 4
    %v6307 = vmax.f32 %v6305, %v6306
    %v6308 = vrot.slane %v6307, 2
    %v6309 = vmax.f32 %v6307, %v6308
    %v6310 = vrot.slane %v6309, 1
    %v6311 = vmax.f32 %v6309, %v6310
    %v6312 = vsel %vm5471, %v4644, -inf
    %v6313 = vrot.slane %v6312, 4
    %v6314 = vmax.f32 %v6312, %v6313
    %v6315 = vrot.slane %v6314, 2
    %v6316 = vmax.f32 %v6314, %v6315
    %v6317 = vrot.slane %v6316, 1
    %v6318 = vmax.f32 %v6316, %v6317
    %v6319 = vsel %vm5471, %v4652, -inf
    %v6320 = vrot.slane %v6319, 4
    %v6321 = vmax.f32 %v6319, %v6320
    %v6322 = vrot.slane %v6321, 2
    %v6323 = vmax.f32 %v6321, %v6322
    %v6324 = vrot.slane %v6323, 1
    %v6325 = vmax.f32 %v6323, %v6324
    %v6326 = vsel %vm5471, %v4651, -inf
    %v6327 = vrot.slane %v6326, 4
    %v6328 = vmax.f32 %v6326, %v6327
    %v6329 = vrot.slane %v6328, 2
    %v6330 = vmax.f32 %v6328, %v6329
    %v6331 = vrot.slane %v6330, 1
    %v6332 = vmax.f32 %v6330, %v6331
    %v6333 = vsel %vm5471, %v4653, -inf
    %v6334 = vrot.slane %v6333, 4
    %v6335 = vmax.f32 %v6333, %v6334
    %v6336 = vrot.slane %v6335, 2
    %v6337 = vmax.f32 %v6335, %v6336
    %v6338 = vrot.slane %v6337, 1
    %v6339 = vmax.f32 %v6337, %v6338
    %v6340 = vsel %vm5471, %v4661, -inf
    %v6341 = vrot.slane %v6340, 4
    %v6342 = vmax.f32 %v6340, %v6341
    %v6343 = vrot.slane %v6342, 2
    %v6344 = vmax.f32 %v6342, %v6343
    %v6345 = vrot.slane %v6344, 1
    %v6346 = vmax.f32 %v6344, %v6345
    %v6347 = vsel %vm5471, %v4669, -inf
    %v6348 = vrot.slane %v6347, 4
    %v6349 = vmax.f32 %v6347, %v6348
    %v6350 = vrot.slane %v6349, 2
    %v6351 = vmax.f32 %v6349, %v6350
    %v6352 = vrot.slane %v6351, 1
    %v6353 = vmax.f32 %v6351, %v6352
    %v6354 = vsel %vm5471, %v4668, -inf
    %v6355 = vrot.slane %v6354, 4
    %v6356 = vmax.f32 %v6354, %v6355
    %v6357 = vrot.slane %v6356, 2
    %v6358 = vmax.f32 %v6356, %v6357
    %v6359 = vrot.slane %v6358, 1
    %v6360 = vmax.f32 %v6358, %v6359
    %v6361 = vsel %vm5471, %v4670, -inf
    %v6362 = vrot.slane %v6361, 4
    %v6363 = vmax.f32 %v6361, %v6362
    %v6364 = vrot.slane %v6363, 2
    %v6365 = vmax.f32 %v6363, %v6364
    %v6366 = vrot.slane %v6365, 1
    %v6367 = vmax.f32 %v6365, %v6366
    %v6368 = vsel %vm5471, %v4678, -inf
    %v6369 = vrot.slane %v6368, 4
    %v6370 = vmax.f32 %v6368, %v6369
    %v6371 = vrot.slane %v6370, 2
    %v6372 = vmax.f32 %v6370, %v6371
    %v6373 = vrot.slane %v6372, 1
    %v6374 = vmax.f32 %v6372, %v6373
    %v6375 = vsel %vm5471, %v4686, -inf
    %v6376 = vrot.slane %v6375, 4
    %v6377 = vmax.f32 %v6375, %v6376
    %v6378 = vrot.slane %v6377, 2
    %v6379 = vmax.f32 %v6377, %v6378
    %v6380 = vrot.slane %v6379, 1
    %v6381 = vmax.f32 %v6379, %v6380
    %v6382 = vsel %vm5471, %v4685, -inf
    %v6383 = vrot.slane %v6382, 4
    %v6384 = vmax.f32 %v6382, %v6383
    %v6385 = vrot.slane %v6384, 2
    %v6386 = vmax.f32 %v6384, %v6385
    %v6387 = vrot.slane %v6386, 1
    %v6388 = vmax.f32 %v6386, %v6387
    %v6389 = vsel %vm5471, %v4687, -inf
    %v6390 = vrot.slane %v6389, 4
    %v6391 = vmax.f32 %v6389, %v6390
    %v6392 = vrot.slane %v6391, 2
    %v6393 = vmax.f32 %v6391, %v6392
    %v6394 = vrot.slane %v6393, 1
    %v6395 = vmax.f32 %v6393, %v6394
    %v6396 = vsel %vm5471, %v4695, -inf
    %v6397 = vrot.slane %v6396, 4
    %v6398 = vmax.f32 %v6396, %v6397
    %v6399 = vrot.slane %v6398, 2
    %v6400 = vmax.f32 %v6398, %v6399
    %v6401 = vrot.slane %v6400, 1
    %v6402 = vmax.f32 %v6400, %v6401
    %v6403 = vsel %vm5471, %v4703, -inf
    %v6404 = vrot.slane %v6403, 4
    %v6405 = vmax.f32 %v6403, %v6404
    %v6406 = vrot.slane %v6405, 2
    %v6407 = vmax.f32 %v6405, %v6406
    %v6408 = vrot.slane %v6407, 1
    %v6409 = vmax.f32 %v6407, %v6408
    %v6410 = vsel %vm5471, %v4702, -inf
    %v6411 = vrot.slane %v6410, 4
    %v6412 = vmax.f32 %v6410, %v6411
    %v6413 = vrot.slane %v6412, 2
    %v6414 = vmax.f32 %v6412, %v6413
    %v6415 = vrot.slane %v6414, 1
    %v6416 = vmax.f32 %v6414, %v6415
    %v6417 = vsel %vm5471, %v4704, -inf
    %v6418 = vrot.slane %v6417, 4
    %v6419 = vmax.f32 %v6417, %v6418
    %v6420 = vrot.slane %v6419, 2
    %v6421 = vmax.f32 %v6419, %v6420
    %v6422 = vrot.slane %v6421, 1
    %v6423 = vmax.f32 %v6421, %v6422
    %v6424 = vsel %vm5471, %v4712, -inf
    %v6425 = vrot.slane %v6424, 4
    %v6426 = vmax.f32 %v6424, %v6425
    %v6427 = vrot.slane %v6426, 2
    %v6428 = vmax.f32 %v6426, %v6427
    %v6429 = vrot.slane %v6428, 1
    %v6430 = vmax.f32 %v6428, %v6429
    %v6431 = vsel %vm5471, %v4720, -inf
    %v6432 = vrot.slane %v6431, 4
    %v6433 = vmax.f32 %v6431, %v6432
    %v6434 = vrot.slane %v6433, 2
    %v6435 = vmax.f32 %v6433, %v6434
    %v6436 = vrot.slane %v6435, 1
    %v6437 = vmax.f32 %v6435, %v6436
    %v6438 = vsel %vm5471, %v4719, -inf
    %v6439 = vrot.slane %v6438, 4
    %v6440 = vmax.f32 %v6438, %v6439
    %v6441 = vrot.slane %v6440, 2
    %v6442 = vmax.f32 %v6440, %v6441
    %v6443 = vrot.slane %v6442, 1
    %v6444 = vmax.f32 %v6442, %v6443
    %v6445 = vsel %vm5471, %v4721, -inf
    %v6446 = vrot.slane %v6445, 4
    %v6447 = vmax.f32 %v6445, %v6446
    %v6448 = vrot.slane %v6447, 2
    %v6449 = vmax.f32 %v6447, %v6448
    %v6450 = vrot.slane %v6449, 1
    %v6451 = vmax.f32 %v6449, %v6450
    %v6452 = vsel %vm5471, %v4729, -inf
    %v6453 = vrot.slane %v6452, 4
    %v6454 = vmax.f32 %v6452, %v6453
    %v6455 = vrot.slane %v6454, 2
    %v6456 = vmax.f32 %v6454, %v6455
    %v6457 = vrot.slane %v6456, 1
    %v6458 = vmax.f32 %v6456, %v6457
    %v6459 = vsel %vm5471, %v4737, -inf
    %v6460 = vrot.slane %v6459, 4
    %v6461 = vmax.f32 %v6459, %v6460
    %v6462 = vrot.slane %v6461, 2
    %v6463 = vmax.f32 %v6461, %v6462
    %v6464 = vrot.slane %v6463, 1
    %v6465 = vmax.f32 %v6463, %v6464
    %v6466 = vsel %vm5471, %v4736, -inf
    %v6467 = vrot.slane %v6466, 4
    %v6468 = vmax.f32 %v6466, %v6467
    %v6469 = vrot.slane %v6468, 2
    %v6470 = vmax.f32 %v6468, %v6469
    %v6471 = vrot.slane %v6470, 1
    %v6472 = vmax.f32 %v6470, %v6471
    %v6473 = vsel %vm5471, %v4738, -inf
    %v6474 = vrot.slane %v6473, 4
    %v6475 = vmax.f32 %v6473, %v6474
    %v6476 = vrot.slane %v6475, 2
    %v6477 = vmax.f32 %v6475, %v6476
    %v6478 = vrot.slane %v6477, 1
    %v6479 = vmax.f32 %v6477, %v6478
    %v6480 = vsel %vm5471, %v4746, -inf
    %v6481 = vrot.slane %v6480, 4
    %v6482 = vmax.f32 %v6480, %v6481
    %v6483 = vrot.slane %v6482, 2
    %v6484 = vmax.f32 %v6482, %v6483
    %v6485 = vrot.slane %v6484, 1
    %v6486 = vmax.f32 %v6484, %v6485
    %v6487 = vsel %vm5471, %v4754, -inf
    %v6488 = vrot.slane %v6487, 4
    %v6489 = vmax.f32 %v6487, %v6488
    %v6490 = vrot.slane %v6489, 2
    %v6491 = vmax.f32 %v6489, %v6490
    %v6492 = vrot.slane %v6491, 1
    %v6493 = vmax.f32 %v6491, %v6492
    %v6494 = vsel %vm5471, %v4753, -inf
    %v6495 = vrot.slane %v6494, 4
    %v6496 = vmax.f32 %v6494, %v6495
    %v6497 = vrot.slane %v6496, 2
    %v6498 = vmax.f32 %v6496, %v6497
    %v6499 = vrot.slane %v6498, 1
    %v6500 = vmax.f32 %v6498, %v6499
    %v6501 = vsel %vm5471, %v4755, -inf
    %v6502 = vrot.slane %v6501, 4
    %v6503 = vmax.f32 %v6501, %v6502
    %v6504 = vrot.slane %v6503, 2
    %v6505 = vmax.f32 %v6503, %v6504
    %v6506 = vrot.slane %v6505, 1
    %v6507 = vmax.f32 %v6505, %v6506
    %v6508 = vsel %vm5471, %v4763, -inf
    %v6509 = vrot.slane %v6508, 4
    %v6510 = vmax.f32 %v6508, %v6509
    %v6511 = vrot.slane %v6510, 2
    %v6512 = vmax.f32 %v6510, %v6511
    %v6513 = vrot.slane %v6512, 1
    %v6514 = vmax.f32 %v6512, %v6513
    %v6515 = vsel %vm5471, %v4771, -inf
    %v6516 = vrot.slane %v6515, 4
    %v6517 = vmax.f32 %v6515, %v6516
    %v6518 = vrot.slane %v6517, 2
    %v6519 = vmax.f32 %v6517, %v6518
    %v6520 = vrot.slane %v6519, 1
    %v6521 = vmax.f32 %v6519, %v6520
    %v6522 = vsel %vm5471, %v4770, -inf
    %v6523 = vrot.slane %v6522, 4
    %v6524 = vmax.f32 %v6522, %v6523
    %v6525 = vrot.slane %v6524, 2
    %v6526 = vmax.f32 %v6524, %v6525
    %v6527 = vrot.slane %v6526, 1
    %v6528 = vmax.f32 %v6526, %v6527
    %v6529 = vsel %vm5471, %v4772, -inf
    %v6530 = vrot.slane %v6529, 4
    %v6531 = vmax.f32 %v6529, %v6530
    %v6532 = vrot.slane %v6531, 2
    %v6533 = vmax.f32 %v6531, %v6532
    %v6534 = vrot.slane %v6533, 1
    %v6535 = vmax.f32 %v6533, %v6534
    %v6536 = vsel %vm5471, %v4780, -inf
    %v6537 = vrot.slane %v6536, 4
    %v6538 = vmax.f32 %v6536, %v6537
    %v6539 = vrot.slane %v6538, 2
    %v6540 = vmax.f32 %v6538, %v6539
    %v6541 = vrot.slane %v6540, 1
    %v6542 = vmax.f32 %v6540, %v6541
    %v6543 = vsel %vm5471, %v4788, -inf
    %v6544 = vrot.slane %v6543, 4
    %v6545 = vmax.f32 %v6543, %v6544
    %v6546 = vrot.slane %v6545, 2
    %v6547 = vmax.f32 %v6545, %v6546
    %v6548 = vrot.slane %v6547, 1
    %v6549 = vmax.f32 %v6547, %v6548
    %v6550 = vsel %vm5471, %v4787, -inf
    %v6551 = vrot.slane %v6550, 4
    %v6552 = vmax.f32 %v6550, %v6551
    %v6553 = vrot.slane %v6552, 2
    %v6554 = vmax.f32 %v6552, %v6553
    %v6555 = vrot.slane %v6554, 1
    %v6556 = vmax.f32 %v6554, %v6555
    %v6557 = vsel %vm5471, %v4789, -inf
    %v6558 = vrot.slane %v6557, 4
    %v6559 = vmax.f32 %v6557, %v6558
    %v6560 = vrot.slane %v6559, 2
    %v6561 = vmax.f32 %v6559, %v6560
    %v6562 = vrot.slane %v6561, 1
    %v6563 = vmax.f32 %v6561, %v6562
    %v6564 = vsel %vm5471, %v4797, -inf
    %v6565 = vrot.slane %v6564, 4
    %v6566 = vmax.f32 %v6564, %v6565
    %v6567 = vrot.slane %v6566, 2
    %v6568 = vmax.f32 %v6566, %v6567
    %v6569 = vrot.slane %v6568, 1
    %v6570 = vmax.f32 %v6568, %v6569
    %v6571 = vsel %vm5471, %v4805, -inf
    %v6572 = vrot.slane %v6571, 4
    %v6573 = vmax.f32 %v6571, %v6572
    %v6574 = vrot.slane %v6573, 2
    %v6575 = vmax.f32 %v6573, %v6574
    %v6576 = vrot.slane %v6575, 1
    %v6577 = vmax.f32 %v6575, %v6576
    %v6578 = vsel %vm5471, %v4804, -inf
    %v6579 = vrot.slane %v6578, 4
    %v6580 = vmax.f32 %v6578, %v6579
    %v6581 = vrot.slane %v6580, 2
    %v6582 = vmax.f32 %v6580, %v6581
    %v6583 = vrot.slane %v6582, 1
    %v6584 = vmax.f32 %v6582, %v6583
    %v6585 = vsel %vm5471, %v4806, -inf
    %v6586 = vrot.slane %v6585, 4
    %v6587 = vmax.f32 %v6585, %v6586
    %v6588 = vrot.slane %v6587, 2
    %v6589 = vmax.f32 %v6587, %v6588
    %v6590 = vrot.slane %v6589, 1
    %v6591 = vmax.f32 %v6589, %v6590
    %v6592 = vsel %vm5471, %v4814, -inf
    %v6593 = vrot.slane %v6592, 4
    %v6594 = vmax.f32 %v6592, %v6593
    %v6595 = vrot.slane %v6594, 2
    %v6596 = vmax.f32 %v6594, %v6595
    %v6597 = vrot.slane %v6596, 1
    %v6598 = vmax.f32 %v6596, %v6597
    %v6599 = vsel %vm5471, %v4822, -inf
    %v6600 = vrot.slane %v6599, 4
    %v6601 = vmax.f32 %v6599, %v6600
    %v6602 = vrot.slane %v6601, 2
    %v6603 = vmax.f32 %v6601, %v6602
    %v6604 = vrot.slane %v6603, 1
    %v6605 = vmax.f32 %v6603, %v6604
    %v6606 = vsel %vm5471, %v4821, -inf
    %v6607 = vrot.slane %v6606, 4
    %v6608 = vmax.f32 %v6606, %v6607
    %v6609 = vrot.slane %v6608, 2
    %v6610 = vmax.f32 %v6608, %v6609
    %v6611 = vrot.slane %v6610, 1
    %v6612 = vmax.f32 %v6610, %v6611
    %v6613 = vsel %vm5471, %v4823, -inf
    %v6614 = vrot.slane %v6613, 4
    %v6615 = vmax.f32 %v6613, %v6614
    %v6616 = vrot.slane %v6615, 2
    %v6617 = vmax.f32 %v6615, %v6616
    %v6618 = vrot.slane %v6617, 1
    %v6619 = vmax.f32 %v6617, %v6618
    %v6620 = vsel %vm5471, %v4831, -inf
    %v6621 = vrot.slane %v6620, 4
    %v6622 = vmax.f32 %v6620, %v6621
    %v6623 = vrot.slane %v6622, 2
    %v6624 = vmax.f32 %v6622, %v6623
    %v6625 = vrot.slane %v6624, 1
    %v6626 = vmax.f32 %v6624, %v6625
    %v6627 = vsel %vm5471, %v4839, -inf
    %v6628 = vrot.slane %v6627, 4
    %v6629 = vmax.f32 %v6627, %v6628
    %v6630 = vrot.slane %v6629, 2
    %v6631 = vmax.f32 %v6629, %v6630
    %v6632 = vrot.slane %v6631, 1
    %v6633 = vmax.f32 %v6631, %v6632
    %v6634 = vsel %vm5471, %v4838, -inf
    %v6635 = vrot.slane %v6634, 4
    %v6636 = vmax.f32 %v6634, %v6635
    %v6637 = vrot.slane %v6636, 2
    %v6638 = vmax.f32 %v6636, %v6637
    %v6639 = vrot.slane %v6638, 1
    %v6640 = vmax.f32 %v6638, %v6639
    %v6641 = vsel %vm5471, %v4840, -inf
    %v6642 = vrot.slane %v6641, 4
    %v6643 = vmax.f32 %v6641, %v6642
    %v6644 = vrot.slane %v6643, 2
    %v6645 = vmax.f32 %v6643, %v6644
    %v6646 = vrot.slane %v6645, 1
    %v6647 = vmax.f32 %v6645, %v6646
    %v6648 = vsel %vm5471, %v4848, -inf
    %v6649 = vrot.slane %v6648, 4
    %v6650 = vmax.f32 %v6648, %v6649
    %v6651 = vrot.slane %v6650, 2
    %v6652 = vmax.f32 %v6650, %v6651
    %v6653 = vrot.slane %v6652, 1
    %v6654 = vmax.f32 %v6652, %v6653
    %v6655 = vsel %vm5471, %v4856, -inf
    %v6656 = vrot.slane %v6655, 4
    %v6657 = vmax.f32 %v6655, %v6656
    %v6658 = vrot.slane %v6657, 2
    %v6659 = vmax.f32 %v6657, %v6658
    %v6660 = vrot.slane %v6659, 1
    %v6661 = vmax.f32 %v6659, %v6660
    %v6662 = vsel %vm5471, %v4855, -inf
    %v6663 = vrot.slane %v6662, 4
    %v6664 = vmax.f32 %v6662, %v6663
    %v6665 = vrot.slane %v6664, 2
    %v6666 = vmax.f32 %v6664, %v6665
    %v6667 = vrot.slane %v6666, 1
    %v6668 = vmax.f32 %v6666, %v6667
    %v6669 = vsel %vm5471, %v4857, -inf
    %v6670 = vrot.slane %v6669, 4
    %v6671 = vmax.f32 %v6669, %v6670
    %v6672 = vrot.slane %v6671, 2
    %v6673 = vmax.f32 %v6671, %v6672
    %v6674 = vrot.slane %v6673, 1
    %v6675 = vmax.f32 %v6673, %v6674
    %v6676 = vsel %vm5471, %v4865, -inf
    %v6677 = vrot.slane %v6676, 4
    %v6678 = vmax.f32 %v6676, %v6677
    %v6679 = vrot.slane %v6678, 2
    %v6680 = vmax.f32 %v6678, %v6679
    %v6681 = vrot.slane %v6680, 1
    %v6682 = vmax.f32 %v6680, %v6681
    %v6683 = vsel %vm5471, %v4873, -inf
    %v6684 = vrot.slane %v6683, 4
    %v6685 = vmax.f32 %v6683, %v6684
    %v6686 = vrot.slane %v6685, 2
    %v6687 = vmax.f32 %v6685, %v6686
    %v6688 = vrot.slane %v6687, 1
    %v6689 = vmax.f32 %v6687, %v6688
    %v6690 = vsel %vm5471, %v4872, -inf
    %v6691 = vrot.slane %v6690, 4
    %v6692 = vmax.f32 %v6690, %v6691
    %v6693 = vrot.slane %v6692, 2
    %v6694 = vmax.f32 %v6692, %v6693
    %v6695 = vrot.slane %v6694, 1
    %v6696 = vmax.f32 %v6694, %v6695
    %v6697 = vsel %vm5471, %v4874, -inf
    %v6698 = vrot.slane %v6697, 4
    %v6699 = vmax.f32 %v6697, %v6698
    %v6700 = vrot.slane %v6699, 2
    %v6701 = vmax.f32 %v6699, %v6700
    %v6702 = vrot.slane %v6701, 1
    %v6703 = vmax.f32 %v6701, %v6702
    %v6704 = vsel %vm5471, %v4882, -inf
    %v6705 = vrot.slane %v6704, 4
    %v6706 = vmax.f32 %v6704, %v6705
    %v6707 = vrot.slane %v6706, 2
    %v6708 = vmax.f32 %v6706, %v6707
    %v6709 = vrot.slane %v6708, 1
    %v6710 = vmax.f32 %v6708, %v6709
    %v6711 = vsel %vm5471, %v4890, -inf
    %v6712 = vrot.slane %v6711, 4
    %v6713 = vmax.f32 %v6711, %v6712
    %v6714 = vrot.slane %v6713, 2
    %v6715 = vmax.f32 %v6713, %v6714
    %v6716 = vrot.slane %v6715, 1
    %v6717 = vmax.f32 %v6715, %v6716
    %v6718 = vsel %vm5471, %v4889, -inf
    %v6719 = vrot.slane %v6718, 4
    %v6720 = vmax.f32 %v6718, %v6719
    %v6721 = vrot.slane %v6720, 2
    %v6722 = vmax.f32 %v6720, %v6721
    %v6723 = vrot.slane %v6722, 1
    %v6724 = vmax.f32 %v6722, %v6723
    %v6725 = vsel %vm5471, %v4891, -inf
    %v6726 = vrot.slane %v6725, 4
    %v6727 = vmax.f32 %v6725, %v6726
    %v6728 = vrot.slane %v6727, 2
    %v6729 = vmax.f32 %v6727, %v6728
    %v6730 = vrot.slane %v6729, 1
    %v6731 = vmax.f32 %v6729, %v6730
    %v6732 = vsel %vm5471, %v4899, -inf
    %v6733 = vrot.slane %v6732, 4
    %v6734 = vmax.f32 %v6732, %v6733
    %v6735 = vrot.slane %v6734, 2
    %v6736 = vmax.f32 %v6734, %v6735
    %v6737 = vrot.slane %v6736, 1
    %v6738 = vmax.f32 %v6736, %v6737
    %v6739 = vsel %vm5471, %v4907, -inf
    %v6740 = vrot.slane %v6739, 4
    %v6741 = vmax.f32 %v6739, %v6740
    %v6742 = vrot.slane %v6741, 2
    %v6743 = vmax.f32 %v6741, %v6742
    %v6744 = vrot.slane %v6743, 1
    %v6745 = vmax.f32 %v6743, %v6744
    %v6746 = vsel %vm5471, %v4906, -inf
    %v6747 = vrot.slane %v6746, 4
    %v6748 = vmax.f32 %v6746, %v6747
    %v6749 = vrot.slane %v6748, 2
    %v6750 = vmax.f32 %v6748, %v6749
    %v6751 = vrot.slane %v6750, 1
    %v6752 = vmax.f32 %v6750, %v6751
    %v6753 = vsel %vm5471, %v4908, -inf
    %v6754 = vrot.slane %v6753, 4
    %v6755 = vmax.f32 %v6753, %v6754
    %v6756 = vrot.slane %v6755, 2
    %v6757 = vmax.f32 %v6755, %v6756
    %v6758 = vrot.slane %v6757, 1
    %v6759 = vmax.f32 %v6757, %v6758
    %v6760 = vsel %vm5471, %v4916, -inf
    %v6761 = vrot.slane %v6760, 4
    %v6762 = vmax.f32 %v6760, %v6761
    %v6763 = vrot.slane %v6762, 2
    %v6764 = vmax.f32 %v6762, %v6763
    %v6765 = vrot.slane %v6764, 1
    %v6766 = vmax.f32 %v6764, %v6765
    %v6767 = vsel %vm5471, %v4924, -inf
    %v6768 = vrot.slane %v6767, 4
    %v6769 = vmax.f32 %v6767, %v6768
    %v6770 = vrot.slane %v6769, 2
    %v6771 = vmax.f32 %v6769, %v6770
    %v6772 = vrot.slane %v6771, 1
    %v6773 = vmax.f32 %v6771, %v6772
    %v6774 = vsel %vm5471, %v4923, -inf
    %v6775 = vrot.slane %v6774, 4
    %v6776 = vmax.f32 %v6774, %v6775
    %v6777 = vrot.slane %v6776, 2
    %v6778 = vmax.f32 %v6776, %v6777
    %v6779 = vrot.slane %v6778, 1
    %v6780 = vmax.f32 %v6778, %v6779
    %v6781 = vsel %vm5471, %v4925, -inf
    %v6782 = vrot.slane %v6781, 4
    %v6783 = vmax.f32 %v6781, %v6782
    %v6784 = vrot.slane %v6783, 2
    %v6785 = vmax.f32 %v6783, %v6784
    %v6786 = vrot.slane %v6785, 1
    %v6787 = vmax.f32 %v6785, %v6786
    %v6788 = vsel %vm5471, %v4933, -inf
    %v6789 = vrot.slane %v6788, 4
    %v6790 = vmax.f32 %v6788, %v6789
    %v6791 = vrot.slane %v6790, 2
    %v6792 = vmax.f32 %v6790, %v6791
    %v6793 = vrot.slane %v6792, 1
    %v6794 = vmax.f32 %v6792, %v6793
    %v6795 = vsel %vm5471, %v4941, -inf
    %v6796 = vrot.slane %v6795, 4
    %v6797 = vmax.f32 %v6795, %v6796
    %v6798 = vrot.slane %v6797, 2
    %v6799 = vmax.f32 %v6797, %v6798
    %v6800 = vrot.slane %v6799, 1
    %v6801 = vmax.f32 %v6799, %v6800
    %v6802 = vsel %vm5471, %v4940, -inf
    %v6803 = vrot.slane %v6802, 4
    %v6804 = vmax.f32 %v6802, %v6803
    %v6805 = vrot.slane %v6804, 2
    %v6806 = vmax.f32 %v6804, %v6805
    %v6807 = vrot.slane %v6806, 1
    %v6808 = vmax.f32 %v6806, %v6807
    %v6809 = vsel %vm5471, %v4942, -inf
    %v6810 = vrot.slane %v6809, 4
    %v6811 = vmax.f32 %v6809, %v6810
    %v6812 = vrot.slane %v6811, 2
    %v6813 = vmax.f32 %v6811, %v6812
    %v6814 = vrot.slane %v6813, 1
    %v6815 = vmax.f32 %v6813, %v6814
    %v6816 = vsel %vm5471, %v4950, -inf
    %v6817 = vrot.slane %v6816, 4
    %v6818 = vmax.f32 %v6816, %v6817
    %v6819 = vrot.slane %v6818, 2
    %v6820 = vmax.f32 %v6818, %v6819
    %v6821 = vrot.slane %v6820, 1
    %v6822 = vmax.f32 %v6820, %v6821
    %v6823 = vsel %vm5471, %v4958, -inf
    %v6824 = vrot.slane %v6823, 4
    %v6825 = vmax.f32 %v6823, %v6824
    %v6826 = vrot.slane %v6825, 2
    %v6827 = vmax.f32 %v6825, %v6826
    %v6828 = vrot.slane %v6827, 1
    %v6829 = vmax.f32 %v6827, %v6828
    %v6830 = vsel %vm5471, %v4957, -inf
    %v6831 = vrot.slane %v6830, 4
    %v6832 = vmax.f32 %v6830, %v6831
    %v6833 = vrot.slane %v6832, 2
    %v6834 = vmax.f32 %v6832, %v6833
    %v6835 = vrot.slane %v6834, 1
    %v6836 = vmax.f32 %v6834, %v6835
    %v6837 = vsel %vm5471, %v4959, -inf
    %v6838 = vrot.slane %v6837, 4
    %v6839 = vmax.f32 %v6837, %v6838
    %v6840 = vrot.slane %v6839, 2
    %v6841 = vmax.f32 %v6839, %v6840
    %v6842 = vrot.slane %v6841, 1
    %v6843 = vmax.f32 %v6841, %v6842
    %v6844 = vsel %vm5471, %v4967, -inf
    %v6845 = vrot.slane %v6844, 4
    %v6846 = vmax.f32 %v6844, %v6845
    %v6847 = vrot.slane %v6846, 2
    %v6848 = vmax.f32 %v6846, %v6847
    %v6849 = vrot.slane %v6848, 1
    %v6850 = vmax.f32 %v6848, %v6849
    %v6851 = vsel %vm5471, %v4975, -inf
    %v6852 = vrot.slane %v6851, 4
    %v6853 = vmax.f32 %v6851, %v6852
    %v6854 = vrot.slane %v6853, 2
    %v6855 = vmax.f32 %v6853, %v6854
    %v6856 = vrot.slane %v6855, 1
    %v6857 = vmax.f32 %v6855, %v6856
    %v6858 = vsel %vm5471, %v4974, -inf
    %v6859 = vrot.slane %v6858, 4
    %v6860 = vmax.f32 %v6858, %v6859
    %v6861 = vrot.slane %v6860, 2
    %v6862 = vmax.f32 %v6860, %v6861
    %v6863 = vrot.slane %v6862, 1
    %v6864 = vmax.f32 %v6862, %v6863
    %v6865 = vsel %vm5471, %v4976, -inf
    %v6866 = vrot.slane %v6865, 4
    %v6867 = vmax.f32 %v6865, %v6866
    %v6868 = vrot.slane %v6867, 2
    %v6869 = vmax.f32 %v6867, %v6868
    %v6870 = vrot.slane %v6869, 1
    %v6871 = vmax.f32 %v6869, %v6870
    %v6872 = vsel %vm5471, %v4984, -inf
    %v6873 = vrot.slane %v6872, 4
    %v6874 = vmax.f32 %v6872, %v6873
    %v6875 = vrot.slane %v6874, 2
    %v6876 = vmax.f32 %v6874, %v6875
    %v6877 = vrot.slane %v6876, 1
    %v6878 = vmax.f32 %v6876, %v6877
    %v6879 = vsel %vm5471, %v4992, -inf
    %v6880 = vrot.slane %v6879, 4
    %v6881 = vmax.f32 %v6879, %v6880
    %v6882 = vrot.slane %v6881, 2
    %v6883 = vmax.f32 %v6881, %v6882
    %v6884 = vrot.slane %v6883, 1
    %v6885 = vmax.f32 %v6883, %v6884
    %v6886 = vsel %vm5471, %v4991, -inf
    %v6887 = vrot.slane %v6886, 4
    %v6888 = vmax.f32 %v6886, %v6887
    %v6889 = vrot.slane %v6888, 2
    %v6890 = vmax.f32 %v6888, %v6889
    %v6891 = vrot.slane %v6890, 1
    %v6892 = vmax.f32 %v6890, %v6891
    %v6893 = vsel %vm5471, %v4993, -inf
    %v6894 = vrot.slane %v6893, 4
    %v6895 = vmax.f32 %v6893, %v6894
    %v6896 = vrot.slane %v6895, 2
    %v6897 = vmax.f32 %v6895, %v6896
    %v6898 = vrot.slane %v6897, 1
    %v6899 = vmax.f32 %v6897, %v6898
    %v6900 = vsel %vm5471, %v5001, -inf
    %v6901 = vrot.slane %v6900, 4
    %v6902 = vmax.f32 %v6900, %v6901
    %v6903 = vrot.slane %v6902, 2
    %v6904 = vmax.f32 %v6902, %v6903
    %v6905 = vrot.slane %v6904, 1
    %v6906 = vmax.f32 %v6904, %v6905
    %v6907 = vsel %vm5471, %v5009, -inf
    %v6908 = vrot.slane %v6907, 4
    %v6909 = vmax.f32 %v6907, %v6908
    %v6910 = vrot.slane %v6909, 2
    %v6911 = vmax.f32 %v6909, %v6910
    %v6912 = vrot.slane %v6911, 1
    %v6913 = vmax.f32 %v6911, %v6912
    %v6914 = vsel %vm5471, %v5008, -inf
    %v6915 = vrot.slane %v6914, 4
    %v6916 = vmax.f32 %v6914, %v6915
    %v6917 = vrot.slane %v6916, 2
    %v6918 = vmax.f32 %v6916, %v6917
    %v6919 = vrot.slane %v6918, 1
    %v6920 = vmax.f32 %v6918, %v6919
    %v6921 = vsel %vm5471, %v5010, -inf
    %v6922 = vrot.slane %v6921, 4
    %v6923 = vmax.f32 %v6921, %v6922
    %v6924 = vrot.slane %v6923, 2
    %v6925 = vmax.f32 %v6923, %v6924
    %v6926 = vrot.slane %v6925, 1
    %v6927 = vmax.f32 %v6925, %v6926
    %v6928 = vsel %vm5471, %v5018, -inf
    %v6929 = vrot.slane %v6928, 4
    %v6930 = vmax.f32 %v6928, %v6929
    %v6931 = vrot.slane %v6930, 2
    %v6932 = vmax.f32 %v6930, %v6931
    %v6933 = vrot.slane %v6932, 1
    %v6934 = vmax.f32 %v6932, %v6933
    %v6935 = vsel %vm5471, %v5026, -inf
    %v6936 = vrot.slane %v6935, 4
    %v6937 = vmax.f32 %v6935, %v6936
    %v6938 = vrot.slane %v6937, 2
    %v6939 = vmax.f32 %v6937, %v6938
    %v6940 = vrot.slane %v6939, 1
    %v6941 = vmax.f32 %v6939, %v6940
    %v6942 = vsel %vm5471, %v5025, -inf
    %v6943 = vrot.slane %v6942, 4
    %v6944 = vmax.f32 %v6942, %v6943
    %v6945 = vrot.slane %v6944, 2
    %v6946 = vmax.f32 %v6944, %v6945
    %v6947 = vrot.slane %v6946, 1
    %v6948 = vmax.f32 %v6946, %v6947
    %v6949 = vsel %vm5471, %v5027, -inf
    %v6950 = vrot.slane %v6949, 4
    %v6951 = vmax.f32 %v6949, %v6950
    %v6952 = vrot.slane %v6951, 2
    %v6953 = vmax.f32 %v6951, %v6952
    %v6954 = vrot.slane %v6953, 1
    %v6955 = vmax.f32 %v6953, %v6954
    %v6956 = vsel %vm5471, %v5035, -inf
    %v6957 = vrot.slane %v6956, 4
    %v6958 = vmax.f32 %v6956, %v6957
    %v6959 = vrot.slane %v6958, 2
    %v6960 = vmax.f32 %v6958, %v6959
    %v6961 = vrot.slane %v6960, 1
    %v6962 = vmax.f32 %v6960, %v6961
    %v6963 = vsel %vm5471, %v5043, -inf
    %v6964 = vrot.slane %v6963, 4
    %v6965 = vmax.f32 %v6963, %v6964
    %v6966 = vrot.slane %v6965, 2
    %v6967 = vmax.f32 %v6965, %v6966
    %v6968 = vrot.slane %v6967, 1
    %v6969 = vmax.f32 %v6967, %v6968
    %v6970 = vsel %vm5471, %v5042, -inf
    %v6971 = vrot.slane %v6970, 4
    %v6972 = vmax.f32 %v6970, %v6971
    %v6973 = vrot.slane %v6972, 2
    %v6974 = vmax.f32 %v6972, %v6973
    %v6975 = vrot.slane %v6974, 1
    %v6976 = vmax.f32 %v6974, %v6975
    %v6977 = vsel %vm5471, %v5044, -inf
    %v6978 = vrot.slane %v6977, 4
    %v6979 = vmax.f32 %v6977, %v6978
    %v6980 = vrot.slane %v6979, 2
    %v6981 = vmax.f32 %v6979, %v6980
    %v6982 = vrot.slane %v6981, 1
    %v6983 = vmax.f32 %v6981, %v6982
    %v6984 = vsel %vm5471, %v5052, -inf
    %v6985 = vrot.slane %v6984, 4
    %v6986 = vmax.f32 %v6984, %v6985
    %v6987 = vrot.slane %v6986, 2
    %v6988 = vmax.f32 %v6986, %v6987
    %v6989 = vrot.slane %v6988, 1
    %v6990 = vmax.f32 %v6988, %v6989
    %v6991 = vsel %vm5471, %v5060, -inf
    %v6992 = vrot.slane %v6991, 4
    %v6993 = vmax.f32 %v6991, %v6992
    %v6994 = vrot.slane %v6993, 2
    %v6995 = vmax.f32 %v6993, %v6994
    %v6996 = vrot.slane %v6995, 1
    %v6997 = vmax.f32 %v6995, %v6996
    %v6998 = vsel %vm5471, %v5059, -inf
    %v6999 = vrot.slane %v6998, 4
    %v7000 = vmax.f32 %v6998, %v6999
    %v7001 = vrot.slane %v7000, 2
    %v7002 = vmax.f32 %v7000, %v7001
    %v7003 = vrot.slane %v7002, 1
    %v7004 = vmax.f32 %v7002, %v7003
    %v7005 = vsel %vm5471, %v5061, -inf
    %v7006 = vrot.slane %v7005, 4
    %v7007 = vmax.f32 %v7005, %v7006
    %v7008 = vrot.slane %v7007, 2
    %v7009 = vmax.f32 %v7007, %v7008
    %v7010 = vrot.slane %v7009, 1
    %v7011 = vmax.f32 %v7009, %v7010
    %v7012 = vsel %vm5471, %v5069, -inf
    %v7013 = vrot.slane %v7012, 4
    %v7014 = vmax.f32 %v7012, %v7013
    %v7015 = vrot.slane %v7014, 2
    %v7016 = vmax.f32 %v7014, %v7015
    %v7017 = vrot.slane %v7016, 1
    %v7018 = vmax.f32 %v7016, %v7017
    %v7019 = vsel %vm5471, %v5077, -inf
    %v7020 = vrot.slane %v7019, 4
    %v7021 = vmax.f32 %v7019, %v7020
    %v7022 = vrot.slane %v7021, 2
    %v7023 = vmax.f32 %v7021, %v7022
    %v7024 = vrot.slane %v7023, 1
    %v7025 = vmax.f32 %v7023, %v7024
    %v7026 = vsel %vm5471, %v5076, -inf
    %v7027 = vrot.slane %v7026, 4
    %v7028 = vmax.f32 %v7026, %v7027
    %v7029 = vrot.slane %v7028, 2
    %v7030 = vmax.f32 %v7028, %v7029
    %v7031 = vrot.slane %v7030, 1
    %v7032 = vmax.f32 %v7030, %v7031
    %v7033 = vsel %vm5471, %v5078, -inf
    %v7034 = vrot.slane %v7033, 4
    %v7035 = vmax.f32 %v7033, %v7034
    %v7036 = vrot.slane %v7035, 2
    %v7037 = vmax.f32 %v7035, %v7036
    %v7038 = vrot.slane %v7037, 1
    %v7039 = vmax.f32 %v7037, %v7038
    %v7040 = vsel %vm5471, %v5086, -inf
    %v7041 = vrot.slane %v7040, 4
    %v7042 = vmax.f32 %v7040, %v7041
    %v7043 = vrot.slane %v7042, 2
    %v7044 = vmax.f32 %v7042, %v7043
    %v7045 = vrot.slane %v7044, 1
    %v7046 = vmax.f32 %v7044, %v7045
    %v7047 = vsel %vm5471, %v5094, -inf
    %v7048 = vrot.slane %v7047, 4
    %v7049 = vmax.f32 %v7047, %v7048
    %v7050 = vrot.slane %v7049, 2
    %v7051 = vmax.f32 %v7049, %v7050
    %v7052 = vrot.slane %v7051, 1
    %v7053 = vmax.f32 %v7051, %v7052
    %v7054 = vsel %vm5471, %v5093, -inf
    %v7055 = vrot.slane %v7054, 4
    %v7056 = vmax.f32 %v7054, %v7055
    %v7057 = vrot.slane %v7056, 2
    %v7058 = vmax.f32 %v7056, %v7057
    %v7059 = vrot.slane %v7058, 1
    %v7060 = vmax.f32 %v7058, %v7059
    %v7061 = vsel %vm5471, %v5095, -inf
    %v7062 = vrot.slane %v7061, 4
    %v7063 = vmax.f32 %v7061, %v7062
    %v7064 = vrot.slane %v7063, 2
    %v7065 = vmax.f32 %v7063, %v7064
    %v7066 = vrot.slane %v7065, 1
    %v7067 = vmax.f32 %v7065, %v7066
    %v7068 = vsel %vm5471, %v5103, -inf
    %v7069 = vrot.slane %v7068, 4
    %v7070 = vmax.f32 %v7068, %v7069
    %v7071 = vrot.slane %v7070, 2
    %v7072 = vmax.f32 %v7070, %v7071
    %v7073 = vrot.slane %v7072, 1
    %v7074 = vmax.f32 %v7072, %v7073
    %v7075 = vsel %vm5471, %v5111, -inf
    %v7076 = vrot.slane %v7075, 4
    %v7077 = vmax.f32 %v7075, %v7076
    %v7078 = vrot.slane %v7077, 2
    %v7079 = vmax.f32 %v7077, %v7078
    %v7080 = vrot.slane %v7079, 1
    %v7081 = vmax.f32 %v7079, %v7080
    %v7082 = vsel %vm5471, %v5110, -inf
    %v7083 = vrot.slane %v7082, 4
    %v7084 = vmax.f32 %v7082, %v7083
    %v7085 = vrot.slane %v7084, 2
    %v7086 = vmax.f32 %v7084, %v7085
    %v7087 = vrot.slane %v7086, 1
    %v7088 = vmax.f32 %v7086, %v7087
    %v7089 = vsel %vm5471, %v5112, -inf
    %v7090 = vrot.slane %v7089, 4
    %v7091 = vmax.f32 %v7089, %v7090
    %v7092 = vrot.slane %v7091, 2
    %v7093 = vmax.f32 %v7091, %v7092
    %v7094 = vrot.slane %v7093, 1
    %v7095 = vmax.f32 %v7093, %v7094
    %v7096 = vsel %vm5471, %v5120, -inf
    %v7097 = vrot.slane %v7096, 4
    %v7098 = vmax.f32 %v7096, %v7097
    %v7099 = vrot.slane %v7098, 2
    %v7100 = vmax.f32 %v7098, %v7099
    %v7101 = vrot.slane %v7100, 1
    %v7102 = vmax.f32 %v7100, %v7101
    %v7103 = vsel %vm5471, %v5128, -inf
    %v7104 = vrot.slane %v7103, 4
    %v7105 = vmax.f32 %v7103, %v7104
    %v7106 = vrot.slane %v7105, 2
    %v7107 = vmax.f32 %v7105, %v7106
    %v7108 = vrot.slane %v7107, 1
    %v7109 = vmax.f32 %v7107, %v7108
    %v7110 = vsel %vm5471, %v5127, -inf
    %v7111 = vrot.slane %v7110, 4
    %v7112 = vmax.f32 %v7110, %v7111
    %v7113 = vrot.slane %v7112, 2
    %v7114 = vmax.f32 %v7112, %v7113
    %v7115 = vrot.slane %v7114, 1
    %v7116 = vmax.f32 %v7114, %v7115
    %v7117 = vsel %vm5471, %v5129, -inf
    %v7118 = vrot.slane %v7117, 4
    %v7119 = vmax.f32 %v7117, %v7118
    %v7120 = vrot.slane %v7119, 2
    %v7121 = vmax.f32 %v7119, %v7120
    %v7122 = vrot.slane %v7121, 1
    %v7123 = vmax.f32 %v7121, %v7122
    %v7124 = vsel %vm5471, %v5137, -inf
    %v7125 = vrot.slane %v7124, 4
    %v7126 = vmax.f32 %v7124, %v7125
    %v7127 = vrot.slane %v7126, 2
    %v7128 = vmax.f32 %v7126, %v7127
    %v7129 = vrot.slane %v7128, 1
    %v7130 = vmax.f32 %v7128, %v7129
    %v7131 = vsel %vm5471, %v5145, -inf
    %v7132 = vrot.slane %v7131, 4
    %v7133 = vmax.f32 %v7131, %v7132
    %v7134 = vrot.slane %v7133, 2
    %v7135 = vmax.f32 %v7133, %v7134
    %v7136 = vrot.slane %v7135, 1
    %v7137 = vmax.f32 %v7135, %v7136
    %v7138 = vsel %vm5471, %v5144, -inf
    %v7139 = vrot.slane %v7138, 4
    %v7140 = vmax.f32 %v7138, %v7139
    %v7141 = vrot.slane %v7140, 2
    %v7142 = vmax.f32 %v7140, %v7141
    %v7143 = vrot.slane %v7142, 1
    %v7144 = vmax.f32 %v7142, %v7143
    %v7145 = vsel %vm5471, %v5146, -inf
    %v7146 = vrot.slane %v7145, 4
    %v7147 = vmax.f32 %v7145, %v7146
    %v7148 = vrot.slane %v7147, 2
    %v7149 = vmax.f32 %v7147, %v7148
    %v7150 = vrot.slane %v7149, 1
    %v7151 = vmax.f32 %v7149, %v7150
    %v7152 = vsel %vm5471, %v5154, -inf
    %v7153 = vrot.slane %v7152, 4
    %v7154 = vmax.f32 %v7152, %v7153
    %v7155 = vrot.slane %v7154, 2
    %v7156 = vmax.f32 %v7154, %v7155
    %v7157 = vrot.slane %v7156, 1
    %v7158 = vmax.f32 %v7156, %v7157
    %v7159 = vsel %vm5471, %v5162, -inf
    %v7160 = vrot.slane %v7159, 4
    %v7161 = vmax.f32 %v7159, %v7160
    %v7162 = vrot.slane %v7161, 2
    %v7163 = vmax.f32 %v7161, %v7162
    %v7164 = vrot.slane %v7163, 1
    %v7165 = vmax.f32 %v7163, %v7164
    %v7166 = vsel %vm5471, %v5161, -inf
    %v7167 = vrot.slane %v7166, 4
    %v7168 = vmax.f32 %v7166, %v7167
    %v7169 = vrot.slane %v7168, 2
    %v7170 = vmax.f32 %v7168, %v7169
    %v7171 = vrot.slane %v7170, 1
    %v7172 = vmax.f32 %v7170, %v7171
    %v7173 = vsel %vm5471, %v5163, -inf
    %v7174 = vrot.slane %v7173, 4
    %v7175 = vmax.f32 %v7173, %v7174
    %v7176 = vrot.slane %v7175, 2
    %v7177 = vmax.f32 %v7175, %v7176
    %v7178 = vrot.slane %v7177, 1
    %v7179 = vmax.f32 %v7177, %v7178
    %v7180 = vsel %vm5471, %v5171, -inf
    %v7181 = vrot.slane %v7180, 4
    %v7182 = vmax.f32 %v7180, %v7181
    %v7183 = vrot.slane %v7182, 2
    %v7184 = vmax.f32 %v7182, %v7183
    %v7185 = vrot.slane %v7184, 1
    %v7186 = vmax.f32 %v7184, %v7185
    %v7187 = vsel %vm5471, %v5179, -inf
    %v7188 = vrot.slane %v7187, 4
    %v7189 = vmax.f32 %v7187, %v7188
    %v7190 = vrot.slane %v7189, 2
    %v7191 = vmax.f32 %v7189, %v7190
    %v7192 = vrot.slane %v7191, 1
    %v7193 = vmax.f32 %v7191, %v7192
    %v7194 = vsel %vm5471, %v5178, -inf
    %v7195 = vrot.slane %v7194, 4
    %v7196 = vmax.f32 %v7194, %v7195
    %v7197 = vrot.slane %v7196, 2
    %v7198 = vmax.f32 %v7196, %v7197
    %v7199 = vrot.slane %v7198, 1
    %v7200 = vmax.f32 %v7198, %v7199
    %v7201 = vsel %vm5471, %v5180, -inf
    %v7202 = vrot.slane %v7201, 4
    %v7203 = vmax.f32 %v7201, %v7202
    %v7204 = vrot.slane %v7203, 2
    %v7205 = vmax.f32 %v7203, %v7204
    %v7206 = vrot.slane %v7205, 1
    %v7207 = vmax.f32 %v7205, %v7206
    %v7208 = vsel %vm5471, %v5188, -inf
    %v7209 = vrot.slane %v7208, 4
    %v7210 = vmax.f32 %v7208, %v7209
    %v7211 = vrot.slane %v7210, 2
    %v7212 = vmax.f32 %v7210, %v7211
    %v7213 = vrot.slane %v7212, 1
    %v7214 = vmax.f32 %v7212, %v7213
    %v7215 = vsel %vm5471, %v5196, -inf
    %v7216 = vrot.slane %v7215, 4
    %v7217 = vmax.f32 %v7215, %v7216
    %v7218 = vrot.slane %v7217, 2
    %v7219 = vmax.f32 %v7217, %v7218
    %v7220 = vrot.slane %v7219, 1
    %v7221 = vmax.f32 %v7219, %v7220
    %v7222 = vsel %vm5471, %v5195, -inf
    %v7223 = vrot.slane %v7222, 4
    %v7224 = vmax.f32 %v7222, %v7223
    %v7225 = vrot.slane %v7224, 2
    %v7226 = vmax.f32 %v7224, %v7225
    %v7227 = vrot.slane %v7226, 1
    %v7228 = vmax.f32 %v7226, %v7227
    %v7229 = vsel %vm5471, %v5197, -inf
    %v7230 = vrot.slane %v7229, 4
    %v7231 = vmax.f32 %v7229, %v7230
    %v7232 = vrot.slane %v7231, 2
    %v7233 = vmax.f32 %v7231, %v7232
    %v7234 = vrot.slane %v7233, 1
    %v7235 = vmax.f32 %v7233, %v7234
    %v7236 = vsel %vm5471, %v5205, -inf
    %v7237 = vrot.slane %v7236, 4
    %v7238 = vmax.f32 %v7236, %v7237
    %v7239 = vrot.slane %v7238, 2
    %v7240 = vmax.f32 %v7238, %v7239
    %v7241 = vrot.slane %v7240, 1
    %v7242 = vmax.f32 %v7240, %v7241
    %v7243 = vsel %vm5471, %v5213, -inf
    %v7244 = vrot.slane %v7243, 4
    %v7245 = vmax.f32 %v7243, %v7244
    %v7246 = vrot.slane %v7245, 2
    %v7247 = vmax.f32 %v7245, %v7246
    %v7248 = vrot.slane %v7247, 1
    %v7249 = vmax.f32 %v7247, %v7248
    %v7250 = vsel %vm5471, %v5212, -inf
    %v7251 = vrot.slane %v7250, 4
    %v7252 = vmax.f32 %v7250, %v7251
    %v7253 = vrot.slane %v7252, 2
    %v7254 = vmax.f32 %v7252, %v7253
    %v7255 = vrot.slane %v7254, 1
    %v7256 = vmax.f32 %v7254, %v7255
    %v7257 = vsel %vm5471, %v5214, -inf
    %v7258 = vrot.slane %v7257, 4
    %v7259 = vmax.f32 %v7257, %v7258
    %v7260 = vrot.slane %v7259, 2
    %v7261 = vmax.f32 %v7259, %v7260
    %v7262 = vrot.slane %v7261, 1
    %v7263 = vmax.f32 %v7261, %v7262
    %v7264 = vmax.f32 %v5478, %v5534
    %v7265 = vmax.f32 %v5485, %v5541
    %v7266 = vmax.f32 %v5492, %v5548
    %v7267 = vmax.f32 %v5499, %v5555
    %v7268 = vmax.f32 %v5506, %v5562
    %v7269 = vmax.f32 %v5513, %v5569
    %v7270 = vmax.f32 %v5520, %v5576
    %v7271 = vmax.f32 %v5527, %v5583
    %v7272 = vmax.f32 %v5590, %v5646
    %v7273 = vmax.f32 %v5597, %v5653
    %v7274 = vmax.f32 %v5604, %v5660
    %v7275 = vmax.f32 %v5611, %v5667
    %v7276 = vmax.f32 %v5618, %v5674
    %v7277 = vmax.f32 %v5625, %v5681
    %v7278 = vmax.f32 %v5632, %v5688
    %v7279 = vmax.f32 %v5639, %v5695
    %v7280 = vmax.f32 %v5702, %v5758
    %v7281 = vmax.f32 %v5709, %v5765
    %v7282 = vmax.f32 %v5716, %v5772
    %v7283 = vmax.f32 %v5723, %v5779
    %v7284 = vmax.f32 %v5730, %v5786
    %v7285 = vmax.f32 %v5737, %v5793
    %v7286 = vmax.f32 %v5744, %v5800
    %v7287 = vmax.f32 %v5751, %v5807
    %v7288 = vmax.f32 %v5814, %v5870
    %v7289 = vmax.f32 %v5821, %v5877
    %v7290 = vmax.f32 %v5828, %v5884
    %v7291 = vmax.f32 %v5835, %v5891
    %v7292 = vmax.f32 %v5842, %v5898
    %v7293 = vmax.f32 %v5849, %v5905
    %v7294 = vmax.f32 %v5856, %v5912
    %v7295 = vmax.f32 %v5863, %v5919
    %v7296 = vmax.f32 %v5926, %v5982
    %v7297 = vmax.f32 %v5933, %v5989
    %v7298 = vmax.f32 %v5940, %v5996
    %v7299 = vmax.f32 %v5947, %v6003
    %v7300 = vmax.f32 %v5954, %v6010
    %v7301 = vmax.f32 %v5961, %v6017
    %v7302 = vmax.f32 %v5968, %v6024
    %v7303 = vmax.f32 %v5975, %v6031
    %v7304 = vmax.f32 %v6038, %v6094
    %v7305 = vmax.f32 %v6045, %v6101
    %v7306 = vmax.f32 %v6052, %v6108
    %v7307 = vmax.f32 %v6059, %v6115
    %v7308 = vmax.f32 %v6066, %v6122
    %v7309 = vmax.f32 %v6073, %v6129
    %v7310 = vmax.f32 %v6080, %v6136
    %v7311 = vmax.f32 %v6087, %v6143
    %v7312 = vmax.f32 %v6150, %v6206
    %v7313 = vmax.f32 %v6157, %v6213
    %v7314 = vmax.f32 %v6164, %v6220
    %v7315 = vmax.f32 %v6171, %v6227
    %v7316 = vmax.f32 %v6178, %v6234
    %v7317 = vmax.f32 %v6185, %v6241
    %v7318 = vmax.f32 %v6192, %v6248
    %v7319 = vmax.f32 %v6199, %v6255
    %v7320 = vmax.f32 %v6262, %v6318
    %v7321 = vmax.f32 %v6269, %v6325
    %v7322 = vmax.f32 %v6276, %v6332
    %v7323 = vmax.f32 %v6283, %v6339
    %v7324 = vmax.f32 %v6290, %v6346
    %v7325 = vmax.f32 %v6297, %v6353
    %v7326 = vmax.f32 %v6304, %v6360
    %v7327 = vmax.f32 %v6311, %v6367
    %v7328 = vmax.f32 %v6374, %v6430
    %v7329 = vmax.f32 %v6381, %v6437
    %v7330 = vmax.f32 %v6388, %v6444
    %v7331 = vmax.f32 %v6395, %v6451
    %v7332 = vmax.f32 %v6402, %v6458
    %v7333 = vmax.f32 %v6409, %v6465
    %v7334 = vmax.f32 %v6416, %v6472
    %v7335 = vmax.f32 %v6423, %v6479
    %v7336 = vmax.f32 %v6486, %v6542
    %v7337 = vmax.f32 %v6493, %v6549
    %v7338 = vmax.f32 %v6500, %v6556
    %v7339 = vmax.f32 %v6507, %v6563
    %v7340 = vmax.f32 %v6514, %v6570
    %v7341 = vmax.f32 %v6521, %v6577
    %v7342 = vmax.f32 %v6528, %v6584
    %v7343 = vmax.f32 %v6535, %v6591
    %v7344 = vmax.f32 %v6598, %v6654
    %v7345 = vmax.f32 %v6605, %v6661
    %v7346 = vmax.f32 %v6612, %v6668
    %v7347 = vmax.f32 %v6619, %v6675
    %v7348 = vmax.f32 %v6626, %v6682
    %v7349 = vmax.f32 %v6633, %v6689
    %v7350 = vmax.f32 %v6640, %v6696
    %v7351 = vmax.f32 %v6647, %v6703
    %v7352 = vmax.f32 %v6710, %v6766
    %v7353 = vmax.f32 %v6717, %v6773
    %v7354 = vmax.f32 %v6724, %v6780
    %v7355 = vmax.f32 %v6731, %v6787
    %v7356 = vmax.f32 %v6738, %v6794
    %v7357 = vmax.f32 %v6745, %v6801
    %v7358 = vmax.f32 %v6752, %v6808
    %v7359 = vmax.f32 %v6759, %v6815
    %v7360 = vmax.f32 %v6822, %v6878
    %v7361 = vmax.f32 %v6829, %v6885
    %v7362 = vmax.f32 %v6836, %v6892
    %v7363 = vmax.f32 %v6843, %v6899
    %v7364 = vmax.f32 %v6850, %v6906
    %v7365 = vmax.f32 %v6857, %v6913
    %v7366 = vmax.f32 %v6864, %v6920
    %v7367 = vmax.f32 %v6871, %v6927
    %v7368 = vmax.f32 %v6934, %v6990
    %v7369 = vmax.f32 %v6941, %v6997
    %v7370 = vmax.f32 %v6948, %v7004
    %v7371 = vmax.f32 %v6955, %v7011
    %v7372 = vmax.f32 %v6962, %v7018
    %v7373 = vmax.f32 %v6969, %v7025
    %v7374 = vmax.f32 %v6976, %v7032
    %v7375 = vmax.f32 %v6983, %v7039
    %v7376 = vmax.f32 %v7046, %v7102
    %v7377 = vmax.f32 %v7053, %v7109
    %v7378 = vmax.f32 %v7060, %v7116
    %v7379 = vmax.f32 %v7067, %v7123
    %v7380 = vmax.f32 %v7074, %v7130
    %v7381 = vmax.f32 %v7081, %v7137
    %v7382 = vmax.f32 %v7088, %v7144
    %v7383 = vmax.f32 %v7095, %v7151
    %v7384 = vmax.f32 %v7158, %v7214
    %v7385 = vmax.f32 %v7165, %v7221
    %v7386 = vmax.f32 %v7172, %v7228
    %v7387 = vmax.f32 %v7179, %v7235
    %v7388 = vmax.f32 %v7186, %v7242
    %v7389 = vmax.f32 %v7193, %v7249
    %v7390 = vmax.f32 %v7200, %v7256
    %v7391 = vmax.f32 %v7207, %v7263
    %7392 = vst.msk [vmem:[#allocation3] sm:$0xff] %vm3517, 0.0
    %7393 = vst.msk [vmem:[#allocation3 + $0x8] sm:$0x3] %vm5471, 0.0
    %7394 = vst.msk [vmem:[#allocation3 + $0x10] sm:$0xff] %vm3517, 0.0
    %7395 = vst.msk [vmem:[#allocation3 + $0x18] sm:$0x3] %vm5471, 0.0
    %7396 = vst.msk [vmem:[#allocation3 + $0x20] sm:$0xff] %vm3517, 0.0
    %7397 = vst.msk [vmem:[#allocation3 + $0x28] sm:$0x3] %vm5471, 0.0
    %7398 = vst.msk [vmem:[#allocation3 + $0x30] sm:$0xff] %vm3517, 0.0
    %7399 = vst.msk [vmem:[#allocation3 + $0x38] sm:$0x3] %vm5471, 0.0
    %7400 = vst.msk [vmem:[#allocation3 + $0x40] sm:$0xff] %vm3517, 0.0
    %7401 = vst.msk [vmem:[#allocation3 + $0x48] sm:$0x3] %vm5471, 0.0
    %7402 = vst.msk [vmem:[#allocation3 + $0x50] sm:$0xff] %vm3517, 0.0
    %7403 = vst.msk [vmem:[#allocation3 + $0x58] sm:$0x3] %vm5471, 0.0
    %7404 = vst.msk [vmem:[#allocation3 + $0x60] sm:$0xff] %vm3517, 0.0
    %7405 = vst.msk [vmem:[#allocation3 + $0x68] sm:$0x3] %vm5471, 0.0
    %7406 = vst.msk [vmem:[#allocation3 + $0x70] sm:$0xff] %vm3517, 0.0
    %7407 = vst.msk [vmem:[#allocation3 + $0x78] sm:$0x3] %vm5471, 0.0
    %7408 = vst.msk [vmem:[#allocation3 + $0x80] sm:$0xff] %vm3517, 0.0
    %7409 = vst.msk [vmem:[#allocation3 + $0x88] sm:$0x3] %vm5471, 0.0
    %7410 = vst.msk [vmem:[#allocation3 + $0x90] sm:$0xff] %vm3517, 0.0
    %7411 = vst.msk [vmem:[#allocation3 + $0x98] sm:$0x3] %vm5471, 0.0
    %7412 = vst.msk [vmem:[#allocation3 + $0xa0] sm:$0xff] %vm3517, 0.0
    %7413 = vst.msk [vmem:[#allocation3 + $0xa8] sm:$0x3] %vm5471, 0.0
    %7414 = vst.msk [vmem:[#allocation3 + $0xb0] sm:$0xff] %vm3517, 0.0
    %7415 = vst.msk [vmem:[#allocation3 + $0xb8] sm:$0x3] %vm5471, 0.0
    %7416 = vst.msk [vmem:[#allocation3 + $0xc0] sm:$0xff] %vm3517, 0.0
    %7417 = vst.msk [vmem:[#allocation3 + $0xc8] sm:$0x3] %vm5471, 0.0
    %7418 = vst.msk [vmem:[#allocation3 + $0xd0] sm:$0xff] %vm3517, 0.0
    %7419 = vst.msk [vmem:[#allocation3 + $0xd8] sm:$0x3] %vm5471, 0.0
    %7420 = vst.msk [vmem:[#allocation3 + $0xe0] sm:$0xff] %vm3517, 0.0
    %7421 = vst.msk [vmem:[#allocation3 + $0xe8] sm:$0x3] %vm5471, 0.0
    %7422 = vst.msk [vmem:[#allocation3 + $0xf0] sm:$0xff] %vm3517, 0.0
    %7423 = vst.msk [vmem:[#allocation3 + $0xf8] sm:$0x3] %vm5471, 0.0
    %7424 = vst.msk [vmem:[#allocation3 + $0x100] sm:$0xff] %vm3517, 0.0
    %7425 = vst.msk [vmem:[#allocation3 + $0x108] sm:$0x3] %vm5471, 0.0
    %7426 = vst.msk [vmem:[#allocation3 + $0x110] sm:$0xff] %vm3517, 0.0
    %7427 = vst.msk [vmem:[#allocation3 + $0x118] sm:$0x3] %vm5471, 0.0
    %7428 = vst.msk [vmem:[#allocation3 + $0x120] sm:$0xff] %vm3517, 0.0
    %7429 = vst.msk [vmem:[#allocation3 + $0x128] sm:$0x3] %vm5471, 0.0
    %7430 = vst.msk [vmem:[#allocation3 + $0x130] sm:$0xff] %vm3517, 0.0
    %7431 = vst.msk [vmem:[#allocation3 + $0x138] sm:$0x3] %vm5471, 0.0
    %vm7560 = vcmask 1041409
    %v7561 = vsel %vm7560, %v7265, %v7264
    %vm7562 = vcmask 1042434
    %v7563 = vsel %vm7562, %v7266, %v7561
    %vm7564 = vcmask 1043459
    %v7565 = vsel %vm7564, %v7267, %v7563
    %vm7566 = vcmask 1044484
    %v7567 = vsel %vm7566, %v7268, %v7565
    %vm7568 = vcmask 1045509
    %v7569 = vsel %vm7568, %v7269, %v7567
    %vm7570 = vcmask 1046534
    %v7571 = vsel %vm7570, %v7270, %v7569
    %vm7572 = vcmask 1047559
    %v7573 = vsel %vm7572, %v7271, %v7571
    %v7574 = vsel %vm7560, %v7273, %v7272
    %v7575 = vsel %vm7562, %v7274, %v7574
    %v7576 = vsel %vm7564, %v7275, %v7575
    %v7577 = vsel %vm7566, %v7276, %v7576
    %v7578 = vsel %vm7568, %v7277, %v7577
    %v7579 = vsel %vm7570, %v7278, %v7578
    %v7580 = vsel %vm7572, %v7279, %v7579
    %v7581 = vsel %vm7560, %v7281, %v7280
    %v7582 = vsel %vm7562, %v7282, %v7581
    %v7583 = vsel %vm7564, %v7283, %v7582
    %v7584 = vsel %vm7566, %v7284, %v7583
    %v7585 = vsel %vm7568, %v7285, %v7584
    %v7586 = vsel %vm7570, %v7286, %v7585
    %v7587 = vsel %vm7572, %v7287, %v7586
    %v7588 = vsel %vm7560, %v7289, %v7288
    %v7589 = vsel %vm7562, %v7290, %v7588
    %v7590 = vsel %vm7564, %v7291, %v7589
    %v7591 = vsel %vm7566, %v7292, %v7590
    %v7592 = vsel %vm7568, %v7293, %v7591
    %v7593 = vsel %vm7570, %v7294, %v7592
    %v7594 = vsel %vm7572, %v7295, %v7593
    %v7595 = vsel %vm7560, %v7297, %v7296
    %v7596 = vsel %vm7562, %v7298, %v7595
    %v7597 = vsel %vm7564, %v7299, %v7596
    %v7598 = vsel %vm7566, %v7300, %v7597
    %v7599 = vsel %vm7568, %v7301, %v7598
    %v7600 = vsel %vm7570, %v7302, %v7599
    %v7601 = vsel %vm7572, %v7303, %v7600
    %v7602 = vsel %vm7560, %v7305, %v7304
    %v7603 = vsel %vm7562, %v7306, %v7602
    %v7604 = vsel %vm7564, %v7307, %v7603
    %v7605 = vsel %vm7566, %v7308, %v7604
    %v7606 = vsel %vm7568, %v7309, %v7605
    %v7607 = vsel %vm7570, %v7310, %v7606
    %v7608 = vsel %vm7572, %v7311, %v7607
    %v7609 = vsel %vm7560, %v7313, %v7312
    %v7610 = vsel %vm7562, %v7314, %v7609
    %v7611 = vsel %vm7564, %v7315, %v7610
    %v7612 = vsel %vm7566, %v7316, %v7611
    %v7613 = vsel %vm7568, %v7317, %v7612
    %v7614 = vsel %vm7570, %v7318, %v7613
    %v7615 = vsel %vm7572, %v7319, %v7614
    %v7616 = vsel %vm7560, %v7321, %v7320
    %v7617 = vsel %vm7562, %v7322, %v7616
    %v7618 = vsel %vm7564, %v7323, %v7617
    %v7619 = vsel %vm7566, %v7324, %v7618
    %v7620 = vsel %vm7568, %v7325, %v7619
    %v7621 = vsel %vm7570, %v7326, %v7620
    %v7622 = vsel %vm7572, %v7327, %v7621
    %v7623 = vsel %vm7560, %v7329, %v7328
    %v7624 = vsel %vm7562, %v7330, %v7623
    %v7625 = vsel %vm7564, %v7331, %v7624
    %v7626 = vsel %vm7566, %v7332, %v7625
    %v7627 = vsel %vm7568, %v7333, %v7626
    %v7628 = vsel %vm7570, %v7334, %v7627
    %v7629 = vsel %vm7572, %v7335, %v7628
    %v7630 = vsel %vm7560, %v7337, %v7336
    %v7631 = vsel %vm7562, %v7338, %v7630
    %v7632 = vsel %vm7564, %v7339, %v7631
    %v7633 = vsel %vm7566, %v7340, %v7632
    %v7634 = vsel %vm7568, %v7341, %v7633
    %v7635 = vsel %vm7570, %v7342, %v7634
    %v7636 = vsel %vm7572, %v7343, %v7635
    %v7637 = vsel %vm7560, %v7345, %v7344
    %v7638 = vsel %vm7562, %v7346, %v7637
    %v7639 = vsel %vm7564, %v7347, %v7638
    %v7640 = vsel %vm7566, %v7348, %v7639
    %v7641 = vsel %vm7568, %v7349, %v7640
    %v7642 = vsel %vm7570, %v7350, %v7641
    %v7643 = vsel %vm7572, %v7351, %v7642
    %v7644 = vsel %vm7560, %v7353, %v7352
    %v7645 = vsel %vm7562, %v7354, %v7644
    %v7646 = vsel %vm7564, %v7355, %v7645
    %v7647 = vsel %vm7566, %v7356, %v7646
    %v7648 = vsel %vm7568, %v7357, %v7647
    %v7649 = vsel %vm7570, %v7358, %v7648
    %v7650 = vsel %vm7572, %v7359, %v7649
    %v7651 = vsel %vm7560, %v7361, %v7360
    %v7652 = vsel %vm7562, %v7362, %v7651
    %v7653 = vsel %vm7564, %v7363, %v7652
    %v7654 = vsel %vm7566, %v7364, %v7653
    %v7655 = vsel %vm7568, %v7365, %v7654
    %v7656 = vsel %vm7570, %v7366, %v7655
    %v7657 = vsel %vm7572, %v7367, %v7656
    %v7658 = vsel %vm7560, %v7369, %v7368
    %v7659 = vsel %vm7562, %v7370, %v7658
    %v7660 = vsel %vm7564, %v7371, %v7659
    %v7661 = vsel %vm7566, %v7372, %v7660
    %v7662 = vsel %vm7568, %v7373, %v7661
    %v7663 = vsel %vm7570, %v7374, %v7662
    %v7664 = vsel %vm7572, %v7375, %v7663
    %v7665 = vsel %vm7560, %v7377, %v7376
    %v7666 = vsel %vm7562, %v7378, %v7665
    %v7667 = vsel %vm7564, %v7379, %v7666
    %v7668 = vsel %vm7566, %v7380, %v7667
    %v7669 = vsel %vm7568, %v7381, %v7668
    %v7670 = vsel %vm7570, %v7382, %v7669
    %v7671 = vsel %vm7572, %v7383, %v7670
    %v7672 = vsel %vm7560, %v7385, %v7384
    %v7673 = vsel %vm7562, %v7386, %v7672
    %v7674 = vsel %vm7564, %v7387, %v7673
    %v7675 = vsel %vm7566, %v7388, %v7674
    %v7676 = vsel %vm7568, %v7389, %v7675
    %v7677 = vsel %vm7570, %v7390, %v7676
    %v7678 = vsel %vm7572, %v7391, %v7677
    %s7695 = scalar_lea.vmem [#allocation3], 16
    %7696 = vst.msk [vmem:[%s7695 + $0x1] sm:$0xff] %vm3517, %v7573
    %7697 = vst.msk [vmem:[%s7695 + $0x11] sm:$0xff] %vm3517, %v7580
    %7698 = vst.msk [vmem:[%s7695 + $0x21] sm:$0xff] %vm3517, %v7587
    %7699 = vst.msk [vmem:[%s7695 + $0x31] sm:$0xff] %vm3517, %v7594
    %7700 = vst.msk [vmem:[%s7695 + $0x41] sm:$0xff] %vm3517, %v7601
    %7701 = vst.msk [vmem:[%s7695 + $0x51] sm:$0xff] %vm3517, %v7608
    %7702 = vst.msk [vmem:[%s7695 + $0x61] sm:$0xff] %vm3517, %v7615
    %7703 = vst.msk [vmem:[%s7695 + $0x71] sm:$0xff] %vm3517, %v7622
    %7704 = vst.msk [vmem:[%s7695 + $0xa1] sm:$0xff] %vm3517, %v7629
    %7705 = vst.msk [vmem:[%s7695 + $0xb1] sm:$0xff] %vm3517, %v7636
    %7706 = vst.msk [vmem:[%s7695 + $0xc1] sm:$0xff] %vm3517, %v7643
    %7707 = vst.msk [vmem:[%s7695 + $0xd1] sm:$0xff] %vm3517, %v7650
    %7708 = vst.msk [vmem:[%s7695 + $0xe1] sm:$0xff] %vm3517, %v7657
    %7709 = vst.msk [vmem:[%s7695 + $0xf1] sm:$0xff] %vm3517, %v7664
    %7710 = vst.msk [vmem:[%s7695 + $0x101] sm:$0xff] %vm3517, %v7671
    %7711 = vst.msk [vmem:[%s7695 + $0x111] sm:$0xff] %vm3517, %v7678
    %v7712 = vld [vmem:[#allocation3] sm:$0xff]
    %v7713 = vld [vmem:[#allocation3 + $0x8] sm:$0x3]
    %v7714 = vld [vmem:[#allocation3 + $0x10] sm:$0xff]
    %v7715 = vld [vmem:[#allocation3 + $0x18] sm:$0x3]
    %v7716 = vld [vmem:[#allocation3 + $0x20] sm:$0xff]
    %v7717 = vld [vmem:[#allocation3 + $0x28] sm:$0x3]
    %v7718 = vld [vmem:[#allocation3 + $0x30] sm:$0xff]
    %v7719 = vld [vmem:[#allocation3 + $0x38] sm:$0x3]
    %v7720 = vld [vmem:[#allocation3 + $0x40] sm:$0xff]
    %v7721 = vld [vmem:[#allocation3 + $0x48] sm:$0x3]
    %v7722 = vld [vmem:[#allocation3 + $0x50] sm:$0xff]
    %v7723 = vld [vmem:[#allocation3 + $0x58] sm:$0x3]
    %v7724 = vld [vmem:[#allocation3 + $0x60] sm:$0xff]
    %v7725 = vld [vmem:[#allocation3 + $0x68] sm:$0x3]
    %v7726 = vld [vmem:[#allocation3 + $0x70] sm:$0xff]
    %v7727 = vld [vmem:[#allocation3 + $0x78] sm:$0x3]
    %v7728 = vld [vmem:[#allocation3 + $0x80] sm:$0xff]
    %v7729 = vld [vmem:[#allocation3 + $0x88] sm:$0x3]
    %v7730 = vld [vmem:[#allocation3 + $0x90] sm:$0xff]
    %v7731 = vld [vmem:[#allocation3 + $0x98] sm:$0x3]
    %v7732 = vld [vmem:[#allocation3 + $0xa0] sm:$0xff]
    %v7733 = vld [vmem:[#allocation3 + $0xa8] sm:$0x3]
    %v7734 = vld [vmem:[#allocation3 + $0xb0] sm:$0xff]
    %v7735 = vld [vmem:[#allocation3 + $0xb8] sm:$0x3]
    %v7736 = vld [vmem:[#allocation3 + $0xc0] sm:$0xff]
    %v7737 = vld [vmem:[#allocation3 + $0xc8] sm:$0x3]
    %v7738 = vld [vmem:[#allocation3 + $0xd0] sm:$0xff]
    %v7739 = vld [vmem:[#allocation3 + $0xd8] sm:$0x3]
    %v7740 = vld [vmem:[#allocation3 + $0xe0] sm:$0xff]
    %v7741 = vld [vmem:[#allocation3 + $0xe8] sm:$0x3]
    %v7742 = vld [vmem:[#allocation3 + $0xf0] sm:$0xff]
    %v7743 = vld [vmem:[#allocation3 + $0xf8] sm:$0x3]
    %v7744 = vld [vmem:[#allocation3 + $0x100] sm:$0xff]
    %v7745 = vld [vmem:[#allocation3 + $0x108] sm:$0x3]
    %v7746 = vld [vmem:[#allocation3 + $0x110] sm:$0xff]
    %v7747 = vld [vmem:[#allocation3 + $0x118] sm:$0x3]
    %v7748 = vld [vmem:[#allocation3 + $0x120] sm:$0xff]
    %v7749 = vld [vmem:[#allocation3 + $0x128] sm:$0x3]
    %v7750 = vld [vmem:[#allocation3 + $0x130] sm:$0xff]
    %v7751 = vld [vmem:[#allocation3 + $0x138] sm:$0x3]
    %v7784 = vrot.slane %v7712, 1
    %v7785 = vrot.slane %v7713, 1
    %v7786 = vsel %vm649, %v7784, %v7785
    %v7787 = vrot.slane %v7714, 1
    %v7788 = vrot.slane %v7715, 1
    %v7789 = vsel %vm649, %v7787, %v7788
    %v7790 = vrot.slane %v7716, 1
    %v7791 = vrot.slane %v7717, 1
    %v7792 = vsel %vm649, %v7790, %v7791
    %v7793 = vrot.slane %v7718, 1
    %v7794 = vrot.slane %v7719, 1
    %v7795 = vsel %vm649, %v7793, %v7794
    %v7796 = vrot.slane %v7720, 1
    %v7797 = vrot.slane %v7721, 1
    %v7798 = vsel %vm649, %v7796, %v7797
    %v7799 = vrot.slane %v7722, 1
    %v7800 = vrot.slane %v7723, 1
    %v7801 = vsel %vm649, %v7799, %v7800
    %v7802 = vrot.slane %v7724, 1
    %v7803 = vrot.slane %v7725, 1
    %v7804 = vsel %vm649, %v7802, %v7803
    %v7805 = vrot.slane %v7726, 1
    %v7806 = vrot.slane %v7727, 1
    %v7807 = vsel %vm649, %v7805, %v7806
    %v7808 = vrot.slane %v7732, 1
    %v7809 = vrot.slane %v7733, 1
    %v7810 = vsel %vm649, %v7808, %v7809
    %v7811 = vrot.slane %v7734, 1
    %v7812 = vrot.slane %v7735, 1
    %v7813 = vsel %vm649, %v7811, %v7812
    %v7814 = vrot.slane %v7736, 1
    %v7815 = vrot.slane %v7737, 1
    %v7816 = vsel %vm649, %v7814, %v7815
    %v7817 = vrot.slane %v7738, 1
    %v7818 = vrot.slane %v7739, 1
    %v7819 = vsel %vm649, %v7817, %v7818
    %v7820 = vrot.slane %v7740, 1
    %v7821 = vrot.slane %v7741, 1
    %v7822 = vsel %vm649, %v7820, %v7821
    %v7823 = vrot.slane %v7742, 1
    %v7824 = vrot.slane %v7743, 1
    %v7825 = vsel %vm649, %v7823, %v7824
    %v7826 = vrot.slane %v7744, 1
    %v7827 = vrot.slane %v7745, 1
    %v7828 = vsel %vm649, %v7826, %v7827
    %v7829 = vrot.slane %v7746, 1
    %v7830 = vrot.slane %v7747, 1
    %v7831 = vsel %vm649, %v7829, %v7830
    %7832 = vrot.lane.b32.xlu0 %v7786, 32
    %v7833 = vpop.permute.xlu0 %7832
    %7834 = vrot.lane.b32.xlu0 %v7789, 32
    %v7835 = vpop.permute.xlu0 %7834
    %7836 = vrot.lane.b32.xlu0 %v7792, 32
    %v7837 = vpop.permute.xlu0 %7836
    %7838 = vrot.lane.b32.xlu0 %v7795, 32
    %v7839 = vpop.permute.xlu0 %7838
    %7840 = vrot.lane.b32.xlu0 %v7798, 32
    %v7841 = vpop.permute.xlu0 %7840
    %7842 = vrot.lane.b32.xlu0 %v7801, 32
    %v7843 = vpop.permute.xlu0 %7842
    %7844 = vrot.lane.b32.xlu0 %v7804, 32
    %v7845 = vpop.permute.xlu0 %7844
    %7846 = vrot.lane.b32.xlu0 %v7807, 32
    %v7847 = vpop.permute.xlu0 %7846
    %7848 = vrot.lane.b32.xlu0 %v7810, 32
    %v7849 = vpop.permute.xlu0 %7848
    %7850 = vrot.lane.b32.xlu0 %v7813, 32
    %v7851 = vpop.permute.xlu0 %7850
    %7852 = vrot.lane.b32.xlu0 %v7816, 32
    %v7853 = vpop.permute.xlu0 %7852
    %7854 = vrot.lane.b32.xlu0 %v7819, 32
    %v7855 = vpop.permute.xlu0 %7854
    %7856 = vrot.lane.b32.xlu0 %v7822, 32
    %v7857 = vpop.permute.xlu0 %7856
    %7858 = vrot.lane.b32.xlu0 %v7825, 32
    %v7859 = vpop.permute.xlu0 %7858
    %7860 = vrot.lane.b32.xlu0 %v7828, 32
    %v7861 = vpop.permute.xlu0 %7860
    %7862 = vrot.lane.b32.xlu0 %v7831, 32
    %v7863 = vpop.permute.xlu0 %7862
    %v7880 = vrot.slane %v7712, 2
    %v7881 = vrot.slane %v7713, 2
    %v7882 = vsel %vm1002, %v7880, %v7881
    %v7883 = vrot.slane %v7714, 2
    %v7884 = vrot.slane %v7715, 2
    %v7885 = vsel %vm1002, %v7883, %v7884
    %v7886 = vrot.slane %v7716, 2
    %v7887 = vrot.slane %v7717, 2
    %v7888 = vsel %vm1002, %v7886, %v7887
    %v7889 = vrot.slane %v7718, 2
    %v7890 = vrot.slane %v7719, 2
    %v7891 = vsel %vm1002, %v7889, %v7890
    %v7892 = vrot.slane %v7720, 2
    %v7893 = vrot.slane %v7721, 2
    %v7894 = vsel %vm1002, %v7892, %v7893
    %v7895 = vrot.slane %v7722, 2
    %v7896 = vrot.slane %v7723, 2
    %v7897 = vsel %vm1002, %v7895, %v7896
    %v7898 = vrot.slane %v7724, 2
    %v7899 = vrot.slane %v7725, 2
    %v7900 = vsel %vm1002, %v7898, %v7899
    %v7901 = vrot.slane %v7726, 2
    %v7902 = vrot.slane %v7727, 2
    %v7903 = vsel %vm1002, %v7901, %v7902
    %v7904 = vrot.slane %v7732, 2
    %v7905 = vrot.slane %v7733, 2
    %v7906 = vsel %vm1002, %v7904, %v7905
    %v7907 = vrot.slane %v7734, 2
    %v7908 = vrot.slane %v7735, 2
    %v7909 = vsel %vm1002, %v7907, %v7908
    %v7910 = vrot.slane %v7736, 2
    %v7911 = vrot.slane %v7737, 2
    %v7912 = vsel %vm1002, %v7910, %v7911
    %v7913 = vrot.slane %v7738, 2
    %v7914 = vrot.slane %v7739, 2
    %v7915 = vsel %vm1002, %v7913, %v7914
    %v7916 = vrot.slane %v7740, 2
    %v7917 = vrot.slane %v7741, 2
    %v7918 = vsel %vm1002, %v7916, %v7917
    %v7919 = vrot.slane %v7742, 2
    %v7920 = vrot.slane %v7743, 2
    %v7921 = vsel %vm1002, %v7919, %v7920
    %v7922 = vrot.slane %v7744, 2
    %v7923 = vrot.slane %v7745, 2
    %v7924 = vsel %vm1002, %v7922, %v7923
    %v7925 = vrot.slane %v7746, 2
    %v7926 = vrot.slane %v7747, 2
    %v7927 = vsel %vm1002, %v7925, %v7926
    %7928 = vrot.lane.b32.xlu0 %v7882, 64
    %v7929 = vpop.permute.xlu0 %7928
    %7930 = vrot.lane.b32.xlu0 %v7885, 64
    %v7931 = vpop.permute.xlu0 %7930
    %7932 = vrot.lane.b32.xlu0 %v7888, 64
    %v7933 = vpop.permute.xlu0 %7932
    %7934 = vrot.lane.b32.xlu0 %v7891, 64
    %v7935 = vpop.permute.xlu0 %7934
    %7936 = vrot.lane.b32.xlu0 %v7894, 64
    %v7937 = vpop.permute.xlu0 %7936
    %7938 = vrot.lane.b32.xlu0 %v7897, 64
    %v7939 = vpop.permute.xlu0 %7938
    %7940 = vrot.lane.b32.xlu0 %v7900, 64
    %v7941 = vpop.permute.xlu0 %7940
    %7942 = vrot.lane.b32.xlu0 %v7903, 64
    %v7943 = vpop.permute.xlu0 %7942
    %7944 = vrot.lane.b32.xlu0 %v7906, 64
    %v7945 = vpop.permute.xlu0 %7944
    %7946 = vrot.lane.b32.xlu0 %v7909, 64
    %v7947 = vpop.permute.xlu0 %7946
    %7948 = vrot.lane.b32.xlu0 %v7912, 64
    %v7949 = vpop.permute.xlu0 %7948
    %7950 = vrot.lane.b32.xlu0 %v7915, 64
    %v7951 = vpop.permute.xlu0 %7950
    %7952 = vrot.lane.b32.xlu0 %v7918, 64
    %v7953 = vpop.permute.xlu0 %7952
    %7954 = vrot.lane.b32.xlu0 %v7921, 64
    %v7955 = vpop.permute.xlu0 %7954
    %7956 = vrot.lane.b32.xlu0 %v7924, 64
    %v7957 = vpop.permute.xlu0 %7956
    %7958 = vrot.lane.b32.xlu0 %v7927, 64
    %v7959 = vpop.permute.xlu0 %7958
    %7978 = vrot.lane.b32.xlu0 %v7714, 96
    %v7979 = vpop.permute.xlu0 %7978
    %7980 = vrot.lane.b32.xlu0 %v7716, 96
    %v7981 = vpop.permute.xlu0 %7980
    %7982 = vrot.lane.b32.xlu0 %v7718, 96
    %v7983 = vpop.permute.xlu0 %7982
    %7984 = vrot.lane.b32.xlu0 %v7720, 96
    %v7985 = vpop.permute.xlu0 %7984
    %7986 = vrot.lane.b32.xlu0 %v7722, 96
    %v7987 = vpop.permute.xlu0 %7986
    %7988 = vrot.lane.b32.xlu0 %v7724, 96
    %v7989 = vpop.permute.xlu0 %7988
    %7990 = vrot.lane.b32.xlu0 %v7726, 96
    %v7991 = vpop.permute.xlu0 %7990
    %7992 = vrot.lane.b32.xlu0 %v7728, 96
    %v7993 = vpop.permute.xlu0 %7992
    %7994 = vrot.lane.b32.xlu0 %v7734, 96
    %v7995 = vpop.permute.xlu0 %7994
    %7996 = vrot.lane.b32.xlu0 %v7736, 96
    %v7997 = vpop.permute.xlu0 %7996
    %7998 = vrot.lane.b32.xlu0 %v7738, 96
    %v7999 = vpop.permute.xlu0 %7998
    %8000 = vrot.lane.b32.xlu0 %v7740, 96
    %v8001 = vpop.permute.xlu0 %8000
    %8002 = vrot.lane.b32.xlu0 %v7742, 96
    %v8003 = vpop.permute.xlu0 %8002
    %8004 = vrot.lane.b32.xlu0 %v7744, 96
    %v8005 = vpop.permute.xlu0 %8004
    %8006 = vrot.lane.b32.xlu0 %v7746, 96
    %v8007 = vpop.permute.xlu0 %8006
    %8008 = vrot.lane.b32.xlu0 %v7748, 96
    %v8009 = vpop.permute.xlu0 %8008
    %v8028 = vrot.slane %v7728, 1
    %v8029 = vrot.slane %v7729, 1
    %v8030 = vsel %vm649, %v8028, %v8029
    %v8031 = vrot.slane %v7748, 1
    %v8032 = vrot.slane %v7749, 1
    %v8033 = vsel %vm649, %v8031, %v8032
    %v8050 = vrot.slane %v7728, 2
    %v8051 = vrot.slane %v7729, 2
    %v8052 = vsel %vm1002, %v8050, %v8051
    %v8053 = vrot.slane %v7748, 2
    %v8054 = vrot.slane %v7749, 2
    %v8055 = vsel %vm1002, %v8053, %v8054
    %8056 = vrot.lane.b32.xlu0 %v7885, 32
    %v8057 = vpop.permute.xlu0 %8056
    %8058 = vrot.lane.b32.xlu0 %v7888, 32
    %v8059 = vpop.permute.xlu0 %8058
    %8060 = vrot.lane.b32.xlu0 %v7891, 32
    %v8061 = vpop.permute.xlu0 %8060
    %8062 = vrot.lane.b32.xlu0 %v7894, 32
    %v8063 = vpop.permute.xlu0 %8062
    %8064 = vrot.lane.b32.xlu0 %v7897, 32
    %v8065 = vpop.permute.xlu0 %8064
    %8066 = vrot.lane.b32.xlu0 %v7900, 32
    %v8067 = vpop.permute.xlu0 %8066
    %8068 = vrot.lane.b32.xlu0 %v7903, 32
    %v8069 = vpop.permute.xlu0 %8068
    %8070 = vrot.lane.b32.xlu0 %v8052, 32
    %v8071 = vpop.permute.xlu0 %8070
    %8072 = vrot.lane.b32.xlu0 %v7909, 32
    %v8073 = vpop.permute.xlu0 %8072
    %8074 = vrot.lane.b32.xlu0 %v7912, 32
    %v8075 = vpop.permute.xlu0 %8074
    %8076 = vrot.lane.b32.xlu0 %v7915, 32
    %v8077 = vpop.permute.xlu0 %8076
    %8078 = vrot.lane.b32.xlu0 %v7918, 32
    %v8079 = vpop.permute.xlu0 %8078
    %8080 = vrot.lane.b32.xlu0 %v7921, 32
    %v8081 = vpop.permute.xlu0 %8080
    %8082 = vrot.lane.b32.xlu0 %v7924, 32
    %v8083 = vpop.permute.xlu0 %8082
    %8084 = vrot.lane.b32.xlu0 %v7927, 32
    %v8085 = vpop.permute.xlu0 %8084
    %8086 = vrot.lane.b32.xlu0 %v8055, 32
    %v8087 = vpop.permute.xlu0 %8086
    %8106 = vrot.lane.b32.xlu0 %v7716, 64
    %v8107 = vpop.permute.xlu0 %8106
    %8108 = vrot.lane.b32.xlu0 %v7718, 64
    %v8109 = vpop.permute.xlu0 %8108
    %8110 = vrot.lane.b32.xlu0 %v7720, 64
    %v8111 = vpop.permute.xlu0 %8110
    %8112 = vrot.lane.b32.xlu0 %v7722, 64
    %v8113 = vpop.permute.xlu0 %8112
    %8114 = vrot.lane.b32.xlu0 %v7724, 64
    %v8115 = vpop.permute.xlu0 %8114
    %8116 = vrot.lane.b32.xlu0 %v7726, 64
    %v8117 = vpop.permute.xlu0 %8116
    %8118 = vrot.lane.b32.xlu0 %v7728, 64
    %v8119 = vpop.permute.xlu0 %8118
    %8120 = vrot.lane.b32.xlu0 %v7730, 64
    %v8121 = vpop.permute.xlu0 %8120
    %8122 = vrot.lane.b32.xlu0 %v7736, 64
    %v8123 = vpop.permute.xlu0 %8122
    %8124 = vrot.lane.b32.xlu0 %v7738, 64
    %v8125 = vpop.permute.xlu0 %8124
    %8126 = vrot.lane.b32.xlu0 %v7740, 64
    %v8127 = vpop.permute.xlu0 %8126
    %8128 = vrot.lane.b32.xlu0 %v7742, 64
    %v8129 = vpop.permute.xlu0 %8128
    %8130 = vrot.lane.b32.xlu0 %v7744, 64
    %v8131 = vpop.permute.xlu0 %8130
    %8132 = vrot.lane.b32.xlu0 %v7746, 64
    %v8133 = vpop.permute.xlu0 %8132
    %8134 = vrot.lane.b32.xlu0 %v7748, 64
    %v8135 = vpop.permute.xlu0 %8134
    %8136 = vrot.lane.b32.xlu0 %v7750, 64
    %v8137 = vpop.permute.xlu0 %8136
    %v8156 = vrot.slane %v7730, 1
    %v8157 = vrot.slane %v7731, 1
    %v8158 = vsel %vm649, %v8156, %v8157
    %v8159 = vrot.slane %v7750, 1
    %v8160 = vrot.slane %v7751, 1
    %v8161 = vsel %vm649, %v8159, %v8160
    %8162 = vrot.lane.b32.xlu0 %v7792, 96
    %v8163 = vpop.permute.xlu0 %8162
    %8164 = vrot.lane.b32.xlu0 %v7795, 96
    %v8165 = vpop.permute.xlu0 %8164
    %8166 = vrot.lane.b32.xlu0 %v7798, 96
    %v8167 = vpop.permute.xlu0 %8166
    %8168 = vrot.lane.b32.xlu0 %v7801, 96
    %v8169 = vpop.permute.xlu0 %8168
    %8170 = vrot.lane.b32.xlu0 %v7804, 96
    %v8171 = vpop.permute.xlu0 %8170
    %8172 = vrot.lane.b32.xlu0 %v7807, 96
    %v8173 = vpop.permute.xlu0 %8172
    %8174 = vrot.lane.b32.xlu0 %v8030, 96
    %v8175 = vpop.permute.xlu0 %8174
    %8176 = vrot.lane.b32.xlu0 %v8158, 96
    %v8177 = vpop.permute.xlu0 %8176
    %8178 = vrot.lane.b32.xlu0 %v7816, 96
    %v8179 = vpop.permute.xlu0 %8178
    %8180 = vrot.lane.b32.xlu0 %v7819, 96
    %v8181 = vpop.permute.xlu0 %8180
    %8182 = vrot.lane.b32.xlu0 %v7822, 96
    %v8183 = vpop.permute.xlu0 %8182
    %8184 = vrot.lane.b32.xlu0 %v7825, 96
    %v8185 = vpop.permute.xlu0 %8184
    %8186 = vrot.lane.b32.xlu0 %v7828, 96
    %v8187 = vpop.permute.xlu0 %8186
    %8188 = vrot.lane.b32.xlu0 %v7831, 96
    %v8189 = vpop.permute.xlu0 %8188
    %8190 = vrot.lane.b32.xlu0 %v8033, 96
    %v8191 = vpop.permute.xlu0 %8190
    %8192 = vrot.lane.b32.xlu0 %v8161, 96
    %v8193 = vpop.permute.xlu0 %8192
    %v8210 = vrot.slane %v7730, 2
    %v8211 = vrot.slane %v7731, 2
    %v8212 = vsel %vm1002, %v8210, %v8211
    %v8213 = vrot.slane %v7750, 2
    %v8214 = vrot.slane %v7751, 2
    %v8215 = vsel %vm1002, %v8213, %v8214
    %v8232 = vsel %vm3517, %v7712, %v7833
    %v8233 = vsel %vm3517, %v7714, %v7835
    %v8234 = vsel %vm3517, %v7716, %v7837
    %v8235 = vsel %vm3517, %v7718, %v7839
    %v8236 = vsel %vm3517, %v7720, %v7841
    %v8237 = vsel %vm3517, %v7722, %v7843
    %v8238 = vsel %vm3517, %v7724, %v7845
    %v8239 = vsel %vm3517, %v7726, %v7847
    %v8240 = vsel %vm3517, %v7732, %v7849
    %v8241 = vsel %vm3517, %v7734, %v7851
    %v8242 = vsel %vm3517, %v7736, %v7853
    %v8243 = vsel %vm3517, %v7738, %v7855
    %v8244 = vsel %vm3517, %v7740, %v7857
    %v8245 = vsel %vm3517, %v7742, %v7859
    %v8246 = vsel %vm3517, %v7744, %v7861
    %v8247 = vsel %vm3517, %v7746, %v7863
    %vm8248 = vcmask 523264
    %v8249 = vsel %vm8248, %v8232, %v7929
    %v8250 = vsel %vm8248, %v8233, %v7931
    %v8251 = vsel %vm8248, %v8234, %v7933
    %v8252 = vsel %vm8248, %v8235, %v7935
    %v8253 = vsel %vm8248, %v8236, %v7937
    %v8254 = vsel %vm8248, %v8237, %v7939
    %v8255 = vsel %vm8248, %v8238, %v7941
    %v8256 = vsel %vm8248, %v8239, %v7943
    %v8257 = vsel %vm8248, %v8240, %v7945
    %v8258 = vsel %vm8248, %v8241, %v7947
    %v8259 = vsel %vm8248, %v8242, %v7949
    %v8260 = vsel %vm8248, %v8243, %v7951
    %v8261 = vsel %vm8248, %v8244, %v7953
    %v8262 = vsel %vm8248, %v8245, %v7955
    %v8263 = vsel %vm8248, %v8246, %v7957
    %v8264 = vsel %vm8248, %v8247, %v7959
    %vm8265 = vcmask 785408
    %v8266 = vsel %vm8265, %v8249, %v7979
    %v8267 = vsel %vm8265, %v8250, %v7981
    %v8268 = vsel %vm8265, %v8251, %v7983
    %v8269 = vsel %vm8265, %v8252, %v7985
    %v8270 = vsel %vm8265, %v8253, %v7987
    %v8271 = vsel %vm8265, %v8254, %v7989
    %v8272 = vsel %vm8265, %v8255, %v7991
    %v8273 = vsel %vm8265, %v8256, %v7993
    %v8274 = vsel %vm8265, %v8257, %v7995
    %v8275 = vsel %vm8265, %v8258, %v7997
    %v8276 = vsel %vm8265, %v8259, %v7999
    %v8277 = vsel %vm8265, %v8260, %v8001
    %v8278 = vsel %vm8265, %v8261, %v8003
    %v8279 = vsel %vm8265, %v8262, %v8005
    %v8280 = vsel %vm8265, %v8263, %v8007
    %v8281 = vsel %vm8265, %v8264, %v8009
    %v8282 = vsel %vm3517, %v7789, %v8057
    %v8283 = vsel %vm3517, %v7792, %v8059
    %v8284 = vsel %vm3517, %v7795, %v8061
    %v8285 = vsel %vm3517, %v7798, %v8063
    %v8286 = vsel %vm3517, %v7801, %v8065
    %v8287 = vsel %vm3517, %v7804, %v8067
    %v8288 = vsel %vm3517, %v7807, %v8069
    %v8289 = vsel %vm3517, %v8030, %v8071
    %v8290 = vsel %vm3517, %v7813, %v8073
    %v8291 = vsel %vm3517, %v7816, %v8075
    %v8292 = vsel %vm3517, %v7819, %v8077
    %v8293 = vsel %vm3517, %v7822, %v8079
    %v8294 = vsel %vm3517, %v7825, %v8081
    %v8295 = vsel %vm3517, %v7828, %v8083
    %v8296 = vsel %vm3517, %v7831, %v8085
    %v8297 = vsel %vm3517, %v8033, %v8087
    %v8298 = vsel %vm8248, %v8282, %v8107
    %v8299 = vsel %vm8248, %v8283, %v8109
    %v8300 = vsel %vm8248, %v8284, %v8111
    %v8301 = vsel %vm8248, %v8285, %v8113
    %v8302 = vsel %vm8248, %v8286, %v8115
    %v8303 = vsel %vm8248, %v8287, %v8117
    %v8304 = vsel %vm8248, %v8288, %v8119
    %v8305 = vsel %vm8248, %v8289, %v8121
    %v8306 = vsel %vm8248, %v8290, %v8123
    %v8307 = vsel %vm8248, %v8291, %v8125
    %v8308 = vsel %vm8248, %v8292, %v8127
    %v8309 = vsel %vm8248, %v8293, %v8129
    %v8310 = vsel %vm8248, %v8294, %v8131
    %v8311 = vsel %vm8248, %v8295, %v8133
    %v8312 = vsel %vm8248, %v8296, %v8135
    %v8313 = vsel %vm8248, %v8297, %v8137
    %v8314 = vsel %vm8265, %v8298, %v8163
    %v8315 = vsel %vm8265, %v8299, %v8165
    %v8316 = vsel %vm8265, %v8300, %v8167
    %v8317 = vsel %vm8265, %v8301, %v8169
    %v8318 = vsel %vm8265, %v8302, %v8171
    %v8319 = vsel %vm8265, %v8303, %v8173
    %v8320 = vsel %vm8265, %v8304, %v8175
    %v8321 = vsel %vm8265, %v8305, %v8177
    %v8322 = vsel %vm8265, %v8306, %v8179
    %v8323 = vsel %vm8265, %v8307, %v8181
    %v8324 = vsel %vm8265, %v8308, %v8183
    %v8325 = vsel %vm8265, %v8309, %v8185
    %v8326 = vsel %vm8265, %v8310, %v8187
    %v8327 = vsel %vm8265, %v8311, %v8189
    %v8328 = vsel %vm8265, %v8312, %v8191
    %v8329 = vsel %vm8265, %v8313, %v8193
    %v8330 = vpack.c.bf16 %v8267, %v8266
    %v8331 = vpack.c.bf16 %v8315, %v8314
    %v8332 = vpack.c.bf16 %v7891, %v7888
    %v8333 = vpack.c.bf16 %v8269, %v8268
    %v8334 = vpack.c.bf16 %v8317, %v8316
    %v8335 = vpack.c.bf16 %v7897, %v7894
    %v8336 = vpack.c.bf16 %v8271, %v8270
    %v8337 = vpack.c.bf16 %v8319, %v8318
    %v8338 = vpack.c.bf16 %v7903, %v7900
    %v8339 = vpack.c.bf16 %v8273, %v8272
    %v8340 = vpack.c.bf16 %v8321, %v8320
    %v8341 = vpack.c.bf16 %v8212, %v8052
    %v8342 = vpack.c.bf16 %v8275, %v8274
    %v8343 = vpack.c.bf16 %v8323, %v8322
    %v8344 = vpack.c.bf16 %v7915, %v7912
    %v8345 = vpack.c.bf16 %v8277, %v8276
    %v8346 = vpack.c.bf16 %v8325, %v8324
    %v8347 = vpack.c.bf16 %v7921, %v7918
    %v8348 = vpack.c.bf16 %v8279, %v8278
    %v8349 = vpack.c.bf16 %v8327, %v8326
    %v8350 = vpack.c.bf16 %v7927, %v7924
    %v8351 = vpack.c.bf16 %v8281, %v8280
    %v8352 = vpack.c.bf16 %v8329, %v8328
    %v8353 = vpack.c.bf16 %v8215, %v8055
    %v8354 = vld [vmem:[#allocation14] sm:$0xf]
    %v8355 = vld [vmem:[#allocation14 + $0x4] sm:$0xf]
    %v8356 = vld [vmem:[#allocation14 + $0x8] sm:$0xf]
    %v8357 = vld [vmem:[#allocation14 + $0xc] sm:$0xf]
    %v8358 = vld [vmem:[#allocation14 + $0x10] sm:$0xf]
    %v8359 = vld [vmem:[#allocation14 + $0x14] sm:$0xf]
    %v8360 = vld [vmem:[#allocation14 + $0x18] sm:$0xf]
    %v8361 = vld [vmem:[#allocation14 + $0x1c] sm:$0xf]
    %v8362 = vld [vmem:[#allocation14 + $0x20] sm:$0xf]
    %v8363 = vld [vmem:[#allocation14 + $0x24] sm:$0xf]
    %v8364 = vld [vmem:[#allocation14 + $0x28] sm:$0xf]
    %v8365 = vld [vmem:[#allocation14 + $0x2c] sm:$0xf]
    %v8366 = vld [vmem:[#allocation14 + $0x30] sm:$0xf]
    %v8367 = vld [vmem:[#allocation14 + $0x34] sm:$0xf]
    %v8368 = vld [vmem:[#allocation14 + $0x38] sm:$0xf]
    %v8369 = vld [vmem:[#allocation14 + $0x3c] sm:$0xf]
    %v8370 = vld [vmem:[#allocation14 + $0x40] sm:$0xf]
    %v8371 = vld [vmem:[#allocation14 + $0x44] sm:$0xf]
    %v8372 = vld [vmem:[#allocation14 + $0x48] sm:$0xf]
    %v8373 = vld [vmem:[#allocation14 + $0x4c] sm:$0xf]
    %v8374 = vld [vmem:[#allocation14 + $0x50] sm:$0xf]
    %v8375 = vld [vmem:[#allocation14 + $0x54] sm:$0xf]
    %v8376 = vld [vmem:[#allocation14 + $0x58] sm:$0xf]
    %v8377 = vld [vmem:[#allocation14 + $0x5c] sm:$0xf]
    %v8378 = vld [vmem:[#allocation14 + $0x60] sm:$0xf]
    %v8379 = vld [vmem:[#allocation14 + $0x64] sm:$0xf]
    %v8380 = vld [vmem:[#allocation14 + $0x68] sm:$0xf]
    %v8381 = vld [vmem:[#allocation14 + $0x6c] sm:$0xf]
    %v8382 = vld [vmem:[#allocation14 + $0x70] sm:$0xf]
    %v8383 = vld [vmem:[#allocation14 + $0x74] sm:$0xf]
    %v8384 = vld [vmem:[#allocation14 + $0x78] sm:$0xf]
    %v8385 = vld [vmem:[#allocation14 + $0x7c] sm:$0xf]
    %v8386 = vld [vmem:[#allocation14 + $0x80] sm:$0xf]
    %v8387 = vld [vmem:[#allocation14 + $0x84] sm:$0xf]
    %v8388 = vld [vmem:[#allocation14 + $0x88] sm:$0xf]
    %v8389 = vld [vmem:[#allocation14 + $0x8c] sm:$0xf]
    %v8426 = vunpack.c.l.b16 %v8354
    %v8427 = vunpack.c.l.b16 %v8355
    %v8428 = vunpack.c.l.b16 %v8356
    %v8429 = vunpack.c.l.b16 %v8357
    %v8430 = vunpack.c.l.b16 %v8358
    %v8431 = vunpack.c.l.b16 %v8359
    %v8432 = vunpack.c.l.b16 %v8360
    %v8433 = vunpack.c.l.b16 %v8361
    %v8434 = vunpack.c.l.b16 %v8362
    %v8435 = vunpack.c.l.b16 %v8363
    %v8436 = vunpack.c.l.b16 %v8364
    %v8437 = vunpack.c.l.b16 %v8365
    %v8438 = vunpack.c.l.b16 %v8366
    %v8439 = vunpack.c.l.b16 %v8367
    %v8440 = vunpack.c.l.b16 %v8368
    %v8441 = vunpack.c.l.b16 %v8369
    %v8442 = vunpack.c.l.b16 %v8370
    %v8443 = vunpack.c.l.b16 %v8371
    %v8444 = vunpack.c.l.b16 %v8372
    %v8445 = vunpack.c.l.b16 %v8373
    %v8446 = vunpack.c.l.b16 %v8374
    %v8447 = vunpack.c.l.b16 %v8375
    %v8448 = vunpack.c.l.b16 %v8376
    %v8449 = vunpack.c.l.b16 %v8377
    %v8450 = vunpack.c.l.b16 %v8378
    %v8451 = vunpack.c.l.b16 %v8379
    %v8452 = vunpack.c.l.b16 %v8380
    %v8453 = vunpack.c.l.b16 %v8381
    %v8454 = vunpack.c.l.b16 %v8382
    %v8455 = vunpack.c.l.b16 %v8383
    %v8456 = vunpack.c.l.b16 %v8384
    %v8457 = vunpack.c.l.b16 %v8385
    %v8458 = vunpack.c.l.b16 %v8386
    %v8459 = vunpack.c.l.b16 %v8387
    %v8460 = vunpack.c.l.b16 %v8388
    %v8461 = vunpack.c.l.b16 %v8389
    %v8462 = vpack.c.b16 %v8427, %v8426
    %v8463 = vpack.c.b16 %v8429, %v8428
    %v8464 = vpack.c.b16 %v8431, %v8430
    %v8465 = vpack.c.b16 %v8433, %v8432
    %v8466 = vpack.c.b16 %v8435, %v8434
    %v8467 = vpack.c.b16 %v8437, %v8436
    %v8468 = vpack.c.b16 %v8439, %v8438
    %v8469 = vpack.c.b16 %v8441, %v8440
    %v8470 = vpack.c.b16 %v8443, %v8442
    %v8471 = vpack.c.b16 %v8445, %v8444
    %v8472 = vpack.c.b16 %v8447, %v8446
    %v8473 = vpack.c.b16 %v8449, %v8448
    %v8474 = vpack.c.b16 %v8451, %v8450
    %v8475 = vpack.c.b16 %v8453, %v8452
    %v8476 = vpack.c.b16 %v8455, %v8454
    %v8477 = vpack.c.b16 %v8457, %v8456
    %v8478 = vpack.c.b16 %v8459, %v8458
    %v8479 = vpack.c.b16 %v8461, %v8460
    %v8499 = vsel %vm3517, %v8332, 0
    %v8502 = vsel %vm3517, %v8335, 0
    %v8505 = vsel %vm3517, %v8338, 0
    %v8508 = vsel %vm3517, %v8341, 0
    %v8511 = vsel %vm3517, %v8344, 0
    %v8514 = vsel %vm3517, %v8347, 0
    %v8517 = vsel %vm3517, %v8350, 0
    %v8520 = vsel %vm3517, %v8353, 0
    %8522 = vmatprep.subr.bf16.mxu0 0
    %8523 = vmatpush1.bf16.msra.mxu0 %v8462
    %8524 = vmatprep.subr.bf16.mxu0 0
    %8525 = vmatpush1.bf16.msra.mxu0 %v8463
    %8526 = vmatprep.subr.bf16.mxu0 0
    %8527 = vmatpush1.bf16.msra.mxu0 %v8464
    %8528 = vmatprep.subr.bf16.mxu0 0
    %8529 = vmatpush1.bf16.msra.mxu0 %v8465
    %8530 = vmatprep.subr.bf16.mxu0 0
    %8531 = vmatpush1.bf16.msra.mxu0 %v8466
    %8532 = vmatprep.subr.bf16.mxu0 0
    %8533 = vmatpush1.bf16.msra.mxu0 %v8467
    %8534 = vmatprep.subr.bf16.mxu0 0
    %8535 = vmatpush1.bf16.msra.mxu0 %v8468
    %8536 = vmatprep.subr.bf16.mxu0 0
    %8537 = vmatpush1.bf16.msra.mxu0 %v8469
    %8538 = vmatprep.subr.bf16.mxu0 0
    %8539 = vmatpush1.bf16.msra.mxu0 %v8470
    %8540 = vmatprep.subr.bf16.mxu0 0
    %8541 = vmatpush1.bf16.msra.mxu0 %v8471
    %8542 = vmatprep.subr.bf16.mxu0 0
    %8543 = vmatpush1.bf16.msra.mxu0 %v8472
    %8544 = vmatprep.subr.bf16.mxu0 0
    %8545 = vmatpush1.bf16.msra.mxu0 %v8473
    %8546 = vmatprep.subr.bf16.mxu0 0
    %8547 = vmatpush1.bf16.msra.mxu0 %v8474
    %8548 = vmatprep.subr.bf16.mxu0 0
    %8549 = vmatpush1.bf16.msra.mxu0 %v8475
    %8550 = vmatprep.subr.bf16.mxu0 0
    %8551 = vmatpush1.bf16.msra.mxu0 %v8476
    %8552 = vmatprep.subr.bf16.mxu0 0
    %8553 = vmatpush1.bf16.msra.mxu0 %v8477
    %8554 = vmatprep.mubr.bf16.mxu0 %v8331
    %8555 = vmatmul.mubr.bf16.gmra.mrb[0].mxu0 %v8330
    %v8556 = vpop.f32.mrb[0].mxu0
    %v8557 = vadd.f32 0.0, %v8556
    %v8558 = vpop.f32.mrb[0].mxu0
    %v8559 = vpop.f32.mrb[0].mxu0
    %v8560 = vadd.f32 0.0, %v8559
    %v8561 = vpop.f32.mrb[0].mxu0
    %8562 = vmatprep.mubr.bf16.mxu0 %v8334
    %8563 = vmatmul.mubr.bf16.gmra.mrb[0].mxu0 %v8333
    %v8564 = vpop.f32.mrb[0].mxu0
    %v8565 = vadd.f32 0.0, %v8564
    %v8566 = vpop.f32.mrb[0].mxu0
    %v8567 = vpop.f32.mrb[0].mxu0
    %v8568 = vadd.f32 0.0, %v8567
    %v8569 = vpop.f32.mrb[0].mxu0
    %8570 = vmatprep.mubr.bf16.mxu0 %v8337
    %8571 = vmatmul.mubr.bf16.gmra.mrb[0].mxu0 %v8336
    %v8572 = vpop.f32.mrb[0].mxu0
    %v8573 = vadd.f32 0.0, %v8572
    %v8574 = vpop.f32.mrb[0].mxu0
    %v8575 = vpop.f32.mrb[0].mxu0
    %v8576 = vadd.f32 0.0, %v8575
    %v8577 = vpop.f32.mrb[0].mxu0
    %8578 = vmatprep.mubr.bf16.mxu0 %v8340
    %8579 = vmatmul.mubr.bf16.gmra.mrb[0].mxu0 %v8339
    %v8580 = vpop.f32.mrb[0].mxu0
    %v8581 = vadd.f32 0.0, %v8580
    %v8582 = vpop.f32.mrb[0].mxu0
    %v8583 = vpop.f32.mrb[0].mxu0
    %v8584 = vadd.f32 0.0, %v8583
    %v8585 = vpop.f32.mrb[0].mxu0
    %8586 = vmatprep.mubr.bf16.mxu0 %v8343
    %8587 = vmatmul.mubr.bf16.gmra.mrb[0].mxu0 %v8342
    %v8588 = vpop.f32.mrb[0].mxu0
    %v8589 = vadd.f32 0.0, %v8588
    %v8590 = vpop.f32.mrb[0].mxu0
    %v8591 = vpop.f32.mrb[0].mxu0
    %v8592 = vadd.f32 0.0, %v8591
    %v8593 = vpop.f32.mrb[0].mxu0
    %8594 = vmatprep.mubr.bf16.mxu0 %v8346
    %8595 = vmatmul.mubr.bf16.gmra.mrb[0].mxu0 %v8345
    %v8596 = vpop.f32.mrb[0].mxu0
    %v8597 = vadd.f32 0.0, %v8596
    %v8598 = vpop.f32.mrb[0].mxu0
    %v8599 = vpop.f32.mrb[0].mxu0
    %v8600 = vadd.f32 0.0, %v8599
    %v8601 = vpop.f32.mrb[0].mxu0
    %8602 = vmatprep.mubr.bf16.mxu0 %v8349
    %8603 = vmatmul.mubr.bf16.gmra.mrb[0].mxu0 %v8348
    %v8604 = vpop.f32.mrb[0].mxu0
    %v8605 = vadd.f32 0.0, %v8604
    %v8606 = vpop.f32.mrb[0].mxu0
    %v8607 = vpop.f32.mrb[0].mxu0
    %v8608 = vadd.f32 0.0, %v8607
    %v8609 = vpop.f32.mrb[0].mxu0
    %8610 = vmatprep.mubr.bf16.mxu0 %v8352
    %8611 = vmatmul.mubr.bf16.gmra.mrb[0].mxu0 %v8351
    %v8612 = vpop.f32.mrb[0].mxu0
    %v8613 = vadd.f32 0.0, %v8612
    %v8614 = vpop.f32.mrb[0].mxu0
    %v8615 = vpop.f32.mrb[0].mxu0
    %v8616 = vadd.f32 0.0, %v8615
    %v8617 = vpop.f32.mrb[0].mxu0
    %8618 = vdwg.mxu0
    %8619 = vmatprep.subr.bf16.mxu0 0
    %8620 = vmatpush1.bf16.msra.mxu0 %v8478
    %8621 = vmatprep.subr.bf16.mxu0 0
    %8622 = vmatpush1.bf16.msra.mxu0 %v8479
    %8623 = vmatprep.subr.bf16.mxu0 0
    %8624 = vmatpush1.bf16.msra.mxu0 0
    %8625 = vmatprep.subr.bf16.mxu0 0
    %8626 = vmatpush1.bf16.msra.mxu0 0
    %8627 = vmatprep.subr.bf16.mxu0 0
    %8628 = vmatpush1.bf16.msra.mxu0 0
    %8629 = vmatprep.subr.bf16.mxu0 0
    %8630 = vmatpush1.bf16.msra.mxu0 0
    %8631 = vmatprep.subr.bf16.mxu0 0
    %8632 = vmatpush1.bf16.msra.mxu0 0
    %8633 = vmatprep.subr.bf16.mxu0 0
    %8634 = vmatpush1.bf16.msra.mxu0 0
    %8635 = vmatprep.subr.bf16.mxu0 0
    %8636 = vmatpush1.bf16.msra.mxu0 0
    %8637 = vmatprep.subr.bf16.mxu0 0
    %8638 = vmatpush1.bf16.msra.mxu0 0
    %8639 = vmatprep.subr.bf16.mxu0 0
    %8640 = vmatpush1.bf16.msra.mxu0 0
    %8641 = vmatprep.subr.bf16.mxu0 0
    %8642 = vmatpush1.bf16.msra.mxu0 0
    %8643 = vmatprep.subr.bf16.mxu0 0
    %8644 = vmatpush1.bf16.msra.mxu0 0
    %8645 = vmatprep.subr.bf16.mxu0 0
    %8646 = vmatpush1.bf16.msra.mxu0 0
    %8647 = vmatprep.subr.bf16.mxu0 0
    %8648 = vmatpush1.bf16.msra.mxu0 0
    %8649 = vmatprep.subr.bf16.mxu0 0
    %8650 = vmatpush1.bf16.msra.mxu0 0
    %8651 = vmatprep.mubr.bf16.mxu0 0
    %8652 = vmatmul.mubr.bf16.gmra.mrb[0].mxu0 %v8499
    %v8653 = vpop.f32.mrb[0].mxu0
    %v8654 = vadd.f32 %v8557, %v8653
    %v8655 = vpop.f32.mrb[0].mxu0
    %v8656 = vpop.f32.mrb[0].mxu0
    %v8657 = vadd.f32 %v8560, %v8656
    %v8658 = vpop.f32.mrb[0].mxu0
    %8659 = vmatprep.mubr.bf16.mxu0 0
    %8660 = vmatmul.mubr.bf16.gmra.mrb[0].mxu0 %v8502
    %v8661 = vpop.f32.mrb[0].mxu0
    %v8662 = vadd.f32 %v8565, %v8661
    %v8663 = vpop.f32.mrb[0].mxu0
    %v8664 = vpop.f32.mrb[0].mxu0
    %v8665 = vadd.f32 %v8568, %v8664
    %v8666 = vpop.f32.mrb[0].mxu0
    %8667 = vmatprep.mubr.bf16.mxu0 0
    %8668 = vmatmul.mubr.bf16.gmra.mrb[0].mxu0 %v8505
    %v8669 = vpop.f32.mrb[0].mxu0
    %v8670 = vadd.f32 %v8573, %v8669
    %v8671 = vpop.f32.mrb[0].mxu0
    %v8672 = vpop.f32.mrb[0].mxu0
    %v8673 = vadd.f32 %v8576, %v8672
    %v8674 = vpop.f32.mrb[0].mxu0
    %8675 = vmatprep.mubr.bf16.mxu0 0
    %8676 = vmatmul.mubr.bf16.gmra.mrb[0].mxu0 %v8508
    %v8677 = vpop.f32.mrb[0].mxu0
    %v8678 = vadd.f32 %v8581, %v8677
    %v8679 = vpop.f32.mrb[0].mxu0
    %v8680 = vpop.f32.mrb[0].mxu0
    %v8681 = vadd.f32 %v8584, %v8680
    %v8682 = vpop.f32.mrb[0].mxu0
    %8683 = vmatprep.mubr.bf16.mxu0 0
    %8684 = vmatmul.mubr.bf16.gmra.mrb[0].mxu0 %v8511
    %v8685 = vpop.f32.mrb[0].mxu0
    %v8686 = vadd.f32 %v8589, %v8685
    %v8687 = vpop.f32.mrb[0].mxu0
    %v8688 = vpop.f32.mrb[0].mxu0
    %v8689 = vadd.f32 %v8592, %v8688
    %v8690 = vpop.f32.mrb[0].mxu0
    %8691 = vmatprep.mubr.bf16.mxu0 0
    %8692 = vmatmul.mubr.bf16.gmra.mrb[0].mxu0 %v8514
    %v8693 = vpop.f32.mrb[0].mxu0
    %v8694 = vadd.f32 %v8597, %v8693
    %v8695 = vpop.f32.mrb[0].mxu0
    %v8696 = vpop.f32.mrb[0].mxu0
    %v8697 = vadd.f32 %v8600, %v8696
    %v8698 = vpop.f32.mrb[0].mxu0
    %8699 = vmatprep.mubr.bf16.mxu0 0
    %8700 = vmatmul.mubr.bf16.gmra.mrb[0].mxu0 %v8517
    %v8701 = vpop.f32.mrb[0].mxu0
    %v8702 = vadd.f32 %v8605, %v8701
    %v8703 = vpop.f32.mrb[0].mxu0
    %v8704 = vpop.f32.mrb[0].mxu0
    %v8705 = vadd.f32 %v8608, %v8704
    %v8706 = vpop.f32.mrb[0].mxu0
    %8707 = vmatprep.mubr.bf16.mxu0 0
    %8708 = vmatmul.mubr.bf16.gmra.mrb[0].mxu0 %v8520
    %v8709 = vpop.f32.mrb[0].mxu0
    %v8710 = vadd.f32 %v8613, %v8709
    %v8711 = vpop.f32.mrb[0].mxu0
    %v8712 = vpop.f32.mrb[0].mxu0
    %v8713 = vadd.f32 %v8616, %v8712
    %v8714 = vpop.f32.mrb[0].mxu0
    %8715 = vdwg.mxu0
    %v8716 = vsel %vm3517, %v8654, 0.0
    %v8717 = vsel %vm3517, %v8657, 0.0
    %v8718 = vadd.f32 %v8716, %v8717
    %v8719 = vsel %vm3517, %v8662, 0.0
    %v8720 = vadd.f32 %v8718, %v8719
    %v8721 = vsel %vm3517, %v8665, 0.0
    %v8722 = vadd.f32 %v8720, %v8721
    %v8723 = vsel %vm3517, %v8670, 0.0
    %v8724 = vadd.f32 %v8722, %v8723
    %v8725 = vsel %vm3517, %v8673, 0.0
    %v8726 = vadd.f32 %v8724, %v8725
    %v8727 = vsel %vm3517, %v8678, 0.0
    %v8728 = vadd.f32 %v8726, %v8727
    %v8729 = vsel %vm3517, %v8681, 0.0
    %v8730 = vadd.f32 %v8728, %v8729
    %v8731 = vsel %vm3517, %v8686, 0.0
    %v8732 = vadd.f32 %v8730, %v8731
    %v8733 = vsel %vm3517, %v8689, 0.0
    %v8734 = vadd.f32 %v8732, %v8733
    %v8735 = vsel %vm3517, %v8694, 0.0
    %v8736 = vadd.f32 %v8734, %v8735
    %v8737 = vsel %vm3517, %v8697, 0.0
    %v8738 = vadd.f32 %v8736, %v8737
    %v8739 = vsel %vm3517, %v8702, 0.0
    %v8740 = vadd.f32 %v8738, %v8739
    %v8741 = vsel %vm3517, %v8705, 0.0
    %v8742 = vadd.f32 %v8740, %v8741
    %v8743 = vsel %vm3517, %v8710, 0.0
    %v8744 = vadd.f32 %v8742, %v8743
    %v8745 = vsel %vm3517, %v8713, 0.0
    %v8746 = vadd.f32 %v8744, %v8745
    %v8747 = vrot.slane %v8746, 4
    %v8748 = vadd.f32 %v8746, %v8747
    %v8749 = vrot.slane %v8748, 2
    %v8750 = vadd.f32 %v8748, %v8749
    %v8751 = vrot.slane %v8750, 1
    %v8752 = vadd.f32 %v8750, %v8751
    %v8753 = vmul.f32 %v8752, 0.0078125
    %v8754 = vmul.f32 %v8654, %v8654
    %v8755 = vmul.f32 %v8657, %v8657
    %v8756 = vmul.f32 %v8662, %v8662
    %v8757 = vmul.f32 %v8665, %v8665
    %v8758 = vmul.f32 %v8670, %v8670
    %v8759 = vmul.f32 %v8673, %v8673
    %v8760 = vmul.f32 %v8678, %v8678
    %v8761 = vmul.f32 %v8681, %v8681
    %v8762 = vmul.f32 %v8686, %v8686
    %v8763 = vmul.f32 %v8689, %v8689
    %v8764 = vmul.f32 %v8694, %v8694
    %v8765 = vmul.f32 %v8697, %v8697
    %v8766 = vmul.f32 %v8702, %v8702
    %v8767 = vmul.f32 %v8705, %v8705
    %v8768 = vmul.f32 %v8710, %v8710
    %v8769 = vmul.f32 %v8713, %v8713
    %v8770 = vsel %vm3517, %v8754, 0.0
    %v8771 = vsel %vm3517, %v8755, 0.0
    %v8772 = vadd.f32 %v8770, %v8771
    %v8773 = vsel %vm3517, %v8756, 0.0
    %v8774 = vadd.f32 %v8772, %v8773
    %v8775 = vsel %vm3517, %v8757, 0.0
    %v8776 = vadd.f32 %v8774, %v8775
    %v8777 = vsel %vm3517, %v8758, 0.0
    %v8778 = vadd.f32 %v8776, %v8777
    %v8779 = vsel %vm3517, %v8759, 0.0
    %v8780 = vadd.f32 %v8778, %v8779
    %v8781 = vsel %vm3517, %v8760, 0.0
    %v8782 = vadd.f32 %v8780, %v8781
    %v8783 = vsel %vm3517, %v8761, 0.0
    %v8784 = vadd.f32 %v8782, %v8783
    %v8785 = vsel %vm3517, %v8762, 0.0
    %v8786 = vadd.f32 %v8784, %v8785
    %v8787 = vsel %vm3517, %v8763, 0.0
    %v8788 = vadd.f32 %v8786, %v8787
    %v8789 = vsel %vm3517, %v8764, 0.0
    %v8790 = vadd.f32 %v8788, %v8789
    %v8791 = vsel %vm3517, %v8765, 0.0
    %v8792 = vadd.f32 %v8790, %v8791
    %v8793 = vsel %vm3517, %v8766, 0.0
    %v8794 = vadd.f32 %v8792, %v8793
    %v8795 = vsel %vm3517, %v8767, 0.0
    %v8796 = vadd.f32 %v8794, %v8795
    %v8797 = vsel %vm3517, %v8768, 0.0
    %v8798 = vadd.f32 %v8796, %v8797
    %v8799 = vsel %vm3517, %v8769, 0.0
    %v8800 = vadd.f32 %v8798, %v8799
    %v8801 = vrot.slane %v8800, 4
    %v8802 = vadd.f32 %v8800, %v8801
    %v8803 = vrot.slane %v8802, 2
    %v8804 = vadd.f32 %v8802, %v8803
    %v8805 = vrot.slane %v8804, 1
    %v8806 = vadd.f32 %v8804, %v8805
    %v8807 = vmul.f32 %v8806, 0.0078125
    %v8808 = vmul.f32 %v8753, %v8753
    %v8809 = vsub.f32 %v8807, %v8808
    %v8810 = vld [vmem:[#allocation15] sm:$0x1]
    %v8811 = vadd.f32 %v8809, 1e-05
    %v8812 = vrsqrt.pop %v8811
    %v8813 = vmul.f32 %v8810, %v8812
    %v8814 = vld [vmem:[#allocation17] sm:$0x1]
    %v8815 = vmul.f32 %v8753, %v8813
    %v8816 = vsub.f32 %v8814, %v8815
    %v8818 = vlaneseq
    %v8819 = vshrl.u32 %v8818, 7
    %v8820 = vsub.s32 0, %v8819
    %v8821 = vrot.slane %v8813, %v8820
    %v8823 = vmul.f32 %v8654, %v8821
    %v8824 = vmul.f32 %v8657, %v8821
    %v8825 = vmul.f32 %v8662, %v8821
    %v8826 = vmul.f32 %v8665, %v8821
    %v8827 = vmul.f32 %v8670, %v8821
    %v8828 = vmul.f32 %v8673, %v8821
    %v8829 = vmul.f32 %v8678, %v8821
    %v8830 = vmul.f32 %v8681, %v8821
    %v8831 = vmul.f32 %v8686, %v8821
    %v8832 = vmul.f32 %v8689, %v8821
    %v8833 = vmul.f32 %v8694, %v8821
    %v8834 = vmul.f32 %v8697, %v8821
    %v8835 = vmul.f32 %v8702, %v8821
    %v8836 = vmul.f32 %v8705, %v8821
    %v8837 = vmul.f32 %v8710, %v8821
    %v8838 = vmul.f32 %v8713, %v8821
    %v8840 = vlaneseq
    %v8841 = vshrl.u32 %v8840, 7
    %v8842 = vsub.s32 0, %v8841
    %v8843 = vrot.slane %v8816, %v8842
    %v8845 = vadd.f32 %v8823, %v8843
    %v8846 = vadd.f32 %v8824, %v8843
    %v8847 = vadd.f32 %v8825, %v8843
    %v8848 = vadd.f32 %v8826, %v8843
    %v8849 = vadd.f32 %v8827, %v8843
    %v8850 = vadd.f32 %v8828, %v8843
    %v8851 = vadd.f32 %v8829, %v8843
    %v8852 = vadd.f32 %v8830, %v8843
    %v8853 = vadd.f32 %v8831, %v8843
    %v8854 = vadd.f32 %v8832, %v8843
    %v8855 = vadd.f32 %v8833, %v8843
    %v8856 = vadd.f32 %v8834, %v8843
    %v8857 = vadd.f32 %v8835, %v8843
    %v8858 = vadd.f32 %v8836, %v8843
    %v8859 = vadd.f32 %v8837, %v8843
    %v8860 = vadd.f32 %v8838, %v8843
    %v8861 = vmax.f32 %v8845, 0.0
    %v8862 = vmax.f32 %v8846, 0.0
    %v8863 = vmax.f32 %v8847, 0.0
    %v8864 = vmax.f32 %v8848, 0.0
    %v8865 = vmax.f32 %v8849, 0.0
    %v8866 = vmax.f32 %v8850, 0.0
    %v8867 = vmax.f32 %v8851, 0.0
    %v8868 = vmax.f32 %v8852, 0.0
    %v8869 = vmax.f32 %v8853, 0.0
    %v8870 = vmax.f32 %v8854, 0.0
    %v8871 = vmax.f32 %v8855, 0.0
    %v8872 = vmax.f32 %v8856, 0.0
    %v8873 = vmax.f32 %v8857, 0.0
    %v8874 = vmax.f32 %v8858, 0.0
    %v8875 = vmax.f32 %v8859, 0.0
    %v8876 = vmax.f32 %v8860, 0.0
    %v8893 = vcombine.high %v8861, %v8861
    %v8895 = vunpack.c.l.s4 1983009808
    %v8896 = vunpack.c.0.s8 %v8895
    %v8897 = vlaneseq
    %v8898 = vshrl.u32 %v8897, 7
    %v8899 = vsub.s32 %v8896, %v8898
    %v8900 = vrot.slane %v8861, %v8899
    %v8902 = vunpack.c.l.s4 1983009808
    %v8903 = vunpack.c.0.s8 %v8902
    %v8904 = vlaneseq
    %v8905 = vshrl.u32 %v8904, 7
    %v8906 = vsub.s32 %v8903, %v8905
    %v8907 = vrot.slane %v8893, %v8906
    %v8908 = vcombine.high %v8900, %v8900
    %v8909 = vcombine.high %v8907, %v8907
    %v8910 = vcombine.high %v8862, %v8862
    %v8912 = vunpack.c.l.s4 1983009808
    %v8913 = vunpack.c.0.s8 %v8912
    %v8914 = vlaneseq
    %v8915 = vshrl.u32 %v8914, 7
    %v8916 = vsub.s32 %v8913, %v8915
    %v8917 = vrot.slane %v8862, %v8916
    %v8919 = vunpack.c.l.s4 1983009808
    %v8920 = vunpack.c.0.s8 %v8919
    %v8921 = vlaneseq
    %v8922 = vshrl.u32 %v8921, 7
    %v8923 = vsub.s32 %v8920, %v8922
    %v8924 = vrot.slane %v8910, %v8923
    %v8925 = vcombine.high %v8917, %v8917
    %v8926 = vcombine.high %v8924, %v8924
    %v8927 = vcombine.high %v8863, %v8863
    %v8929 = vunpack.c.l.s4 1983009808
    %v8930 = vunpack.c.0.s8 %v8929
    %v8931 = vlaneseq
    %v8932 = vshrl.u32 %v8931, 7
    %v8933 = vsub.s32 %v8930, %v8932
    %v8934 = vrot.slane %v8863, %v8933
    %v8936 = vunpack.c.l.s4 1983009808
    %v8937 = vunpack.c.0.s8 %v8936
    %v8938 = vlaneseq
    %v8939 = vshrl.u32 %v8938, 7
    %v8940 = vsub.s32 %v8937, %v8939
    %v8941 = vrot.slane %v8927, %v8940
    %v8942 = vcombine.high %v8934, %v8934
    %v8943 = vcombine.high %v8941, %v8941
    %v8944 = vcombine.high %v8864, %v8864
    %v8946 = vunpack.c.l.s4 1983009808
    %v8947 = vunpack.c.0.s8 %v8946
    %v8948 = vlaneseq
    %v8949 = vshrl.u32 %v8948, 7
    %v8950 = vsub.s32 %v8947, %v8949
    %v8951 = vrot.slane %v8864, %v8950
    %v8953 = vunpack.c.l.s4 1983009808
    %v8954 = vunpack.c.0.s8 %v8953
    %v8955 = vlaneseq
    %v8956 = vshrl.u32 %v8955, 7
    %v8957 = vsub.s32 %v8954, %v8956
    %v8958 = vrot.slane %v8944, %v8957
    %v8959 = vcombine.high %v8951, %v8951
    %v8960 = vcombine.high %v8958, %v8958
    %v8961 = vcombine.high %v8865, %v8865
    %v8963 = vunpack.c.l.s4 1983009808
    %v8964 = vunpack.c.0.s8 %v8963
    %v8965 = vlaneseq
    %v8966 = vshrl.u32 %v8965, 7
    %v8967 = vsub.s32 %v8964, %v8966
    %v8968 = vrot.slane %v8865, %v8967
    %v8970 = vunpack.c.l.s4 1983009808
    %v8971 = vunpack.c.0.s8 %v8970
    %v8972 = vlaneseq
    %v8973 = vshrl.u32 %v8972, 7
    %v8974 = vsub.s32 %v8971, %v8973
    %v8975 = vrot.slane %v8961, %v8974
    %v8976 = vcombine.high %v8968, %v8968
    %v8977 = vcombine.high %v8975, %v8975
    %v8978 = vcombine.high %v8866, %v8866
    %v8980 = vunpack.c.l.s4 1983009808
    %v8981 = vunpack.c.0.s8 %v8980
    %v8982 = vlaneseq
    %v8983 = vshrl.u32 %v8982, 7
    %v8984 = vsub.s32 %v8981, %v8983
    %v8985 = vrot.slane %v8866, %v8984
    %v8987 = vunpack.c.l.s4 1983009808
    %v8988 = vunpack.c.0.s8 %v8987
    %v8989 = vlaneseq
    %v8990 = vshrl.u32 %v8989, 7
    %v8991 = vsub.s32 %v8988, %v8990
    %v8992 = vrot.slane %v8978, %v8991
    %v8993 = vcombine.high %v8985, %v8985
    %v8994 = vcombine.high %v8992, %v8992
    %v8995 = vcombine.high %v8867, %v8867
    %v8997 = vunpack.c.l.s4 1983009808
    %v8998 = vunpack.c.0.s8 %v8997
    %v8999 = vlaneseq
    %v9000 = vshrl.u32 %v8999, 7
    %v9001 = vsub.s32 %v8998, %v9000
    %v9002 = vrot.slane %v8867, %v9001
    %v9004 = vunpack.c.l.s4 1983009808
    %v9005 = vunpack.c.0.s8 %v9004
    %v9006 = vlaneseq
    %v9007 = vshrl.u32 %v9006, 7
    %v9008 = vsub.s32 %v9005, %v9007
    %v9009 = vrot.slane %v8995, %v9008
    %v9010 = vcombine.high %v9002, %v9002
    %v9011 = vcombine.high %v9009, %v9009
    %v9012 = vcombine.high %v8868, %v8868
    %v9014 = vunpack.c.l.s4 1983009808
    %v9015 = vunpack.c.0.s8 %v9014
    %v9016 = vlaneseq
    %v9017 = vshrl.u32 %v9016, 7
    %v9018 = vsub.s32 %v9015, %v9017
    %v9019 = vrot.slane %v8868, %v9018
    %v9021 = vunpack.c.l.s4 1983009808
    %v9022 = vunpack.c.0.s8 %v9021
    %v9023 = vlaneseq
    %v9024 = vshrl.u32 %v9023, 7
    %v9025 = vsub.s32 %v9022, %v9024
    %v9026 = vrot.slane %v9012, %v9025
    %v9027 = vcombine.high %v9019, %v9019
    %v9028 = vcombine.high %v9026, %v9026
    %v9029 = vcombine.high %v8869, %v8869
    %v9031 = vunpack.c.l.s4 1983009808
    %v9032 = vunpack.c.0.s8 %v9031
    %v9033 = vlaneseq
    %v9034 = vshrl.u32 %v9033, 7
    %v9035 = vsub.s32 %v9032, %v9034
    %v9036 = vrot.slane %v8869, %v9035
    %v9038 = vunpack.c.l.s4 1983009808
    %v9039 = vunpack.c.0.s8 %v9038
    %v9040 = vlaneseq
    %v9041 = vshrl.u32 %v9040, 7
    %v9042 = vsub.s32 %v9039, %v9041
    %v9043 = vrot.slane %v9029, %v9042
    %v9044 = vcombine.high %v9036, %v9036
    %v9045 = vcombine.high %v9043, %v9043
    %v9046 = vcombine.high %v8870, %v8870
    %v9048 = vunpack.c.l.s4 1983009808
    %v9049 = vunpack.c.0.s8 %v9048
    %v9050 = vlaneseq
    %v9051 = vshrl.u32 %v9050, 7
    %v9052 = vsub.s32 %v9049, %v9051
    %v9053 = vrot.slane %v8870, %v9052
    %v9055 = vunpack.c.l.s4 1983009808
    %v9056 = vunpack.c.0.s8 %v9055
    %v9057 = vlaneseq
    %v9058 = vshrl.u32 %v9057, 7
    %v9059 = vsub.s32 %v9056, %v9058
    %v9060 = vrot.slane %v9046, %v9059
    %v9061 = vcombine.high %v9053, %v9053
    %v9062 = vcombine.high %v9060, %v9060
    %v9063 = vcombine.high %v8871, %v8871
    %v9065 = vunpack.c.l.s4 1983009808
    %v9066 = vunpack.c.0.s8 %v9065
    %v9067 = vlaneseq
    %v9068 = vshrl.u32 %v9067, 7
    %v9069 = vsub.s32 %v9066, %v9068
    %v9070 = vrot.slane %v8871, %v9069
    %v9072 = vunpack.c.l.s4 1983009808
    %v9073 = vunpack.c.0.s8 %v9072
    %v9074 = vlaneseq
    %v9075 = vshrl.u32 %v9074, 7
    %v9076 = vsub.s32 %v9073, %v9075
    %v9077 = vrot.slane %v9063, %v9076
    %v9078 = vcombine.high %v9070, %v9070
    %v9079 = vcombine.high %v9077, %v9077
    %v9080 = vcombine.high %v8872, %v8872
    %v9082 = vunpack.c.l.s4 1983009808
    %v9083 = vunpack.c.0.s8 %v9082
    %v9084 = vlaneseq
    %v9085 = vshrl.u32 %v9084, 7
    %v9086 = vsub.s32 %v9083, %v9085
    %v9087 = vrot.slane %v8872, %v9086
    %v9089 = vunpack.c.l.s4 1983009808
    %v9090 = vunpack.c.0.s8 %v9089
    %v9091 = vlaneseq
    %v9092 = vshrl.u32 %v9091, 7
    %v9093 = vsub.s32 %v9090, %v9092
    %v9094 = vrot.slane %v9080, %v9093
    %v9095 = vcombine.high %v9087, %v9087
    %v9096 = vcombine.high %v9094, %v9094
    %v9097 = vcombine.high %v8873, %v8873
    %v9099 = vunpack.c.l.s4 1983009808
    %v9100 = vunpack.c.0.s8 %v9099
    %v9101 = vlaneseq
    %v9102 = vshrl.u32 %v9101, 7
    %v9103 = vsub.s32 %v9100, %v9102
    %v9104 = vrot.slane %v8873, %v9103
    %v9106 = vunpack.c.l.s4 1983009808
    %v9107 = vunpack.c.0.s8 %v9106
    %v9108 = vlaneseq
    %v9109 = vshrl.u32 %v9108, 7
    %v9110 = vsub.s32 %v9107, %v9109
    %v9111 = vrot.slane %v9097, %v9110
    %v9112 = vcombine.high %v9104, %v9104
    %v9113 = vcombine.high %v9111, %v9111
    %v9114 = vcombine.high %v8874, %v8874
    %v9116 = vunpack.c.l.s4 1983009808
    %v9117 = vunpack.c.0.s8 %v9116
    %v9118 = vlaneseq
    %v9119 = vshrl.u32 %v9118, 7
    %v9120 = vsub.s32 %v9117, %v9119
    %v9121 = vrot.slane %v8874, %v9120
    %v9123 = vunpack.c.l.s4 1983009808
    %v9124 = vunpack.c.0.s8 %v9123
    %v9125 = vlaneseq
    %v9126 = vshrl.u32 %v9125, 7
    %v9127 = vsub.s32 %v9124, %v9126
    %v9128 = vrot.slane %v9114, %v9127
    %v9129 = vcombine.high %v9121, %v9121
    %v9130 = vcombine.high %v9128, %v9128
    %v9131 = vcombine.high %v8875, %v8875
    %v9133 = vunpack.c.l.s4 1983009808
    %v9134 = vunpack.c.0.s8 %v9133
    %v9135 = vlaneseq
    %v9136 = vshrl.u32 %v9135, 7
    %v9137 = vsub.s32 %v9134, %v9136
    %v9138 = vrot.slane %v8875, %v9137
    %v9140 = vunpack.c.l.s4 1983009808
    %v9141 = vunpack.c.0.s8 %v9140
    %v9142 = vlaneseq
    %v9143 = vshrl.u32 %v9142, 7
    %v9144 = vsub.s32 %v9141, %v9143
    %v9145 = vrot.slane %v9131, %v9144
    %v9146 = vcombine.high %v9138, %v9138
    %v9147 = vcombine.high %v9145, %v9145
    %v9148 = vcombine.high %v8876, %v8876
    %v9150 = vunpack.c.l.s4 1983009808
    %v9151 = vunpack.c.0.s8 %v9150
    %v9152 = vlaneseq
    %v9153 = vshrl.u32 %v9152, 7
    %v9154 = vsub.s32 %v9151, %v9153
    %v9155 = vrot.slane %v8876, %v9154
    %v9157 = vunpack.c.l.s4 1983009808
    %v9158 = vunpack.c.0.s8 %v9157
    %v9159 = vlaneseq
    %v9160 = vshrl.u32 %v9159, 7
    %v9161 = vsub.s32 %v9158, %v9160
    %v9162 = vrot.slane %v9148, %v9161
    %v9163 = vcombine.high %v9155, %v9155
    %v9164 = vcombine.high %v9162, %v9162
    %v9229 = vsel %vm5471, %v8900, -inf
    %v9230 = vrot.slane %v9229, 4
    %v9231 = vmax.f32 %v9229, %v9230
    %v9232 = vrot.slane %v9231, 2
    %v9233 = vmax.f32 %v9231, %v9232
    %v9234 = vrot.slane %v9233, 1
    %v9235 = vmax.f32 %v9233, %v9234
    %v9236 = vsel %vm5471, %v8908, -inf
    %v9237 = vrot.slane %v9236, 4
    %v9238 = vmax.f32 %v9236, %v9237
    %v9239 = vrot.slane %v9238, 2
    %v9240 = vmax.f32 %v9238, %v9239
    %v9241 = vrot.slane %v9240, 1
    %v9242 = vmax.f32 %v9240, %v9241
    %v9243 = vsel %vm5471, %v8907, -inf
    %v9244 = vrot.slane %v9243, 4
    %v9245 = vmax.f32 %v9243, %v9244
    %v9246 = vrot.slane %v9245, 2
    %v9247 = vmax.f32 %v9245, %v9246
    %v9248 = vrot.slane %v9247, 1
    %v9249 = vmax.f32 %v9247, %v9248
    %v9250 = vsel %vm5471, %v8909, -inf
    %v9251 = vrot.slane %v9250, 4
    %v9252 = vmax.f32 %v9250, %v9251
    %v9253 = vrot.slane %v9252, 2
    %v9254 = vmax.f32 %v9252, %v9253
    %v9255 = vrot.slane %v9254, 1
    %v9256 = vmax.f32 %v9254, %v9255
    %v9257 = vsel %vm5471, %v8917, -inf
    %v9258 = vrot.slane %v9257, 4
    %v9259 = vmax.f32 %v9257, %v9258
    %v9260 = vrot.slane %v9259, 2
    %v9261 = vmax.f32 %v9259, %v9260
    %v9262 = vrot.slane %v9261, 1
    %v9263 = vmax.f32 %v9261, %v9262
    %v9264 = vsel %vm5471, %v8925, -inf
    %v9265 = vrot.slane %v9264, 4
    %v9266 = vmax.f32 %v9264, %v9265
    %v9267 = vrot.slane %v9266, 2
    %v9268 = vmax.f32 %v9266, %v9267
    %v9269 = vrot.slane %v9268, 1
    %v9270 = vmax.f32 %v9268, %v9269
    %v9271 = vsel %vm5471, %v8924, -inf
    %v9272 = vrot.slane %v9271, 4
    %v9273 = vmax.f32 %v9271, %v9272
    %v9274 = vrot.slane %v9273, 2
    %v9275 = vmax.f32 %v9273, %v9274
    %v9276 = vrot.slane %v9275, 1
    %v9277 = vmax.f32 %v9275, %v9276
    %v9278 = vsel %vm5471, %v8926, -inf
    %v9279 = vrot.slane %v9278, 4
    %v9280 = vmax.f32 %v9278, %v9279
    %v9281 = vrot.slane %v9280, 2
    %v9282 = vmax.f32 %v9280, %v9281
    %v9283 = vrot.slane %v9282, 1
    %v9284 = vmax.f32 %v9282, %v9283
    %v9285 = vsel %vm5471, %v8934, -inf
    %v9286 = vrot.slane %v9285, 4
    %v9287 = vmax.f32 %v9285, %v9286
    %v9288 = vrot.slane %v9287, 2
    %v9289 = vmax.f32 %v9287, %v9288
    %v9290 = vrot.slane %v9289, 1
    %v9291 = vmax.f32 %v9289, %v9290
    %v9292 = vsel %vm5471, %v8942, -inf
    %v9293 = vrot.slane %v9292, 4
    %v9294 = vmax.f32 %v9292, %v9293
    %v9295 = vrot.slane %v9294, 2
    %v9296 = vmax.f32 %v9294, %v9295
    %v9297 = vrot.slane %v9296, 1
    %v9298 = vmax.f32 %v9296, %v9297
    %v9299 = vsel %vm5471, %v8941, -inf
    %v9300 = vrot.slane %v9299, 4
    %v9301 = vmax.f32 %v9299, %v9300
    %v9302 = vrot.slane %v9301, 2
    %v9303 = vmax.f32 %v9301, %v9302
    %v9304 = vrot.slane %v9303, 1
    %v9305 = vmax.f32 %v9303, %v9304
    %v9306 = vsel %vm5471, %v8943, -inf
    %v9307 = vrot.slane %v9306, 4
    %v9308 = vmax.f32 %v9306, %v9307
    %v9309 = vrot.slane %v9308, 2
    %v9310 = vmax.f32 %v9308, %v9309
    %v9311 = vrot.slane %v9310, 1
    %v9312 = vmax.f32 %v9310, %v9311
    %v9313 = vsel %vm5471, %v8951, -inf
    %v9314 = vrot.slane %v9313, 4
    %v9315 = vmax.f32 %v9313, %v9314
    %v9316 = vrot.slane %v9315, 2
    %v9317 = vmax.f32 %v9315, %v9316
    %v9318 = vrot.slane %v9317, 1
    %v9319 = vmax.f32 %v9317, %v9318
    %v9320 = vsel %vm5471, %v8959, -inf
    %v9321 = vrot.slane %v9320, 4
    %v9322 = vmax.f32 %v9320, %v9321
    %v9323 = vrot.slane %v9322, 2
    %v9324 = vmax.f32 %v9322, %v9323
    %v9325 = vrot.slane %v9324, 1
    %v9326 = vmax.f32 %v9324, %v9325
    %v9327 = vsel %vm5471, %v8958, -inf
    %v9328 = vrot.slane %v9327, 4
    %v9329 = vmax.f32 %v9327, %v9328
    %v9330 = vrot.slane %v9329, 2
    %v9331 = vmax.f32 %v9329, %v9330
    %v9332 = vrot.slane %v9331, 1
    %v9333 = vmax.f32 %v9331, %v9332
    %v9334 = vsel %vm5471, %v8960, -inf
    %v9335 = vrot.slane %v9334, 4
    %v9336 = vmax.f32 %v9334, %v9335
    %v9337 = vrot.slane %v9336, 2
    %v9338 = vmax.f32 %v9336, %v9337
    %v9339 = vrot.slane %v9338, 1
    %v9340 = vmax.f32 %v9338, %v9339
    %v9341 = vsel %vm5471, %v8968, -inf
    %v9342 = vrot.slane %v9341, 4
    %v9343 = vmax.f32 %v9341, %v9342
    %v9344 = vrot.slane %v9343, 2
    %v9345 = vmax.f32 %v9343, %v9344
    %v9346 = vrot.slane %v9345, 1
    %v9347 = vmax.f32 %v9345, %v9346
    %v9348 = vsel %vm5471, %v8976, -inf
    %v9349 = vrot.slane %v9348, 4
    %v9350 = vmax.f32 %v9348, %v9349
    %v9351 = vrot.slane %v9350, 2
    %v9352 = vmax.f32 %v9350, %v9351
    %v9353 = vrot.slane %v9352, 1
    %v9354 = vmax.f32 %v9352, %v9353
    %v9355 = vsel %vm5471, %v8975, -inf
    %v9356 = vrot.slane %v9355, 4
    %v9357 = vmax.f32 %v9355, %v9356
    %v9358 = vrot.slane %v9357, 2
    %v9359 = vmax.f32 %v9357, %v9358
    %v9360 = vrot.slane %v9359, 1
    %v9361 = vmax.f32 %v9359, %v9360
    %v9362 = vsel %vm5471, %v8977, -inf
    %v9363 = vrot.slane %v9362, 4
    %v9364 = vmax.f32 %v9362, %v9363
    %v9365 = vrot.slane %v9364, 2
    %v9366 = vmax.f32 %v9364, %v9365
    %v9367 = vrot.slane %v9366, 1
    %v9368 = vmax.f32 %v9366, %v9367
    %v9369 = vsel %vm5471, %v8985, -inf
    %v9370 = vrot.slane %v9369, 4
    %v9371 = vmax.f32 %v9369, %v9370
    %v9372 = vrot.slane %v9371, 2
    %v9373 = vmax.f32 %v9371, %v9372
    %v9374 = vrot.slane %v9373, 1
    %v9375 = vmax.f32 %v9373, %v9374
    %v9376 = vsel %vm5471, %v8993, -inf
    %v9377 = vrot.slane %v9376, 4
    %v9378 = vmax.f32 %v9376, %v9377
    %v9379 = vrot.slane %v9378, 2
    %v9380 = vmax.f32 %v9378, %v9379
    %v9381 = vrot.slane %v9380, 1
    %v9382 = vmax.f32 %v9380, %v9381
    %v9383 = vsel %vm5471, %v8992, -inf
    %v9384 = vrot.slane %v9383, 4
    %v9385 = vmax.f32 %v9383, %v9384
    %v9386 = vrot.slane %v9385, 2
    %v9387 = vmax.f32 %v9385, %v9386
    %v9388 = vrot.slane %v9387, 1
    %v9389 = vmax.f32 %v9387, %v9388
    %v9390 = vsel %vm5471, %v8994, -inf
    %v9391 = vrot.slane %v9390, 4
    %v9392 = vmax.f32 %v9390, %v9391
    %v9393 = vrot.slane %v9392, 2
    %v9394 = vmax.f32 %v9392, %v9393
    %v9395 = vrot.slane %v9394, 1
    %v9396 = vmax.f32 %v9394, %v9395
    %v9397 = vsel %vm5471, %v9002, -inf
    %v9398 = vrot.slane %v9397, 4
    %v9399 = vmax.f32 %v9397, %v9398
    %v9400 = vrot.slane %v9399, 2
    %v9401 = vmax.f32 %v9399, %v9400
    %v9402 = vrot.slane %v9401, 1
    %v9403 = vmax.f32 %v9401, %v9402
    %v9404 = vsel %vm5471, %v9010, -inf
    %v9405 = vrot.slane %v9404, 4
    %v9406 = vmax.f32 %v9404, %v9405
    %v9407 = vrot.slane %v9406, 2
    %v9408 = vmax.f32 %v9406, %v9407
    %v9409 = vrot.slane %v9408, 1
    %v9410 = vmax.f32 %v9408, %v9409
    %v9411 = vsel %vm5471, %v9009, -inf
    %v9412 = vrot.slane %v9411, 4
    %v9413 = vmax.f32 %v9411, %v9412
    %v9414 = vrot.slane %v9413, 2
    %v9415 = vmax.f32 %v9413, %v9414
    %v9416 = vrot.slane %v9415, 1
    %v9417 = vmax.f32 %v9415, %v9416
    %v9418 = vsel %vm5471, %v9011, -inf
    %v9419 = vrot.slane %v9418, 4
    %v9420 = vmax.f32 %v9418, %v9419
    %v9421 = vrot.slane %v9420, 2
    %v9422 = vmax.f32 %v9420, %v9421
    %v9423 = vrot.slane %v9422, 1
    %v9424 = vmax.f32 %v9422, %v9423
    %v9425 = vsel %vm5471, %v9019, -inf
    %v9426 = vrot.slane %v9425, 4
    %v9427 = vmax.f32 %v9425, %v9426
    %v9428 = vrot.slane %v9427, 2
    %v9429 = vmax.f32 %v9427, %v9428
    %v9430 = vrot.slane %v9429, 1
    %v9431 = vmax.f32 %v9429, %v9430
    %v9432 = vsel %vm5471, %v9027, -inf
    %v9433 = vrot.slane %v9432, 4
    %v9434 = vmax.f32 %v9432, %v9433
    %v9435 = vrot.slane %v9434, 2
    %v9436 = vmax.f32 %v9434, %v9435
    %v9437 = vrot.slane %v9436, 1
    %v9438 = vmax.f32 %v9436, %v9437
    %v9439 = vsel %vm5471, %v9026, -inf
    %v9440 = vrot.slane %v9439, 4
    %v9441 = vmax.f32 %v9439, %v9440
    %v9442 = vrot.slane %v9441, 2
    %v9443 = vmax.f32 %v9441, %v9442
    %v9444 = vrot.slane %v9443, 1
    %v9445 = vmax.f32 %v9443, %v9444
    %v9446 = vsel %vm5471, %v9028, -inf
    %v9447 = vrot.slane %v9446, 4
    %v9448 = vmax.f32 %v9446, %v9447
    %v9449 = vrot.slane %v9448, 2
    %v9450 = vmax.f32 %v9448, %v9449
    %v9451 = vrot.slane %v9450, 1
    %v9452 = vmax.f32 %v9450, %v9451
    %v9453 = vsel %vm5471, %v9036, -inf
    %v9454 = vrot.slane %v9453, 4
    %v9455 = vmax.f32 %v9453, %v9454
    %v9456 = vrot.slane %v9455, 2
    %v9457 = vmax.f32 %v9455, %v9456
    %v9458 = vrot.slane %v9457, 1
    %v9459 = vmax.f32 %v9457, %v9458
    %v9460 = vsel %vm5471, %v9044, -inf
    %v9461 = vrot.slane %v9460, 4
    %v9462 = vmax.f32 %v9460, %v9461
    %v9463 = vrot.slane %v9462, 2
    %v9464 = vmax.f32 %v9462, %v9463
    %v9465 = vrot.slane %v9464, 1
    %v9466 = vmax.f32 %v9464, %v9465
    %v9467 = vsel %vm5471, %v9043, -inf
    %v9468 = vrot.slane %v9467, 4
    %v9469 = vmax.f32 %v9467, %v9468
    %v9470 = vrot.slane %v9469, 2
    %v9471 = vmax.f32 %v9469, %v9470
    %v9472 = vrot.slane %v9471, 1
    %v9473 = vmax.f32 %v9471, %v9472
    %v9474 = vsel %vm5471, %v9045, -inf
    %v9475 = vrot.slane %v9474, 4
    %v9476 = vmax.f32 %v9474, %v9475
    %v9477 = vrot.slane %v9476, 2
    %v9478 = vmax.f32 %v9476, %v9477
    %v9479 = vrot.slane %v9478, 1
    %v9480 = vmax.f32 %v9478, %v9479
    %v9481 = vsel %vm5471, %v9053, -inf
    %v9482 = vrot.slane %v9481, 4
    %v9483 = vmax.f32 %v9481, %v9482
    %v9484 = vrot.slane %v9483, 2
    %v9485 = vmax.f32 %v9483, %v9484
    %v9486 = vrot.slane %v9485, 1
    %v9487 = vmax.f32 %v9485, %v9486
    %v9488 = vsel %vm5471, %v9061, -inf
    %v9489 = vrot.slane %v9488, 4
    %v9490 = vmax.f32 %v9488, %v9489
    %v9491 = vrot.slane %v9490, 2
    %v9492 = vmax.f32 %v9490, %v9491
    %v9493 = vrot.slane %v9492, 1
    %v9494 = vmax.f32 %v9492, %v9493
    %v9495 = vsel %vm5471, %v9060, -inf
    %v9496 = vrot.slane %v9495, 4
    %v9497 = vmax.f32 %v9495, %v9496
    %v9498 = vrot.slane %v9497, 2
    %v9499 = vmax.f32 %v9497, %v9498
    %v9500 = vrot.slane %v9499, 1
    %v9501 = vmax.f32 %v9499, %v9500
    %v9502 = vsel %vm5471, %v9062, -inf
    %v9503 = vrot.slane %v9502, 4
    %v9504 = vmax.f32 %v9502, %v9503
    %v9505 = vrot.slane %v9504, 2
    %v9506 = vmax.f32 %v9504, %v9505
    %v9507 = vrot.slane %v9506, 1
    %v9508 = vmax.f32 %v9506, %v9507
    %v9509 = vsel %vm5471, %v9070, -inf
    %v9510 = vrot.slane %v9509, 4
    %v9511 = vmax.f32 %v9509, %v9510
    %v9512 = vrot.slane %v9511, 2
    %v9513 = vmax.f32 %v9511, %v9512
    %v9514 = vrot.slane %v9513, 1
    %v9515 = vmax.f32 %v9513, %v9514
    %v9516 = vsel %vm5471, %v9078, -inf
    %v9517 = vrot.slane %v9516, 4
    %v9518 = vmax.f32 %v9516, %v9517
    %v9519 = vrot.slane %v9518, 2
    %v9520 = vmax.f32 %v9518, %v9519
    %v9521 = vrot.slane %v9520, 1
    %v9522 = vmax.f32 %v9520, %v9521
    %v9523 = vsel %vm5471, %v9077, -inf
    %v9524 = vrot.slane %v9523, 4
    %v9525 = vmax.f32 %v9523, %v9524
    %v9526 = vrot.slane %v9525, 2
    %v9527 = vmax.f32 %v9525, %v9526
    %v9528 = vrot.slane %v9527, 1
    %v9529 = vmax.f32 %v9527, %v9528
    %v9530 = vsel %vm5471, %v9079, -inf
    %v9531 = vrot.slane %v9530, 4
    %v9532 = vmax.f32 %v9530, %v9531
    %v9533 = vrot.slane %v9532, 2
    %v9534 = vmax.f32 %v9532, %v9533
    %v9535 = vrot.slane %v9534, 1
    %v9536 = vmax.f32 %v9534, %v9535
    %v9537 = vsel %vm5471, %v9087, -inf
    %v9538 = vrot.slane %v9537, 4
    %v9539 = vmax.f32 %v9537, %v9538
    %v9540 = vrot.slane %v9539, 2
    %v9541 = vmax.f32 %v9539, %v9540
    %v9542 = vrot.slane %v9541, 1
    %v9543 = vmax.f32 %v9541, %v9542
    %v9544 = vsel %vm5471, %v9095, -inf
    %v9545 = vrot.slane %v9544, 4
    %v9546 = vmax.f32 %v9544, %v9545
    %v9547 = vrot.slane %v9546, 2
    %v9548 = vmax.f32 %v9546, %v9547
    %v9549 = vrot.slane %v9548, 1
    %v9550 = vmax.f32 %v9548, %v9549
    %v9551 = vsel %vm5471, %v9094, -inf
    %v9552 = vrot.slane %v9551, 4
    %v9553 = vmax.f32 %v9551, %v9552
    %v9554 = vrot.slane %v9553, 2
    %v9555 = vmax.f32 %v9553, %v9554
    %v9556 = vrot.slane %v9555, 1
    %v9557 = vmax.f32 %v9555, %v9556
    %v9558 = vsel %vm5471, %v9096, -inf
    %v9559 = vrot.slane %v9558, 4
    %v9560 = vmax.f32 %v9558, %v9559
    %v9561 = vrot.slane %v9560, 2
    %v9562 = vmax.f32 %v9560, %v9561
    %v9563 = vrot.slane %v9562, 1
    %v9564 = vmax.f32 %v9562, %v9563
    %v9565 = vsel %vm5471, %v9104, -inf
    %v9566 = vrot.slane %v9565, 4
    %v9567 = vmax.f32 %v9565, %v9566
    %v9568 = vrot.slane %v9567, 2
    %v9569 = vmax.f32 %v9567, %v9568
    %v9570 = vrot.slane %v9569, 1
    %v9571 = vmax.f32 %v9569, %v9570
    %v9572 = vsel %vm5471, %v9112, -inf
    %v9573 = vrot.slane %v9572, 4
    %v9574 = vmax.f32 %v9572, %v9573
    %v9575 = vrot.slane %v9574, 2
    %v9576 = vmax.f32 %v9574, %v9575
    %v9577 = vrot.slane %v9576, 1
    %v9578 = vmax.f32 %v9576, %v9577
    %v9579 = vsel %vm5471, %v9111, -inf
    %v9580 = vrot.slane %v9579, 4
    %v9581 = vmax.f32 %v9579, %v9580
    %v9582 = vrot.slane %v9581, 2
    %v9583 = vmax.f32 %v9581, %v9582
    %v9584 = vrot.slane %v9583, 1
    %v9585 = vmax.f32 %v9583, %v9584
    %v9586 = vsel %vm5471, %v9113, -inf
    %v9587 = vrot.slane %v9586, 4
    %v9588 = vmax.f32 %v9586, %v9587
    %v9589 = vrot.slane %v9588, 2
    %v9590 = vmax.f32 %v9588, %v9589
    %v9591 = vrot.slane %v9590, 1
    %v9592 = vmax.f32 %v9590, %v9591
    %v9593 = vsel %vm5471, %v9121, -inf
    %v9594 = vrot.slane %v9593, 4
    %v9595 = vmax.f32 %v9593, %v9594
    %v9596 = vrot.slane %v9595, 2
    %v9597 = vmax.f32 %v9595, %v9596
    %v9598 = vrot.slane %v9597, 1
    %v9599 = vmax.f32 %v9597, %v9598
    %v9600 = vsel %vm5471, %v9129, -inf
    %v9601 = vrot.slane %v9600, 4
    %v9602 = vmax.f32 %v9600, %v9601
    %v9603 = vrot.slane %v9602, 2
    %v9604 = vmax.f32 %v9602, %v9603
    %v9605 = vrot.slane %v9604, 1
    %v9606 = vmax.f32 %v9604, %v9605
    %v9607 = vsel %vm5471, %v9128, -inf
    %v9608 = vrot.slane %v9607, 4
    %v9609 = vmax.f32 %v9607, %v9608
    %v9610 = vrot.slane %v9609, 2
    %v9611 = vmax.f32 %v9609, %v9610
    %v9612 = vrot.slane %v9611, 1
    %v9613 = vmax.f32 %v9611, %v9612
    %v9614 = vsel %vm5471, %v9130, -inf
    %v9615 = vrot.slane %v9614, 4
    %v9616 = vmax.f32 %v9614, %v9615
    %v9617 = vrot.slane %v9616, 2
    %v9618 = vmax.f32 %v9616, %v9617
    %v9619 = vrot.slane %v9618, 1
    %v9620 = vmax.f32 %v9618, %v9619
    %v9621 = vsel %vm5471, %v9138, -inf
    %v9622 = vrot.slane %v9621, 4
    %v9623 = vmax.f32 %v9621, %v9622
    %v9624 = vrot.slane %v9623, 2
    %v9625 = vmax.f32 %v9623, %v9624
    %v9626 = vrot.slane %v9625, 1
    %v9627 = vmax.f32 %v9625, %v9626
    %v9628 = vsel %vm5471, %v9146, -inf
    %v9629 = vrot.slane %v9628, 4
    %v9630 = vmax.f32 %v9628, %v9629
    %v9631 = vrot.slane %v9630, 2
    %v9632 = vmax.f32 %v9630, %v9631
    %v9633 = vrot.slane %v9632, 1
    %v9634 = vmax.f32 %v9632, %v9633
    %v9635 = vsel %vm5471, %v9145, -inf
    %v9636 = vrot.slane %v9635, 4
    %v9637 = vmax.f32 %v9635, %v9636
    %v9638 = vrot.slane %v9637, 2
    %v9639 = vmax.f32 %v9637, %v9638
    %v9640 = vrot.slane %v9639, 1
    %v9641 = vmax.f32 %v9639, %v9640
    %v9642 = vsel %vm5471, %v9147, -inf
    %v9643 = vrot.slane %v9642, 4
    %v9644 = vmax.f32 %v9642, %v9643
    %v9645 = vrot.slane %v9644, 2
    %v9646 = vmax.f32 %v9644, %v9645
    %v9647 = vrot.slane %v9646, 1
    %v9648 = vmax.f32 %v9646, %v9647
    %v9649 = vsel %vm5471, %v9155, -inf
    %v9650 = vrot.slane %v9649, 4
    %v9651 = vmax.f32 %v9649, %v9650
    %v9652 = vrot.slane %v9651, 2
    %v9653 = vmax.f32 %v9651, %v9652
    %v9654 = vrot.slane %v9653, 1
    %v9655 = vmax.f32 %v9653, %v9654
    %v9656 = vsel %vm5471, %v9163, -inf
    %v9657 = vrot.slane %v9656, 4
    %v9658 = vmax.f32 %v9656, %v9657
    %v9659 = vrot.slane %v9658, 2
    %v9660 = vmax.f32 %v9658, %v9659
    %v9661 = vrot.slane %v9660, 1
    %v9662 = vmax.f32 %v9660, %v9661
    %v9663 = vsel %vm5471, %v9162, -inf
    %v9664 = vrot.slane %v9663, 4
    %v9665 = vmax.f32 %v9663, %v9664
    %v9666 = vrot.slane %v9665, 2
    %v9667 = vmax.f32 %v9665, %v9666
    %v9668 = vrot.slane %v9667, 1
    %v9669 = vmax.f32 %v9667, %v9668
    %v9670 = vsel %vm5471, %v9164, -inf
    %v9671 = vrot.slane %v9670, 4
    %v9672 = vmax.f32 %v9670, %v9671
    %v9673 = vrot.slane %v9672, 2
    %v9674 = vmax.f32 %v9672, %v9673
    %v9675 = vrot.slane %v9674, 1
    %v9676 = vmax.f32 %v9674, %v9675
    %v9677 = vmax.f32 %v9235, %v9263
    %v9678 = vmax.f32 %v9242, %v9270
    %v9679 = vmax.f32 %v9249, %v9277
    %v9680 = vmax.f32 %v9256, %v9284
    %v9681 = vmax.f32 %v9291, %v9319
    %v9682 = vmax.f32 %v9298, %v9326
    %v9683 = vmax.f32 %v9305, %v9333
    %v9684 = vmax.f32 %v9312, %v9340
    %v9685 = vmax.f32 %v9347, %v9375
    %v9686 = vmax.f32 %v9354, %v9382
    %v9687 = vmax.f32 %v9361, %v9389
    %v9688 = vmax.f32 %v9368, %v9396
    %v9689 = vmax.f32 %v9403, %v9431
    %v9690 = vmax.f32 %v9410, %v9438
    %v9691 = vmax.f32 %v9417, %v9445
    %v9692 = vmax.f32 %v9424, %v9452
    %v9693 = vmax.f32 %v9459, %v9487
    %v9694 = vmax.f32 %v9466, %v9494
    %v9695 = vmax.f32 %v9473, %v9501
    %v9696 = vmax.f32 %v9480, %v9508
    %v9697 = vmax.f32 %v9515, %v9543
    %v9698 = vmax.f32 %v9522, %v9550
    %v9699 = vmax.f32 %v9529, %v9557
    %v9700 = vmax.f32 %v9536, %v9564
    %v9701 = vmax.f32 %v9571, %v9599
    %v9702 = vmax.f32 %v9578, %v9606
    %v9703 = vmax.f32 %v9585, %v9613
    %v9704 = vmax.f32 %v9592, %v9620
    %v9705 = vmax.f32 %v9627, %v9655
    %v9706 = vmax.f32 %v9634, %v9662
    %v9707 = vmax.f32 %v9641, %v9669
    %v9708 = vmax.f32 %v9648, %v9676
    %vm9709 = vcmask 259072
    %9710 = vst.msk [vmem:[#allocation4] sm:$0x3f] %vm9709, 0.0
    %9711 = vst.msk [vmem:[#allocation4 + $0x8] sm:$0x3f] %vm9709, 0.0
    %9712 = vst.msk [vmem:[#allocation4 + $0x10] sm:$0x3f] %vm9709, 0.0
    %9713 = vst.msk [vmem:[#allocation4 + $0x18] sm:$0x3f] %vm9709, 0.0
    %9714 = vst.msk [vmem:[#allocation4 + $0x20] sm:$0x3f] %vm9709, 0.0
    %9715 = vst.msk [vmem:[#allocation4 + $0x28] sm:$0x3f] %vm9709, 0.0
    %9716 = vst.msk [vmem:[#allocation4 + $0x30] sm:$0x3f] %vm9709, 0.0
    %9717 = vst.msk [vmem:[#allocation4 + $0x38] sm:$0x3f] %vm9709, 0.0
    %9718 = vst.msk [vmem:[#allocation4 + $0x40] sm:$0x3f] %vm9709, 0.0
    %9719 = vst.msk [vmem:[#allocation4 + $0x48] sm:$0x3f] %vm9709, 0.0
    %9720 = vst.msk [vmem:[#allocation4 + $0x50] sm:$0x3f] %vm9709, 0.0
    %9721 = vst.msk [vmem:[#allocation4 + $0x58] sm:$0x3f] %vm9709, 0.0
    %v9754 = vsel %vm7560, %v9678, %v9677
    %v9755 = vsel %vm7562, %v9679, %v9754
    %v9756 = vsel %vm7564, %v9680, %v9755
    %v9757 = vsel %vm7560, %v9682, %v9681
    %v9758 = vsel %vm7562, %v9683, %v9757
    %v9759 = vsel %vm7564, %v9684, %v9758
    %v9760 = vsel %vm7560, %v9686, %v9685
    %v9761 = vsel %vm7562, %v9687, %v9760
    %v9762 = vsel %vm7564, %v9688, %v9761
    %v9763 = vsel %vm7560, %v9690, %v9689
    %v9764 = vsel %vm7562, %v9691, %v9763
    %v9765 = vsel %vm7564, %v9692, %v9764
    %v9766 = vsel %vm7560, %v9694, %v9693
    %v9767 = vsel %vm7562, %v9695, %v9766
    %v9768 = vsel %vm7564, %v9696, %v9767
    %v9769 = vsel %vm7560, %v9698, %v9697
    %v9770 = vsel %vm7562, %v9699, %v9769
    %v9771 = vsel %vm7564, %v9700, %v9770
    %v9772 = vsel %vm7560, %v9702, %v9701
    %v9773 = vsel %vm7562, %v9703, %v9772
    %v9774 = vsel %vm7564, %v9704, %v9773
    %v9775 = vsel %vm7560, %v9706, %v9705
    %v9776 = vsel %vm7562, %v9707, %v9775
    %v9777 = vsel %vm7564, %v9708, %v9776
    %s9786 = scalar_lea.vmem [#allocation4], 8
    %vm9787 = vcmask 257024
    %9788 = vst.msk [vmem:[%s9786 + $0x1] sm:$0xf] %vm9787, %v9756
    %9789 = vst.msk [vmem:[%s9786 + $0x9] sm:$0xf] %vm9787, %v9759
    %9790 = vst.msk [vmem:[%s9786 + $0x11] sm:$0xf] %vm9787, %v9762
    %9791 = vst.msk [vmem:[%s9786 + $0x19] sm:$0xf] %vm9787, %v9765
    %9792 = vst.msk [vmem:[%s9786 + $0x31] sm:$0xf] %vm9787, %v9768
    %9793 = vst.msk [vmem:[%s9786 + $0x39] sm:$0xf] %vm9787, %v9771
    %9794 = vst.msk [vmem:[%s9786 + $0x41] sm:$0xf] %vm9787, %v9774
    %9795 = vst.msk [vmem:[%s9786 + $0x49] sm:$0xf] %vm9787, %v9777
    %v9796 = vld [vmem:[#allocation4] sm:$0x3f]
    %v9797 = vld [vmem:[#allocation4 + $0x8] sm:$0x3f]
    %v9798 = vld [vmem:[#allocation4 + $0x10] sm:$0x3f]
    %v9799 = vld [vmem:[#allocation4 + $0x18] sm:$0x3f]
    %v9800 = vld [vmem:[#allocation4 + $0x20] sm:$0x3f]
    %v9801 = vld [vmem:[#allocation4 + $0x28] sm:$0x3f]
    %v9802 = vld [vmem:[#allocation4 + $0x30] sm:$0x3f]
    %v9803 = vld [vmem:[#allocation4 + $0x38] sm:$0x3f]
    %v9804 = vld [vmem:[#allocation4 + $0x40] sm:$0x3f]
    %v9805 = vld [vmem:[#allocation4 + $0x48] sm:$0x3f]
    %v9806 = vld [vmem:[#allocation4 + $0x50] sm:$0x3f]
    %v9807 = vld [vmem:[#allocation4 + $0x58] sm:$0x3f]
    %v9816 = vrot.slane %v9796, 1
    %v9817 = vrot.slane %v9797, 1
    %v9818 = vrot.slane %v9798, 1
    %v9819 = vrot.slane %v9799, 1
    %v9820 = vrot.slane %v9802, 1
    %v9821 = vrot.slane %v9803, 1
    %v9822 = vrot.slane %v9804, 1
    %v9823 = vrot.slane %v9805, 1
    %9824 = vrot.lane.b32.xlu0 %v9816, 32
    %v9825 = vpop.permute.xlu0 %9824
    %9826 = vrot.lane.b32.xlu0 %v9817, 32
    %v9827 = vpop.permute.xlu0 %9826
    %9828 = vrot.lane.b32.xlu0 %v9818, 32
    %v9829 = vpop.permute.xlu0 %9828
    %9830 = vrot.lane.b32.xlu0 %v9819, 32
    %v9831 = vpop.permute.xlu0 %9830
    %9832 = vrot.lane.b32.xlu0 %v9820, 32
    %v9833 = vpop.permute.xlu0 %9832
    %9834 = vrot.lane.b32.xlu0 %v9821, 32
    %v9835 = vpop.permute.xlu0 %9834
    %9836 = vrot.lane.b32.xlu0 %v9822, 32
    %v9837 = vpop.permute.xlu0 %9836
    %9838 = vrot.lane.b32.xlu0 %v9823, 32
    %v9839 = vpop.permute.xlu0 %9838
    %v9848 = vrot.slane %v9796, 2
    %v9849 = vrot.slane %v9797, 2
    %v9850 = vrot.slane %v9798, 2
    %v9851 = vrot.slane %v9799, 2
    %v9852 = vrot.slane %v9802, 2
    %v9853 = vrot.slane %v9803, 2
    %v9854 = vrot.slane %v9804, 2
    %v9855 = vrot.slane %v9805, 2
    %9856 = vrot.lane.b32.xlu0 %v9848, 64
    %v9857 = vpop.permute.xlu0 %9856
    %9858 = vrot.lane.b32.xlu0 %v9849, 64
    %v9859 = vpop.permute.xlu0 %9858
    %9860 = vrot.lane.b32.xlu0 %v9850, 64
    %v9861 = vpop.permute.xlu0 %9860
    %9862 = vrot.lane.b32.xlu0 %v9851, 64
    %v9863 = vpop.permute.xlu0 %9862
    %9864 = vrot.lane.b32.xlu0 %v9852, 64
    %v9865 = vpop.permute.xlu0 %9864
    %9866 = vrot.lane.b32.xlu0 %v9853, 64
    %v9867 = vpop.permute.xlu0 %9866
    %9868 = vrot.lane.b32.xlu0 %v9854, 64
    %v9869 = vpop.permute.xlu0 %9868
    %9870 = vrot.lane.b32.xlu0 %v9855, 64
    %v9871 = vpop.permute.xlu0 %9870
    %9882 = vrot.lane.b32.xlu0 %v9797, 96
    %v9883 = vpop.permute.xlu0 %9882
    %9884 = vrot.lane.b32.xlu0 %v9798, 96
    %v9885 = vpop.permute.xlu0 %9884
    %9886 = vrot.lane.b32.xlu0 %v9799, 96
    %v9887 = vpop.permute.xlu0 %9886
    %9888 = vrot.lane.b32.xlu0 %v9800, 96
    %v9889 = vpop.permute.xlu0 %9888
    %9890 = vrot.lane.b32.xlu0 %v9803, 96
    %v9891 = vpop.permute.xlu0 %9890
    %9892 = vrot.lane.b32.xlu0 %v9804, 96
    %v9893 = vpop.permute.xlu0 %9892
    %9894 = vrot.lane.b32.xlu0 %v9805, 96
    %v9895 = vpop.permute.xlu0 %9894
    %9896 = vrot.lane.b32.xlu0 %v9806, 96
    %v9897 = vpop.permute.xlu0 %9896
    %v9906 = vrot.slane %v9800, 1
    %v9907 = vrot.slane %v9806, 1
    %v9916 = vrot.slane %v9800, 2
    %v9917 = vrot.slane %v9806, 2
    %9918 = vrot.lane.b32.xlu0 %v9849, 32
    %v9919 = vpop.permute.xlu0 %9918
    %9920 = vrot.lane.b32.xlu0 %v9850, 32
    %v9921 = vpop.permute.xlu0 %9920
    %9922 = vrot.lane.b32.xlu0 %v9851, 32
    %v9923 = vpop.permute.xlu0 %9922
    %9924 = vrot.lane.b32.xlu0 %v9916, 32
    %v9925 = vpop.permute.xlu0 %9924
    %9926 = vrot.lane.b32.xlu0 %v9853, 32
    %v9927 = vpop.permute.xlu0 %9926
    %9928 = vrot.lane.b32.xlu0 %v9854, 32
    %v9929 = vpop.permute.xlu0 %9928
    %9930 = vrot.lane.b32.xlu0 %v9855, 32
    %v9931 = vpop.permute.xlu0 %9930
    %9932 = vrot.lane.b32.xlu0 %v9917, 32
    %v9933 = vpop.permute.xlu0 %9932
    %9944 = vrot.lane.b32.xlu0 %v9798, 64
    %v9945 = vpop.permute.xlu0 %9944
    %9946 = vrot.lane.b32.xlu0 %v9799, 64
    %v9947 = vpop.permute.xlu0 %9946
    %9948 = vrot.lane.b32.xlu0 %v9800, 64
    %v9949 = vpop.permute.xlu0 %9948
    %9950 = vrot.lane.b32.xlu0 %v9801, 64
    %v9951 = vpop.permute.xlu0 %9950
    %9952 = vrot.lane.b32.xlu0 %v9804, 64
    %v9953 = vpop.permute.xlu0 %9952
    %9954 = vrot.lane.b32.xlu0 %v9805, 64
    %v9955 = vpop.permute.xlu0 %9954
    %9956 = vrot.lane.b32.xlu0 %v9806, 64
    %v9957 = vpop.permute.xlu0 %9956
    %9958 = vrot.lane.b32.xlu0 %v9807, 64
    %v9959 = vpop.permute.xlu0 %9958
    %v9968 = vrot.slane %v9801, 1
    %v9969 = vrot.slane %v9807, 1
    %9970 = vrot.lane.b32.xlu0 %v9818, 96
    %v9971 = vpop.permute.xlu0 %9970
    %9972 = vrot.lane.b32.xlu0 %v9819, 96
    %v9973 = vpop.permute.xlu0 %9972
    %9974 = vrot.lane.b32.xlu0 %v9906, 96
    %v9975 = vpop.permute.xlu0 %9974
    %9976 = vrot.lane.b32.xlu0 %v9968, 96
    %v9977 = vpop.permute.xlu0 %9976
    %9978 = vrot.lane.b32.xlu0 %v9822, 96
    %v9979 = vpop.permute.xlu0 %9978
    %9980 = vrot.lane.b32.xlu0 %v9823, 96
    %v9981 = vpop.permute.xlu0 %9980
    %9982 = vrot.lane.b32.xlu0 %v9907, 96
    %v9983 = vpop.permute.xlu0 %9982
    %9984 = vrot.lane.b32.xlu0 %v9969, 96
    %v9985 = vpop.permute.xlu0 %9984
    %v9994 = vrot.slane %v9801, 2
    %v9995 = vrot.slane %v9807, 2
    %v9996 = vsel %vm3517, %v9796, %v9825
    %v9997 = vsel %vm3517, %v9797, %v9827
    %v9998 = vsel %vm3517, %v9798, %v9829
    %v9999 = vsel %vm3517, %v9799, %v9831
    %v10000 = vsel %vm3517, %v9802, %v9833
    %v10001 = vsel %vm3517, %v9803, %v9835
    %v10002 = vsel %vm3517, %v9804, %v9837
    %v10003 = vsel %vm3517, %v9805, %v9839
    %v10004 = vsel %vm8248, %v9996, %v9857
    %v10005 = vsel %vm8248, %v9997, %v9859
    %v10006 = vsel %vm8248, %v9998, %v9861
    %v10007 = vsel %vm8248, %v9999, %v9863
    %v10008 = vsel %vm8248, %v10000, %v9865
    %v10009 = vsel %vm8248, %v10001, %v9867
    %v10010 = vsel %vm8248, %v10002, %v9869
    %v10011 = vsel %vm8248, %v10003, %v9871
    %v10012 = vsel %vm8265, %v10004, %v9883
    %v10013 = vsel %vm8265, %v10005, %v9885
    %v10014 = vsel %vm8265, %v10006, %v9887
    %v10015 = vsel %vm8265, %v10007, %v9889
    %v10016 = vsel %vm8265, %v10008, %v9891
    %v10017 = vsel %vm8265, %v10009, %v9893
    %v10018 = vsel %vm8265, %v10010, %v9895
    %v10019 = vsel %vm8265, %v10011, %v9897
    %v10020 = vsel %vm3517, %v9817, %v9919
    %v10021 = vsel %vm3517, %v9818, %v9921
    %v10022 = vsel %vm3517, %v9819, %v9923
    %v10023 = vsel %vm3517, %v9906, %v9925
    %v10024 = vsel %vm3517, %v9821, %v9927
    %v10025 = vsel %vm3517, %v9822, %v9929
    %v10026 = vsel %vm3517, %v9823, %v9931
    %v10027 = vsel %vm3517, %v9907, %v9933
    %v10028 = vsel %vm8248, %v10020, %v9945
    %v10029 = vsel %vm8248, %v10021, %v9947
    %v10030 = vsel %vm8248, %v10022, %v9949
    %v10031 = vsel %vm8248, %v10023, %v9951
    %v10032 = vsel %vm8248, %v10024, %v9953
    %v10033 = vsel %vm8248, %v10025, %v9955
    %v10034 = vsel %vm8248, %v10026, %v9957
    %v10035 = vsel %vm8248, %v10027, %v9959
    %v10036 = vsel %vm8265, %v10028, %v9971
    %v10037 = vsel %vm8265, %v10029, %v9973
    %v10038 = vsel %vm8265, %v10030, %v9975
    %v10039 = vsel %vm8265, %v10031, %v9977
    %v10040 = vsel %vm8265, %v10032, %v9979
    %v10041 = vsel %vm8265, %v10033, %v9981
    %v10042 = vsel %vm8265, %v10034, %v9983
    %v10043 = vsel %vm8265, %v10035, %v9985
    %v10060 = vcombine.low %v10012, %v10036
    %v10061 = vcombine.low %v10013, %v10037
    %v10062 = vcombine.low %v10014, %v10038
    %v10063 = vcombine.low %v10015, %v10039
    %v10064 = vcombine.low %v10016, %v10040
    %v10065 = vcombine.low %v10017, %v10041
    %v10066 = vcombine.low %v10018, %v10042
    %v10067 = vcombine.low %v10019, %v10043
    %v10068 = vcombine.low %v10060, %v10061
    %v10069 = vcombine.high %v10060, %v10061
    %v10070 = vcombine.low %v9850, %v9851
    %v10071 = vcombine.low %v10062, %v10063
    %v10072 = vcombine.high %v10062, %v10063
    %v10073 = vcombine.low %v9916, %v9994
    %v10074 = vcombine.low %v10064, %v10065
    %v10075 = vcombine.high %v10064, %v10065
    %v10076 = vcombine.low %v9854, %v9855
    %v10077 = vcombine.low %v10066, %v10067
    %v10078 = vcombine.high %v10066, %v10067
    %v10079 = vcombine.low %v9917, %v9995
    %v10092 = vpack.c.bf16 %v10071, %v10068
    %v10093 = vpack.c.bf16 %v10072, %v10069
    %v10094 = vpack.c.bf16 %v10073, %v10070
    %v10095 = vpack.c.bf16 %v10077, %v10074
    %v10096 = vpack.c.bf16 %v10078, %v10075
    %v10097 = vpack.c.bf16 %v10079, %v10076
    %v10098 = vld [vmem:[#allocation18] sm:$0xf]
    %v10099 = vld [vmem:[#allocation18 + $0x4] sm:$0xf]
    %v10100 = vld [vmem:[#allocation18 + $0x8] sm:$0xf]
    %v10101 = vld [vmem:[#allocation18 + $0xc] sm:$0xf]
    %v10102 = vld [vmem:[#allocation18 + $0x10] sm:$0xf]
    %v10103 = vld [vmem:[#allocation18 + $0x14] sm:$0xf]
    %v10104 = vld [vmem:[#allocation18 + $0x18] sm:$0xf]
    %v10105 = vld [vmem:[#allocation18 + $0x1c] sm:$0xf]
    %v10106 = vld [vmem:[#allocation18 + $0x20] sm:$0xf]
    %v10107 = vld [vmem:[#allocation18 + $0x24] sm:$0xf]
    %v10108 = vld [vmem:[#allocation18 + $0x28] sm:$0xf]
    %v10109 = vld [vmem:[#allocation18 + $0x2c] sm:$0xf]
    %v10110 = vld [vmem:[#allocation18 + $0x30] sm:$0xf]
    %v10111 = vld [vmem:[#allocation18 + $0x34] sm:$0xf]
    %v10112 = vld [vmem:[#allocation18 + $0x38] sm:$0xf]
    %v10113 = vld [vmem:[#allocation18 + $0x3c] sm:$0xf]
    %v10114 = vld [vmem:[#allocation18 + $0x40] sm:$0xf]
    %v10115 = vld [vmem:[#allocation18 + $0x44] sm:$0xf]
    %v10116 = vld [vmem:[#allocation18 + $0x48] sm:$0xf]
    %v10117 = vld [vmem:[#allocation18 + $0x4c] sm:$0xf]
    %v10118 = vld [vmem:[#allocation18 + $0x50] sm:$0xf]
    %v10119 = vld [vmem:[#allocation18 + $0x54] sm:$0xf]
    %v10120 = vld [vmem:[#allocation18 + $0x58] sm:$0xf]
    %v10121 = vld [vmem:[#allocation18 + $0x5c] sm:$0xf]
    %v10122 = vld [vmem:[#allocation18 + $0x60] sm:$0xf]
    %v10123 = vld [vmem:[#allocation18 + $0x64] sm:$0xf]
    %v10124 = vld [vmem:[#allocation18 + $0x68] sm:$0xf]
    %v10125 = vld [vmem:[#allocation18 + $0x6c] sm:$0xf]
    %v10126 = vld [vmem:[#allocation18 + $0x70] sm:$0xf]
    %v10127 = vld [vmem:[#allocation18 + $0x74] sm:$0xf]
    %v10128 = vld [vmem:[#allocation18 + $0x78] sm:$0xf]
    %v10129 = vld [vmem:[#allocation18 + $0x7c] sm:$0xf]
    %v10130 = vld [vmem:[#allocation18 + $0x80] sm:$0xf]
    %v10131 = vld [vmem:[#allocation18 + $0x84] sm:$0xf]
    %v10132 = vld [vmem:[#allocation18 + $0x88] sm:$0xf]
    %v10133 = vld [vmem:[#allocation18 + $0x8c] sm:$0xf]
    %v10170 = vunpack.c.l.b16 %v10098
    %v10171 = vunpack.c.l.b16 %v10099
    %v10172 = vunpack.c.l.b16 %v10100
    %v10173 = vunpack.c.l.b16 %v10101
    %v10174 = vunpack.c.l.b16 %v10102
    %v10175 = vunpack.c.l.b16 %v10103
    %v10176 = vunpack.c.l.b16 %v10104
    %v10177 = vunpack.c.l.b16 %v10105
    %v10178 = vunpack.c.l.b16 %v10106
    %v10179 = vunpack.c.l.b16 %v10107
    %v10180 = vunpack.c.l.b16 %v10108
    %v10181 = vunpack.c.l.b16 %v10109
    %v10182 = vunpack.c.l.b16 %v10110
    %v10183 = vunpack.c.l.b16 %v10111
    %v10184 = vunpack.c.l.b16 %v10112
    %v10185 = vunpack.c.l.b16 %v10113
    %v10186 = vunpack.c.l.b16 %v10114
    %v10187 = vunpack.c.l.b16 %v10115
    %v10188 = vunpack.c.l.b16 %v10116
    %v10189 = vunpack.c.l.b16 %v10117
    %v10190 = vunpack.c.l.b16 %v10118
    %v10191 = vunpack.c.l.b16 %v10119
    %v10192 = vunpack.c.l.b16 %v10120
    %v10193 = vunpack.c.l.b16 %v10121
    %v10194 = vunpack.c.l.b16 %v10122
    %v10195 = vunpack.c.l.b16 %v10123
    %v10196 = vunpack.c.l.b16 %v10124
    %v10197 = vunpack.c.l.b16 %v10125
    %v10198 = vunpack.c.l.b16 %v10126
    %v10199 = vunpack.c.l.b16 %v10127
    %v10200 = vunpack.c.l.b16 %v10128
    %v10201 = vunpack.c.l.b16 %v10129
    %v10202 = vunpack.c.l.b16 %v10130
    %v10203 = vunpack.c.l.b16 %v10131
    %v10204 = vunpack.c.l.b16 %v10132
    %v10205 = vunpack.c.l.b16 %v10133
    %v10206 = vpack.c.b16 %v10171, %v10170
    %v10207 = vpack.c.b16 %v10173, %v10172
    %v10208 = vpack.c.b16 %v10175, %v10174
    %v10209 = vpack.c.b16 %v10177, %v10176
    %v10210 = vpack.c.b16 %v10179, %v10178
    %v10211 = vpack.c.b16 %v10181, %v10180
    %v10212 = vpack.c.b16 %v10183, %v10182
    %v10213 = vpack.c.b16 %v10185, %v10184
    %v10214 = vpack.c.b16 %v10187, %v10186
    %v10215 = vpack.c.b16 %v10189, %v10188
    %v10216 = vpack.c.b16 %v10191, %v10190
    %v10217 = vpack.c.b16 %v10193, %v10192
    %v10218 = vpack.c.b16 %v10195, %v10194
    %v10219 = vpack.c.b16 %v10197, %v10196
    %v10220 = vpack.c.b16 %v10199, %v10198
    %v10221 = vpack.c.b16 %v10201, %v10200
    %v10222 = vpack.c.b16 %v10203, %v10202
    %v10223 = vpack.c.b16 %v10205, %v10204
    %v10243 = vsel %vm3517, %v10094, 0
    %v10246 = vsel %vm3517, %v10097, 0
    %10248 = vmatprep.subr.bf16.mxu0 0
    %10249 = vmatpush1.bf16.msra.mxu0 %v10206
    %10250 = vmatprep.subr.bf16.mxu0 0
    %10251 = vmatpush1.bf16.msra.mxu0 %v10207
    %10252 = vmatprep.subr.bf16.mxu0 0
    %10253 = vmatpush1.bf16.msra.mxu0 %v10208
    %10254 = vmatprep.subr.bf16.mxu0 0
    %10255 = vmatpush1.bf16.msra.mxu0 %v10209
    %10256 = vmatprep.subr.bf16.mxu0 0
    %10257 = vmatpush1.bf16.msra.mxu0 %v10210
    %10258 = vmatprep.subr.bf16.mxu0 0
    %10259 = vmatpush1.bf16.msra.mxu0 %v10211
    %10260 = vmatprep.subr.bf16.mxu0 0
    %10261 = vmatpush1.bf16.msra.mxu0 %v10212
    %10262 = vmatprep.subr.bf16.mxu0 0
    %10263 = vmatpush1.bf16.msra.mxu0 %v10213
    %10264 = vmatprep.subr.bf16.mxu0 0
    %10265 = vmatpush1.bf16.msra.mxu0 %v10214
    %10266 = vmatprep.subr.bf16.mxu0 0
    %10267 = vmatpush1.bf16.msra.mxu0 %v10215
    %10268 = vmatprep.subr.bf16.mxu0 0
    %10269 = vmatpush1.bf16.msra.mxu0 %v10216
    %10270 = vmatprep.subr.bf16.mxu0 0
    %10271 = vmatpush1.bf16.msra.mxu0 %v10217
    %10272 = vmatprep.subr.bf16.mxu0 0
    %10273 = vmatpush1.bf16.msra.mxu0 %v10218
    %10274 = vmatprep.subr.bf16.mxu0 0
    %10275 = vmatpush1.bf16.msra.mxu0 %v10219
    %10276 = vmatprep.subr.bf16.mxu0 0
    %10277 = vmatpush1.bf16.msra.mxu0 %v10220
    %10278 = vmatprep.subr.bf16.mxu0 0
    %10279 = vmatpush1.bf16.msra.mxu0 %v10221
    %10280 = vmatprep.mubr.bf16.mxu0 %v10093
    %10281 = vmatmul.mubr.bf16.gmra.mrb[0].mxu0 %v10092
    %v10282 = vpop.f32.mrb[0].mxu0
    %v10283 = vadd.f32 0.0, %v10282
    %v10284 = vpop.f32.mrb[0].mxu0
    %v10285 = vpop.f32.mrb[0].mxu0
    %v10286 = vadd.f32 0.0, %v10285
    %v10287 = vpop.f32.mrb[0].mxu0
    %10288 = vmatprep.mubr.bf16.mxu0 %v10096
    %10289 = vmatmul.mubr.bf16.gmra.mrb[0].mxu0 %v10095
    %v10290 = vpop.f32.mrb[0].mxu0
    %v10291 = vadd.f32 0.0, %v10290
    %v10292 = vpop.f32.mrb[0].mxu0
    %v10293 = vpop.f32.mrb[0].mxu0
    %v10294 = vadd.f32 0.0, %v10293
    %v10295 = vpop.f32.mrb[0].mxu0
    %10296 = vdwg.mxu0
    %10297 = vmatprep.subr.bf16.mxu0 0
    %10298 = vmatpush1.bf16.msra.mxu0 %v10222
    %10299 = vmatprep.subr.bf16.mxu0 0
    %10300 = vmatpush1.bf16.msra.mxu0 %v10223
    %10301 = vmatprep.subr.bf16.mxu0 0
    %10302 = vmatpush1.bf16.msra.mxu0 0
    %10303 = vmatprep.subr.bf16.mxu0 0
    %10304 = vmatpush1.bf16.msra.mxu0 0
    %10305 = vmatprep.subr.bf16.mxu0 0
    %10306 = vmatpush1.bf16.msra.mxu0 0
    %10307 = vmatprep.subr.bf16.mxu0 0
    %10308 = vmatpush1.bf16.msra.mxu0 0
    %10309 = vmatprep.subr.bf16.mxu0 0
    %10310 = vmatpush1.bf16.msra.mxu0 0
    %10311 = vmatprep.subr.bf16.mxu0 0
    %10312 = vmatpush1.bf16.msra.mxu0 0
    %10313 = vmatprep.subr.bf16.mxu0 0
    %10314 = vmatpush1.bf16.msra.mxu0 0
    %10315 = vmatprep.subr.bf16.mxu0 0
    %10316 = vmatpush1.bf16.msra.mxu0 0
    %10317 = vmatprep.subr.bf16.mxu0 0
    %10318 = vmatpush1.bf16.msra.mxu0 0
    %10319 = vmatprep.subr.bf16.mxu0 0
    %10320 = vmatpush1.bf16.msra.mxu0 0
    %10321 = vmatprep.subr.bf16.mxu0 0
    %10322 = vmatpush1.bf16.msra.mxu0 0
    %10323 = vmatprep.subr.bf16.mxu0 0
    %10324 = vmatpush1.bf16.msra.mxu0 0
    %10325 = vmatprep.subr.bf16.mxu0 0
    %10326 = vmatpush1.bf16.msra.mxu0 0
    %10327 = vmatprep.subr.bf16.mxu0 0
    %10328 = vmatpush1.bf16.msra.mxu0 0
    %10329 = vmatprep.mubr.bf16.mxu0 0
    %10330 = vmatmul.mubr.bf16.gmra.mrb[0].mxu0 %v10243
    %v10331 = vpop.f32.mrb[0].mxu0
    %v10332 = vadd.f32 %v10283, %v10331
    %v10333 = vpop.f32.mrb[0].mxu0
    %v10334 = vpop.f32.mrb[0].mxu0
    %v10335 = vadd.f32 %v10286, %v10334
    %v10336 = vpop.f32.mrb[0].mxu0
    %10337 = vmatprep.mubr.bf16.mxu0 0
    %10338 = vmatmul.mubr.bf16.gmra.mrb[0].mxu0 %v10246
    %v10339 = vpop.f32.mrb[0].mxu0
    %v10340 = vadd.f32 %v10291, %v10339
    %v10341 = vpop.f32.mrb[0].mxu0
    %v10342 = vpop.f32.mrb[0].mxu0
    %v10343 = vadd.f32 %v10294, %v10342
    %v10344 = vpop.f32.mrb[0].mxu0
    %10345 = vdwg.mxu0
    %v10346 = vsel %vm3517, %v10332, 0.0
    %v10347 = vsel %vm3517, %v10335, 0.0
    %v10348 = vadd.f32 %v10346, %v10347
    %v10349 = vsel %vm3517, %v10340, 0.0
    %v10350 = vadd.f32 %v10348, %v10349
    %v10351 = vsel %vm3517, %v10343, 0.0
    %v10352 = vadd.f32 %v10350, %v10351
    %v10353 = vrot.slane %v10352, 4
    %v10354 = vadd.f32 %v10352, %v10353
    %v10355 = vrot.slane %v10354, 2
    %v10356 = vadd.f32 %v10354, %v10355
    %v10357 = vrot.slane %v10356, 1
    %v10358 = vadd.f32 %v10356, %v10357
    %v10359 = vmul.f32 %v10358, 0.03125
    %v10360 = vmul.f32 %v10332, %v10332
    %v10361 = vmul.f32 %v10335, %v10335
    %v10362 = vmul.f32 %v10340, %v10340
    %v10363 = vmul.f32 %v10343, %v10343
    %v10364 = vsel %vm3517, %v10360, 0.0
    %v10365 = vsel %vm3517, %v10361, 0.0
    %v10366 = vadd.f32 %v10364, %v10365
    %v10367 = vsel %vm3517, %v10362, 0.0
    %v10368 = vadd.f32 %v10366, %v10367
    %v10369 = vsel %vm3517, %v10363, 0.0
    %v10370 = vadd.f32 %v10368, %v10369
    %v10371 = vrot.slane %v10370, 4
    %v10372 = vadd.f32 %v10370, %v10371
    %v10373 = vrot.slane %v10372, 2
    %v10374 = vadd.f32 %v10372, %v10373
    %v10375 = vrot.slane %v10374, 1
    %v10376 = vadd.f32 %v10374, %v10375
    %v10377 = vmul.f32 %v10376, 0.03125
    %v10378 = vmul.f32 %v10359, %v10359
    %v10379 = vsub.f32 %v10377, %v10378
    %v10380 = vld [vmem:[#allocation20] sm:$0x1]
    %v10381 = vadd.f32 %v10379, 1e-05
    %v10382 = vrsqrt.pop %v10381
    %v10383 = vmul.f32 %v10380, %v10382
    %v10384 = vld [vmem:[#allocation21] sm:$0x1]
    %v10385 = vmul.f32 %v10359, %v10383
    %v10386 = vsub.f32 %v10384, %v10385
    %v10388 = vlaneseq
    %v10389 = vshrl.u32 %v10388, 7
    %v10390 = vsub.s32 0, %v10389
    %v10391 = vrot.slane %v10383, %v10390
    %v10393 = vmul.f32 %v10332, %v10391
    %v10394 = vmul.f32 %v10335, %v10391
    %v10395 = vmul.f32 %v10340, %v10391
    %v10396 = vmul.f32 %v10343, %v10391
    %v10398 = vlaneseq
    %v10399 = vshrl.u32 %v10398, 7
    %v10400 = vsub.s32 0, %v10399
    %v10401 = vrot.slane %v10386, %v10400
    %v10403 = vadd.f32 %v10393, %v10401
    %v10404 = vadd.f32 %v10394, %v10401
    %v10405 = vadd.f32 %v10395, %v10401
    %v10406 = vadd.f32 %v10396, %v10401
    %v10407 = vmax.f32 %v10403, 0.0
    %v10408 = vmax.f32 %v10404, 0.0
    %v10409 = vmax.f32 %v10405, 0.0
    %v10410 = vmax.f32 %v10406, 0.0
    %v10415 = vcombine.high %v10407, %v10407
    %v10417 = vunpack.c.l.s4 1983009808
    %v10418 = vunpack.c.0.s8 %v10417
    %v10419 = vlaneseq
    %v10420 = vshrl.u32 %v10419, 7
    %v10421 = vsub.s32 %v10418, %v10420
    %v10422 = vrot.slane %v10407, %v10421
    %v10424 = vunpack.c.l.s4 1983009808
    %v10425 = vunpack.c.0.s8 %v10424
    %v10426 = vlaneseq
    %v10427 = vshrl.u32 %v10426, 7
    %v10428 = vsub.s32 %v10425, %v10427
    %v10429 = vrot.slane %v10415, %v10428
    %v10430 = vcombine.high %v10422, %v10422
    %v10431 = vcombine.high %v10429, %v10429
    %v10432 = vcombine.high %v10408, %v10408
    %v10434 = vunpack.c.l.s4 1983009808
    %v10435 = vunpack.c.0.s8 %v10434
    %v10436 = vlaneseq
    %v10437 = vshrl.u32 %v10436, 7
    %v10438 = vsub.s32 %v10435, %v10437
    %v10439 = vrot.slane %v10408, %v10438
    %v10441 = vunpack.c.l.s4 1983009808
    %v10442 = vunpack.c.0.s8 %v10441
    %v10443 = vlaneseq
    %v10444 = vshrl.u32 %v10443, 7
    %v10445 = vsub.s32 %v10442, %v10444
    %v10446 = vrot.slane %v10432, %v10445
    %v10447 = vcombine.high %v10439, %v10439
    %v10448 = vcombine.high %v10446, %v10446
    %v10449 = vcombine.high %v10409, %v10409
    %v10451 = vunpack.c.l.s4 1983009808
    %v10452 = vunpack.c.0.s8 %v10451
    %v10453 = vlaneseq
    %v10454 = vshrl.u32 %v10453, 7
    %v10455 = vsub.s32 %v10452, %v10454
    %v10456 = vrot.slane %v10409, %v10455
    %v10458 = vunpack.c.l.s4 1983009808
    %v10459 = vunpack.c.0.s8 %v10458
    %v10460 = vlaneseq
    %v10461 = vshrl.u32 %v10460, 7
    %v10462 = vsub.s32 %v10459, %v10461
    %v10463 = vrot.slane %v10449, %v10462
    %v10464 = vcombine.high %v10456, %v10456
    %v10465 = vcombine.high %v10463, %v10463
    %v10466 = vcombine.high %v10410, %v10410
    %v10468 = vunpack.c.l.s4 1983009808
    %v10469 = vunpack.c.0.s8 %v10468
    %v10470 = vlaneseq
    %v10471 = vshrl.u32 %v10470, 7
    %v10472 = vsub.s32 %v10469, %v10471
    %v10473 = vrot.slane %v10410, %v10472
    %v10475 = vunpack.c.l.s4 1983009808
    %v10476 = vunpack.c.0.s8 %v10475
    %v10477 = vlaneseq
    %v10478 = vshrl.u32 %v10477, 7
    %v10479 = vsub.s32 %v10476, %v10478
    %v10480 = vrot.slane %v10466, %v10479
    %v10481 = vcombine.high %v10473, %v10473
    %v10482 = vcombine.high %v10480, %v10480
    %v10499 = vsel %vm5471, %v10422, -inf
    %v10500 = vrot.slane %v10499, 4
    %v10501 = vmax.f32 %v10499, %v10500
    %v10502 = vrot.slane %v10501, 2
    %v10503 = vmax.f32 %v10501, %v10502
    %v10504 = vrot.slane %v10503, 1
    %v10505 = vmax.f32 %v10503, %v10504
    %v10506 = vsel %vm5471, %v10430, -inf
    %v10507 = vrot.slane %v10506, 4
    %v10508 = vmax.f32 %v10506, %v10507
    %v10509 = vrot.slane %v10508, 2
    %v10510 = vmax.f32 %v10508, %v10509
    %v10511 = vrot.slane %v10510, 1
    %v10512 = vmax.f32 %v10510, %v10511
    %v10513 = vsel %vm5471, %v10429, -inf
    %v10514 = vrot.slane %v10513, 4
    %v10515 = vmax.f32 %v10513, %v10514
    %v10516 = vrot.slane %v10515, 2
    %v10517 = vmax.f32 %v10515, %v10516
    %v10518 = vrot.slane %v10517, 1
    %v10519 = vmax.f32 %v10517, %v10518
    %v10520 = vsel %vm5471, %v10431, -inf
    %v10521 = vrot.slane %v10520, 4
    %v10522 = vmax.f32 %v10520, %v10521
    %v10523 = vrot.slane %v10522, 2
    %v10524 = vmax.f32 %v10522, %v10523
    %v10525 = vrot.slane %v10524, 1
    %v10526 = vmax.f32 %v10524, %v10525
    %v10527 = vsel %vm5471, %v10439, -inf
    %v10528 = vrot.slane %v10527, 4
    %v10529 = vmax.f32 %v10527, %v10528
    %v10530 = vrot.slane %v10529, 2
    %v10531 = vmax.f32 %v10529, %v10530
    %v10532 = vrot.slane %v10531, 1
    %v10533 = vmax.f32 %v10531, %v10532
    %v10534 = vsel %vm5471, %v10447, -inf
    %v10535 = vrot.slane %v10534, 4
    %v10536 = vmax.f32 %v10534, %v10535
    %v10537 = vrot.slane %v10536, 2
    %v10538 = vmax.f32 %v10536, %v10537
    %v10539 = vrot.slane %v10538, 1
    %v10540 = vmax.f32 %v10538, %v10539
    %v10541 = vsel %vm5471, %v10446, -inf
    %v10542 = vrot.slane %v10541, 4
    %v10543 = vmax.f32 %v10541, %v10542
    %v10544 = vrot.slane %v10543, 2
    %v10545 = vmax.f32 %v10543, %v10544
    %v10546 = vrot.slane %v10545, 1
    %v10547 = vmax.f32 %v10545, %v10546
    %v10548 = vsel %vm5471, %v10448, -inf
    %v10549 = vrot.slane %v10548, 4
    %v10550 = vmax.f32 %v10548, %v10549
    %v10551 = vrot.slane %v10550, 2
    %v10552 = vmax.f32 %v10550, %v10551
    %v10553 = vrot.slane %v10552, 1
    %v10554 = vmax.f32 %v10552, %v10553
    %v10555 = vsel %vm5471, %v10456, -inf
    %v10556 = vrot.slane %v10555, 4
    %v10557 = vmax.f32 %v10555, %v10556
    %v10558 = vrot.slane %v10557, 2
    %v10559 = vmax.f32 %v10557, %v10558
    %v10560 = vrot.slane %v10559, 1
    %v10561 = vmax.f32 %v10559, %v10560
    %v10562 = vsel %vm5471, %v10464, -inf
    %v10563 = vrot.slane %v10562, 4
    %v10564 = vmax.f32 %v10562, %v10563
    %v10565 = vrot.slane %v10564, 2
    %v10566 = vmax.f32 %v10564, %v10565
    %v10567 = vrot.slane %v10566, 1
    %v10568 = vmax.f32 %v10566, %v10567
    %v10569 = vsel %vm5471, %v10463, -inf
    %v10570 = vrot.slane %v10569, 4
    %v10571 = vmax.f32 %v10569, %v10570
    %v10572 = vrot.slane %v10571, 2
    %v10573 = vmax.f32 %v10571, %v10572
    %v10574 = vrot.slane %v10573, 1
    %v10575 = vmax.f32 %v10573, %v10574
    %v10576 = vsel %vm5471, %v10465, -inf
    %v10577 = vrot.slane %v10576, 4
    %v10578 = vmax.f32 %v10576, %v10577
    %v10579 = vrot.slane %v10578, 2
    %v10580 = vmax.f32 %v10578, %v10579
    %v10581 = vrot.slane %v10580, 1
    %v10582 = vmax.f32 %v10580, %v10581
    %v10583 = vsel %vm5471, %v10473, -inf
    %v10584 = vrot.slane %v10583, 4
    %v10585 = vmax.f32 %v10583, %v10584
    %v10586 = vrot.slane %v10585, 2
    %v10587 = vmax.f32 %v10585, %v10586
    %v10588 = vrot.slane %v10587, 1
    %v10589 = vmax.f32 %v10587, %v10588
    %v10590 = vsel %vm5471, %v10481, -inf
    %v10591 = vrot.slane %v10590, 4
    %v10592 = vmax.f32 %v10590, %v10591
    %v10593 = vrot.slane %v10592, 2
    %v10594 = vmax.f32 %v10592, %v10593
    %v10595 = vrot.slane %v10594, 1
    %v10596 = vmax.f32 %v10594, %v10595
    %v10597 = vsel %vm5471, %v10480, -inf
    %v10598 = vrot.slane %v10597, 4
    %v10599 = vmax.f32 %v10597, %v10598
    %v10600 = vrot.slane %v10599, 2
    %v10601 = vmax.f32 %v10599, %v10600
    %v10602 = vrot.slane %v10601, 1
    %v10603 = vmax.f32 %v10601, %v10602
    %v10604 = vsel %vm5471, %v10482, -inf
    %v10605 = vrot.slane %v10604, 4
    %v10606 = vmax.f32 %v10604, %v10605
    %v10607 = vrot.slane %v10606, 2
    %v10608 = vmax.f32 %v10606, %v10607
    %v10609 = vrot.slane %v10608, 1
    %v10610 = vmax.f32 %v10608, %v10609
    %v10611 = vmax.f32 %v10505, %v10519
    %v10612 = vmax.f32 %v10512, %v10526
    %v10613 = vmax.f32 %v10533, %v10547
    %v10614 = vmax.f32 %v10540, %v10554
    %v10615 = vmax.f32 %v10561, %v10575
    %v10616 = vmax.f32 %v10568, %v10582
    %v10617 = vmax.f32 %v10589, %v10603
    %v10618 = vmax.f32 %v10596, %v10610
    %10619 = vst.msk [vmem:[#allocation5] sm:$0xf] %vm9787, 0.0
    %10620 = vst.msk [vmem:[#allocation5 + $0x4] sm:$0xf] %vm9787, 0.0
    %10621 = vst.msk [vmem:[#allocation5 + $0x8] sm:$0xf] %vm9787, 0.0
    %10622 = vst.msk [vmem:[#allocation5 + $0xc] sm:$0xf] %vm9787, 0.0
    %10623 = vst.msk [vmem:[#allocation5 + $0x10] sm:$0xf] %vm9787, 0.0
    %10624 = vst.msk [vmem:[#allocation5 + $0x14] sm:$0xf] %vm9787, 0.0
    %10625 = vst.msk [vmem:[#allocation5 + $0x18] sm:$0xf] %vm9787, 0.0
    %10626 = vst.msk [vmem:[#allocation5 + $0x1c] sm:$0xf] %vm9787, 0.0
    %v10635 = vsel %vm7560, %v10612, %v10611
    %v10636 = vsel %vm7560, %v10614, %v10613
    %v10637 = vsel %vm7560, %v10616, %v10615
    %v10638 = vsel %vm7560, %v10618, %v10617
    %s10643 = scalar_lea.vmem [#allocation5], 4
    %10644 = vst.msk [vmem:[%s10643 + $0x1] sm:$0x3] %vm5471, %v10635
    %10645 = vst.msk [vmem:[%s10643 + $0x5] sm:$0x3] %vm5471, %v10636
    %10646 = vst.msk [vmem:[%s10643 + $0x11] sm:$0x3] %vm5471, %v10637
    %10647 = vst.msk [vmem:[%s10643 + $0x15] sm:$0x3] %vm5471, %v10638
    %v10648 = vld [vmem:[#allocation5] sm:$0xf]
    %v10649 = vld [vmem:[#allocation5 + $0x4] sm:$0xf]
    %v10650 = vld [vmem:[#allocation5 + $0x8] sm:$0xf]
    %v10651 = vld [vmem:[#allocation5 + $0xc] sm:$0xf]
    %v10652 = vld [vmem:[#allocation5 + $0x10] sm:$0xf]
    %v10653 = vld [vmem:[#allocation5 + $0x14] sm:$0xf]
    %v10654 = vld [vmem:[#allocation5 + $0x18] sm:$0xf]
    %v10655 = vld [vmem:[#allocation5 + $0x1c] sm:$0xf]
    %v10660 = vrot.slane %v10648, 1
    %v10661 = vrot.slane %v10649, 1
    %v10662 = vrot.slane %v10652, 1
    %v10663 = vrot.slane %v10653, 1
    %10664 = vrot.lane.b32.xlu0 %v10660, 32
    %v10665 = vpop.permute.xlu0 %10664
    %10666 = vrot.lane.b32.xlu0 %v10661, 32
    %v10667 = vpop.permute.xlu0 %10666
    %10668 = vrot.lane.b32.xlu0 %v10662, 32
    %v10669 = vpop.permute.xlu0 %10668
    %10670 = vrot.lane.b32.xlu0 %v10663, 32
    %v10671 = vpop.permute.xlu0 %10670
    %v10676 = vrot.slane %v10648, 2
    %v10677 = vrot.slane %v10649, 2
    %v10678 = vrot.slane %v10652, 2
    %v10679 = vrot.slane %v10653, 2
    %10680 = vrot.lane.b32.xlu0 %v10676, 64
    %v10681 = vpop.permute.xlu0 %10680
    %10682 = vrot.lane.b32.xlu0 %v10677, 64
    %v10683 = vpop.permute.xlu0 %10682
    %10684 = vrot.lane.b32.xlu0 %v10678, 64
    %v10685 = vpop.permute.xlu0 %10684
    %10686 = vrot.lane.b32.xlu0 %v10679, 64
    %v10687 = vpop.permute.xlu0 %10686
    %10694 = vrot.lane.b32.xlu0 %v10649, 96
    %v10695 = vpop.permute.xlu0 %10694
    %10696 = vrot.lane.b32.xlu0 %v10650, 96
    %v10697 = vpop.permute.xlu0 %10696
    %10698 = vrot.lane.b32.xlu0 %v10653, 96
    %v10699 = vpop.permute.xlu0 %10698
    %10700 = vrot.lane.b32.xlu0 %v10654, 96
    %v10701 = vpop.permute.xlu0 %10700
    %v10706 = vrot.slane %v10650, 1
    %v10707 = vrot.slane %v10654, 1
    %v10712 = vrot.slane %v10650, 2
    %v10713 = vrot.slane %v10654, 2
    %10714 = vrot.lane.b32.xlu0 %v10677, 32
    %v10715 = vpop.permute.xlu0 %10714
    %10716 = vrot.lane.b32.xlu0 %v10712, 32
    %v10717 = vpop.permute.xlu0 %10716
    %10718 = vrot.lane.b32.xlu0 %v10679, 32
    %v10719 = vpop.permute.xlu0 %10718
    %10720 = vrot.lane.b32.xlu0 %v10713, 32
    %v10721 = vpop.permute.xlu0 %10720
    %10728 = vrot.lane.b32.xlu0 %v10650, 64
    %v10729 = vpop.permute.xlu0 %10728
    %10730 = vrot.lane.b32.xlu0 %v10651, 64
    %v10731 = vpop.permute.xlu0 %10730
    %10732 = vrot.lane.b32.xlu0 %v10654, 64
    %v10733 = vpop.permute.xlu0 %10732
    %10734 = vrot.lane.b32.xlu0 %v10655, 64
    %v10735 = vpop.permute.xlu0 %10734
    %v10740 = vrot.slane %v10651, 1
    %v10741 = vrot.slane %v10655, 1
    %10742 = vrot.lane.b32.xlu0 %v10706, 96
    %v10743 = vpop.permute.xlu0 %10742
    %10744 = vrot.lane.b32.xlu0 %v10740, 96
    %v10745 = vpop.permute.xlu0 %10744
    %10746 = vrot.lane.b32.xlu0 %v10707, 96
    %v10747 = vpop.permute.xlu0 %10746
    %10748 = vrot.lane.b32.xlu0 %v10741, 96
    %v10749 = vpop.permute.xlu0 %10748
    %v10754 = vrot.slane %v10651, 2
    %v10755 = vrot.slane %v10655, 2
    %v10756 = vsel %vm3517, %v10648, %v10665
    %v10757 = vsel %vm3517, %v10649, %v10667
    %v10758 = vsel %vm3517, %v10652, %v10669
    %v10759 = vsel %vm3517, %v10653, %v10671
    %v10760 = vsel %vm8248, %v10756, %v10681
    %v10761 = vsel %vm8248, %v10757, %v10683
    %v10762 = vsel %vm8248, %v10758, %v10685
    %v10763 = vsel %vm8248, %v10759, %v10687
    %v10764 = vsel %vm8265, %v10760, %v10695
    %v10765 = vsel %vm8265, %v10761, %v10697
    %v10766 = vsel %vm8265, %v10762, %v10699
    %v10767 = vsel %vm8265, %v10763, %v10701
    %v10768 = vsel %vm3517, %v10661, %v10715
    %v10769 = vsel %vm3517, %v10706, %v10717
    %v10770 = vsel %vm3517, %v10663, %v10719
    %v10771 = vsel %vm3517, %v10707, %v10721
    %v10772 = vsel %vm8248, %v10768, %v10729
    %v10773 = vsel %vm8248, %v10769, %v10731
    %v10774 = vsel %vm8248, %v10770, %v10733
    %v10775 = vsel %vm8248, %v10771, %v10735
    %v10776 = vsel %vm8265, %v10772, %v10743
    %v10777 = vsel %vm8265, %v10773, %v10745
    %v10778 = vsel %vm8265, %v10774, %v10747
    %v10779 = vsel %vm8265, %v10775, %v10749
    %v10788 = vcombine.low %v10764, %v10776
    %v10790 = vunpack.c.l.s4 1983009808
    %v10791 = vunpack.c.0.s8 %v10790
    %v10792 = vlaneseq
    %v10793 = vshrl.u32 %v10792, 7
    %v10794 = vsub.s32 %v10791, %v10793
    %v10795 = vrot.slane %v10788, %v10794
    %v10797 = vunpack.c.l.s4 1983009808
    %v10798 = vunpack.c.0.s8 %v10797
    %v10799 = vlaneseq
    %v10800 = vshrl.u32 %v10799, 7
    %v10801 = vsub.s32 %v10798, %v10800
    %v10802 = vrot.slane %v10712, %v10801
    %v10803 = vcombine.low %v10795, %v10802
    %v10804 = vcombine.low %v10765, %v10777
    %v10806 = vunpack.c.l.s4 1983009808
    %v10807 = vunpack.c.0.s8 %v10806
    %v10808 = vlaneseq
    %v10809 = vshrl.u32 %v10808, 7
    %v10810 = vsub.s32 %v10807, %v10809
    %v10811 = vrot.slane %v10804, %v10810
    %v10813 = vunpack.c.l.s4 1983009808
    %v10814 = vunpack.c.0.s8 %v10813
    %v10815 = vlaneseq
    %v10816 = vshrl.u32 %v10815, 7
    %v10817 = vsub.s32 %v10814, %v10816
    %v10818 = vrot.slane %v10754, %v10817
    %v10819 = vcombine.low %v10811, %v10818
    %v10820 = vcombine.low %v10766, %v10778
    %v10822 = vunpack.c.l.s4 1983009808
    %v10823 = vunpack.c.0.s8 %v10822
    %v10824 = vlaneseq
    %v10825 = vshrl.u32 %v10824, 7
    %v10826 = vsub.s32 %v10823, %v10825
    %v10827 = vrot.slane %v10820, %v10826
    %v10829 = vunpack.c.l.s4 1983009808
    %v10830 = vunpack.c.0.s8 %v10829
    %v10831 = vlaneseq
    %v10832 = vshrl.u32 %v10831, 7
    %v10833 = vsub.s32 %v10830, %v10832
    %v10834 = vrot.slane %v10713, %v10833
    %v10835 = vcombine.low %v10827, %v10834
    %v10836 = vcombine.low %v10767, %v10779
    %v10838 = vunpack.c.l.s4 1983009808
    %v10839 = vunpack.c.0.s8 %v10838
    %v10840 = vlaneseq
    %v10841 = vshrl.u32 %v10840, 7
    %v10842 = vsub.s32 %v10839, %v10841
    %v10843 = vrot.slane %v10836, %v10842
    %v10845 = vunpack.c.l.s4 1983009808
    %v10846 = vunpack.c.0.s8 %v10845
    %v10847 = vlaneseq
    %v10848 = vshrl.u32 %v10847, 7
    %v10849 = vsub.s32 %v10846, %v10848
    %v10850 = vrot.slane %v10755, %v10849
    %v10851 = vcombine.low %v10843, %v10850
    %v10852 = vcombine.low %v10803, %v10819
    %v10853 = vcombine.high %v10803, %v10819
    %v10854 = vcombine.low %v10835, %v10851
    %v10855 = vcombine.high %v10835, %v10851
    %v10857 = vunpack.c.l.s4 1983009808
    %v10858 = vunpack.c.0.s8 %v10857
    %v10859 = vlaneseq
    %v10860 = vshrl.u32 %v10859, 7
    %v10861 = vsub.s32 %v10858, %v10860
    %v10862 = vrot.slane %v10852, %v10861
    %v10864 = vunpack.c.l.s4 1983009808
    %v10865 = vunpack.c.0.s8 %v10864
    %v10866 = vlaneseq
    %v10867 = vshrl.u32 %v10866, 7
    %v10868 = vsub.s32 %v10865, %v10867
    %v10869 = vrot.slane %v10853, %v10868
    %v10871 = vunpack.c.l.s4 1983009808
    %v10872 = vunpack.c.0.s8 %v10871
    %v10873 = vlaneseq
    %v10874 = vshrl.u32 %v10873, 7
    %v10875 = vsub.s32 %v10872, %v10874
    %v10876 = vrot.slane %v10854, %v10875
    %v10878 = vunpack.c.l.s4 1983009808
    %v10879 = vunpack.c.0.s8 %v10878
    %v10880 = vlaneseq
    %v10881 = vshrl.u32 %v10880, 7
    %v10882 = vsub.s32 %v10879, %v10881
    %v10883 = vrot.slane %v10855, %v10882
    %v10884 = vcombine.low %v10862, %v10876
    %v10885 = vcombine.high %v10862, %v10876
    %v10886 = vcombine.low %v10869, %v10883
    %v10890 = vpack.c.bf16 %v10884, %v10884
    %v10891 = vpack.c.bf16 %v10885, %v10885
    %v10892 = vpack.c.bf16 %v10886, %v10886
    %v10893 = vld [vmem:[#allocation23] sm:$0xf]
    %v10894 = vld [vmem:[#allocation23 + $0x4] sm:$0xf]
    %v10895 = vld [vmem:[#allocation23 + $0x8] sm:$0xf]
    %v10896 = vld [vmem:[#allocation23 + $0xc] sm:$0xf]
    %v10897 = vld [vmem:[#allocation23 + $0x10] sm:$0xf]
    %v10898 = vld [vmem:[#allocation23 + $0x14] sm:$0xf]
    %v10899 = vld [vmem:[#allocation23 + $0x18] sm:$0xf]
    %v10900 = vld [vmem:[#allocation23 + $0x1c] sm:$0xf]
    %v10901 = vld [vmem:[#allocation23 + $0x20] sm:$0xf]
    %v10902 = vld [vmem:[#allocation23 + $0x24] sm:$0xf]
    %v10903 = vld [vmem:[#allocation23 + $0x28] sm:$0xf]
    %v10904 = vld [vmem:[#allocation23 + $0x2c] sm:$0xf]
    %v10905 = vld [vmem:[#allocation23 + $0x30] sm:$0xf]
    %v10906 = vld [vmem:[#allocation23 + $0x34] sm:$0xf]
    %v10907 = vld [vmem:[#allocation23 + $0x38] sm:$0xf]
    %v10908 = vld [vmem:[#allocation23 + $0x3c] sm:$0xf]
    %v10909 = vld [vmem:[#allocation23 + $0x40] sm:$0xf]
    %v10910 = vld [vmem:[#allocation23 + $0x44] sm:$0xf]
    %v10911 = vld [vmem:[#allocation23 + $0x48] sm:$0xf]
    %v10912 = vld [vmem:[#allocation23 + $0x4c] sm:$0xf]
    %v10913 = vld [vmem:[#allocation23 + $0x50] sm:$0xf]
    %v10914 = vld [vmem:[#allocation23 + $0x54] sm:$0xf]
    %v10915 = vld [vmem:[#allocation23 + $0x58] sm:$0xf]
    %v10916 = vld [vmem:[#allocation23 + $0x5c] sm:$0xf]
    %v10917 = vld [vmem:[#allocation23 + $0x60] sm:$0xf]
    %v10918 = vld [vmem:[#allocation23 + $0x64] sm:$0xf]
    %v10919 = vld [vmem:[#allocation23 + $0x68] sm:$0xf]
    %v10920 = vld [vmem:[#allocation23 + $0x6c] sm:$0xf]
    %v10921 = vld [vmem:[#allocation23 + $0x70] sm:$0xf]
    %v10922 = vld [vmem:[#allocation23 + $0x74] sm:$0xf]
    %v10923 = vld [vmem:[#allocation23 + $0x78] sm:$0xf]
    %v10924 = vld [vmem:[#allocation23 + $0x7c] sm:$0xf]
    %v10925 = vld [vmem:[#allocation23 + $0x80] sm:$0xf]
    %v10926 = vld [vmem:[#allocation23 + $0x84] sm:$0xf]
    %v10927 = vld [vmem:[#allocation23 + $0x88] sm:$0xf]
    %v10928 = vld [vmem:[#allocation23 + $0x8c] sm:$0xf]
    %v10965 = vunpack.c.l.b16 %v10893
    %v10966 = vunpack.c.l.b16 %v10894
    %v10967 = vunpack.c.l.b16 %v10895
    %v10968 = vunpack.c.l.b16 %v10896
    %v10969 = vunpack.c.l.b16 %v10897
    %v10970 = vunpack.c.l.b16 %v10898
    %v10971 = vunpack.c.l.b16 %v10899
    %v10972 = vunpack.c.l.b16 %v10900
    %v10973 = vunpack.c.l.b16 %v10901
    %v10974 = vunpack.c.l.b16 %v10902
    %v10975 = vunpack.c.l.b16 %v10903
    %v10976 = vunpack.c.l.b16 %v10904
    %v10977 = vunpack.c.l.b16 %v10905
    %v10978 = vunpack.c.l.b16 %v10906
    %v10979 = vunpack.c.l.b16 %v10907
    %v10980 = vunpack.c.l.b16 %v10908
    %v10981 = vunpack.c.l.b16 %v10909
    %v10982 = vunpack.c.l.b16 %v10910
    %v10983 = vunpack.c.l.b16 %v10911
    %v10984 = vunpack.c.l.b16 %v10912
    %v10985 = vunpack.c.l.b16 %v10913
    %v10986 = vunpack.c.l.b16 %v10914
    %v10987 = vunpack.c.l.b16 %v10915
    %v10988 = vunpack.c.l.b16 %v10916
    %v10989 = vunpack.c.l.b16 %v10917
    %v10990 = vunpack.c.l.b16 %v10918
    %v10991 = vunpack.c.l.b16 %v10919
    %v10992 = vunpack.c.l.b16 %v10920
    %v10993 = vunpack.c.l.b16 %v10921
    %v10994 = vunpack.c.l.b16 %v10922
    %v10995 = vunpack.c.l.b16 %v10923
    %v10996 = vunpack.c.l.b16 %v10924
    %v10997 = vunpack.c.l.b16 %v10925
    %v10998 = vunpack.c.l.b16 %v10926
    %v10999 = vunpack.c.l.b16 %v10927
    %v11000 = vunpack.c.l.b16 %v10928
    %v11001 = vpack.c.b16 %v10966, %v10965
    %v11002 = vpack.c.b16 %v10968, %v10967
    %v11003 = vpack.c.b16 %v10970, %v10969
    %v11004 = vpack.c.b16 %v10972, %v10971
    %v11005 = vpack.c.b16 %v10974, %v10973
    %v11006 = vpack.c.b16 %v10976, %v10975
    %v11007 = vpack.c.b16 %v10978, %v10977
    %v11008 = vpack.c.b16 %v10980, %v10979
    %v11009 = vpack.c.b16 %v10982, %v10981
    %v11010 = vpack.c.b16 %v10984, %v10983
    %v11011 = vpack.c.b16 %v10986, %v10985
    %v11012 = vpack.c.b16 %v10988, %v10987
    %v11013 = vpack.c.b16 %v10990, %v10989
    %v11014 = vpack.c.b16 %v10992, %v10991
    %v11015 = vpack.c.b16 %v10994, %v10993
    %v11016 = vpack.c.b16 %v10996, %v10995
    %v11017 = vpack.c.b16 %v10998, %v10997
    %v11018 = vpack.c.b16 %v11000, %v10999
    %v11038 = vsel %vm3517, %v10892, 0
    %11040 = vmatprep.subr.bf16.mxu0 0
    %11041 = vmatpush1.bf16.msra.mxu0 %v11001
    %11042 = vmatprep.subr.bf16.mxu0 0
    %11043 = vmatpush1.bf16.msra.mxu0 %v11002
    %11044 = vmatprep.subr.bf16.mxu0 0
    %11045 = vmatpush1.bf16.msra.mxu0 %v11003
    %11046 = vmatprep.subr.bf16.mxu0 0
    %11047 = vmatpush1.bf16.msra.mxu0 %v11004
    %11048 = vmatprep.subr.bf16.mxu0 0
    %11049 = vmatpush1.bf16.msra.mxu0 %v11005
    %11050 = vmatprep.subr.bf16.mxu0 0
    %11051 = vmatpush1.bf16.msra.mxu0 %v11006
    %11052 = vmatprep.subr.bf16.mxu0 0
    %11053 = vmatpush1.bf16.msra.mxu0 %v11007
    %11054 = vmatprep.subr.bf16.mxu0 0
    %11055 = vmatpush1.bf16.msra.mxu0 %v11008
    %11056 = vmatprep.subr.bf16.mxu0 0
    %11057 = vmatpush1.bf16.msra.mxu0 %v11009
    %11058 = vmatprep.subr.bf16.mxu0 0
    %11059 = vmatpush1.bf16.msra.mxu0 %v11010
    %11060 = vmatprep.subr.bf16.mxu0 0
    %11061 = vmatpush1.bf16.msra.mxu0 %v11011
    %11062 = vmatprep.subr.bf16.mxu0 0
    %11063 = vmatpush1.bf16.msra.mxu0 %v11012
    %11064 = vmatprep.subr.bf16.mxu0 0
    %11065 = vmatpush1.bf16.msra.mxu0 %v11013
    %11066 = vmatprep.subr.bf16.mxu0 0
    %11067 = vmatpush1.bf16.msra.mxu0 %v11014
    %11068 = vmatprep.subr.bf16.mxu0 0
    %11069 = vmatpush1.bf16.msra.mxu0 %v11015
    %11070 = vmatprep.subr.bf16.mxu0 0
    %11071 = vmatpush1.bf16.msra.mxu0 %v11016
    %11072 = vmatprep.mubr.bf16.mxu0 %v10891
    %11073 = vmatmul.mubr.bf16.gmra.mrb[0].mxu0 %v10890
    %v11074 = vpop.f32.mrb[0].mxu0
    %v11075 = vadd.f32 0.0, %v11074
    %v11076 = vpop.f32.mrb[0].mxu0
    %v11077 = vpop.f32.mrb[0].mxu0
    %v11078 = vpop.f32.mrb[0].mxu0
    %11079 = vdwg.mxu0
    %11080 = vmatprep.subr.bf16.mxu0 0
    %11081 = vmatpush1.bf16.msra.mxu0 %v11017
    %11082 = vmatprep.subr.bf16.mxu0 0
    %11083 = vmatpush1.bf16.msra.mxu0 %v11018
    %11084 = vmatprep.subr.bf16.mxu0 0
    %11085 = vmatpush1.bf16.msra.mxu0 0
    %11086 = vmatprep.subr.bf16.mxu0 0
    %11087 = vmatpush1.bf16.msra.mxu0 0
    %11088 = vmatprep.subr.bf16.mxu0 0
    %11089 = vmatpush1.bf16.msra.mxu0 0
    %11090 = vmatprep.subr.bf16.mxu0 0
    %11091 = vmatpush1.bf16.msra.mxu0 0
    %11092 = vmatprep.subr.bf16.mxu0 0
    %11093 = vmatpush1.bf16.msra.mxu0 0
    %11094 = vmatprep.subr.bf16.mxu0 0
    %11095 = vmatpush1.bf16.msra.mxu0 0
    %11096 = vmatprep.subr.bf16.mxu0 0
    %11097 = vmatpush1.bf16.msra.mxu0 0
    %11098 = vmatprep.subr.bf16.mxu0 0
    %11099 = vmatpush1.bf16.msra.mxu0 0
    %11100 = vmatprep.subr.bf16.mxu0 0
    %11101 = vmatpush1.bf16.msra.mxu0 0
    %11102 = vmatprep.subr.bf16.mxu0 0
    %11103 = vmatpush1.bf16.msra.mxu0 0
    %11104 = vmatprep.subr.bf16.mxu0 0
    %11105 = vmatpush1.bf16.msra.mxu0 0
    %11106 = vmatprep.subr.bf16.mxu0 0
    %11107 = vmatpush1.bf16.msra.mxu0 0
    %11108 = vmatprep.subr.bf16.mxu0 0
    %11109 = vmatpush1.bf16.msra.mxu0 0
    %11110 = vmatprep.subr.bf16.mxu0 0
    %11111 = vmatpush1.bf16.msra.mxu0 0
    %11112 = vmatprep.mubr.bf16.mxu0 0
    %11113 = vmatmul.mubr.bf16.gmra.mrb[0].mxu0 %v11038
    %v11114 = vpop.f32.mrb[0].mxu0
    %v11115 = vadd.f32 %v11075, %v11114
    %v11116 = vpop.f32.mrb[0].mxu0
    %v11117 = vpop.f32.mrb[0].mxu0
    %v11118 = vpop.f32.mrb[0].mxu0
    %11119 = vdwg.mxu0
    %v11120 = vsel %vm3517, %v11115, 0.0
    %v11121 = vrot.slane %v11120, 4
    %v11122 = vadd.f32 %v11120, %v11121
    %v11123 = vrot.slane %v11122, 2
    %v11124 = vadd.f32 %v11122, %v11123
    %v11125 = vrot.slane %v11124, 1
    %v11126 = vadd.f32 %v11124, %v11125
    %v11127 = vmul.f32 %v11126, 0.125
    %v11128 = vmul.f32 %v11115, %v11115
    %v11129 = vsel %vm3517, %v11128, 0.0
    %v11130 = vrot.slane %v11129, 4
    %v11131 = vadd.f32 %v11129, %v11130
    %v11132 = vrot.slane %v11131, 2
    %v11133 = vadd.f32 %v11131, %v11132
    %v11134 = vrot.slane %v11133, 1
    %v11135 = vadd.f32 %v11133, %v11134
    %v11136 = vmul.f32 %v11135, 0.125
    %v11137 = vmul.f32 %v11127, %v11127
    %v11138 = vsub.f32 %v11136, %v11137
    %v11139 = vld [vmem:[#allocation24] sm:$0x1]
    %v11140 = vadd.f32 %v11138, 1e-05
    %v11141 = vrsqrt.pop %v11140
    %v11142 = vmul.f32 %v11139, %v11141
    %v11143 = vld [vmem:[#allocation26] sm:$0x1]
    %v11144 = vmul.f32 %v11127, %v11142
    %v11145 = vsub.f32 %v11143, %v11144
    %v11147 = vlaneseq
    %v11148 = vshrl.u32 %v11147, 7
    %v11149 = vsub.s32 0, %v11148
    %v11150 = vrot.slane %v11142, %v11149
    %v11152 = vmul.f32 %v11115, %v11150
    %v11154 = vlaneseq
    %v11155 = vshrl.u32 %v11154, 7
    %v11156 = vsub.s32 0, %v11155
    %v11157 = vrot.slane %v11145, %v11156
    %v11159 = vadd.f32 %v11152, %v11157
    %v11160 = vmax.f32 %v11159, 0.0
    %v11162 = vcombine.high %v11160, %v11160
    %v11164 = vunpack.c.l.s4 1983009808
    %v11165 = vunpack.c.0.s8 %v11164
    %v11166 = vlaneseq
    %v11167 = vshrl.u32 %v11166, 7
    %v11168 = vsub.s32 %v11165, %v11167
    %v11169 = vrot.slane %v11160, %v11168
    %v11171 = vunpack.c.l.s4 1983009808
    %v11172 = vunpack.c.0.s8 %v11171
    %v11173 = vlaneseq
    %v11174 = vshrl.u32 %v11173, 7
    %v11175 = vsub.s32 %v11172, %v11174
    %v11176 = vrot.slane %v11162, %v11175
    %v11177 = vcombine.high %v11169, %v11169
    %v11178 = vcombine.high %v11176, %v11176
    %v11183 = vsel %vm5471, %v11169, -inf
    %v11184 = vrot.slane %v11183, 4
    %v11185 = vmax.f32 %v11183, %v11184
    %v11186 = vrot.slane %v11185, 2
    %v11187 = vmax.f32 %v11185, %v11186
    %v11188 = vrot.slane %v11187, 1
    %v11189 = vmax.f32 %v11187, %v11188
    %v11190 = vsel %vm5471, %v11177, -inf
    %v11191 = vrot.slane %v11190, 4
    %v11192 = vmax.f32 %v11190, %v11191
    %v11193 = vrot.slane %v11192, 2
    %v11194 = vmax.f32 %v11192, %v11193
    %v11195 = vrot.slane %v11194, 1
    %v11196 = vmax.f32 %v11194, %v11195
    %v11197 = vsel %vm5471, %v11176, -inf
    %v11198 = vrot.slane %v11197, 4
    %v11199 = vmax.f32 %v11197, %v11198
    %v11200 = vrot.slane %v11199, 2
    %v11201 = vmax.f32 %v11199, %v11200
    %v11202 = vrot.slane %v11201, 1
    %v11203 = vmax.f32 %v11201, %v11202
    %v11204 = vsel %vm5471, %v11178, -inf
    %v11205 = vrot.slane %v11204, 4
    %v11206 = vmax.f32 %v11204, %v11205
    %v11207 = vrot.slane %v11206, 2
    %v11208 = vmax.f32 %v11206, %v11207
    %v11209 = vrot.slane %v11208, 1
    %v11210 = vmax.f32 %v11208, %v11209
    %v11211 = vmax.f32 %v11189, %v11196
    %v11212 = vmax.f32 %v11203, %v11210
    %vm11213 = vcmask 253952
    %11214 = vst.msk [vmem:[#allocation27] sm:$0x1] %vm11213, %v11211
    %11215 = vst.msk [vmem:[#allocation27 + $0x1] sm:$0x1] %vm11213, %v11212
    // Predicated region
    $region106: #{conv_standard_forward.1} parent=1 // pred_check
      _
    $region107: #{conv_standard_forward.1} parent=1 // pred_check_branch
      %11217 = sbr.rel (0) target = $region109
    $region108: #{conv_standard_forward.1} parent=1 // pred_region
      %s11219 = ssub.s32 32, 32
      %11220 = vsyncadd [#allocation8], %s11219
      %s11221 = sshll.u32 [#allocation27], 4
      %s11222 = int_to_ptr.vmem [resolvable:$true] %s11221
      %11227 = dma.vmem_to_hbm [thread:$0]  %s11222, 32, %s13, [#allocation8], 16, 16, 1
    $region109: #{conv_standard_forward.1} parent=1 // pred_fallthru
      _
    // Predicated region
    $region110: #{conv_standard_forward.1} parent=1 // pred_check
      _
    $region111: #{conv_standard_forward.1} parent=1 // pred_check_branch
      %11229 = sbr.rel (0) target = $region113
    $region112: #{conv_standard_forward.1} parent=1 // pred_region
      %11230 = dma.done [#allocation8], 32
    $region113: #{conv_standard_forward.1} parent=1 // pred_fallthru
      _
    %11231 = vsyncpa [#allocation7], 1
    %11232 = vsyncpa [#allocation10], 1
    %11233 = vsyncpa [#allocation13], 1
    %11234 = vsyncpa [#allocation16], 1
    %11235 = vsyncpa [#allocation19], 1
    %11236 = vsyncpa [#allocation22], 1
    %11237 = vsyncpa [#allocation25], 1
    %11238 = vsyncpa [#allocation8], 1

</llo_original>
